<compile_context>
chip_gen: v7x
topology: tpu7x:2x2x1
jax: 0.10.0
libtpu: 0.0.40
codegen_flags: <defaults>
</compile_context>

<pallas_src>
import jax
import jax.numpy as jnp
from jax.experimental import pallas as pl
from jax.experimental.pallas import tpu as pltpu


# --------------------------- fused LSTM + FC kernel ---------------------------
def _make_fused_kernel(*, L, N, H, S, B, num_layers, O_pad):
    G = 4 * H
    last = num_layers - 1

    def kernel(*refs):
        x_ref = refs[0]                               # (L*N, 2) time-major input
        layer_refs = refs[1:1 + 3 * num_layers]       # (w_ih_t, w_hh_t, b) per layer
        wfc_ref = refs[1 + 3 * num_layers]            # (L*H, O_pad)
        bfc_ref = refs[2 + 3 * num_layers]            # (1, O_pad)
        out_ref = refs[3 + 3 * num_layers]            # (B, O_pad)
        xp_scr = refs[4 + 3 * num_layers]             # (L*N, 4H) hoisted layer-0 proj

        # ---------------- constants, built once and hoisted -------------------
        lane = jax.lax.broadcasted_iota(jnp.int32, (N, G), 1)
        g_mask = (lane >= 2 * H) & (lane < 3 * H)
        # One-EUP-pass activations: tanh(x) = 2*sigmoid(2x) - 1.
        #   i,f,o lanes: scale=1, shift=0  -> sigmoid(x)
        #   g lanes    : scale=2, shift=-1 -> tanh(x)
        s_vec = jnp.where(g_mask, 2.0, 1.0).astype(jnp.float32)   # (N, 4H)
        t_vec = jnp.where(g_mask, -1.0, 0.0).astype(jnp.float32)  # (N, 4H)

        # 0/1 selection matrix picking rows n = b*S + (S-1) (torch's [:, -1, :]).
        row = jax.lax.broadcasted_iota(jnp.int32, (B, N), 1)
        want = jax.lax.broadcasted_iota(jnp.int32, (B, N), 0) * S + (S - 1)
        sel = (row == want).astype(jnp.float32)                    # (B, N)

        # ------------- loop-invariant weights held in vregs -------------------
        wih, whh, bias = [], [], []
        for k in range(num_layers):
            wih.append(layer_refs[3 * k + 0][...])
            whh.append(layer_refs[3 * k + 1][...])
            bias.append(layer_refs[3 * k + 2][...])
        # Hoist the (1,4H)->(N,4H) bias broadcast out of the unrolled loop.
        bias_nb = [b if k == 0 else jnp.broadcast_to(b, (N, G))
                   for k, b in enumerate(bias)]

        # ------- layer-0 input projection hoisted out of the recurrence -------
        xp_scr[...] = (jnp.dot(x_ref[...], wih[0],
                               preferred_element_type=jnp.float32) + bias[0])

        def cell(pre, h_prev, c_prev, whh_k):
            # NOTE: we rely on Mosaic keeping whh_k staged on the MXU across the
            # unrolled steps (explicit matmul_push_rhs/acc_lhs not used).
            gates = pre + jnp.dot(h_prev, whh_k,
                                  preferred_element_type=jnp.float32)
            act = jax.nn.sigmoid(gates * s_vec) * s_vec + t_vec   # single EUP pass
            i_g = act[:, 0 * H:1 * H]
            f_g = act[:, 1 * H:2 * H]
            g_g = act[:, 2 * H:3 * H]
            o_g = act[:, 3 * H:4 * H]
            c_new = f_g * c_prev + i_g * g_g
            h_new = o_g * jnp.tanh(c_new)
            return h_new, c_new

        h = [jnp.zeros((N, H), jnp.float32) for _ in range(num_layers)]
        c = [jnp.zeros((N, H), jnp.float32) for _ in range(num_layers)]
        fc_acc = jnp.zeros((B, O_pad), jnp.float32)

        # --------- software-pipelined, fully unrolled recurrence ---------------
        # Pipeline step p runs layer k on landmark t = p - k (when valid); the
        # values read from h[.] are the previous pipeline step's results, so the
        # per-step bodies of the two layers are data-independent and the LLO
        # scheduler can overlap their matmul / EUP / VPU work.
        for p in range(L + num_layers - 1):
            h_nxt, c_nxt = list(h), list(c)
            for k in range(num_layers):
                t = p - k
                if t < 0 or t >= L:
                    continue
                if k == 0:
                    pre = xp_scr[pl.ds(t * N, N), :]
                else:
                    # Incremental input projection from the layer below
                    # (off the serial chain; replaces the old h_scr buffer).
                    pre = jnp.dot(h[k - 1], wih[k],
                                  preferred_element_type=jnp.float32) + bias_nb[k]
                h_nxt[k], c_nxt[k] = cell(pre, h[k], c[k], whh[k])
                if k == last:
                    # Reduce to the B rows the Linear uses, then a tiny partial
                    # FC — both matmuls off the recurrence's dependency chain.
                    hsel_t = jnp.dot(sel, h_nxt[k],
                                     preferred_element_type=jnp.float32)   # (B, H)
                    fc_acc = fc_acc + jnp.dot(
                        hsel_t, wfc_ref[pl.ds(t * H, H), :],
                        preferred_element_type=jnp.float32)                # (B, O_pad)
            h, c = h_nxt, c_nxt

        # Lane-dense (256-wide, unmasked) output store.
        out_ref[...] = fc_acc + bfc_ref[...]

    return kernel


def lstm_model_forward(params, x, hidden_size):
    """x: (B, S, L, 2) -> (B, output_classes). Single fused Pallas kernel."""
    B, S, L, C = x.shape
    N = B * S
    H = hidden_size
    layers = params["lstm"]
    num_layers = len(layers)

    # Time-major (landmark-major) flatten: row t*N + n holds x[n, t, :].
    x_tm = jnp.transpose(x.reshape(N, L, C).astype(jnp.float32),
                         (1, 0, 2)).reshape(L * N, C)

    w_fc_t = params["fc"]["w_t"]                      # (L*H, O)
    b_fc = params["fc"]["b"]                          # (1, O)
    O = w_fc_t.shape[1]
    O_pad = ((O + 127) // 128) * 128                  # lane-dense (unmasked) store
    w_fc_pad = jnp.pad(w_fc_t, ((0, 0), (0, O_pad - O)))
    b_fc_pad = jnp.pad(b_fc, ((0, 0), (0, O_pad - O)))

    operands = [x_tm]
    for lyr in layers:
        operands += [lyr["w_ih_t"], lyr["w_hh_t"], lyr["b"]]
    operands += [w_fc_pad, b_fc_pad]

    kernel = _make_fused_kernel(L=L, N=N, H=H, S=S, B=B,
                                num_layers=num_layers, O_pad=O_pad)
    vmem = pltpu.MemorySpace.VMEM
    out_pad = pl.pallas_call(
        kernel,
        out_shape=jax.ShapeDtypeStruct((B, O_pad), jnp.float32),
        in_specs=[pl.BlockSpec(memory_space=vmem)] * len(operands),
        out_specs=pl.BlockSpec(memory_space=vmem),
        scratch_shapes=[pltpu.VMEM((L * N, 4 * H), jnp.float32)],  # hoisted layer-0 proj
    )(*operands)
    return out_pad[:, :O]


# ------------------------------ parameter init --------------------------------
def init_params(key, num_landmarks, hidden_size, num_layers, output_classes):
    k = 1.0 / jnp.sqrt(jnp.float32(hidden_size))
    params = {"lstm": [], "fc": {}}
    keys = jax.random.split(key, num_layers * 4 + 2)
    ki = 0
    for layer in range(num_layers):
        d_in = 2 if layer == 0 else hidden_size
        w_ih = jax.random.uniform(keys[ki], (4 * hidden_size, d_in),
                                  jnp.float32, -k, k); ki += 1
        w_hh = jax.random.uniform(keys[ki], (4 * hidden_size, hidden_size),
                                  jnp.float32, -k, k); ki += 1
        b_ih = jax.random.uniform(keys[ki], (4 * hidden_size,),
                                  jnp.float32, -k, k); ki += 1
        b_hh = jax.random.uniform(keys[ki], (4 * hidden_size,),
                                  jnp.float32, -k, k); ki += 1
        params["lstm"].append({
            "w_ih_t": w_ih.T,                      # (d_in, 4H)
            "w_hh_t": w_hh.T,                      # (H, 4H)
            "b": (b_ih + b_hh)[None, :],           # (1, 4H)
        })
    fan_in = hidden_size * num_landmarks
    kf = 1.0 / jnp.sqrt(jnp.float32(fan_in))
    w_fc = jax.random.uniform(keys[ki], (output_classes, fan_in),
                              jnp.float32, -kf, kf); ki += 1
    b_fc = jax.random.uniform(keys[ki], (output_classes,),
                              jnp.float32, -kf, kf)
    params["fc"]["w_t"] = w_fc.T                   # (L*H, O)
    params["fc"]["b"] = b_fc[None, :]              # (1, O)
    return params


# --------------------------- pure-JAX reference --------------------------------
def lstm_model_reference(params, x, hidden_size):
    """Pure-JAX reference mirroring torch.nn.LSTM + Linear semantics."""
    B, S, L, C = x.shape
    N = B * S
    H = hidden_size
    seq = x.reshape(N, L, C).astype(jnp.float32)
    for layer in params["lstm"]:
        w_ih_t, w_hh_t, b = layer["w_ih_t"], layer["w_hh_t"], layer["b"]

        def step(carry, x_t):
            h, c = carry
            gates = x_t @ w_ih_t + h @ w_hh_t + b[0]
            i = jax.nn.sigmoid(gates[:, 0 * H:1 * H])
            f = jax.nn.sigmoid(gates[:, 1 * H:2 * H])
            g = jnp.tanh(gates[:, 2 * H:3 * H])
            o = jax.nn.sigmoid(gates[:, 3 * H:4 * H])
            c = f * c + i * g
            h = o * jnp.tanh(c)
            return (h, c), h

        h0 = jnp.zeros((N, H), jnp.float32)
        c0 = jnp.zeros((N, H), jnp.float32)
        _, ys = jax.lax.scan(step, (h0, c0), jnp.transpose(seq, (1, 0, 2)))
        seq = jnp.transpose(ys, (1, 0, 2))                   # (N, L, H)
    out = seq.reshape(B, S, L * H)[:, -1, :]
    return out @ params["fc"]["w_t"] + params["fc"]["b"][0]


# ----------------------------------- main -------------------------------------
if __name__ == "__main__":
    B, S, L, H = 2, 8, 16, 32          # batch, seq_len, num_landmarks, hidden
    NUM_LAYERS, OUT_CLASSES = 2, 250

    key = jax.random.PRNGKey(0)
    k_x, k_p = jax.random.split(key)
    x = jax.random.normal(k_x, (B, S, L, 2), jnp.float32)
    params = init_params(k_p, L, H, NUM_LAYERS, OUT_CLASSES)

    fwd = jax.jit(lstm_model_forward, static_argnums=2)
    out = jax.block_until_ready(fwd(params, x, H))

    ref = lstm_model_reference(params, x, H)
    assert out.shape == (B, OUT_CLASSES)
    err = jnp.max(jnp.abs(out - ref))
    assert jnp.allclose(out, ref, atol=1e-4, rtol=1e-4), f"max abs err {err}"

    print("KERNEL_OK")
</pallas_src>

<mosaic_0001>
module attributes {stable_mosaic.version = 11 : i64} {
  func.func @kernel(%arg0: memref<256x2xf32, #tpu.memory_space<vmem>>, %arg1: memref<2x128xf32, #tpu.memory_space<vmem>>, %arg2: memref<32x128xf32, #tpu.memory_space<vmem>>, %arg3: memref<1x128xf32, #tpu.memory_space<vmem>>, %arg4: memref<32x128xf32, #tpu.memory_space<vmem>>, %arg5: memref<32x128xf32, #tpu.memory_space<vmem>>, %arg6: memref<1x128xf32, #tpu.memory_space<vmem>>, %arg7: memref<512x256xf32, #tpu.memory_space<vmem>>, %arg8: memref<1x256xf32, #tpu.memory_space<vmem>>, %arg9: memref<2x256xf32, #tpu.memory_space<vmem>>, %arg10: memref<256x128xf32, #tpu.memory_space<vmem>>) attributes {dimension_semantics = [], scalar_prefetch = 0 : i64, scratch_operands = 1 : i64, tpu.core_type = #tpu.core_type<tc>} {
    %0 = tpu.iota {dimensions = array<i32: 1>} : vector<16x128xi32>
    %c64_i32 = arith.constant 64 : i32
    %1 = vector.broadcast %c64_i32 : i32 to vector<16x128xi32>
    %2 = arith.cmpi sge, %0, %1 : vector<16x128xi32>
    %c96_i32 = arith.constant 96 : i32
    %3 = vector.broadcast %c96_i32 : i32 to vector<16x128xi32>
    %4 = arith.cmpi slt, %0, %3 : vector<16x128xi32>
    %5 = arith.andi %2, %4 : vector<16x128xi1>
    %cst = arith.constant 2.000000e+00 : f32
    %cst_0 = arith.constant 1.000000e+00 : f32
    %6 = vector.broadcast %cst : f32 to vector<16x128xf32>
    %7 = vector.broadcast %cst_0 : f32 to vector<16x128xf32>
    %8 = arith.select %5, %6, %7 : vector<16x128xi1>, vector<16x128xf32>
    %cst_1 = arith.constant -1.000000e+00 : f32
    %cst_2 = arith.constant 0.000000e+00 : f32
    %9 = vector.broadcast %cst_1 : f32 to vector<16x128xf32>
    %10 = vector.broadcast %cst_2 : f32 to vector<16x128xf32>
    %11 = arith.select %5, %9, %10 : vector<16x128xi1>, vector<16x128xf32>
    %12 = tpu.iota {dimensions = array<i32: 1>} : vector<2x16xi32>
    %13 = tpu.iota {dimensions = array<i32: 0>} : vector<2x16xi32>
    %c8_i32 = arith.constant 8 : i32
    %14 = vector.broadcast %c8_i32 : i32 to vector<2x16xi32>
    %15 = arith.muli %13, %14 : vector<2x16xi32>
    %c7_i32 = arith.constant 7 : i32
    %16 = vector.broadcast %c7_i32 : i32 to vector<2x16xi32>
    %17 = arith.addi %15, %16 : vector<2x16xi32>
    %18 = arith.cmpi eq, %12, %17 : vector<2x16xi32>
    %19 = arith.extui %18 : vector<2x16xi1> to vector<2x16xi32>
    %20 = arith.sitofp %19 : vector<2x16xi32> to vector<2x16xf32>
    %c0 = arith.constant 0 : index
    %c0_3 = arith.constant 0 : index
    %21 = vector.load %arg1[%c0, %c0_3] : memref<2x128xf32, #tpu.memory_space<vmem>>, vector<2x128xf32>
    %c0_4 = arith.constant 0 : index
    %c0_5 = arith.constant 0 : index
    %22 = vector.load %arg2[%c0_4, %c0_5] : memref<32x128xf32, #tpu.memory_space<vmem>>, vector<32x128xf32>
    %c0_6 = arith.constant 0 : index
    %c0_7 = arith.constant 0 : index
    %23 = vector.load %arg3[%c0_6, %c0_7] : memref<1x128xf32, #tpu.memory_space<vmem>>, vector<1x128xf32>
    %c0_8 = arith.constant 0 : index
    %c0_9 = arith.constant 0 : index
    %24 = vector.load %arg4[%c0_8, %c0_9] : memref<32x128xf32, #tpu.memory_space<vmem>>, vector<32x128xf32>
    %c0_10 = arith.constant 0 : index
    %c0_11 = arith.constant 0 : index
    %25 = vector.load %arg5[%c0_10, %c0_11] : memref<32x128xf32, #tpu.memory_space<vmem>>, vector<32x128xf32>
    %c0_12 = arith.constant 0 : index
    %c0_13 = arith.constant 0 : index
    %26 = vector.load %arg6[%c0_12, %c0_13] : memref<1x128xf32, #tpu.memory_space<vmem>>, vector<1x128xf32>
    %27 = vector.shape_cast %26 : vector<1x128xf32> to vector<1x128xf32>
    %28 = vector.broadcast %27 : vector<1x128xf32> to vector<16x128xf32>
    %c0_14 = arith.constant 0 : index
    %c0_15 = arith.constant 0 : index
    %29 = vector.load %arg0[%c0_14, %c0_15] : memref<256x2xf32, #tpu.memory_space<vmem>>, vector<256x2xf32>
    %cst_16 = arith.constant dense<0.000000e+00> : vector<256x128xf32>
    %30 = tpu.matmul %29, %21, %cst_16 {dimension_numbers = #tpu.dot_dimension_numbers<[1], [0], [0], [1], [0, 0, 1, 1], [], []>} : vector<256x2xf32>, vector<2x128xf32>, vector<256x128xf32> -> vector<256x128xf32>
    %31 = vector.broadcast %23 : vector<1x128xf32> to vector<256x128xf32>
    %32 = arith.addf %30, %31 : vector<256x128xf32>
    %c0_17 = arith.constant 0 : index
    %c0_18 = arith.constant 0 : index
    %33 = vector.load %arg10[%c0_17, %c0_18] : memref<256x128xf32, #tpu.memory_space<vmem>>, vector<256x128xf32>
    tpu.vector_store %arg10[%c0_17, %c0_18], %32 {strides = array<i32>} : memref<256x128xf32, #tpu.memory_space<vmem>>, vector<256x128xf32>,
    %cst_19 = arith.constant 0.000000e+00 : f32
    %34 = vector.broadcast %cst_19 : f32 to vector<16x32xf32>
    %cst_20 = arith.constant 0.000000e+00 : f32
    %35 = vector.broadcast %cst_20 : f32 to vector<16x32xf32>
    %cst_21 = arith.constant 0.000000e+00 : f32
    %36 = vector.broadcast %cst_21 : f32 to vector<16x32xf32>
    %cst_22 = arith.constant 0.000000e+00 : f32
    %37 = vector.broadcast %cst_22 : f32 to vector<16x32xf32>
    %cst_23 = arith.constant 0.000000e+00 : f32
    %38 = vector.broadcast %cst_23 : f32 to vector<2x256xf32>
    %c0_24 = arith.constant 0 : index
    %c0_25 = arith.constant 0 : index
    %39 = vector.load %arg10[%c0_24, %c0_25] : memref<256x128xf32, #tpu.memory_space<vmem>>, vector<16x128xf32>
    %cst_26 = arith.constant dense<0.000000e+00> : vector<16x128xf32>
    %40 = tpu.matmul %34, %22, %cst_26 {dimension_numbers = #tpu.dot_dimension_numbers<[1], [0], [0], [1], [0, 0, 1, 1], [], []>} : vector<16x32xf32>, vector<32x128xf32>, vector<16x128xf32> -> vector<16x128xf32>
    %41 = arith.addf %39, %40 : vector<16x128xf32>
    %42 = arith.mulf %41, %8 : vector<16x128xf32>
    %43 = arith.negf %42 : vector<16x128xf32>
    %44 = math.exp %43 : vector<16x128xf32>
    %cst_27 = arith.constant 1.000000e+00 : f32
    %45 = vector.broadcast %cst_27 : f32 to vector<16x128xf32>
    %46 = arith.addf %45, %44 : vector<16x128xf32>
    %47 = arith.divf %45, %46 : vector<16x128xf32>
    %48 = arith.mulf %47, %8 : vector<16x128xf32>
    %49 = arith.addf %48, %11 : vector<16x128xf32>
    %50 = vector.extract_strided_slice %49 {offsets = [0, 0], sizes = [16, 32], strides = [1, 1]} : vector<16x128xf32> to vector<16x32xf32>
    %51 = vector.extract_strided_slice %49 {offsets = [0, 32], sizes = [16, 32], strides = [1, 1]} : vector<16x128xf32> to vector<16x32xf32>
    %52 = vector.extract_strided_slice %49 {offsets = [0, 64], sizes = [16, 32], strides = [1, 1]} : vector<16x128xf32> to vector<16x32xf32>
    %53 = vector.extract_strided_slice %49 {offsets = [0, 96], sizes = [16, 32], strides = [1, 1]} : vector<16x128xf32> to vector<16x32xf32>
    %54 = arith.mulf %51, %36 : vector<16x32xf32>
    %55 = arith.mulf %50, %52 : vector<16x32xf32>
    %56 = arith.addf %54, %55 : vector<16x32xf32>
    %57 = math.tanh %56 : vector<16x32xf32>
    %58 = arith.mulf %53, %57 : vector<16x32xf32>
    %c16 = arith.constant 16 : index
    %c0_28 = arith.constant 0 : index
    %59 = vector.load %arg10[%c16, %c0_28] : memref<256x128xf32, #tpu.memory_space<vmem>>, vector<16x128xf32>
    %cst_29 = arith.constant dense<0.000000e+00> : vector<16x128xf32>
    %60 = tpu.matmul %58, %22, %cst_29 {dimension_numbers = #tpu.dot_dimension_numbers<[1], [0], [0], [1], [0, 0, 1, 1], [], []>} : vector<16x32xf32>, vector<32x128xf32>, vector<16x128xf32> -> vector<16x128xf32>
    %61 = arith.addf %59, %60 : vector<16x128xf32>
    %62 = arith.mulf %61, %8 : vector<16x128xf32>
    %63 = arith.negf %62 : vector<16x128xf32>
    %64 = math.exp %63 : vector<16x128xf32>
    %cst_30 = arith.constant 1.000000e+00 : f32
    %65 = vector.broadcast %cst_30 : f32 to vector<16x128xf32>
    %66 = arith.addf %65, %64 : vector<16x128xf32>
    %67 = arith.divf %65, %66 : vector<16x128xf32>
    %68 = arith.mulf %67, %8 : vector<16x128xf32>
    %69 = arith.addf %68, %11 : vector<16x128xf32>
    %70 = vector.extract_strided_slice %69 {offsets = [0, 0], sizes = [16, 32], strides = [1, 1]} : vector<16x128xf32> to vector<16x32xf32>
    %71 = vector.extract_strided_slice %69 {offsets = [0, 32], sizes = [16, 32], strides = [1, 1]} : vector<16x128xf32> to vector<16x32xf32>
    %72 = vector.extract_strided_slice %69 {offsets = [0, 64], sizes = [16, 32], strides = [1, 1]} : vector<16x128xf32> to vector<16x32xf32>
    %73 = vector.extract_strided_slice %69 {offsets = [0, 96], sizes = [16, 32], strides = [1, 1]} : vector<16x128xf32> to vector<16x32xf32>
    %74 = arith.mulf %71, %56 : vector<16x32xf32>
    %75 = arith.mulf %70, %72 : vector<16x32xf32>
    %76 = arith.addf %74, %75 : vector<16x32xf32>
    %77 = math.tanh %76 : vector<16x32xf32>
    %78 = arith.mulf %73, %77 : vector<16x32xf32>
    %cst_31 = arith.constant dense<0.000000e+00> : vector<16x128xf32>
    %79 = tpu.matmul %58, %24, %cst_31 {dimension_numbers = #tpu.dot_dimension_numbers<[1], [0], [0], [1], [0, 0, 1, 1], [], []>} : vector<16x32xf32>, vector<32x128xf32>, vector<16x128xf32> -> vector<16x128xf32>
    %80 = arith.addf %79, %28 : vector<16x128xf32>
    %cst_32 = arith.constant dense<0.000000e+00> : vector<16x128xf32>
    %81 = tpu.matmul %35, %25, %cst_32 {dimension_numbers = #tpu.dot_dimension_numbers<[1], [0], [0], [1], [0, 0, 1, 1], [], []>} : vector<16x32xf32>, vector<32x128xf32>, vector<16x128xf32> -> vector<16x128xf32>
    %82 = arith.addf %80, %81 : vector<16x128xf32>
    %83 = arith.mulf %82, %8 : vector<16x128xf32>
    %84 = arith.negf %83 : vector<16x128xf32>
    %85 = math.exp %84 : vector<16x128xf32>
    %cst_33 = arith.constant 1.000000e+00 : f32
    %86 = vector.broadcast %cst_33 : f32 to vector<16x128xf32>
    %87 = arith.addf %86, %85 : vector<16x128xf32>
    %88 = arith.divf %86, %87 : vector<16x128xf32>
    %89 = arith.mulf %88, %8 : vector<16x128xf32>
    %90 = arith.addf %89, %11 : vector<16x128xf32>
    %91 = vector.extract_strided_slice %90 {offsets = [0, 0], sizes = [16, 32], strides = [1, 1]} : vector<16x128xf32> to vector<16x32xf32>
    %92 = vector.extract_strided_slice %90 {offsets = [0, 32], sizes = [16, 32], strides = [1, 1]} : vector<16x128xf32> to vector<16x32xf32>
    %93 = vector.extract_strided_slice %90 {offsets = [0, 64], sizes = [16, 32], strides = [1, 1]} : vector<16x128xf32> to vector<16x32xf32>
    %94 = vector.extract_strided_slice %90 {offsets = [0, 96], sizes = [16, 32], strides = [1, 1]} : vector<16x128xf32> to vector<16x32xf32>
    %95 = arith.mulf %92, %37 : vector<16x32xf32>
    %96 = arith.mulf %91, %93 : vector<16x32xf32>
    %97 = arith.addf %95, %96 : vector<16x32xf32>
    %98 = math.tanh %97 : vector<16x32xf32>
    %99 = arith.mulf %94, %98 : vector<16x32xf32>
    %cst_34 = arith.constant dense<0.000000e+00> : vector<2x32xf32>
    %100 = tpu.matmul %20, %99, %cst_34 {dimension_numbers = #tpu.dot_dimension_numbers<[1], [0], [0], [1], [0, 0, 1, 1], [], []>} : vector<2x16xf32>, vector<16x32xf32>, vector<2x32xf32> -> vector<2x32xf32>
    %c0_35 = arith.constant 0 : index
    %c0_36 = arith.constant 0 : index
    %101 = vector.load %arg7[%c0_35, %c0_36] : memref<512x256xf32, #tpu.memory_space<vmem>>, vector<32x256xf32>
    %cst_37 = arith.constant dense<0.000000e+00> : vector<2x256xf32>
    %102 = tpu.matmul %100, %101, %cst_37 {dimension_numbers = #tpu.dot_dimension_numbers<[1], [0], [0], [1], [0, 0, 1, 1], [], []>} : vector<2x32xf32>, vector<32x256xf32>, vector<2x256xf32> -> vector<2x256xf32>
    %103 = arith.addf %38, %102 : vector<2x256xf32>
    %c32 = arith.constant 32 : index
    %c0_38 = arith.constant 0 : index
    %104 = vector.load %arg10[%c32, %c0_38] : memref<256x128xf32, #tpu.memory_space<vmem>>, vector<16x128xf32>
    %cst_39 = arith.constant dense<0.000000e+00> : vector<16x128xf32>
    %105 = tpu.matmul %78, %22, %cst_39 {dimension_numbers = #tpu.dot_dimension_numbers<[1], [0], [0], [1], [0, 0, 1, 1], [], []>} : vector<16x32xf32>, vector<32x128xf32>, vector<16x128xf32> -> vector<16x128xf32>
    %106 = arith.addf %104, %105 : vector<16x128xf32>
    %107 = arith.mulf %106, %8 : vector<16x128xf32>
    %108 = arith.negf %107 : vector<16x128xf32>
    %109 = math.exp %108 : vector<16x128xf32>
    %cst_40 = arith.constant 1.000000e+00 : f32
    %110 = vector.broadcast %cst_40 : f32 to vector<16x128xf32>
    %111 = arith.addf %110, %109 : vector<16x128xf32>
    %112 = arith.divf %110, %111 : vector<16x128xf32>
    %113 = arith.mulf %112, %8 : vector<16x128xf32>
    %114 = arith.addf %113, %11 : vector<16x128xf32>
    %115 = vector.extract_strided_slice %114 {offsets = [0, 0], sizes = [16, 32], strides = [1, 1]} : vector<16x128xf32> to vector<16x32xf32>
    %116 = vector.extract_strided_slice %114 {offsets = [0, 32], sizes = [16, 32], strides = [1, 1]} : vector<16x128xf32> to vector<16x32xf32>
    %117 = vector.extract_strided_slice %114 {offsets = [0, 64], sizes = [16, 32], strides = [1, 1]} : vector<16x128xf32> to vector<16x32xf32>
    %118 = vector.extract_strided_slice %114 {offsets = [0, 96], sizes = [16, 32], strides = [1, 1]} : vector<16x128xf32> to vector<16x32xf32>
    %119 = arith.mulf %116, %76 : vector<16x32xf32>
    %120 = arith.mulf %115, %117 : vector<16x32xf32>
    %121 = arith.addf %119, %120 : vector<16x32xf32>
    %122 = math.tanh %121 : vector<16x32xf32>
    %123 = arith.mulf %118, %122 : vector<16x32xf32>
    %cst_41 = arith.constant dense<0.000000e+00> : vector<16x128xf32>
    %124 = tpu.matmul %78, %24, %cst_41 {dimension_numbers = #tpu.dot_dimension_numbers<[1], [0], [0], [1], [0, 0, 1, 1], [], []>} : vector<16x32xf32>, vector<32x128xf32>, vector<16x128xf32> -> vector<16x128xf32>
    %125 = arith.addf %124, %28 : vector<16x128xf32>
    %cst_42 = arith.constant dense<0.000000e+00> : vector<16x128xf32>
    %126 = tpu.matmul %99, %25, %cst_42 {dimension_numbers = #tpu.dot_dimension_numbers<[1], [0], [0], [1], [0, 0, 1, 1], [], []>} : vector<16x32xf32>, vector<32x128xf32>, vector<16x128xf32> -> vector<16x128xf32>
    %127 = arith.addf %125, %126 : vector<16x128xf32>
    %128 = arith.mulf %127, %8 : vector<16x128xf32>
    %129 = arith.negf %128 : vector<16x128xf32>
    %130 = math.exp %129 : vector<16x128xf32>
    %cst_43 = arith.constant 1.000000e+00 : f32
    %131 = vector.broadcast %cst_43 : f32 to vector<16x128xf32>
    %132 = arith.addf %131, %130 : vector<16x128xf32>
    %133 = arith.divf %131, %132 : vector<16x128xf32>
    %134 = arith.mulf %133, %8 : vector<16x128xf32>
    %135 = arith.addf %134, %11 : vector<16x128xf32>
    %136 = vector.extract_strided_slice %135 {offsets = [0, 0], sizes = [16, 32], strides = [1, 1]} : vector<16x128xf32> to vector<16x32xf32>
    %137 = vector.extract_strided_slice %135 {offsets = [0, 32], sizes = [16, 32], strides = [1, 1]} : vector<16x128xf32> to vector<16x32xf32>
    %138 = vector.extract_strided_slice %135 {offsets = [0, 64], sizes = [16, 32], strides = [1, 1]} : vector<16x128xf32> to vector<16x32xf32>
    %139 = vector.extract_strided_slice %135 {offsets = [0, 96], sizes = [16, 32], strides = [1, 1]} : vector<16x128xf32> to vector<16x32xf32>
    %140 = arith.mulf %137, %97 : vector<16x32xf32>
    %141 = arith.mulf %136, %138 : vector<16x32xf32>
    %142 = arith.addf %140, %141 : vector<16x32xf32>
    %143 = math.tanh %142 : vector<16x32xf32>
    %144 = arith.mulf %139, %143 : vector<16x32xf32>
    %cst_44 = arith.constant dense<0.000000e+00> : vector<2x32xf32>
    %145 = tpu.matmul %20, %144, %cst_44 {dimension_numbers = #tpu.dot_dimension_numbers<[1], [0], [0], [1], [0, 0, 1, 1], [], []>} : vector<2x16xf32>, vector<16x32xf32>, vector<2x32xf32> -> vector<2x32xf32>
    %c32_45 = arith.constant 32 : index
    %c0_46 = arith.constant 0 : index
    %146 = vector.load %arg7[%c32_45, %c0_46] : memref<512x256xf32, #tpu.memory_space<vmem>>, vector<32x256xf32>
    %cst_47 = arith.constant dense<0.000000e+00> : vector<2x256xf32>
    %147 = tpu.matmul %145, %146, %cst_47 {dimension_numbers = #tpu.dot_dimension_numbers<[1], [0], [0], [1], [0, 0, 1, 1], [], []>} : vector<2x32xf32>, vector<32x256xf32>, vector<2x256xf32> -> vector<2x256xf32>
    %148 = arith.addf %103, %147 : vector<2x256xf32>
    %c48 = arith.constant 48 : index
    %c0_48 = arith.constant 0 : index
    %149 = vector.load %arg10[%c48, %c0_48] : memref<256x128xf32, #tpu.memory_space<vmem>>, vector<16x128xf32>
    %cst_49 = arith.constant dense<0.000000e+00> : vector<16x128xf32>
    %150 = tpu.matmul %123, %22, %cst_49 {dimension_numbers = #tpu.dot_dimension_numbers<[1], [0], [0], [1], [0, 0, 1, 1], [], []>} : vector<16x32xf32>, vector<32x128xf32>, vector<16x128xf32> -> vector<16x128xf32>
    %151 = arith.addf %149, %150 : vector<16x128xf32>
    %152 = arith.mulf %151, %8 : vector<16x128xf32>
    %153 = arith.negf %152 : vector<16x128xf32>
    %154 = math.exp %153 : vector<16x128xf32>
    %cst_50 = arith.constant 1.000000e+00 : f32
    %155 = vector.broadcast %cst_50 : f32 to vector<16x128xf32>
    %156 = arith.addf %155, %154 : vector<16x128xf32>
    %157 = arith.divf %155, %156 : vector<16x128xf32>
    %158 = arith.mulf %157, %8 : vector<16x128xf32>
    %159 = arith.addf %158, %11 : vector<16x128xf32>
    %160 = vector.extract_strided_slice %159 {offsets = [0, 0], sizes = [16, 32], strides = [1, 1]} : vector<16x128xf32> to vector<16x32xf32>
    %161 = vector.extract_strided_slice %159 {offsets = [0, 32], sizes = [16, 32], strides = [1, 1]} : vector<16x128xf32> to vector<16x32xf32>
    %162 = vector.extract_strided_slice %159 {offsets = [0, 64], sizes = [16, 32], strides = [1, 1]} : vector<16x128xf32> to vector<16x32xf32>
    %163 = vector.extract_strided_slice %159 {offsets = [0, 96], sizes = [16, 32], strides = [1, 1]} : vector<16x128xf32> to vector<16x32xf32>
    %164 = arith.mulf %161, %121 : vector<16x32xf32>
    %165 = arith.mulf %160, %162 : vector<16x32xf32>
    %166 = arith.addf %164, %165 : vector<16x32xf32>
    %167 = math.tanh %166 : vector<16x32xf32>
    %168 = arith.mulf %163, %167 : vector<16x32xf32>
    %cst_51 = arith.constant dense<0.000000e+00> : vector<16x128xf32>
    %169 = tpu.matmul %123, %24, %cst_51 {dimension_numbers = #tpu.dot_dimension_numbers<[1], [0], [0], [1], [0, 0, 1, 1], [], []>} : vector<16x32xf32>, vector<32x128xf32>, vector<16x128xf32> -> vector<16x128xf32>
    %170 = arith.addf %169, %28 : vector<16x128xf32>
    %cst_52 = arith.constant dense<0.000000e+00> : vector<16x128xf32>
    %171 = tpu.matmul %144, %25, %cst_52 {dimension_numbers = #tpu.dot_dimension_numbers<[1], [0], [0], [1], [0, 0, 1, 1], [], []>} : vector<16x32xf32>, vector<32x128xf32>, vector<16x128xf32> -> vector<16x128xf32>
    %172 = arith.addf %170, %171 : vector<16x128xf32>
    %173 = arith.mulf %172, %8 : vector<16x128xf32>
    %174 = arith.negf %173 : vector<16x128xf32>
    %175 = math.exp %174 : vector<16x128xf32>
    %cst_53 = arith.constant 1.000000e+00 : f32
    %176 = vector.broadcast %cst_53 : f32 to vector<16x128xf32>
    %177 = arith.addf %176, %175 : vector<16x128xf32>
    %178 = arith.divf %176, %177 : vector<16x128xf32>
    %179 = arith.mulf %178, %8 : vector<16x128xf32>
    %180 = arith.addf %179, %11 : vector<16x128xf32>
    %181 = vector.extract_strided_slice %180 {offsets = [0, 0], sizes = [16, 32], strides = [1, 1]} : vector<16x128xf32> to vector<16x32xf32>
    %182 = vector.extract_strided_slice %180 {offsets = [0, 32], sizes = [16, 32], strides = [1, 1]} : vector<16x128xf32> to vector<16x32xf32>
    %183 = vector.extract_strided_slice %180 {offsets = [0, 64], sizes = [16, 32], strides = [1, 1]} : vector<16x128xf32> to vector<16x32xf32>
    %184 = vector.extract_strided_slice %180 {offsets = [0, 96], sizes = [16, 32], strides = [1, 1]} : vector<16x128xf32> to vector<16x32xf32>
    %185 = arith.mulf %182, %142 : vector<16x32xf32>
    %186 = arith.mulf %181, %183 : vector<16x32xf32>
    %187 = arith.addf %185, %186 : vector<16x32xf32>
    %188 = math.tanh %187 : vector<16x32xf32>
    %189 = arith.mulf %184, %188 : vector<16x32xf32>
    %cst_54 = arith.constant dense<0.000000e+00> : vector<2x32xf32>
    %190 = tpu.matmul %20, %189, %cst_54 {dimension_numbers = #tpu.dot_dimension_numbers<[1], [0], [0], [1], [0, 0, 1, 1], [], []>} : vector<2x16xf32>, vector<16x32xf32>, vector<2x32xf32> -> vector<2x32xf32>
    %c64 = arith.constant 64 : index
    %c0_55 = arith.constant 0 : index
    %191 = vector.load %arg7[%c64, %c0_55] : memref<512x256xf32, #tpu.memory_space<vmem>>, vector<32x256xf32>
    %cst_56 = arith.constant dense<0.000000e+00> : vector<2x256xf32>
    %192 = tpu.matmul %190, %191, %cst_56 {dimension_numbers = #tpu.dot_dimension_numbers<[1], [0], [0], [1], [0, 0, 1, 1], [], []>} : vector<2x32xf32>, vector<32x256xf32>, vector<2x256xf32> -> vector<2x256xf32>
    %193 = arith.addf %148, %192 : vector<2x256xf32>
    %c64_57 = arith.constant 64 : index
    %c0_58 = arith.constant 0 : index
    %194 = vector.load %arg10[%c64_57, %c0_58] : memref<256x128xf32, #tpu.memory_space<vmem>>, vector<16x128xf32>
    %cst_59 = arith.constant dense<0.000000e+00> : vector<16x128xf32>
    %195 = tpu.matmul %168, %22, %cst_59 {dimension_numbers = #tpu.dot_dimension_numbers<[1], [0], [0], [1], [0, 0, 1, 1], [], []>} : vector<16x32xf32>, vector<32x128xf32>, vector<16x128xf32> -> vector<16x128xf32>
    %196 = arith.addf %194, %195 : vector<16x128xf32>
    %197 = arith.mulf %196, %8 : vector<16x128xf32>
    %198 = arith.negf %197 : vector<16x128xf32>
    %199 = math.exp %198 : vector<16x128xf32>
    %cst_60 = arith.constant 1.000000e+00 : f32
    %200 = vector.broadcast %cst_60 : f32 to vector<16x128xf32>
    %201 = arith.addf %200, %199 : vector<16x128xf32>
    %202 = arith.divf %200, %201 : vector<16x128xf32>
    %203 = arith.mulf %202, %8 : vector<16x128xf32>
    %204 = arith.addf %203, %11 : vector<16x128xf32>
    %205 = vector.extract_strided_slice %204 {offsets = [0, 0], sizes = [16, 32], strides = [1, 1]} : vector<16x128xf32> to vector<16x32xf32>
    %206 = vector.extract_strided_slice %204 {offsets = [0, 32], sizes = [16, 32], strides = [1, 1]} : vector<16x128xf32> to vector<16x32xf32>
    %207 = vector.extract_strided_slice %204 {offsets = [0, 64], sizes = [16, 32], strides = [1, 1]} : vector<16x128xf32> to vector<16x32xf32>
    %208 = vector.extract_strided_slice %204 {offsets = [0, 96], sizes = [16, 32], strides = [1, 1]} : vector<16x128xf32> to vector<16x32xf32>
    %209 = arith.mulf %206, %166 : vector<16x32xf32>
    %210 = arith.mulf %205, %207 : vector<16x32xf32>
    %211 = arith.addf %209, %210 : vector<16x32xf32>
    %212 = math.tanh %211 : vector<16x32xf32>
    %213 = arith.mulf %208, %212 : vector<16x32xf32>
    %cst_61 = arith.constant dense<0.000000e+00> : vector<16x128xf32>
    %214 = tpu.matmul %168, %24, %cst_61 {dimension_numbers = #tpu.dot_dimension_numbers<[1], [0], [0], [1], [0, 0, 1, 1], [], []>} : vector<16x32xf32>, vector<32x128xf32>, vector<16x128xf32> -> vector<16x128xf32>
    %215 = arith.addf %214, %28 : vector<16x128xf32>
    %cst_62 = arith.constant dense<0.000000e+00> : vector<16x128xf32>
    %216 = tpu.matmul %189, %25, %cst_62 {dimension_numbers = #tpu.dot_dimension_numbers<[1], [0], [0], [1], [0, 0, 1, 1], [], []>} : vector<16x32xf32>, vector<32x128xf32>, vector<16x128xf32> -> vector<16x128xf32>
    %217 = arith.addf %215, %216 : vector<16x128xf32>
    %218 = arith.mulf %217, %8 : vector<16x128xf32>
    %219 = arith.negf %218 : vector<16x128xf32>
    %220 = math.exp %219 : vector<16x128xf32>
    %cst_63 = arith.constant 1.000000e+00 : f32
    %221 = vector.broadcast %cst_63 : f32 to vector<16x128xf32>
    %222 = arith.addf %221, %220 : vector<16x128xf32>
    %223 = arith.divf %221, %222 : vector<16x128xf32>
    %224 = arith.mulf %223, %8 : vector<16x128xf32>
    %225 = arith.addf %224, %11 : vector<16x128xf32>
    %226 = vector.extract_strided_slice %225 {offsets = [0, 0], sizes = [16, 32], strides = [1, 1]} : vector<16x128xf32> to vector<16x32xf32>
    %227 = vector.extract_strided_slice %225 {offsets = [0, 32], sizes = [16, 32], strides = [1, 1]} : vector<16x128xf32> to vector<16x32xf32>
    %228 = vector.extract_strided_slice %225 {offsets = [0, 64], sizes = [16, 32], strides = [1, 1]} : vector<16x128xf32> to vector<16x32xf32>
    %229 = vector.extract_strided_slice %225 {offsets = [0, 96], sizes = [16, 32], strides = [1, 1]} : vector<16x128xf32> to vector<16x32xf32>
    %230 = arith.mulf %227, %187 : vector<16x32xf32>
    %231 = arith.mulf %226, %228 : vector<16x32xf32>
    %232 = arith.addf %230, %231 : vector<16x32xf32>
    %233 = math.tanh %232 : vector<16x32xf32>
    %234 = arith.mulf %229, %233 : vector<16x32xf32>
    %cst_64 = arith.constant dense<0.000000e+00> : vector<2x32xf32>
    %235 = tpu.matmul %20, %234, %cst_64 {dimension_numbers = #tpu.dot_dimension_numbers<[1], [0], [0], [1], [0, 0, 1, 1], [], []>} : vector<2x16xf32>, vector<16x32xf32>, vector<2x32xf32> -> vector<2x32xf32>
    %c96 = arith.constant 96 : index
    %c0_65 = arith.constant 0 : index
    %236 = vector.load %arg7[%c96, %c0_65] : memref<512x256xf32, #tpu.memory_space<vmem>>, vector<32x256xf32>
    %cst_66 = arith.constant dense<0.000000e+00> : vector<2x256xf32>
    %237 = tpu.matmul %235, %236, %cst_66 {dimension_numbers = #tpu.dot_dimension_numbers<[1], [0], [0], [1], [0, 0, 1, 1], [], []>} : vector<2x32xf32>, vector<32x256xf32>, vector<2x256xf32> -> vector<2x256xf32>
    %238 = arith.addf %193, %237 : vector<2x256xf32>
    %c80 = arith.constant 80 : index
    %c0_67 = arith.constant 0 : index
    %239 = vector.load %arg10[%c80, %c0_67] : memref<256x128xf32, #tpu.memory_space<vmem>>, vector<16x128xf32>
    %cst_68 = arith.constant dense<0.000000e+00> : vector<16x128xf32>
    %240 = tpu.matmul %213, %22, %cst_68 {dimension_numbers = #tpu.dot_dimension_numbers<[1], [0], [0], [1], [0, 0, 1, 1], [], []>} : vector<16x32xf32>, vector<32x128xf32>, vector<16x128xf32> -> vector<16x128xf32>
    %241 = arith.addf %239, %240 : vector<16x128xf32>
    %242 = arith.mulf %241, %8 : vector<16x128xf32>
    %243 = arith.negf %242 : vector<16x128xf32>
    %244 = math.exp %243 : vector<16x128xf32>
    %cst_69 = arith.constant 1.000000e+00 : f32
    %245 = vector.broadcast %cst_69 : f32 to vector<16x128xf32>
    %246 = arith.addf %245, %244 : vector<16x128xf32>
    %247 = arith.divf %245, %246 : vector<16x128xf32>
    %248 = arith.mulf %247, %8 : vector<16x128xf32>
    %249 = arith.addf %248, %11 : vector<16x128xf32>
    %250 = vector.extract_strided_slice %249 {offsets = [0, 0], sizes = [16, 32], strides = [1, 1]} : vector<16x128xf32> to vector<16x32xf32>
    %251 = vector.extract_strided_slice %249 {offsets = [0, 32], sizes = [16, 32], strides = [1, 1]} : vector<16x128xf32> to vector<16x32xf32>
    %252 = vector.extract_strided_slice %249 {offsets = [0, 64], sizes = [16, 32], strides = [1, 1]} : vector<16x128xf32> to vector<16x32xf32>
    %253 = vector.extract_strided_slice %249 {offsets = [0, 96], sizes = [16, 32], strides = [1, 1]} : vector<16x128xf32> to vector<16x32xf32>
    %254 = arith.mulf %251, %211 : vector<16x32xf32>
    %255 = arith.mulf %250, %252 : vector<16x32xf32>
    %256 = arith.addf %254, %255 : vector<16x32xf32>
    %257 = math.tanh %256 : vector<16x32xf32>
    %258 = arith.mulf %253, %257 : vector<16x32xf32>
    %cst_70 = arith.constant dense<0.000000e+00> : vector<16x128xf32>
    %259 = tpu.matmul %213, %24, %cst_70 {dimension_numbers = #tpu.dot_dimension_numbers<[1], [0], [0], [1], [0, 0, 1, 1], [], []>} : vector<16x32xf32>, vector<32x128xf32>, vector<16x128xf32> -> vector<16x128xf32>
    %260 = arith.addf %259, %28 : vector<16x128xf32>
    %cst_71 = arith.constant dense<0.000000e+00> : vector<16x128xf32>
    %261 = tpu.matmul %234, %25, %cst_71 {dimension_numbers = #tpu.dot_dimension_numbers<[1], [0], [0], [1], [0, 0, 1, 1], [], []>} : vector<16x32xf32>, vector<32x128xf32>, vector<16x128xf32> -> vector<16x128xf32>
    %262 = arith.addf %260, %261 : vector<16x128xf32>
    %263 = arith.mulf %262, %8 : vector<16x128xf32>
    %264 = arith.negf %263 : vector<16x128xf32>
    %265 = math.exp %264 : vector<16x128xf32>
    %cst_72 = arith.constant 1.000000e+00 : f32
    %266 = vector.broadcast %cst_72 : f32 to vector<16x128xf32>
    %267 = arith.addf %266, %265 : vector<16x128xf32>
    %268 = arith.divf %266, %267 : vector<16x128xf32>
    %269 = arith.mulf %268, %8 : vector<16x128xf32>
    %270 = arith.addf %269, %11 : vector<16x128xf32>
    %271 = vector.extract_strided_slice %270 {offsets = [0, 0], sizes = [16, 32], strides = [1, 1]} : vector<16x128xf32> to vector<16x32xf32>
    %272 = vector.extract_strided_slice %270 {offsets = [0, 32], sizes = [16, 32], strides = [1, 1]} : vector<16x128xf32> to vector<16x32xf32>
    %273 = vector.extract_strided_slice %270 {offsets = [0, 64], sizes = [16, 32], strides = [1, 1]} : vector<16x128xf32> to vector<16x32xf32>
    %274 = vector.extract_strided_slice %270 {offsets = [0, 96], sizes = [16, 32], strides = [1, 1]} : vector<16x128xf32> to vector<16x32xf32>
    %275 = arith.mulf %272, %232 : vector<16x32xf32>
    %276 = arith.mulf %271, %273 : vector<16x32xf32>
    %277 = arith.addf %275, %276 : vector<16x32xf32>
    %278 = math.tanh %277 : vector<16x32xf32>
    %279 = arith.mulf %274, %278 : vector<16x32xf32>
    %cst_73 = arith.constant dense<0.000000e+00> : vector<2x32xf32>
    %280 = tpu.matmul %20, %279, %cst_73 {dimension_numbers = #tpu.dot_dimension_numbers<[1], [0], [0], [1], [0, 0, 1, 1], [], []>} : vector<2x16xf32>, vector<16x32xf32>, vector<2x32xf32> -> vector<2x32xf32>
    %c128 = arith.constant 128 : index
    %c0_74 = arith.constant 0 : index
    %281 = vector.load %arg7[%c128, %c0_74] : memref<512x256xf32, #tpu.memory_space<vmem>>, vector<32x256xf32>
    %cst_75 = arith.constant dense<0.000000e+00> : vector<2x256xf32>
    %282 = tpu.matmul %280, %281, %cst_75 {dimension_numbers = #tpu.dot_dimension_numbers<[1], [0], [0], [1], [0, 0, 1, 1], [], []>} : vector<2x32xf32>, vector<32x256xf32>, vector<2x256xf32> -> vector<2x256xf32>
    %283 = arith.addf %238, %282 : vector<2x256xf32>
    %c96_76 = arith.constant 96 : index
    %c0_77 = arith.constant 0 : index
    %284 = vector.load %arg10[%c96_76, %c0_77] : memref<256x128xf32, #tpu.memory_space<vmem>>, vector<16x128xf32>
    %cst_78 = arith.constant dense<0.000000e+00> : vector<16x128xf32>
    %285 = tpu.matmul %258, %22, %cst_78 {dimension_numbers = #tpu.dot_dimension_numbers<[1], [0], [0], [1], [0, 0, 1, 1], [], []>} : vector<16x32xf32>, vector<32x128xf32>, vector<16x128xf32> -> vector<16x128xf32>
    %286 = arith.addf %284, %285 : vector<16x128xf32>
    %287 = arith.mulf %286, %8 : vector<16x128xf32>
    %288 = arith.negf %287 : vector<16x128xf32>
    %289 = math.exp %288 : vector<16x128xf32>
    %cst_79 = arith.constant 1.000000e+00 : f32
    %290 = vector.broadcast %cst_79 : f32 to vector<16x128xf32>
    %291 = arith.addf %290, %289 : vector<16x128xf32>
    %292 = arith.divf %290, %291 : vector<16x128xf32>
    %293 = arith.mulf %292, %8 : vector<16x128xf32>
    %294 = arith.addf %293, %11 : vector<16x128xf32>
    %295 = vector.extract_strided_slice %294 {offsets = [0, 0], sizes = [16, 32], strides = [1, 1]} : vector<16x128xf32> to vector<16x32xf32>
    %296 = vector.extract_strided_slice %294 {offsets = [0, 32], sizes = [16, 32], strides = [1, 1]} : vector<16x128xf32> to vector<16x32xf32>
    %297 = vector.extract_strided_slice %294 {offsets = [0, 64], sizes = [16, 32], strides = [1, 1]} : vector<16x128xf32> to vector<16x32xf32>
    %298 = vector.extract_strided_slice %294 {offsets = [0, 96], sizes = [16, 32], strides = [1, 1]} : vector<16x128xf32> to vector<16x32xf32>
    %299 = arith.mulf %296, %256 : vector<16x32xf32>
    %300 = arith.mulf %295, %297 : vector<16x32xf32>
    %301 = arith.addf %299, %300 : vector<16x32xf32>
    %302 = math.tanh %301 : vector<16x32xf32>
    %303 = arith.mulf %298, %302 : vector<16x32xf32>
    %cst_80 = arith.constant dense<0.000000e+00> : vector<16x128xf32>
    %304 = tpu.matmul %258, %24, %cst_80 {dimension_numbers = #tpu.dot_dimension_numbers<[1], [0], [0], [1], [0, 0, 1, 1], [], []>} : vector<16x32xf32>, vector<32x128xf32>, vector<16x128xf32> -> vector<16x128xf32>
    %305 = arith.addf %304, %28 : vector<16x128xf32>
    %cst_81 = arith.constant dense<0.000000e+00> : vector<16x128xf32>
    %306 = tpu.matmul %279, %25, %cst_81 {dimension_numbers = #tpu.dot_dimension_numbers<[1], [0], [0], [1], [0, 0, 1, 1], [], []>} : vector<16x32xf32>, vector<32x128xf32>, vector<16x128xf32> -> vector<16x128xf32>
    %307 = arith.addf %305, %306 : vector<16x128xf32>
    %308 = arith.mulf %307, %8 : vector<16x128xf32>
    %309 = arith.negf %308 : vector<16x128xf32>
    %310 = math.exp %309 : vector<16x128xf32>
    %cst_82 = arith.constant 1.000000e+00 : f32
    %311 = vector.broadcast %cst_82 : f32 to vector<16x128xf32>
    %312 = arith.addf %311, %310 : vector<16x128xf32>
    %313 = arith.divf %311, %312 : vector<16x128xf32>
    %314 = arith.mulf %313, %8 : vector<16x128xf32>
    %315 = arith.addf %314, %11 : vector<16x128xf32>
    %316 = vector.extract_strided_slice %315 {offsets = [0, 0], sizes = [16, 32], strides = [1, 1]} : vector<16x128xf32> to vector<16x32xf32>
    %317 = vector.extract_strided_slice %315 {offsets = [0, 32], sizes = [16, 32], strides = [1, 1]} : vector<16x128xf32> to vector<16x32xf32>
    %318 = vector.extract_strided_slice %315 {offsets = [0, 64], sizes = [16, 32], strides = [1, 1]} : vector<16x128xf32> to vector<16x32xf32>
    %319 = vector.extract_strided_slice %315 {offsets = [0, 96], sizes = [16, 32], strides = [1, 1]} : vector<16x128xf32> to vector<16x32xf32>
    %320 = arith.mulf %317, %277 : vector<16x32xf32>
    %321 = arith.mulf %316, %318 : vector<16x32xf32>
    %322 = arith.addf %320, %321 : vector<16x32xf32>
    %323 = math.tanh %322 : vector<16x32xf32>
    %324 = arith.mulf %319, %323 : vector<16x32xf32>
    %cst_83 = arith.constant dense<0.000000e+00> : vector<2x32xf32>
    %325 = tpu.matmul %20, %324, %cst_83 {dimension_numbers = #tpu.dot_dimension_numbers<[1], [0], [0], [1], [0, 0, 1, 1], [], []>} : vector<2x16xf32>, vector<16x32xf32>, vector<2x32xf32> -> vector<2x32xf32>
    %c160 = arith.constant 160 : index
    %c0_84 = arith.constant 0 : index
    %326 = vector.load %arg7[%c160, %c0_84] : memref<512x256xf32, #tpu.memory_space<vmem>>, vector<32x256xf32>
    %cst_85 = arith.constant dense<0.000000e+00> : vector<2x256xf32>
    %327 = tpu.matmul %325, %326, %cst_85 {dimension_numbers = #tpu.dot_dimension_numbers<[1], [0], [0], [1], [0, 0, 1, 1], [], []>} : vector<2x32xf32>, vector<32x256xf32>, vector<2x256xf32> -> vector<2x256xf32>
    %328 = arith.addf %283, %327 : vector<2x256xf32>
    %c112 = arith.constant 112 : index
    %c0_86 = arith.constant 0 : index
    %329 = vector.load %arg10[%c112, %c0_86] : memref<256x128xf32, #tpu.memory_space<vmem>>, vector<16x128xf32>
    %cst_87 = arith.constant dense<0.000000e+00> : vector<16x128xf32>
    %330 = tpu.matmul %303, %22, %cst_87 {dimension_numbers = #tpu.dot_dimension_numbers<[1], [0], [0], [1], [0, 0, 1, 1], [], []>} : vector<16x32xf32>, vector<32x128xf32>, vector<16x128xf32> -> vector<16x128xf32>
    %331 = arith.addf %329, %330 : vector<16x128xf32>
    %332 = arith.mulf %331, %8 : vector<16x128xf32>
    %333 = arith.negf %332 : vector<16x128xf32>
    %334 = math.exp %333 : vector<16x128xf32>
    %cst_88 = arith.constant 1.000000e+00 : f32
    %335 = vector.broadcast %cst_88 : f32 to vector<16x128xf32>
    %336 = arith.addf %335, %334 : vector<16x128xf32>
    %337 = arith.divf %335, %336 : vector<16x128xf32>
    %338 = arith.mulf %337, %8 : vector<16x128xf32>
    %339 = arith.addf %338, %11 : vector<16x128xf32>
    %340 = vector.extract_strided_slice %339 {offsets = [0, 0], sizes = [16, 32], strides = [1, 1]} : vector<16x128xf32> to vector<16x32xf32>
    %341 = vector.extract_strided_slice %339 {offsets = [0, 32], sizes = [16, 32], strides = [1, 1]} : vector<16x128xf32> to vector<16x32xf32>
    %342 = vector.extract_strided_slice %339 {offsets = [0, 64], sizes = [16, 32], strides = [1, 1]} : vector<16x128xf32> to vector<16x32xf32>
    %343 = vector.extract_strided_slice %339 {offsets = [0, 96], sizes = [16, 32], strides = [1, 1]} : vector<16x128xf32> to vector<16x32xf32>
    %344 = arith.mulf %341, %301 : vector<16x32xf32>
    %345 = arith.mulf %340, %342 : vector<16x32xf32>
    %346 = arith.addf %344, %345 : vector<16x32xf32>
    %347 = math.tanh %346 : vector<16x32xf32>
    %348 = arith.mulf %343, %347 : vector<16x32xf32>
    %cst_89 = arith.constant dense<0.000000e+00> : vector<16x128xf32>
    %349 = tpu.matmul %303, %24, %cst_89 {dimension_numbers = #tpu.dot_dimension_numbers<[1], [0], [0], [1], [0, 0, 1, 1], [], []>} : vector<16x32xf32>, vector<32x128xf32>, vector<16x128xf32> -> vector<16x128xf32>
    %350 = arith.addf %349, %28 : vector<16x128xf32>
    %cst_90 = arith.constant dense<0.000000e+00> : vector<16x128xf32>
    %351 = tpu.matmul %324, %25, %cst_90 {dimension_numbers = #tpu.dot_dimension_numbers<[1], [0], [0], [1], [0, 0, 1, 1], [], []>} : vector<16x32xf32>, vector<32x128xf32>, vector<16x128xf32> -> vector<16x128xf32>
    %352 = arith.addf %350, %351 : vector<16x128xf32>
    %353 = arith.mulf %352, %8 : vector<16x128xf32>
    %354 = arith.negf %353 : vector<16x128xf32>
    %355 = math.exp %354 : vector<16x128xf32>
    %cst_91 = arith.constant 1.000000e+00 : f32
    %356 = vector.broadcast %cst_91 : f32 to vector<16x128xf32>
    %357 = arith.addf %356, %355 : vector<16x128xf32>
    %358 = arith.divf %356, %357 : vector<16x128xf32>
    %359 = arith.mulf %358, %8 : vector<16x128xf32>
    %360 = arith.addf %359, %11 : vector<16x128xf32>
    %361 = vector.extract_strided_slice %360 {offsets = [0, 0], sizes = [16, 32], strides = [1, 1]} : vector<16x128xf32> to vector<16x32xf32>
    %362 = vector.extract_strided_slice %360 {offsets = [0, 32], sizes = [16, 32], strides = [1, 1]} : vector<16x128xf32> to vector<16x32xf32>
    %363 = vector.extract_strided_slice %360 {offsets = [0, 64], sizes = [16, 32], strides = [1, 1]} : vector<16x128xf32> to vector<16x32xf32>
    %364 = vector.extract_strided_slice %360 {offsets = [0, 96], sizes = [16, 32], strides = [1, 1]} : vector<16x128xf32> to vector<16x32xf32>
    %365 = arith.mulf %362, %322 : vector<16x32xf32>
    %366 = arith.mulf %361, %363 : vector<16x32xf32>
    %367 = arith.addf %365, %366 : vector<16x32xf32>
    %368 = math.tanh %367 : vector<16x32xf32>
    %369 = arith.mulf %364, %368 : vector<16x32xf32>
    %cst_92 = arith.constant dense<0.000000e+00> : vector<2x32xf32>
    %370 = tpu.matmul %20, %369, %cst_92 {dimension_numbers = #tpu.dot_dimension_numbers<[1], [0], [0], [1], [0, 0, 1, 1], [], []>} : vector<2x16xf32>, vector<16x32xf32>, vector<2x32xf32> -> vector<2x32xf32>
    %c192 = arith.constant 192 : index
    %c0_93 = arith.constant 0 : index
    %371 = vector.load %arg7[%c192, %c0_93] : memref<512x256xf32, #tpu.memory_space<vmem>>, vector<32x256xf32>
    %cst_94 = arith.constant dense<0.000000e+00> : vector<2x256xf32>
    %372 = tpu.matmul %370, %371, %cst_94 {dimension_numbers = #tpu.dot_dimension_numbers<[1], [0], [0], [1], [0, 0, 1, 1], [], []>} : vector<2x32xf32>, vector<32x256xf32>, vector<2x256xf32> -> vector<2x256xf32>
    %373 = arith.addf %328, %372 : vector<2x256xf32>
    %c128_95 = arith.constant 128 : index
    %c0_96 = arith.constant 0 : index
    %374 = vector.load %arg10[%c128_95, %c0_96] : memref<256x128xf32, #tpu.memory_space<vmem>>, vector<16x128xf32>
    %cst_97 = arith.constant dense<0.000000e+00> : vector<16x128xf32>
    %375 = tpu.matmul %348, %22, %cst_97 {dimension_numbers = #tpu.dot_dimension_numbers<[1], [0], [0], [1], [0, 0, 1, 1], [], []>} : vector<16x32xf32>, vector<32x128xf32>, vector<16x128xf32> -> vector<16x128xf32>
    %376 = arith.addf %374, %375 : vector<16x128xf32>
    %377 = arith.mulf %376, %8 : vector<16x128xf32>
    %378 = arith.negf %377 : vector<16x128xf32>
    %379 = math.exp %378 : vector<16x128xf32>
    %cst_98 = arith.constant 1.000000e+00 : f32
    %380 = vector.broadcast %cst_98 : f32 to vector<16x128xf32>
    %381 = arith.addf %380, %379 : vector<16x128xf32>
    %382 = arith.divf %380, %381 : vector<16x128xf32>
    %383 = arith.mulf %382, %8 : vector<16x128xf32>
    %384 = arith.addf %383, %11 : vector<16x128xf32>
    %385 = vector.extract_strided_slice %384 {offsets = [0, 0], sizes = [16, 32], strides = [1, 1]} : vector<16x128xf32> to vector<16x32xf32>
    %386 = vector.extract_strided_slice %384 {offsets = [0, 32], sizes = [16, 32], strides = [1, 1]} : vector<16x128xf32> to vector<16x32xf32>
    %387 = vector.extract_strided_slice %384 {offsets = [0, 64], sizes = [16, 32], strides = [1, 1]} : vector<16x128xf32> to vector<16x32xf32>
    %388 = vector.extract_strided_slice %384 {offsets = [0, 96], sizes = [16, 32], strides = [1, 1]} : vector<16x128xf32> to vector<16x32xf32>
    %389 = arith.mulf %386, %346 : vector<16x32xf32>
    %390 = arith.mulf %385, %387 : vector<16x32xf32>
    %391 = arith.addf %389, %390 : vector<16x32xf32>
    %392 = math.tanh %391 : vector<16x32xf32>
    %393 = arith.mulf %388, %392 : vector<16x32xf32>
    %cst_99 = arith.constant dense<0.000000e+00> : vector<16x128xf32>
    %394 = tpu.matmul %348, %24, %cst_99 {dimension_numbers = #tpu.dot_dimension_numbers<[1], [0], [0], [1], [0, 0, 1, 1], [], []>} : vector<16x32xf32>, vector<32x128xf32>, vector<16x128xf32> -> vector<16x128xf32>
    %395 = arith.addf %394, %28 : vector<16x128xf32>
    %cst_100 = arith.constant dense<0.000000e+00> : vector<16x128xf32>
    %396 = tpu.matmul %369, %25, %cst_100 {dimension_numbers = #tpu.dot_dimension_numbers<[1], [0], [0], [1], [0, 0, 1, 1], [], []>} : vector<16x32xf32>, vector<32x128xf32>, vector<16x128xf32> -> vector<16x128xf32>
    %397 = arith.addf %395, %396 : vector<16x128xf32>
    %398 = arith.mulf %397, %8 : vector<16x128xf32>
    %399 = arith.negf %398 : vector<16x128xf32>
    %400 = math.exp %399 : vector<16x128xf32>
    %cst_101 = arith.constant 1.000000e+00 : f32
    %401 = vector.broadcast %cst_101 : f32 to vector<16x128xf32>
    %402 = arith.addf %401, %400 : vector<16x128xf32>
    %403 = arith.divf %401, %402 : vector<16x128xf32>
    %404 = arith.mulf %403, %8 : vector<16x128xf32>
    %405 = arith.addf %404, %11 : vector<16x128xf32>
    %406 = vector.extract_strided_slice %405 {offsets = [0, 0], sizes = [16, 32], strides = [1, 1]} : vector<16x128xf32> to vector<16x32xf32>
    %407 = vector.extract_strided_slice %405 {offsets = [0, 32], sizes = [16, 32], strides = [1, 1]} : vector<16x128xf32> to vector<16x32xf32>
    %408 = vector.extract_strided_slice %405 {offsets = [0, 64], sizes = [16, 32], strides = [1, 1]} : vector<16x128xf32> to vector<16x32xf32>
    %409 = vector.extract_strided_slice %405 {offsets = [0, 96], sizes = [16, 32], strides = [1, 1]} : vector<16x128xf32> to vector<16x32xf32>
    %410 = arith.mulf %407, %367 : vector<16x32xf32>
    %411 = arith.mulf %406, %408 : vector<16x32xf32>
    %412 = arith.addf %410, %411 : vector<16x32xf32>
    %413 = math.tanh %412 : vector<16x32xf32>
    %414 = arith.mulf %409, %413 : vector<16x32xf32>
    %cst_102 = arith.constant dense<0.000000e+00> : vector<2x32xf32>
    %415 = tpu.matmul %20, %414, %cst_102 {dimension_numbers = #tpu.dot_dimension_numbers<[1], [0], [0], [1], [0, 0, 1, 1], [], []>} : vector<2x16xf32>, vector<16x32xf32>, vector<2x32xf32> -> vector<2x32xf32>
    %c224 = arith.constant 224 : index
    %c0_103 = arith.constant 0 : index
    %416 = vector.load %arg7[%c224, %c0_103] : memref<512x256xf32, #tpu.memory_space<vmem>>, vector<32x256xf32>
    %cst_104 = arith.constant dense<0.000000e+00> : vector<2x256xf32>
    %417 = tpu.matmul %415, %416, %cst_104 {dimension_numbers = #tpu.dot_dimension_numbers<[1], [0], [0], [1], [0, 0, 1, 1], [], []>} : vector<2x32xf32>, vector<32x256xf32>, vector<2x256xf32> -> vector<2x256xf32>
    %418 = arith.addf %373, %417 : vector<2x256xf32>
    %c144 = arith.constant 144 : index
    %c0_105 = arith.constant 0 : index
    %419 = vector.load %arg10[%c144, %c0_105] : memref<256x128xf32, #tpu.memory_space<vmem>>, vector<16x128xf32>
    %cst_106 = arith.constant dense<0.000000e+00> : vector<16x128xf32>
    %420 = tpu.matmul %393, %22, %cst_106 {dimension_numbers = #tpu.dot_dimension_numbers<[1], [0], [0], [1], [0, 0, 1, 1], [], []>} : vector<16x32xf32>, vector<32x128xf32>, vector<16x128xf32> -> vector<16x128xf32>
    %421 = arith.addf %419, %420 : vector<16x128xf32>
    %422 = arith.mulf %421, %8 : vector<16x128xf32>
    %423 = arith.negf %422 : vector<16x128xf32>
    %424 = math.exp %423 : vector<16x128xf32>
    %cst_107 = arith.constant 1.000000e+00 : f32
    %425 = vector.broadcast %cst_107 : f32 to vector<16x128xf32>
    %426 = arith.addf %425, %424 : vector<16x128xf32>
    %427 = arith.divf %425, %426 : vector<16x128xf32>
    %428 = arith.mulf %427, %8 : vector<16x128xf32>
    %429 = arith.addf %428, %11 : vector<16x128xf32>
    %430 = vector.extract_strided_slice %429 {offsets = [0, 0], sizes = [16, 32], strides = [1, 1]} : vector<16x128xf32> to vector<16x32xf32>
    %431 = vector.extract_strided_slice %429 {offsets = [0, 32], sizes = [16, 32], strides = [1, 1]} : vector<16x128xf32> to vector<16x32xf32>
    %432 = vector.extract_strided_slice %429 {offsets = [0, 64], sizes = [16, 32], strides = [1, 1]} : vector<16x128xf32> to vector<16x32xf32>
    %433 = vector.extract_strided_slice %429 {offsets = [0, 96], sizes = [16, 32], strides = [1, 1]} : vector<16x128xf32> to vector<16x32xf32>
    %434 = arith.mulf %431, %391 : vector<16x32xf32>
    %435 = arith.mulf %430, %432 : vector<16x32xf32>
    %436 = arith.addf %434, %435 : vector<16x32xf32>
    %437 = math.tanh %436 : vector<16x32xf32>
    %438 = arith.mulf %433, %437 : vector<16x32xf32>
    %cst_108 = arith.constant dense<0.000000e+00> : vector<16x128xf32>
    %439 = tpu.matmul %393, %24, %cst_108 {dimension_numbers = #tpu.dot_dimension_numbers<[1], [0], [0], [1], [0, 0, 1, 1], [], []>} : vector<16x32xf32>, vector<32x128xf32>, vector<16x128xf32> -> vector<16x128xf32>
    %440 = arith.addf %439, %28 : vector<16x128xf32>
    %cst_109 = arith.constant dense<0.000000e+00> : vector<16x128xf32>
    %441 = tpu.matmul %414, %25, %cst_109 {dimension_numbers = #tpu.dot_dimension_numbers<[1], [0], [0], [1], [0, 0, 1, 1], [], []>} : vector<16x32xf32>, vector<32x128xf32>, vector<16x128xf32> -> vector<16x128xf32>
    %442 = arith.addf %440, %441 : vector<16x128xf32>
    %443 = arith.mulf %442, %8 : vector<16x128xf32>
    %444 = arith.negf %443 : vector<16x128xf32>
    %445 = math.exp %444 : vector<16x128xf32>
    %cst_110 = arith.constant 1.000000e+00 : f32
    %446 = vector.broadcast %cst_110 : f32 to vector<16x128xf32>
    %447 = arith.addf %446, %445 : vector<16x128xf32>
    %448 = arith.divf %446, %447 : vector<16x128xf32>
    %449 = arith.mulf %448, %8 : vector<16x128xf32>
    %450 = arith.addf %449, %11 : vector<16x128xf32>
    %451 = vector.extract_strided_slice %450 {offsets = [0, 0], sizes = [16, 32], strides = [1, 1]} : vector<16x128xf32> to vector<16x32xf32>
    %452 = vector.extract_strided_slice %450 {offsets = [0, 32], sizes = [16, 32], strides = [1, 1]} : vector<16x128xf32> to vector<16x32xf32>
    %453 = vector.extract_strided_slice %450 {offsets = [0, 64], sizes = [16, 32], strides = [1, 1]} : vector<16x128xf32> to vector<16x32xf32>
    %454 = vector.extract_strided_slice %450 {offsets = [0, 96], sizes = [16, 32], strides = [1, 1]} : vector<16x128xf32> to vector<16x32xf32>
    %455 = arith.mulf %452, %412 : vector<16x32xf32>
    %456 = arith.mulf %451, %453 : vector<16x32xf32>
    %457 = arith.addf %455, %456 : vector<16x32xf32>
    %458 = math.tanh %457 : vector<16x32xf32>
    %459 = arith.mulf %454, %458 : vector<16x32xf32>
    %cst_111 = arith.constant dense<0.000000e+00> : vector<2x32xf32>
    %460 = tpu.matmul %20, %459, %cst_111 {dimension_numbers = #tpu.dot_dimension_numbers<[1], [0], [0], [1], [0, 0, 1, 1], [], []>} : vector<2x16xf32>, vector<16x32xf32>, vector<2x32xf32> -> vector<2x32xf32>
    %c256 = arith.constant 256 : index
    %c0_112 = arith.constant 0 : index
    %461 = vector.load %arg7[%c256, %c0_112] : memref<512x256xf32, #tpu.memory_space<vmem>>, vector<32x256xf32>
    %cst_113 = arith.constant dense<0.000000e+00> : vector<2x256xf32>
    %462 = tpu.matmul %460, %461, %cst_113 {dimension_numbers = #tpu.dot_dimension_numbers<[1], [0], [0], [1], [0, 0, 1, 1], [], []>} : vector<2x32xf32>, vector<32x256xf32>, vector<2x256xf32> -> vector<2x256xf32>
    %463 = arith.addf %418, %462 : vector<2x256xf32>
    %c160_114 = arith.constant 160 : index
    %c0_115 = arith.constant 0 : index
    %464 = vector.load %arg10[%c160_114, %c0_115] : memref<256x128xf32, #tpu.memory_space<vmem>>, vector<16x128xf32>
    %cst_116 = arith.constant dense<0.000000e+00> : vector<16x128xf32>
    %465 = tpu.matmul %438, %22, %cst_116 {dimension_numbers = #tpu.dot_dimension_numbers<[1], [0], [0], [1], [0, 0, 1, 1], [], []>} : vector<16x32xf32>, vector<32x128xf32>, vector<16x128xf32> -> vector<16x128xf32>
    %466 = arith.addf %464, %465 : vector<16x128xf32>
    %467 = arith.mulf %466, %8 : vector<16x128xf32>
    %468 = arith.negf %467 : vector<16x128xf32>
    %469 = math.exp %468 : vector<16x128xf32>
    %cst_117 = arith.constant 1.000000e+00 : f32
    %470 = vector.broadcast %cst_117 : f32 to vector<16x128xf32>
    %471 = arith.addf %470, %469 : vector<16x128xf32>
    %472 = arith.divf %470, %471 : vector<16x128xf32>
    %473 = arith.mulf %472, %8 : vector<16x128xf32>
    %474 = arith.addf %473, %11 : vector<16x128xf32>
    %475 = vector.extract_strided_slice %474 {offsets = [0, 0], sizes = [16, 32], strides = [1, 1]} : vector<16x128xf32> to vector<16x32xf32>
    %476 = vector.extract_strided_slice %474 {offsets = [0, 32], sizes = [16, 32], strides = [1, 1]} : vector<16x128xf32> to vector<16x32xf32>
    %477 = vector.extract_strided_slice %474 {offsets = [0, 64], sizes = [16, 32], strides = [1, 1]} : vector<16x128xf32> to vector<16x32xf32>
    %478 = vector.extract_strided_slice %474 {offsets = [0, 96], sizes = [16, 32], strides = [1, 1]} : vector<16x128xf32> to vector<16x32xf32>
    %479 = arith.mulf %476, %436 : vector<16x32xf32>
    %480 = arith.mulf %475, %477 : vector<16x32xf32>
    %481 = arith.addf %479, %480 : vector<16x32xf32>
    %482 = math.tanh %481 : vector<16x32xf32>
    %483 = arith.mulf %478, %482 : vector<16x32xf32>
    %cst_118 = arith.constant dense<0.000000e+00> : vector<16x128xf32>
    %484 = tpu.matmul %438, %24, %cst_118 {dimension_numbers = #tpu.dot_dimension_numbers<[1], [0], [0], [1], [0, 0, 1, 1], [], []>} : vector<16x32xf32>, vector<32x128xf32>, vector<16x128xf32> -> vector<16x128xf32>
    %485 = arith.addf %484, %28 : vector<16x128xf32>
    %cst_119 = arith.constant dense<0.000000e+00> : vector<16x128xf32>
    %486 = tpu.matmul %459, %25, %cst_119 {dimension_numbers = #tpu.dot_dimension_numbers<[1], [0], [0], [1], [0, 0, 1, 1], [], []>} : vector<16x32xf32>, vector<32x128xf32>, vector<16x128xf32> -> vector<16x128xf32>
    %487 = arith.addf %485, %486 : vector<16x128xf32>
    %488 = arith.mulf %487, %8 : vector<16x128xf32>
    %489 = arith.negf %488 : vector<16x128xf32>
    %490 = math.exp %489 : vector<16x128xf32>
    %cst_120 = arith.constant 1.000000e+00 : f32
    %491 = vector.broadcast %cst_120 : f32 to vector<16x128xf32>
    %492 = arith.addf %491, %490 : vector<16x128xf32>
    %493 = arith.divf %491, %492 : vector<16x128xf32>
    %494 = arith.mulf %493, %8 : vector<16x128xf32>
    %495 = arith.addf %494, %11 : vector<16x128xf32>
    %496 = vector.extract_strided_slice %495 {offsets = [0, 0], sizes = [16, 32], strides = [1, 1]} : vector<16x128xf32> to vector<16x32xf32>
    %497 = vector.extract_strided_slice %495 {offsets = [0, 32], sizes = [16, 32], strides = [1, 1]} : vector<16x128xf32> to vector<16x32xf32>
    %498 = vector.extract_strided_slice %495 {offsets = [0, 64], sizes = [16, 32], strides = [1, 1]} : vector<16x128xf32> to vector<16x32xf32>
    %499 = vector.extract_strided_slice %495 {offsets = [0, 96], sizes = [16, 32], strides = [1, 1]} : vector<16x128xf32> to vector<16x32xf32>
    %500 = arith.mulf %497, %457 : vector<16x32xf32>
    %501 = arith.mulf %496, %498 : vector<16x32xf32>
    %502 = arith.addf %500, %501 : vector<16x32xf32>
    %503 = math.tanh %502 : vector<16x32xf32>
    %504 = arith.mulf %499, %503 : vector<16x32xf32>
    %cst_121 = arith.constant dense<0.000000e+00> : vector<2x32xf32>
    %505 = tpu.matmul %20, %504, %cst_121 {dimension_numbers = #tpu.dot_dimension_numbers<[1], [0], [0], [1], [0, 0, 1, 1], [], []>} : vector<2x16xf32>, vector<16x32xf32>, vector<2x32xf32> -> vector<2x32xf32>
    %c288 = arith.constant 288 : index
    %c0_122 = arith.constant 0 : index
    %506 = vector.load %arg7[%c288, %c0_122] : memref<512x256xf32, #tpu.memory_space<vmem>>, vector<32x256xf32>
    %cst_123 = arith.constant dense<0.000000e+00> : vector<2x256xf32>
    %507 = tpu.matmul %505, %506, %cst_123 {dimension_numbers = #tpu.dot_dimension_numbers<[1], [0], [0], [1], [0, 0, 1, 1], [], []>} : vector<2x32xf32>, vector<32x256xf32>, vector<2x256xf32> -> vector<2x256xf32>
    %508 = arith.addf %463, %507 : vector<2x256xf32>
    %c176 = arith.constant 176 : index
    %c0_124 = arith.constant 0 : index
    %509 = vector.load %arg10[%c176, %c0_124] : memref<256x128xf32, #tpu.memory_space<vmem>>, vector<16x128xf32>
    %cst_125 = arith.constant dense<0.000000e+00> : vector<16x128xf32>
    %510 = tpu.matmul %483, %22, %cst_125 {dimension_numbers = #tpu.dot_dimension_numbers<[1], [0], [0], [1], [0, 0, 1, 1], [], []>} : vector<16x32xf32>, vector<32x128xf32>, vector<16x128xf32> -> vector<16x128xf32>
    %511 = arith.addf %509, %510 : vector<16x128xf32>
    %512 = arith.mulf %511, %8 : vector<16x128xf32>
    %513 = arith.negf %512 : vector<16x128xf32>
    %514 = math.exp %513 : vector<16x128xf32>
    %cst_126 = arith.constant 1.000000e+00 : f32
    %515 = vector.broadcast %cst_126 : f32 to vector<16x128xf32>
    %516 = arith.addf %515, %514 : vector<16x128xf32>
    %517 = arith.divf %515, %516 : vector<16x128xf32>
    %518 = arith.mulf %517, %8 : vector<16x128xf32>
    %519 = arith.addf %518, %11 : vector<16x128xf32>
    %520 = vector.extract_strided_slice %519 {offsets = [0, 0], sizes = [16, 32], strides = [1, 1]} : vector<16x128xf32> to vector<16x32xf32>
    %521 = vector.extract_strided_slice %519 {offsets = [0, 32], sizes = [16, 32], strides = [1, 1]} : vector<16x128xf32> to vector<16x32xf32>
    %522 = vector.extract_strided_slice %519 {offsets = [0, 64], sizes = [16, 32], strides = [1, 1]} : vector<16x128xf32> to vector<16x32xf32>
    %523 = vector.extract_strided_slice %519 {offsets = [0, 96], sizes = [16, 32], strides = [1, 1]} : vector<16x128xf32> to vector<16x32xf32>
    %524 = arith.mulf %521, %481 : vector<16x32xf32>
    %525 = arith.mulf %520, %522 : vector<16x32xf32>
    %526 = arith.addf %524, %525 : vector<16x32xf32>
    %527 = math.tanh %526 : vector<16x32xf32>
    %528 = arith.mulf %523, %527 : vector<16x32xf32>
    %cst_127 = arith.constant dense<0.000000e+00> : vector<16x128xf32>
    %529 = tpu.matmul %483, %24, %cst_127 {dimension_numbers = #tpu.dot_dimension_numbers<[1], [0], [0], [1], [0, 0, 1, 1], [], []>} : vector<16x32xf32>, vector<32x128xf32>, vector<16x128xf32> -> vector<16x128xf32>
    %530 = arith.addf %529, %28 : vector<16x128xf32>
    %cst_128 = arith.constant dense<0.000000e+00> : vector<16x128xf32>
    %531 = tpu.matmul %504, %25, %cst_128 {dimension_numbers = #tpu.dot_dimension_numbers<[1], [0], [0], [1], [0, 0, 1, 1], [], []>} : vector<16x32xf32>, vector<32x128xf32>, vector<16x128xf32> -> vector<16x128xf32>
    %532 = arith.addf %530, %531 : vector<16x128xf32>
    %533 = arith.mulf %532, %8 : vector<16x128xf32>
    %534 = arith.negf %533 : vector<16x128xf32>
    %535 = math.exp %534 : vector<16x128xf32>
    %cst_129 = arith.constant 1.000000e+00 : f32
    %536 = vector.broadcast %cst_129 : f32 to vector<16x128xf32>
    %537 = arith.addf %536, %535 : vector<16x128xf32>
    %538 = arith.divf %536, %537 : vector<16x128xf32>
    %539 = arith.mulf %538, %8 : vector<16x128xf32>
    %540 = arith.addf %539, %11 : vector<16x128xf32>
    %541 = vector.extract_strided_slice %540 {offsets = [0, 0], sizes = [16, 32], strides = [1, 1]} : vector<16x128xf32> to vector<16x32xf32>
    %542 = vector.extract_strided_slice %540 {offsets = [0, 32], sizes = [16, 32], strides = [1, 1]} : vector<16x128xf32> to vector<16x32xf32>
    %543 = vector.extract_strided_slice %540 {offsets = [0, 64], sizes = [16, 32], strides = [1, 1]} : vector<16x128xf32> to vector<16x32xf32>
    %544 = vector.extract_strided_slice %540 {offsets = [0, 96], sizes = [16, 32], strides = [1, 1]} : vector<16x128xf32> to vector<16x32xf32>
    %545 = arith.mulf %542, %502 : vector<16x32xf32>
    %546 = arith.mulf %541, %543 : vector<16x32xf32>
    %547 = arith.addf %545, %546 : vector<16x32xf32>
    %548 = math.tanh %547 : vector<16x32xf32>
    %549 = arith.mulf %544, %548 : vector<16x32xf32>
    %cst_130 = arith.constant dense<0.000000e+00> : vector<2x32xf32>
    %550 = tpu.matmul %20, %549, %cst_130 {dimension_numbers = #tpu.dot_dimension_numbers<[1], [0], [0], [1], [0, 0, 1, 1], [], []>} : vector<2x16xf32>, vector<16x32xf32>, vector<2x32xf32> -> vector<2x32xf32>
    %c320 = arith.constant 320 : index
    %c0_131 = arith.constant 0 : index
    %551 = vector.load %arg7[%c320, %c0_131] : memref<512x256xf32, #tpu.memory_space<vmem>>, vector<32x256xf32>
    %cst_132 = arith.constant dense<0.000000e+00> : vector<2x256xf32>
    %552 = tpu.matmul %550, %551, %cst_132 {dimension_numbers = #tpu.dot_dimension_numbers<[1], [0], [0], [1], [0, 0, 1, 1], [], []>} : vector<2x32xf32>, vector<32x256xf32>, vector<2x256xf32> -> vector<2x256xf32>
    %553 = arith.addf %508, %552 : vector<2x256xf32>
    %c192_133 = arith.constant 192 : index
    %c0_134 = arith.constant 0 : index
    %554 = vector.load %arg10[%c192_133, %c0_134] : memref<256x128xf32, #tpu.memory_space<vmem>>, vector<16x128xf32>
    %cst_135 = arith.constant dense<0.000000e+00> : vector<16x128xf32>
    %555 = tpu.matmul %528, %22, %cst_135 {dimension_numbers = #tpu.dot_dimension_numbers<[1], [0], [0], [1], [0, 0, 1, 1], [], []>} : vector<16x32xf32>, vector<32x128xf32>, vector<16x128xf32> -> vector<16x128xf32>
    %556 = arith.addf %554, %555 : vector<16x128xf32>
    %557 = arith.mulf %556, %8 : vector<16x128xf32>
    %558 = arith.negf %557 : vector<16x128xf32>
    %559 = math.exp %558 : vector<16x128xf32>
    %cst_136 = arith.constant 1.000000e+00 : f32
    %560 = vector.broadcast %cst_136 : f32 to vector<16x128xf32>
    %561 = arith.addf %560, %559 : vector<16x128xf32>
    %562 = arith.divf %560, %561 : vector<16x128xf32>
    %563 = arith.mulf %562, %8 : vector<16x128xf32>
    %564 = arith.addf %563, %11 : vector<16x128xf32>
    %565 = vector.extract_strided_slice %564 {offsets = [0, 0], sizes = [16, 32], strides = [1, 1]} : vector<16x128xf32> to vector<16x32xf32>
    %566 = vector.extract_strided_slice %564 {offsets = [0, 32], sizes = [16, 32], strides = [1, 1]} : vector<16x128xf32> to vector<16x32xf32>
    %567 = vector.extract_strided_slice %564 {offsets = [0, 64], sizes = [16, 32], strides = [1, 1]} : vector<16x128xf32> to vector<16x32xf32>
    %568 = vector.extract_strided_slice %564 {offsets = [0, 96], sizes = [16, 32], strides = [1, 1]} : vector<16x128xf32> to vector<16x32xf32>
    %569 = arith.mulf %566, %526 : vector<16x32xf32>
    %570 = arith.mulf %565, %567 : vector<16x32xf32>
    %571 = arith.addf %569, %570 : vector<16x32xf32>
    %572 = math.tanh %571 : vector<16x32xf32>
    %573 = arith.mulf %568, %572 : vector<16x32xf32>
    %cst_137 = arith.constant dense<0.000000e+00> : vector<16x128xf32>
    %574 = tpu.matmul %528, %24, %cst_137 {dimension_numbers = #tpu.dot_dimension_numbers<[1], [0], [0], [1], [0, 0, 1, 1], [], []>} : vector<16x32xf32>, vector<32x128xf32>, vector<16x128xf32> -> vector<16x128xf32>
    %575 = arith.addf %574, %28 : vector<16x128xf32>
    %cst_138 = arith.constant dense<0.000000e+00> : vector<16x128xf32>
    %576 = tpu.matmul %549, %25, %cst_138 {dimension_numbers = #tpu.dot_dimension_numbers<[1], [0], [0], [1], [0, 0, 1, 1], [], []>} : vector<16x32xf32>, vector<32x128xf32>, vector<16x128xf32> -> vector<16x128xf32>
    %577 = arith.addf %575, %576 : vector<16x128xf32>
    %578 = arith.mulf %577, %8 : vector<16x128xf32>
    %579 = arith.negf %578 : vector<16x128xf32>
    %580 = math.exp %579 : vector<16x128xf32>
    %cst_139 = arith.constant 1.000000e+00 : f32
    %581 = vector.broadcast %cst_139 : f32 to vector<16x128xf32>
    %582 = arith.addf %581, %580 : vector<16x128xf32>
    %583 = arith.divf %581, %582 : vector<16x128xf32>
    %584 = arith.mulf %583, %8 : vector<16x128xf32>
    %585 = arith.addf %584, %11 : vector<16x128xf32>
    %586 = vector.extract_strided_slice %585 {offsets = [0, 0], sizes = [16, 32], strides = [1, 1]} : vector<16x128xf32> to vector<16x32xf32>
    %587 = vector.extract_strided_slice %585 {offsets = [0, 32], sizes = [16, 32], strides = [1, 1]} : vector<16x128xf32> to vector<16x32xf32>
    %588 = vector.extract_strided_slice %585 {offsets = [0, 64], sizes = [16, 32], strides = [1, 1]} : vector<16x128xf32> to vector<16x32xf32>
    %589 = vector.extract_strided_slice %585 {offsets = [0, 96], sizes = [16, 32], strides = [1, 1]} : vector<16x128xf32> to vector<16x32xf32>
    %590 = arith.mulf %587, %547 : vector<16x32xf32>
    %591 = arith.mulf %586, %588 : vector<16x32xf32>
    %592 = arith.addf %590, %591 : vector<16x32xf32>
    %593 = math.tanh %592 : vector<16x32xf32>
    %594 = arith.mulf %589, %593 : vector<16x32xf32>
    %cst_140 = arith.constant dense<0.000000e+00> : vector<2x32xf32>
    %595 = tpu.matmul %20, %594, %cst_140 {dimension_numbers = #tpu.dot_dimension_numbers<[1], [0], [0], [1], [0, 0, 1, 1], [], []>} : vector<2x16xf32>, vector<16x32xf32>, vector<2x32xf32> -> vector<2x32xf32>
    %c352 = arith.constant 352 : index
    %c0_141 = arith.constant 0 : index
    %596 = vector.load %arg7[%c352, %c0_141] : memref<512x256xf32, #tpu.memory_space<vmem>>, vector<32x256xf32>
    %cst_142 = arith.constant dense<0.000000e+00> : vector<2x256xf32>
    %597 = tpu.matmul %595, %596, %cst_142 {dimension_numbers = #tpu.dot_dimension_numbers<[1], [0], [0], [1], [0, 0, 1, 1], [], []>} : vector<2x32xf32>, vector<32x256xf32>, vector<2x256xf32> -> vector<2x256xf32>
    %598 = arith.addf %553, %597 : vector<2x256xf32>
    %c208 = arith.constant 208 : index
    %c0_143 = arith.constant 0 : index
    %599 = vector.load %arg10[%c208, %c0_143] : memref<256x128xf32, #tpu.memory_space<vmem>>, vector<16x128xf32>
    %cst_144 = arith.constant dense<0.000000e+00> : vector<16x128xf32>
    %600 = tpu.matmul %573, %22, %cst_144 {dimension_numbers = #tpu.dot_dimension_numbers<[1], [0], [0], [1], [0, 0, 1, 1], [], []>} : vector<16x32xf32>, vector<32x128xf32>, vector<16x128xf32> -> vector<16x128xf32>
    %601 = arith.addf %599, %600 : vector<16x128xf32>
    %602 = arith.mulf %601, %8 : vector<16x128xf32>
    %603 = arith.negf %602 : vector<16x128xf32>
    %604 = math.exp %603 : vector<16x128xf32>
    %cst_145 = arith.constant 1.000000e+00 : f32
    %605 = vector.broadcast %cst_145 : f32 to vector<16x128xf32>
    %606 = arith.addf %605, %604 : vector<16x128xf32>
    %607 = arith.divf %605, %606 : vector<16x128xf32>
    %608 = arith.mulf %607, %8 : vector<16x128xf32>
    %609 = arith.addf %608, %11 : vector<16x128xf32>
    %610 = vector.extract_strided_slice %609 {offsets = [0, 0], sizes = [16, 32], strides = [1, 1]} : vector<16x128xf32> to vector<16x32xf32>
    %611 = vector.extract_strided_slice %609 {offsets = [0, 32], sizes = [16, 32], strides = [1, 1]} : vector<16x128xf32> to vector<16x32xf32>
    %612 = vector.extract_strided_slice %609 {offsets = [0, 64], sizes = [16, 32], strides = [1, 1]} : vector<16x128xf32> to vector<16x32xf32>
    %613 = vector.extract_strided_slice %609 {offsets = [0, 96], sizes = [16, 32], strides = [1, 1]} : vector<16x128xf32> to vector<16x32xf32>
    %614 = arith.mulf %611, %571 : vector<16x32xf32>
    %615 = arith.mulf %610, %612 : vector<16x32xf32>
    %616 = arith.addf %614, %615 : vector<16x32xf32>
    %617 = math.tanh %616 : vector<16x32xf32>
    %618 = arith.mulf %613, %617 : vector<16x32xf32>
    %cst_146 = arith.constant dense<0.000000e+00> : vector<16x128xf32>
    %619 = tpu.matmul %573, %24, %cst_146 {dimension_numbers = #tpu.dot_dimension_numbers<[1], [0], [0], [1], [0, 0, 1, 1], [], []>} : vector<16x32xf32>, vector<32x128xf32>, vector<16x128xf32> -> vector<16x128xf32>
    %620 = arith.addf %619, %28 : vector<16x128xf32>
    %cst_147 = arith.constant dense<0.000000e+00> : vector<16x128xf32>
    %621 = tpu.matmul %594, %25, %cst_147 {dimension_numbers = #tpu.dot_dimension_numbers<[1], [0], [0], [1], [0, 0, 1, 1], [], []>} : vector<16x32xf32>, vector<32x128xf32>, vector<16x128xf32> -> vector<16x128xf32>
    %622 = arith.addf %620, %621 : vector<16x128xf32>
    %623 = arith.mulf %622, %8 : vector<16x128xf32>
    %624 = arith.negf %623 : vector<16x128xf32>
    %625 = math.exp %624 : vector<16x128xf32>
    %cst_148 = arith.constant 1.000000e+00 : f32
    %626 = vector.broadcast %cst_148 : f32 to vector<16x128xf32>
    %627 = arith.addf %626, %625 : vector<16x128xf32>
    %628 = arith.divf %626, %627 : vector<16x128xf32>
    %629 = arith.mulf %628, %8 : vector<16x128xf32>
    %630 = arith.addf %629, %11 : vector<16x128xf32>
    %631 = vector.extract_strided_slice %630 {offsets = [0, 0], sizes = [16, 32], strides = [1, 1]} : vector<16x128xf32> to vector<16x32xf32>
    %632 = vector.extract_strided_slice %630 {offsets = [0, 32], sizes = [16, 32], strides = [1, 1]} : vector<16x128xf32> to vector<16x32xf32>
    %633 = vector.extract_strided_slice %630 {offsets = [0, 64], sizes = [16, 32], strides = [1, 1]} : vector<16x128xf32> to vector<16x32xf32>
    %634 = vector.extract_strided_slice %630 {offsets = [0, 96], sizes = [16, 32], strides = [1, 1]} : vector<16x128xf32> to vector<16x32xf32>
    %635 = arith.mulf %632, %592 : vector<16x32xf32>
    %636 = arith.mulf %631, %633 : vector<16x32xf32>
    %637 = arith.addf %635, %636 : vector<16x32xf32>
    %638 = math.tanh %637 : vector<16x32xf32>
    %639 = arith.mulf %634, %638 : vector<16x32xf32>
    %cst_149 = arith.constant dense<0.000000e+00> : vector<2x32xf32>
    %640 = tpu.matmul %20, %639, %cst_149 {dimension_numbers = #tpu.dot_dimension_numbers<[1], [0], [0], [1], [0, 0, 1, 1], [], []>} : vector<2x16xf32>, vector<16x32xf32>, vector<2x32xf32> -> vector<2x32xf32>
    %c384 = arith.constant 384 : index
    %c0_150 = arith.constant 0 : index
    %641 = vector.load %arg7[%c384, %c0_150] : memref<512x256xf32, #tpu.memory_space<vmem>>, vector<32x256xf32>
    %cst_151 = arith.constant dense<0.000000e+00> : vector<2x256xf32>
    %642 = tpu.matmul %640, %641, %cst_151 {dimension_numbers = #tpu.dot_dimension_numbers<[1], [0], [0], [1], [0, 0, 1, 1], [], []>} : vector<2x32xf32>, vector<32x256xf32>, vector<2x256xf32> -> vector<2x256xf32>
    %643 = arith.addf %598, %642 : vector<2x256xf32>
    %c224_152 = arith.constant 224 : index
    %c0_153 = arith.constant 0 : index
    %644 = vector.load %arg10[%c224_152, %c0_153] : memref<256x128xf32, #tpu.memory_space<vmem>>, vector<16x128xf32>
    %cst_154 = arith.constant dense<0.000000e+00> : vector<16x128xf32>
    %645 = tpu.matmul %618, %22, %cst_154 {dimension_numbers = #tpu.dot_dimension_numbers<[1], [0], [0], [1], [0, 0, 1, 1], [], []>} : vector<16x32xf32>, vector<32x128xf32>, vector<16x128xf32> -> vector<16x128xf32>
    %646 = arith.addf %644, %645 : vector<16x128xf32>
    %647 = arith.mulf %646, %8 : vector<16x128xf32>
    %648 = arith.negf %647 : vector<16x128xf32>
    %649 = math.exp %648 : vector<16x128xf32>
    %cst_155 = arith.constant 1.000000e+00 : f32
    %650 = vector.broadcast %cst_155 : f32 to vector<16x128xf32>
    %651 = arith.addf %650, %649 : vector<16x128xf32>
    %652 = arith.divf %650, %651 : vector<16x128xf32>
    %653 = arith.mulf %652, %8 : vector<16x128xf32>
    %654 = arith.addf %653, %11 : vector<16x128xf32>
    %655 = vector.extract_strided_slice %654 {offsets = [0, 0], sizes = [16, 32], strides = [1, 1]} : vector<16x128xf32> to vector<16x32xf32>
    %656 = vector.extract_strided_slice %654 {offsets = [0, 32], sizes = [16, 32], strides = [1, 1]} : vector<16x128xf32> to vector<16x32xf32>
    %657 = vector.extract_strided_slice %654 {offsets = [0, 64], sizes = [16, 32], strides = [1, 1]} : vector<16x128xf32> to vector<16x32xf32>
    %658 = vector.extract_strided_slice %654 {offsets = [0, 96], sizes = [16, 32], strides = [1, 1]} : vector<16x128xf32> to vector<16x32xf32>
    %659 = arith.mulf %656, %616 : vector<16x32xf32>
    %660 = arith.mulf %655, %657 : vector<16x32xf32>
    %661 = arith.addf %659, %660 : vector<16x32xf32>
    %662 = math.tanh %661 : vector<16x32xf32>
    %663 = arith.mulf %658, %662 : vector<16x32xf32>
    %cst_156 = arith.constant dense<0.000000e+00> : vector<16x128xf32>
    %664 = tpu.matmul %618, %24, %cst_156 {dimension_numbers = #tpu.dot_dimension_numbers<[1], [0], [0], [1], [0, 0, 1, 1], [], []>} : vector<16x32xf32>, vector<32x128xf32>, vector<16x128xf32> -> vector<16x128xf32>
    %665 = arith.addf %664, %28 : vector<16x128xf32>
    %cst_157 = arith.constant dense<0.000000e+00> : vector<16x128xf32>
    %666 = tpu.matmul %639, %25, %cst_157 {dimension_numbers = #tpu.dot_dimension_numbers<[1], [0], [0], [1], [0, 0, 1, 1], [], []>} : vector<16x32xf32>, vector<32x128xf32>, vector<16x128xf32> -> vector<16x128xf32>
    %667 = arith.addf %665, %666 : vector<16x128xf32>
    %668 = arith.mulf %667, %8 : vector<16x128xf32>
    %669 = arith.negf %668 : vector<16x128xf32>
    %670 = math.exp %669 : vector<16x128xf32>
    %cst_158 = arith.constant 1.000000e+00 : f32
    %671 = vector.broadcast %cst_158 : f32 to vector<16x128xf32>
    %672 = arith.addf %671, %670 : vector<16x128xf32>
    %673 = arith.divf %671, %672 : vector<16x128xf32>
    %674 = arith.mulf %673, %8 : vector<16x128xf32>
    %675 = arith.addf %674, %11 : vector<16x128xf32>
    %676 = vector.extract_strided_slice %675 {offsets = [0, 0], sizes = [16, 32], strides = [1, 1]} : vector<16x128xf32> to vector<16x32xf32>
    %677 = vector.extract_strided_slice %675 {offsets = [0, 32], sizes = [16, 32], strides = [1, 1]} : vector<16x128xf32> to vector<16x32xf32>
    %678 = vector.extract_strided_slice %675 {offsets = [0, 64], sizes = [16, 32], strides = [1, 1]} : vector<16x128xf32> to vector<16x32xf32>
    %679 = vector.extract_strided_slice %675 {offsets = [0, 96], sizes = [16, 32], strides = [1, 1]} : vector<16x128xf32> to vector<16x32xf32>
    %680 = arith.mulf %677, %637 : vector<16x32xf32>
    %681 = arith.mulf %676, %678 : vector<16x32xf32>
    %682 = arith.addf %680, %681 : vector<16x32xf32>
    %683 = math.tanh %682 : vector<16x32xf32>
    %684 = arith.mulf %679, %683 : vector<16x32xf32>
    %cst_159 = arith.constant dense<0.000000e+00> : vector<2x32xf32>
    %685 = tpu.matmul %20, %684, %cst_159 {dimension_numbers = #tpu.dot_dimension_numbers<[1], [0], [0], [1], [0, 0, 1, 1], [], []>} : vector<2x16xf32>, vector<16x32xf32>, vector<2x32xf32> -> vector<2x32xf32>
    %c416 = arith.constant 416 : index
    %c0_160 = arith.constant 0 : index
    %686 = vector.load %arg7[%c416, %c0_160] : memref<512x256xf32, #tpu.memory_space<vmem>>, vector<32x256xf32>
    %cst_161 = arith.constant dense<0.000000e+00> : vector<2x256xf32>
    %687 = tpu.matmul %685, %686, %cst_161 {dimension_numbers = #tpu.dot_dimension_numbers<[1], [0], [0], [1], [0, 0, 1, 1], [], []>} : vector<2x32xf32>, vector<32x256xf32>, vector<2x256xf32> -> vector<2x256xf32>
    %688 = arith.addf %643, %687 : vector<2x256xf32>
    %c240 = arith.constant 240 : index
    %c0_162 = arith.constant 0 : index
    %689 = vector.load %arg10[%c240, %c0_162] : memref<256x128xf32, #tpu.memory_space<vmem>>, vector<16x128xf32>
    %cst_163 = arith.constant dense<0.000000e+00> : vector<16x128xf32>
    %690 = tpu.matmul %663, %22, %cst_163 {dimension_numbers = #tpu.dot_dimension_numbers<[1], [0], [0], [1], [0, 0, 1, 1], [], []>} : vector<16x32xf32>, vector<32x128xf32>, vector<16x128xf32> -> vector<16x128xf32>
    %691 = arith.addf %689, %690 : vector<16x128xf32>
    %692 = arith.mulf %691, %8 : vector<16x128xf32>
    %693 = arith.negf %692 : vector<16x128xf32>
    %694 = math.exp %693 : vector<16x128xf32>
    %cst_164 = arith.constant 1.000000e+00 : f32
    %695 = vector.broadcast %cst_164 : f32 to vector<16x128xf32>
    %696 = arith.addf %695, %694 : vector<16x128xf32>
    %697 = arith.divf %695, %696 : vector<16x128xf32>
    %698 = arith.mulf %697, %8 : vector<16x128xf32>
    %699 = arith.addf %698, %11 : vector<16x128xf32>
    %700 = vector.extract_strided_slice %699 {offsets = [0, 0], sizes = [16, 32], strides = [1, 1]} : vector<16x128xf32> to vector<16x32xf32>
    %701 = vector.extract_strided_slice %699 {offsets = [0, 32], sizes = [16, 32], strides = [1, 1]} : vector<16x128xf32> to vector<16x32xf32>
    %702 = vector.extract_strided_slice %699 {offsets = [0, 64], sizes = [16, 32], strides = [1, 1]} : vector<16x128xf32> to vector<16x32xf32>
    %703 = vector.extract_strided_slice %699 {offsets = [0, 96], sizes = [16, 32], strides = [1, 1]} : vector<16x128xf32> to vector<16x32xf32>
    %704 = arith.mulf %701, %661 : vector<16x32xf32>
    %705 = arith.mulf %700, %702 : vector<16x32xf32>
    %706 = arith.addf %704, %705 : vector<16x32xf32>
    %707 = math.tanh %706 : vector<16x32xf32>
    %708 = arith.mulf %703, %707 : vector<16x32xf32>
    %cst_165 = arith.constant dense<0.000000e+00> : vector<16x128xf32>
    %709 = tpu.matmul %663, %24, %cst_165 {dimension_numbers = #tpu.dot_dimension_numbers<[1], [0], [0], [1], [0, 0, 1, 1], [], []>} : vector<16x32xf32>, vector<32x128xf32>, vector<16x128xf32> -> vector<16x128xf32>
    %710 = arith.addf %709, %28 : vector<16x128xf32>
    %cst_166 = arith.constant dense<0.000000e+00> : vector<16x128xf32>
    %711 = tpu.matmul %684, %25, %cst_166 {dimension_numbers = #tpu.dot_dimension_numbers<[1], [0], [0], [1], [0, 0, 1, 1], [], []>} : vector<16x32xf32>, vector<32x128xf32>, vector<16x128xf32> -> vector<16x128xf32>
    %712 = arith.addf %710, %711 : vector<16x128xf32>
    %713 = arith.mulf %712, %8 : vector<16x128xf32>
    %714 = arith.negf %713 : vector<16x128xf32>
    %715 = math.exp %714 : vector<16x128xf32>
    %cst_167 = arith.constant 1.000000e+00 : f32
    %716 = vector.broadcast %cst_167 : f32 to vector<16x128xf32>
    %717 = arith.addf %716, %715 : vector<16x128xf32>
    %718 = arith.divf %716, %717 : vector<16x128xf32>
    %719 = arith.mulf %718, %8 : vector<16x128xf32>
    %720 = arith.addf %719, %11 : vector<16x128xf32>
    %721 = vector.extract_strided_slice %720 {offsets = [0, 0], sizes = [16, 32], strides = [1, 1]} : vector<16x128xf32> to vector<16x32xf32>
    %722 = vector.extract_strided_slice %720 {offsets = [0, 32], sizes = [16, 32], strides = [1, 1]} : vector<16x128xf32> to vector<16x32xf32>
    %723 = vector.extract_strided_slice %720 {offsets = [0, 64], sizes = [16, 32], strides = [1, 1]} : vector<16x128xf32> to vector<16x32xf32>
    %724 = vector.extract_strided_slice %720 {offsets = [0, 96], sizes = [16, 32], strides = [1, 1]} : vector<16x128xf32> to vector<16x32xf32>
    %725 = arith.mulf %722, %682 : vector<16x32xf32>
    %726 = arith.mulf %721, %723 : vector<16x32xf32>
    %727 = arith.addf %725, %726 : vector<16x32xf32>
    %728 = math.tanh %727 : vector<16x32xf32>
    %729 = arith.mulf %724, %728 : vector<16x32xf32>
    %cst_168 = arith.constant dense<0.000000e+00> : vector<2x32xf32>
    %730 = tpu.matmul %20, %729, %cst_168 {dimension_numbers = #tpu.dot_dimension_numbers<[1], [0], [0], [1], [0, 0, 1, 1], [], []>} : vector<2x16xf32>, vector<16x32xf32>, vector<2x32xf32> -> vector<2x32xf32>
    %c448 = arith.constant 448 : index
    %c0_169 = arith.constant 0 : index
    %731 = vector.load %arg7[%c448, %c0_169] : memref<512x256xf32, #tpu.memory_space<vmem>>, vector<32x256xf32>
    %cst_170 = arith.constant dense<0.000000e+00> : vector<2x256xf32>
    %732 = tpu.matmul %730, %731, %cst_170 {dimension_numbers = #tpu.dot_dimension_numbers<[1], [0], [0], [1], [0, 0, 1, 1], [], []>} : vector<2x32xf32>, vector<32x256xf32>, vector<2x256xf32> -> vector<2x256xf32>
    %733 = arith.addf %688, %732 : vector<2x256xf32>
    %cst_171 = arith.constant dense<0.000000e+00> : vector<16x128xf32>
    %734 = tpu.matmul %708, %24, %cst_171 {dimension_numbers = #tpu.dot_dimension_numbers<[1], [0], [0], [1], [0, 0, 1, 1], [], []>} : vector<16x32xf32>, vector<32x128xf32>, vector<16x128xf32> -> vector<16x128xf32>
    %735 = arith.addf %734, %28 : vector<16x128xf32>
    %cst_172 = arith.constant dense<0.000000e+00> : vector<16x128xf32>
    %736 = tpu.matmul %729, %25, %cst_172 {dimension_numbers = #tpu.dot_dimension_numbers<[1], [0], [0], [1], [0, 0, 1, 1], [], []>} : vector<16x32xf32>, vector<32x128xf32>, vector<16x128xf32> -> vector<16x128xf32>
    %737 = arith.addf %735, %736 : vector<16x128xf32>
    %738 = arith.mulf %737, %8 : vector<16x128xf32>
    %739 = arith.negf %738 : vector<16x128xf32>
    %740 = math.exp %739 : vector<16x128xf32>
    %cst_173 = arith.constant 1.000000e+00 : f32
    %741 = vector.broadcast %cst_173 : f32 to vector<16x128xf32>
    %742 = arith.addf %741, %740 : vector<16x128xf32>
    %743 = arith.divf %741, %742 : vector<16x128xf32>
    %744 = arith.mulf %743, %8 : vector<16x128xf32>
    %745 = arith.addf %744, %11 : vector<16x128xf32>
    %746 = vector.extract_strided_slice %745 {offsets = [0, 0], sizes = [16, 32], strides = [1, 1]} : vector<16x128xf32> to vector<16x32xf32>
    %747 = vector.extract_strided_slice %745 {offsets = [0, 32], sizes = [16, 32], strides = [1, 1]} : vector<16x128xf32> to vector<16x32xf32>
    %748 = vector.extract_strided_slice %745 {offsets = [0, 64], sizes = [16, 32], strides = [1, 1]} : vector<16x128xf32> to vector<16x32xf32>
    %749 = vector.extract_strided_slice %745 {offsets = [0, 96], sizes = [16, 32], strides = [1, 1]} : vector<16x128xf32> to vector<16x32xf32>
    %750 = arith.mulf %747, %727 : vector<16x32xf32>
    %751 = arith.mulf %746, %748 : vector<16x32xf32>
    %752 = arith.addf %750, %751 : vector<16x32xf32>
    %753 = math.tanh %752 : vector<16x32xf32>
    %754 = arith.mulf %749, %753 : vector<16x32xf32>
    %cst_174 = arith.constant dense<0.000000e+00> : vector<2x32xf32>
    %755 = tpu.matmul %20, %754, %cst_174 {dimension_numbers = #tpu.dot_dimension_numbers<[1], [0], [0], [1], [0, 0, 1, 1], [], []>} : vector<2x16xf32>, vector<16x32xf32>, vector<2x32xf32> -> vector<2x32xf32>
    %c480 = arith.constant 480 : index
    %c0_175 = arith.constant 0 : index
    %756 = vector.load %arg7[%c480, %c0_175] : memref<512x256xf32, #tpu.memory_space<vmem>>, vector<32x256xf32>
    %cst_176 = arith.constant dense<0.000000e+00> : vector<2x256xf32>
    %757 = tpu.matmul %755, %756, %cst_176 {dimension_numbers = #tpu.dot_dimension_numbers<[1], [0], [0], [1], [0, 0, 1, 1], [], []>} : vector<2x32xf32>, vector<32x256xf32>, vector<2x256xf32> -> vector<2x256xf32>
    %758 = arith.addf %733, %757 : vector<2x256xf32>
    %c0_177 = arith.constant 0 : index
    %c0_178 = arith.constant 0 : index
    %759 = vector.load %arg8[%c0_177, %c0_178] : memref<1x256xf32, #tpu.memory_space<vmem>>, vector<1x256xf32>
    %760 = vector.broadcast %759 : vector<1x256xf32> to vector<2x256xf32>
    %761 = arith.addf %758, %760 : vector<2x256xf32>
    %c0_179 = arith.constant 0 : index
    %c0_180 = arith.constant 0 : index
    %762 = vector.load %arg9[%c0_179, %c0_180] : memref<2x256xf32, #tpu.memory_space<vmem>>, vector<2x256xf32>
    tpu.vector_store %arg9[%c0_179, %c0_180], %761 {strides = array<i32>} : memref<2x256xf32, #tpu.memory_space<vmem>>, vector<2x256xf32>,
    return
  }
}

</mosaic_0001>

<llo_original>
// kernel: lstm_model_forward.1
$region0: #{lstm_model_forward.1}
  #allocation0 [shape = 'u32[]', space=smem, size = 0x4, offset = 0x4, fixed_abs, tag = 'smem constant byte address 0x4 - core index']
  #allocation1 [shape = 'u32[144,128]{1,0:T(1,128)}', space=vmem, size = 0x12000, scoped, tag = 'internal scratch']
  #allocation2 [shape = 'f32[256,128]{1,0:T(8,128)}', space=vmem, size = 0x20000, scoped, tag = 'scratch operand']
  %s0 = inlined_call_operand.vmem [shape: f32[256,2], index: 0, kind: input, shape index: {}]
  %s1 = inlined_call_operand.vmem [shape: f32[2,128], index: 1, kind: input, shape index: {}]
  %s2 = inlined_call_operand.vmem [shape: f32[32,128], index: 2, kind: input, shape index: {}]
  %s3 = inlined_call_operand.vmem [shape: f32[1,128], index: 3, kind: input, shape index: {}]
  %s4 = inlined_call_operand.vmem [shape: f32[32,128], index: 4, kind: input, shape index: {}]
  %s5 = inlined_call_operand.vmem [shape: f32[32,128], index: 5, kind: input, shape index: {}]
  %s6 = inlined_call_operand.vmem [shape: f32[1,128], index: 6, kind: input, shape index: {}]
  %s7 = inlined_call_operand.vmem [shape: f32[512,256], index: 7, kind: input, shape index: {}]
  %s8 = inlined_call_operand.vmem [shape: f32[1,256], index: 8, kind: input, shape index: {}]
  %s9 = inlined_call_operand.hbm [shape: f32[2,256], index: 9, kind: output, shape index: {}]
  %s10 = sld [smem:[#allocation0]]
  $region46: #{lstm_model_forward.1} parent=0
    _
  %s12 = ssub.s32 1, %s10
  %s13 = scalar_select 0, %s12, %s10
  $region1: #{lstm_model_forward.1} parent=0
    #allocation3 [shape = 'u8[2048]{0}', space=vmem, size = 0x800, scoped, tag = 'output window, operand 0, single buffered']
    #allocation4 [shape = 's32[1]{0}', space=sflag, size = 0x4, scoped, tag = 'scoped memory for lstm_model_forward.1']
    %14 = vsyncpa [#allocation4], 0
    // Predicated region
    $region2: #{lstm_model_forward.1} parent=1 // pred_check
      _
    $region3: #{lstm_model_forward.1} parent=1 // pred_check_branch
      %16 = sbr.rel (0) target = $region5
    $region4: #{lstm_model_forward.1} parent=1 // pred_region
      _
    $region5: #{lstm_model_forward.1} parent=1 // pred_fallthru
      _
    // Predicated region
    $region6: #{lstm_model_forward.1} parent=1 // pred_check
      _
    $region7: #{lstm_model_forward.1} parent=1 // pred_check_branch
      %18 = sbr.rel (0) target = $region9
    $region8: #{lstm_model_forward.1} parent=1 // pred_region
      _
    $region9: #{lstm_model_forward.1} parent=1 // pred_fallthru
      _
    // Predicated region
    $region10: #{lstm_model_forward.1} parent=1 // pred_check
      _
    $region11: #{lstm_model_forward.1} parent=1 // pred_check_branch
      %20 = sbr.rel (0) target = $region13
    $region12: #{lstm_model_forward.1} parent=1 // pred_region
      _
    $region13: #{lstm_model_forward.1} parent=1 // pred_fallthru
      _
    // Predicated region
    $region14: #{lstm_model_forward.1} parent=1 // pred_check
      _
    $region15: #{lstm_model_forward.1} parent=1 // pred_check_branch
      %22 = sbr.rel (0) target = $region17
    $region16: #{lstm_model_forward.1} parent=1 // pred_region
      _
    $region17: #{lstm_model_forward.1} parent=1 // pred_fallthru
      _
    // Predicated region
    $region18: #{lstm_model_forward.1} parent=1 // pred_check
      _
    $region19: #{lstm_model_forward.1} parent=1 // pred_check_branch
      %24 = sbr.rel (0) target = $region21
    $region20: #{lstm_model_forward.1} parent=1 // pred_region
      _
    $region21: #{lstm_model_forward.1} parent=1 // pred_fallthru
      _
    // Predicated region
    $region22: #{lstm_model_forward.1} parent=1 // pred_check
      _
    $region23: #{lstm_model_forward.1} parent=1 // pred_check_branch
      %26 = sbr.rel (0) target = $region25
    $region24: #{lstm_model_forward.1} parent=1 // pred_region
      _
    $region25: #{lstm_model_forward.1} parent=1 // pred_fallthru
      _
    // Predicated region
    $region26: #{lstm_model_forward.1} parent=1 // pred_check
      _
    $region27: #{lstm_model_forward.1} parent=1 // pred_check_branch
      %28 = sbr.rel (0) target = $region29
    $region28: #{lstm_model_forward.1} parent=1 // pred_region
      _
    $region29: #{lstm_model_forward.1} parent=1 // pred_fallthru
      _
    // Predicated region
    $region30: #{lstm_model_forward.1} parent=1 // pred_check
      _
    $region31: #{lstm_model_forward.1} parent=1 // pred_check_branch
      %30 = sbr.rel (0) target = $region33
    $region32: #{lstm_model_forward.1} parent=1 // pred_region
      _
    $region33: #{lstm_model_forward.1} parent=1 // pred_fallthru
      _
    // Predicated region
    $region34: #{lstm_model_forward.1} parent=1 // pred_check
      _
    $region35: #{lstm_model_forward.1} parent=1 // pred_check_branch
      %32 = sbr.rel (0) target = $region37
    $region36: #{lstm_model_forward.1} parent=1 // pred_region
      _
    $region37: #{lstm_model_forward.1} parent=1 // pred_fallthru
      _
    %v33 = vlaneseq
    %v34 = vand.u32 %v33, 127
    %vm35 = vcmp.ge.s32.totalorder %v34, 64
    %vm36 = vcmp.lt.s32.totalorder %v34, 96
    %vm37 = vmand %vm35, %vm36
    %v38 = vsel %vm37, 2.0, 1.0
    %v39 = vsel %vm37, -1.0, 0.0
    %v40 = vlaneseq
    %v41 = vshrl.u32 %v40, 7
    %v42 = vmul.u32 %v41, 8
    %v43 = vadd.s32 %v42, 7
    %vm44 = vcmp.eq.s32.totalorder %v34, %v43
    %v45 = vsel %vm44, 1, 0
    %v46 = vcvt.s32.f32 %v45
    %v47 = vld [vmem:[%s1] sm:$0x3]
    %v48 = vld [vmem:[%s2] sm:$0xff]
    %v49 = vld [vmem:[%s2 + $0x8] sm:$0xff]
    %v50 = vld [vmem:[%s2 + $0x10] sm:$0xff]
    %v51 = vld [vmem:[%s2 + $0x18] sm:$0xff]
    %v52 = vld [vmem:[%s3] sm:$0x1]
    %v53 = vld [vmem:[%s4] sm:$0xff]
    %v54 = vld [vmem:[%s4 + $0x8] sm:$0xff]
    %v55 = vld [vmem:[%s4 + $0x10] sm:$0xff]
    %v56 = vld [vmem:[%s4 + $0x18] sm:$0xff]
    %v57 = vld [vmem:[%s5] sm:$0xff]
    %v58 = vld [vmem:[%s5 + $0x8] sm:$0xff]
    %v59 = vld [vmem:[%s5 + $0x10] sm:$0xff]
    %v60 = vld [vmem:[%s5 + $0x18] sm:$0xff]
    %v61 = vld [vmem:[%s6] sm:$0x1]
    %v63 = vlaneseq
    %v64 = vshrl.u32 %v63, 7
    %v65 = vsub.s32 0, %v64
    %v66 = vrot.slane %v61, %v65
    %v68 = vld [vmem:[%s0] sm:$0xff]
    %v69 = vld [vmem:[%s0 + $0x8] sm:$0xff]
    %v70 = vld [vmem:[%s0 + $0x10] sm:$0xff]
    %v71 = vld [vmem:[%s0 + $0x18] sm:$0xff]
    %v72 = vld [vmem:[%s0 + $0x20] sm:$0xff]
    %v73 = vld [vmem:[%s0 + $0x28] sm:$0xff]
    %v74 = vld [vmem:[%s0 + $0x30] sm:$0xff]
    %v75 = vld [vmem:[%s0 + $0x38] sm:$0xff]
    %v76 = vld [vmem:[%s0 + $0x40] sm:$0xff]
    %v77 = vld [vmem:[%s0 + $0x48] sm:$0xff]
    %v78 = vld [vmem:[%s0 + $0x50] sm:$0xff]
    %v79 = vld [vmem:[%s0 + $0x58] sm:$0xff]
    %v80 = vld [vmem:[%s0 + $0x60] sm:$0xff]
    %v81 = vld [vmem:[%s0 + $0x68] sm:$0xff]
    %v82 = vld [vmem:[%s0 + $0x70] sm:$0xff]
    %v83 = vld [vmem:[%s0 + $0x78] sm:$0xff]
    %v84 = vld [vmem:[%s0 + $0x80] sm:$0xff]
    %v85 = vld [vmem:[%s0 + $0x88] sm:$0xff]
    %v86 = vld [vmem:[%s0 + $0x90] sm:$0xff]
    %v87 = vld [vmem:[%s0 + $0x98] sm:$0xff]
    %v88 = vld [vmem:[%s0 + $0xa0] sm:$0xff]
    %v89 = vld [vmem:[%s0 + $0xa8] sm:$0xff]
    %v90 = vld [vmem:[%s0 + $0xb0] sm:$0xff]
    %v91 = vld [vmem:[%s0 + $0xb8] sm:$0xff]
    %v92 = vld [vmem:[%s0 + $0xc0] sm:$0xff]
    %v93 = vld [vmem:[%s0 + $0xc8] sm:$0xff]
    %v94 = vld [vmem:[%s0 + $0xd0] sm:$0xff]
    %v95 = vld [vmem:[%s0 + $0xd8] sm:$0xff]
    %v96 = vld [vmem:[%s0 + $0xe0] sm:$0xff]
    %v97 = vld [vmem:[%s0 + $0xe8] sm:$0xff]
    %v98 = vld [vmem:[%s0 + $0xf0] sm:$0xff]
    %v99 = vld [vmem:[%s0 + $0xf8] sm:$0xff]
    %v101 = vlaneseq
    %v102 = vshrl.u32 %v101, 7
    %v103 = vsub.s32 0, %v102
    %v104 = vrot.slane %v52, %v103
    %vm106 = vcmask 15360
    %v108 = vsel %vm106, %v68, 0
    %v111 = vsel %vm106, %v69, 0
    %v114 = vsel %vm106, %v70, 0
    %v117 = vsel %vm106, %v71, 0
    %v120 = vsel %vm106, %v72, 0
    %v123 = vsel %vm106, %v73, 0
    %v126 = vsel %vm106, %v74, 0
    %v129 = vsel %vm106, %v75, 0
    %v132 = vsel %vm106, %v76, 0
    %v135 = vsel %vm106, %v77, 0
    %v138 = vsel %vm106, %v78, 0
    %v141 = vsel %vm106, %v79, 0
    %v144 = vsel %vm106, %v80, 0
    %v147 = vsel %vm106, %v81, 0
    %v150 = vsel %vm106, %v82, 0
    %v153 = vsel %vm106, %v83, 0
    %v156 = vsel %vm106, %v84, 0
    %v159 = vsel %vm106, %v85, 0
    %v162 = vsel %vm106, %v86, 0
    %v165 = vsel %vm106, %v87, 0
    %v168 = vsel %vm106, %v88, 0
    %v171 = vsel %vm106, %v89, 0
    %v174 = vsel %vm106, %v90, 0
    %v177 = vsel %vm106, %v91, 0
    %v180 = vsel %vm106, %v92, 0
    %v183 = vsel %vm106, %v93, 0
    %v186 = vsel %vm106, %v94, 0
    %v189 = vsel %vm106, %v95, 0
    %v192 = vsel %vm106, %v96, 0
    %v195 = vsel %vm106, %v97, 0
    %v198 = vsel %vm106, %v98, 0
    %v201 = vsel %vm106, %v99, 0
    %vm203 = vcmask 1041408
    %v205 = vsel %vm203, %v47, 0
    %207 = vmatprep.subr.mxu0 0.0
    %208 = vmatpush1.msra.mxu0 %v205
    %209 = vmatprep.subr.mxu0 0.0
    %210 = vmatpush1.msra.mxu0 0.0
    %211 = vmatprep.subr.mxu0 0.0
    %212 = vmatpush1.msra.mxu0 0.0
    %213 = vmatprep.subr.mxu0 0.0
    %214 = vmatpush1.msra.mxu0 0.0
    %215 = vmatprep.subr.mxu0 0.0
    %216 = vmatpush1.msra.mxu0 0.0
    %217 = vmatprep.subr.mxu0 0.0
    %218 = vmatpush1.msra.mxu0 0.0
    %219 = vmatprep.subr.mxu0 0.0
    %220 = vmatpush1.msra.mxu0 0.0
    %221 = vmatprep.subr.mxu0 0.0
    %222 = vmatpush1.msra.mxu0 0.0
    %223 = vmatprep.subr.mxu0 0.0
    %224 = vmatpush1.msra.mxu0 0.0
    %225 = vmatprep.subr.mxu0 0.0
    %226 = vmatpush1.msra.mxu0 0.0
    %227 = vmatprep.subr.mxu0 0.0
    %228 = vmatpush1.msra.mxu0 0.0
    %229 = vmatprep.subr.mxu0 0.0
    %230 = vmatpush1.msra.mxu0 0.0
    %231 = vmatprep.subr.mxu0 0.0
    %232 = vmatpush1.msra.mxu0 0.0
    %233 = vmatprep.subr.mxu0 0.0
    %234 = vmatpush1.msra.mxu0 0.0
    %235 = vmatprep.subr.mxu0 0.0
    %236 = vmatpush1.msra.mxu0 0.0
    %237 = vmatprep.subr.mxu0 0.0
    %238 = vmatpush1.msra.mxu0 0.0
    %239 = vmatprep.subr.mxu0 0.0
    %240 = vmatpush1.msra.mxu0 0.0
    %241 = vmatprep.subr.mxu0 0.0
    %242 = vmatpush1.msra.mxu0 0.0
    %243 = vmatprep.subr.mxu0 0.0
    %244 = vmatpush1.msra.mxu0 0.0
    %245 = vmatprep.subr.mxu0 0.0
    %246 = vmatpush1.msra.mxu0 0.0
    %247 = vmatprep.subr.mxu0 0.0
    %248 = vmatpush1.msra.mxu0 0.0
    %249 = vmatprep.subr.mxu0 0.0
    %250 = vmatpush1.msra.mxu0 0.0
    %251 = vmatprep.subr.mxu0 0.0
    %252 = vmatpush1.msra.mxu0 0.0
    %253 = vmatprep.subr.mxu0 0.0
    %254 = vmatpush1.msra.mxu0 0.0
    %255 = vmatprep.subr.mxu0 0.0
    %256 = vmatpush1.msra.mxu0 0.0
    %257 = vmatprep.subr.mxu0 0.0
    %258 = vmatpush1.msra.mxu0 0.0
    %259 = vmatprep.subr.mxu0 0.0
    %260 = vmatpush1.msra.mxu0 0.0
    %261 = vmatprep.subr.mxu0 0.0
    %262 = vmatpush1.msra.mxu0 0.0
    %263 = vmatprep.subr.mxu0 0.0
    %264 = vmatpush1.msra.mxu0 0.0
    %265 = vmatprep.subr.mxu0 0.0
    %266 = vmatpush1.msra.mxu0 0.0
    %267 = vmatprep.subr.mxu0 0.0
    %268 = vmatpush1.msra.mxu0 0.0
    %269 = vmatprep.subr.mxu0 0.0
    %270 = vmatpush1.msra.mxu0 0.0
    %271 = vmatprep.mubr.f32.mxu0 0.0
    %272 = vmatmul.mubr.f32.gmra.mrb[0].mxu0 %v108
    %v273 = vpop.f32.mrb[0].mxu0
    %v274 = vadd.f32 %v104, %v273
    %v275 = vpop.f32.mrb[0].mxu0
    %276 = vmatprep.mubr.f32.mxu0 0.0
    %277 = vmatmul.mubr.f32.gmra.mrb[0].mxu0 %v111
    %v278 = vpop.f32.mrb[0].mxu0
    %v279 = vadd.f32 %v104, %v278
    %v280 = vpop.f32.mrb[0].mxu0
    %281 = vmatprep.mubr.f32.mxu0 0.0
    %282 = vmatmul.mubr.f32.gmra.mrb[0].mxu0 %v114
    %v283 = vpop.f32.mrb[0].mxu0
    %v284 = vadd.f32 %v104, %v283
    %v285 = vpop.f32.mrb[0].mxu0
    %286 = vmatprep.mubr.f32.mxu0 0.0
    %287 = vmatmul.mubr.f32.gmra.mrb[0].mxu0 %v117
    %v288 = vpop.f32.mrb[0].mxu0
    %v289 = vadd.f32 %v104, %v288
    %v290 = vpop.f32.mrb[0].mxu0
    %291 = vmatprep.mubr.f32.mxu0 0.0
    %292 = vmatmul.mubr.f32.gmra.mrb[0].mxu0 %v120
    %v293 = vpop.f32.mrb[0].mxu0
    %v294 = vadd.f32 %v104, %v293
    %v295 = vpop.f32.mrb[0].mxu0
    %296 = vmatprep.mubr.f32.mxu0 0.0
    %297 = vmatmul.mubr.f32.gmra.mrb[0].mxu0 %v123
    %v298 = vpop.f32.mrb[0].mxu0
    %v299 = vadd.f32 %v104, %v298
    %v300 = vpop.f32.mrb[0].mxu0
    %301 = vmatprep.mubr.f32.mxu0 0.0
    %302 = vmatmul.mubr.f32.gmra.mrb[0].mxu0 %v126
    %v303 = vpop.f32.mrb[0].mxu0
    %v304 = vadd.f32 %v104, %v303
    %v305 = vpop.f32.mrb[0].mxu0
    %306 = vmatprep.mubr.f32.mxu0 0.0
    %307 = vmatmul.mubr.f32.gmra.mrb[0].mxu0 %v129
    %v308 = vpop.f32.mrb[0].mxu0
    %v309 = vadd.f32 %v104, %v308
    %v310 = vpop.f32.mrb[0].mxu0
    %311 = vmatprep.mubr.f32.mxu0 0.0
    %312 = vmatmul.mubr.f32.gmra.mrb[0].mxu0 %v132
    %v313 = vpop.f32.mrb[0].mxu0
    %v314 = vadd.f32 %v104, %v313
    %v315 = vpop.f32.mrb[0].mxu0
    %316 = vmatprep.mubr.f32.mxu0 0.0
    %317 = vmatmul.mubr.f32.gmra.mrb[0].mxu0 %v135
    %v318 = vpop.f32.mrb[0].mxu0
    %v319 = vadd.f32 %v104, %v318
    %v320 = vpop.f32.mrb[0].mxu0
    %321 = vmatprep.mubr.f32.mxu0 0.0
    %322 = vmatmul.mubr.f32.gmra.mrb[0].mxu0 %v138
    %v323 = vpop.f32.mrb[0].mxu0
    %v324 = vadd.f32 %v104, %v323
    %v325 = vpop.f32.mrb[0].mxu0
    %326 = vmatprep.mubr.f32.mxu0 0.0
    %327 = vmatmul.mubr.f32.gmra.mrb[0].mxu0 %v141
    %v328 = vpop.f32.mrb[0].mxu0
    %v329 = vadd.f32 %v104, %v328
    %v330 = vpop.f32.mrb[0].mxu0
    %331 = vmatprep.mubr.f32.mxu0 0.0
    %332 = vmatmul.mubr.f32.gmra.mrb[0].mxu0 %v144
    %v333 = vpop.f32.mrb[0].mxu0
    %v334 = vadd.f32 %v104, %v333
    %v335 = vpop.f32.mrb[0].mxu0
    %336 = vmatprep.mubr.f32.mxu0 0.0
    %337 = vmatmul.mubr.f32.gmra.mrb[0].mxu0 %v147
    %v338 = vpop.f32.mrb[0].mxu0
    %v339 = vadd.f32 %v104, %v338
    %v340 = vpop.f32.mrb[0].mxu0
    %341 = vmatprep.mubr.f32.mxu0 0.0
    %342 = vmatmul.mubr.f32.gmra.mrb[0].mxu0 %v150
    %v343 = vpop.f32.mrb[0].mxu0
    %v344 = vadd.f32 %v104, %v343
    %v345 = vpop.f32.mrb[0].mxu0
    %346 = vmatprep.mubr.f32.mxu0 0.0
    %347 = vmatmul.mubr.f32.gmra.mrb[0].mxu0 %v153
    %v348 = vpop.f32.mrb[0].mxu0
    %v349 = vadd.f32 %v104, %v348
    %v350 = vpop.f32.mrb[0].mxu0
    %351 = vmatprep.mubr.f32.mxu0 0.0
    %352 = vmatmul.mubr.f32.gmra.mrb[0].mxu0 %v156
    %v353 = vpop.f32.mrb[0].mxu0
    %v354 = vadd.f32 %v104, %v353
    %v355 = vpop.f32.mrb[0].mxu0
    %356 = vmatprep.mubr.f32.mxu0 0.0
    %357 = vmatmul.mubr.f32.gmra.mrb[0].mxu0 %v159
    %v358 = vpop.f32.mrb[0].mxu0
    %v359 = vadd.f32 %v104, %v358
    %v360 = vpop.f32.mrb[0].mxu0
    %361 = vmatprep.mubr.f32.mxu0 0.0
    %362 = vmatmul.mubr.f32.gmra.mrb[0].mxu0 %v162
    %v363 = vpop.f32.mrb[0].mxu0
    %v364 = vadd.f32 %v104, %v363
    %v365 = vpop.f32.mrb[0].mxu0
    %366 = vmatprep.mubr.f32.mxu0 0.0
    %367 = vmatmul.mubr.f32.gmra.mrb[0].mxu0 %v165
    %v368 = vpop.f32.mrb[0].mxu0
    %v369 = vadd.f32 %v104, %v368
    %v370 = vpop.f32.mrb[0].mxu0
    %371 = vmatprep.mubr.f32.mxu0 0.0
    %372 = vmatmul.mubr.f32.gmra.mrb[0].mxu0 %v168
    %v373 = vpop.f32.mrb[0].mxu0
    %v374 = vadd.f32 %v104, %v373
    %v375 = vpop.f32.mrb[0].mxu0
    %376 = vmatprep.mubr.f32.mxu0 0.0
    %377 = vmatmul.mubr.f32.gmra.mrb[0].mxu0 %v171
    %v378 = vpop.f32.mrb[0].mxu0
    %v379 = vadd.f32 %v104, %v378
    %v380 = vpop.f32.mrb[0].mxu0
    %381 = vmatprep.mubr.f32.mxu0 0.0
    %382 = vmatmul.mubr.f32.gmra.mrb[0].mxu0 %v174
    %v383 = vpop.f32.mrb[0].mxu0
    %v384 = vadd.f32 %v104, %v383
    %v385 = vpop.f32.mrb[0].mxu0
    %386 = vmatprep.mubr.f32.mxu0 0.0
    %387 = vmatmul.mubr.f32.gmra.mrb[0].mxu0 %v177
    %v388 = vpop.f32.mrb[0].mxu0
    %v389 = vadd.f32 %v104, %v388
    %v390 = vpop.f32.mrb[0].mxu0
    %391 = vmatprep.mubr.f32.mxu0 0.0
    %392 = vmatmul.mubr.f32.gmra.mrb[0].mxu0 %v180
    %v393 = vpop.f32.mrb[0].mxu0
    %v394 = vadd.f32 %v104, %v393
    %v395 = vpop.f32.mrb[0].mxu0
    %396 = vmatprep.mubr.f32.mxu0 0.0
    %397 = vmatmul.mubr.f32.gmra.mrb[0].mxu0 %v183
    %v398 = vpop.f32.mrb[0].mxu0
    %v399 = vadd.f32 %v104, %v398
    %v400 = vpop.f32.mrb[0].mxu0
    %401 = vmatprep.mubr.f32.mxu0 0.0
    %402 = vmatmul.mubr.f32.gmra.mrb[0].mxu0 %v186
    %v403 = vpop.f32.mrb[0].mxu0
    %v404 = vadd.f32 %v104, %v403
    %v405 = vpop.f32.mrb[0].mxu0
    %406 = vmatprep.mubr.f32.mxu0 0.0
    %407 = vmatmul.mubr.f32.gmra.mrb[0].mxu0 %v189
    %v408 = vpop.f32.mrb[0].mxu0
    %v409 = vadd.f32 %v104, %v408
    %v410 = vpop.f32.mrb[0].mxu0
    %411 = vmatprep.mubr.f32.mxu0 0.0
    %412 = vmatmul.mubr.f32.gmra.mrb[0].mxu0 %v192
    %v413 = vpop.f32.mrb[0].mxu0
    %v414 = vadd.f32 %v104, %v413
    %v415 = vpop.f32.mrb[0].mxu0
    %416 = vmatprep.mubr.f32.mxu0 0.0
    %417 = vmatmul.mubr.f32.gmra.mrb[0].mxu0 %v195
    %v418 = vpop.f32.mrb[0].mxu0
    %v419 = vadd.f32 %v104, %v418
    %v420 = vpop.f32.mrb[0].mxu0
    %421 = vmatprep.mubr.f32.mxu0 0.0
    %422 = vmatmul.mubr.f32.gmra.mrb[0].mxu0 %v198
    %v423 = vpop.f32.mrb[0].mxu0
    %v424 = vadd.f32 %v104, %v423
    %v425 = vpop.f32.mrb[0].mxu0
    %426 = vmatprep.mubr.f32.mxu0 0.0
    %427 = vmatmul.mubr.f32.gmra.mrb[0].mxu0 %v201
    %v428 = vpop.f32.mrb[0].mxu0
    %v429 = vadd.f32 %v104, %v428
    %v430 = vpop.f32.mrb[0].mxu0
    %431 = vdwg.mxu0
    %432 = vst [vmem:[#allocation2] sm:$0xff] %v274
    %433 = vst [vmem:[#allocation2 + $0x8] sm:$0xff] %v279
    %434 = vst [vmem:[#allocation2 + $0x10] sm:$0xff] %v284
    %435 = vst [vmem:[#allocation2 + $0x18] sm:$0xff] %v289
    %436 = vst [vmem:[#allocation2 + $0x20] sm:$0xff] %v294
    %437 = vst [vmem:[#allocation2 + $0x28] sm:$0xff] %v299
    %438 = vst [vmem:[#allocation2 + $0x30] sm:$0xff] %v304
    %439 = vst [vmem:[#allocation2 + $0x38] sm:$0xff] %v309
    %440 = vst [vmem:[#allocation2 + $0x40] sm:$0xff] %v314
    %441 = vst [vmem:[#allocation2 + $0x48] sm:$0xff] %v319
    %442 = vst [vmem:[#allocation2 + $0x50] sm:$0xff] %v324
    %443 = vst [vmem:[#allocation2 + $0x58] sm:$0xff] %v329
    %444 = vst [vmem:[#allocation2 + $0x60] sm:$0xff] %v334
    %445 = vst [vmem:[#allocation2 + $0x68] sm:$0xff] %v339
    %446 = vst [vmem:[#allocation2 + $0x70] sm:$0xff] %v344
    %447 = vst [vmem:[#allocation2 + $0x78] sm:$0xff] %v349
    %448 = vst [vmem:[#allocation2 + $0x80] sm:$0xff] %v354
    %449 = vst [vmem:[#allocation2 + $0x88] sm:$0xff] %v359
    %450 = vst [vmem:[#allocation2 + $0x90] sm:$0xff] %v364
    %451 = vst [vmem:[#allocation2 + $0x98] sm:$0xff] %v369
    %452 = vst [vmem:[#allocation2 + $0xa0] sm:$0xff] %v374
    %453 = vst [vmem:[#allocation2 + $0xa8] sm:$0xff] %v379
    %454 = vst [vmem:[#allocation2 + $0xb0] sm:$0xff] %v384
    %455 = vst [vmem:[#allocation2 + $0xb8] sm:$0xff] %v389
    %456 = vst [vmem:[#allocation2 + $0xc0] sm:$0xff] %v394
    %457 = vst [vmem:[#allocation2 + $0xc8] sm:$0xff] %v399
    %458 = vst [vmem:[#allocation2 + $0xd0] sm:$0xff] %v404
    %459 = vst [vmem:[#allocation2 + $0xd8] sm:$0xff] %v409
    %460 = vst [vmem:[#allocation2 + $0xe0] sm:$0xff] %v414
    %461 = vst [vmem:[#allocation2 + $0xe8] sm:$0xff] %v419
    %462 = vst [vmem:[#allocation2 + $0xf0] sm:$0xff] %v424
    %463 = vst [vmem:[#allocation2 + $0xf8] sm:$0xff] %v429
    %v464 = vld [vmem:[#allocation2] sm:$0xff]
    %v465 = vld [vmem:[#allocation2 + $0x8] sm:$0xff]
    %vm466 = vcmask 261120
    %v468 = vsel %vm466, 0.0, 0
    %470 = vmatprep.subr.mxu0 0.0
    %471 = vmatpush1.msra.mxu0 %v48
    %472 = vmatprep.subr.mxu0 0.0
    %473 = vmatpush1.msra.mxu0 %v49
    %474 = vmatprep.subr.mxu0 0.0
    %475 = vmatpush1.msra.mxu0 %v50
    %476 = vmatprep.subr.mxu0 0.0
    %477 = vmatpush1.msra.mxu0 %v51
    %478 = vmatprep.subr.mxu0 0.0
    %479 = vmatpush1.msra.mxu0 0.0
    %480 = vmatprep.subr.mxu0 0.0
    %481 = vmatpush1.msra.mxu0 0.0
    %482 = vmatprep.subr.mxu0 0.0
    %483 = vmatpush1.msra.mxu0 0.0
    %484 = vmatprep.subr.mxu0 0.0
    %485 = vmatpush1.msra.mxu0 0.0
    %486 = vmatprep.subr.mxu0 0.0
    %487 = vmatpush1.msra.mxu0 0.0
    %488 = vmatprep.subr.mxu0 0.0
    %489 = vmatpush1.msra.mxu0 0.0
    %490 = vmatprep.subr.mxu0 0.0
    %491 = vmatpush1.msra.mxu0 0.0
    %492 = vmatprep.subr.mxu0 0.0
    %493 = vmatpush1.msra.mxu0 0.0
    %494 = vmatprep.subr.mxu0 0.0
    %495 = vmatpush1.msra.mxu0 0.0
    %496 = vmatprep.subr.mxu0 0.0
    %497 = vmatpush1.msra.mxu0 0.0
    %498 = vmatprep.subr.mxu0 0.0
    %499 = vmatpush1.msra.mxu0 0.0
    %500 = vmatprep.subr.mxu0 0.0
    %501 = vmatpush1.msra.mxu0 0.0
    %502 = vmatprep.subr.mxu0 0.0
    %503 = vmatpush1.msra.mxu0 0.0
    %504 = vmatprep.subr.mxu0 0.0
    %505 = vmatpush1.msra.mxu0 0.0
    %506 = vmatprep.subr.mxu0 0.0
    %507 = vmatpush1.msra.mxu0 0.0
    %508 = vmatprep.subr.mxu0 0.0
    %509 = vmatpush1.msra.mxu0 0.0
    %510 = vmatprep.subr.mxu0 0.0
    %511 = vmatpush1.msra.mxu0 0.0
    %512 = vmatprep.subr.mxu0 0.0
    %513 = vmatpush1.msra.mxu0 0.0
    %514 = vmatprep.subr.mxu0 0.0
    %515 = vmatpush1.msra.mxu0 0.0
    %516 = vmatprep.subr.mxu0 0.0
    %517 = vmatpush1.msra.mxu0 0.0
    %518 = vmatprep.subr.mxu0 0.0
    %519 = vmatpush1.msra.mxu0 0.0
    %520 = vmatprep.subr.mxu0 0.0
    %521 = vmatpush1.msra.mxu0 0.0
    %522 = vmatprep.subr.mxu0 0.0
    %523 = vmatpush1.msra.mxu0 0.0
    %524 = vmatprep.subr.mxu0 0.0
    %525 = vmatpush1.msra.mxu0 0.0
    %526 = vmatprep.subr.mxu0 0.0
    %527 = vmatpush1.msra.mxu0 0.0
    %528 = vmatprep.subr.mxu0 0.0
    %529 = vmatpush1.msra.mxu0 0.0
    %530 = vmatprep.subr.mxu0 0.0
    %531 = vmatpush1.msra.mxu0 0.0
    %532 = vmatprep.subr.mxu0 0.0
    %533 = vmatpush1.msra.mxu0 0.0
    %534 = vmatprep.mubr.f32.mxu0 0.0
    %535 = vmatmul.mubr.f32.gmra.mrb[0].mxu0 %v468
    %v536 = vpop.f32.mrb[0].mxu0
    %v537 = vadd.f32 0.0, %v536
    %v538 = vpop.f32.mrb[0].mxu0
    %539 = vmatprep.mubr.f32.mxu0 0.0
    %540 = vmatmul.mubr.f32.gmra.mrb[0].mxu0 %v468
    %v541 = vpop.f32.mrb[0].mxu0
    %v542 = vadd.f32 0.0, %v541
    %v543 = vpop.f32.mrb[0].mxu0
    %544 = vdwg.mxu0
    %v545 = vadd.f32 %v464, %v537
    %v546 = vadd.f32 %v465, %v542
    %v547 = vmul.f32 %v545, %v38
    %v548 = vmul.f32 %v546, %v38
    %v549 = vxor.u32 %v547, 2147483648
    %v550 = vxor.u32 %v548, 2147483648
    %v551 = vmul.f32 %v549, 1.442695
    %v552 = vpow.pop %v551
    %v553 = vmul.f32 %v550, 1.442695
    %v554 = vpow.pop %v553
    %v555 = vadd.f32 %v552, 1.0
    %v556 = vadd.f32 %v554, 1.0
    %v557 = vrcp.pop %v555
    %v558 = vmul.f32 1.0, %v557
    %v559 = vrcp.pop %v556
    %v560 = vmul.f32 1.0, %v559
    %v561 = vmul.f32 %v558, %v38
    %v562 = vmul.f32 %v560, %v38
    %v563 = vadd.f32 %v561, %v39
    %v564 = vadd.f32 %v562, %v39
    %v565 = vmul.f32 %v563, 0.0
    %v566 = vmul.f32 %v564, 0.0
    %569 = vrot.lane.b32.xlu0 %v563, 64
    %v570 = vpop.permute.xlu0 %569
    %571 = vrot.lane.b32.xlu0 %v564, 64
    %v572 = vpop.permute.xlu0 %571
    %v575 = vmul.f32 %v563, %v570
    %v576 = vmul.f32 %v564, %v572
    %579 = vrot.lane.b32.xlu0 %v575, 32
    %v580 = vpop.permute.xlu0 %579
    %581 = vrot.lane.b32.xlu0 %v576, 32
    %v582 = vpop.permute.xlu0 %581
    %v585 = vadd.f32 %v565, %v580
    %v586 = vadd.f32 %v566, %v582
    %v587 = vtanh.pop %v585
    %v588 = vtanh.pop %v586
    %591 = vrot.lane.b32.xlu0 %v587, 64
    %v592 = vpop.permute.xlu0 %591
    %593 = vrot.lane.b32.xlu0 %v588, 64
    %v594 = vpop.permute.xlu0 %593
    %v597 = vmul.f32 %v563, %v592
    %v598 = vmul.f32 %v564, %v594
    %v599 = vld [vmem:[#allocation2 + $0x10] sm:$0xff]
    %v600 = vld [vmem:[#allocation2 + $0x18] sm:$0xff]
    %603 = vrot.lane.b32.xlu0 %v597, 32
    %v604 = vpop.permute.xlu0 %603
    %605 = vrot.lane.b32.xlu0 %v598, 32
    %v606 = vpop.permute.xlu0 %605
    %v607 = vsel %vm466, %v604, 0
    %v609 = vsel %vm466, %v606, 0
    %611 = vmatprep.subr.mxu0 0.0
    %612 = vmatpush1.msra.mxu0 %v48
    %613 = vmatprep.subr.mxu0 0.0
    %614 = vmatpush1.msra.mxu0 %v49
    %615 = vmatprep.subr.mxu0 0.0
    %616 = vmatpush1.msra.mxu0 %v50
    %617 = vmatprep.subr.mxu0 0.0
    %618 = vmatpush1.msra.mxu0 %v51
    %619 = vmatprep.subr.mxu0 0.0
    %620 = vmatpush1.msra.mxu0 0.0
    %621 = vmatprep.subr.mxu0 0.0
    %622 = vmatpush1.msra.mxu0 0.0
    %623 = vmatprep.subr.mxu0 0.0
    %624 = vmatpush1.msra.mxu0 0.0
    %625 = vmatprep.subr.mxu0 0.0
    %626 = vmatpush1.msra.mxu0 0.0
    %627 = vmatprep.subr.mxu0 0.0
    %628 = vmatpush1.msra.mxu0 0.0
    %629 = vmatprep.subr.mxu0 0.0
    %630 = vmatpush1.msra.mxu0 0.0
    %631 = vmatprep.subr.mxu0 0.0
    %632 = vmatpush1.msra.mxu0 0.0
    %633 = vmatprep.subr.mxu0 0.0
    %634 = vmatpush1.msra.mxu0 0.0
    %635 = vmatprep.subr.mxu0 0.0
    %636 = vmatpush1.msra.mxu0 0.0
    %637 = vmatprep.subr.mxu0 0.0
    %638 = vmatpush1.msra.mxu0 0.0
    %639 = vmatprep.subr.mxu0 0.0
    %640 = vmatpush1.msra.mxu0 0.0
    %641 = vmatprep.subr.mxu0 0.0
    %642 = vmatpush1.msra.mxu0 0.0
    %643 = vmatprep.subr.mxu0 0.0
    %644 = vmatpush1.msra.mxu0 0.0
    %645 = vmatprep.subr.mxu0 0.0
    %646 = vmatpush1.msra.mxu0 0.0
    %647 = vmatprep.subr.mxu0 0.0
    %648 = vmatpush1.msra.mxu0 0.0
    %649 = vmatprep.subr.mxu0 0.0
    %650 = vmatpush1.msra.mxu0 0.0
    %651 = vmatprep.subr.mxu0 0.0
    %652 = vmatpush1.msra.mxu0 0.0
    %653 = vmatprep.subr.mxu0 0.0
    %654 = vmatpush1.msra.mxu0 0.0
    %655 = vmatprep.subr.mxu0 0.0
    %656 = vmatpush1.msra.mxu0 0.0
    %657 = vmatprep.subr.mxu0 0.0
    %658 = vmatpush1.msra.mxu0 0.0
    %659 = vmatprep.subr.mxu0 0.0
    %660 = vmatpush1.msra.mxu0 0.0
    %661 = vmatprep.subr.mxu0 0.0
    %662 = vmatpush1.msra.mxu0 0.0
    %663 = vmatprep.subr.mxu0 0.0
    %664 = vmatpush1.msra.mxu0 0.0
    %665 = vmatprep.subr.mxu0 0.0
    %666 = vmatpush1.msra.mxu0 0.0
    %667 = vmatprep.subr.mxu0 0.0
    %668 = vmatpush1.msra.mxu0 0.0
    %669 = vmatprep.subr.mxu0 0.0
    %670 = vmatpush1.msra.mxu0 0.0
    %671 = vmatprep.subr.mxu0 0.0
    %672 = vmatpush1.msra.mxu0 0.0
    %673 = vmatprep.subr.mxu0 0.0
    %674 = vmatpush1.msra.mxu0 0.0
    %675 = vmatprep.mubr.f32.mxu0 0.0
    %676 = vmatmul.mubr.f32.gmra.mrb[0].mxu0 %v607
    %v677 = vpop.f32.mrb[0].mxu0
    %v678 = vadd.f32 0.0, %v677
    %v679 = vpop.f32.mrb[0].mxu0
    %680 = vmatprep.mubr.f32.mxu0 0.0
    %681 = vmatmul.mubr.f32.gmra.mrb[0].mxu0 %v609
    %v682 = vpop.f32.mrb[0].mxu0
    %v683 = vadd.f32 0.0, %v682
    %v684 = vpop.f32.mrb[0].mxu0
    %685 = vdwg.mxu0
    %v686 = vadd.f32 %v599, %v678
    %v687 = vadd.f32 %v600, %v683
    %v688 = vmul.f32 %v686, %v38
    %v689 = vmul.f32 %v687, %v38
    %v690 = vxor.u32 %v688, 2147483648
    %v691 = vxor.u32 %v689, 2147483648
    %v692 = vmul.f32 %v690, 1.442695
    %v693 = vpow.pop %v692
    %v694 = vmul.f32 %v691, 1.442695
    %v695 = vpow.pop %v694
    %v696 = vadd.f32 %v693, 1.0
    %v697 = vadd.f32 %v695, 1.0
    %v698 = vrcp.pop %v696
    %v699 = vmul.f32 1.0, %v698
    %v700 = vrcp.pop %v697
    %v701 = vmul.f32 1.0, %v700
    %v702 = vmul.f32 %v699, %v38
    %v703 = vmul.f32 %v701, %v38
    %v704 = vadd.f32 %v702, %v39
    %v705 = vadd.f32 %v703, %v39
    %v706 = vmul.f32 %v704, %v585
    %v707 = vmul.f32 %v705, %v586
    %710 = vrot.lane.b32.xlu0 %v704, 64
    %v711 = vpop.permute.xlu0 %710
    %712 = vrot.lane.b32.xlu0 %v705, 64
    %v713 = vpop.permute.xlu0 %712
    %v716 = vmul.f32 %v704, %v711
    %v717 = vmul.f32 %v705, %v713
    %720 = vrot.lane.b32.xlu0 %v716, 32
    %v721 = vpop.permute.xlu0 %720
    %722 = vrot.lane.b32.xlu0 %v717, 32
    %v723 = vpop.permute.xlu0 %722
    %v726 = vadd.f32 %v706, %v721
    %v727 = vadd.f32 %v707, %v723
    %v728 = vtanh.pop %v726
    %v729 = vtanh.pop %v727
    %732 = vrot.lane.b32.xlu0 %v728, 64
    %v733 = vpop.permute.xlu0 %732
    %734 = vrot.lane.b32.xlu0 %v729, 64
    %v735 = vpop.permute.xlu0 %734
    %v738 = vmul.f32 %v704, %v733
    %v739 = vmul.f32 %v705, %v735
    %740 = vmatprep.subr.mxu0 0.0
    %741 = vmatpush1.msra.mxu0 %v53
    %742 = vmatprep.subr.mxu0 0.0
    %743 = vmatpush1.msra.mxu0 %v54
    %744 = vmatprep.subr.mxu0 0.0
    %745 = vmatpush1.msra.mxu0 %v55
    %746 = vmatprep.subr.mxu0 0.0
    %747 = vmatpush1.msra.mxu0 %v56
    %748 = vmatprep.subr.mxu0 0.0
    %749 = vmatpush1.msra.mxu0 0.0
    %750 = vmatprep.subr.mxu0 0.0
    %751 = vmatpush1.msra.mxu0 0.0
    %752 = vmatprep.subr.mxu0 0.0
    %753 = vmatpush1.msra.mxu0 0.0
    %754 = vmatprep.subr.mxu0 0.0
    %755 = vmatpush1.msra.mxu0 0.0
    %756 = vmatprep.subr.mxu0 0.0
    %757 = vmatpush1.msra.mxu0 0.0
    %758 = vmatprep.subr.mxu0 0.0
    %759 = vmatpush1.msra.mxu0 0.0
    %760 = vmatprep.subr.mxu0 0.0
    %761 = vmatpush1.msra.mxu0 0.0
    %762 = vmatprep.subr.mxu0 0.0
    %763 = vmatpush1.msra.mxu0 0.0
    %764 = vmatprep.subr.mxu0 0.0
    %765 = vmatpush1.msra.mxu0 0.0
    %766 = vmatprep.subr.mxu0 0.0
    %767 = vmatpush1.msra.mxu0 0.0
    %768 = vmatprep.subr.mxu0 0.0
    %769 = vmatpush1.msra.mxu0 0.0
    %770 = vmatprep.subr.mxu0 0.0
    %771 = vmatpush1.msra.mxu0 0.0
    %772 = vmatprep.subr.mxu0 0.0
    %773 = vmatpush1.msra.mxu0 0.0
    %774 = vmatprep.subr.mxu0 0.0
    %775 = vmatpush1.msra.mxu0 0.0
    %776 = vmatprep.subr.mxu0 0.0
    %777 = vmatpush1.msra.mxu0 0.0
    %778 = vmatprep.subr.mxu0 0.0
    %779 = vmatpush1.msra.mxu0 0.0
    %780 = vmatprep.subr.mxu0 0.0
    %781 = vmatpush1.msra.mxu0 0.0
    %782 = vmatprep.subr.mxu0 0.0
    %783 = vmatpush1.msra.mxu0 0.0
    %784 = vmatprep.subr.mxu0 0.0
    %785 = vmatpush1.msra.mxu0 0.0
    %786 = vmatprep.subr.mxu0 0.0
    %787 = vmatpush1.msra.mxu0 0.0
    %788 = vmatprep.subr.mxu0 0.0
    %789 = vmatpush1.msra.mxu0 0.0
    %790 = vmatprep.subr.mxu0 0.0
    %791 = vmatpush1.msra.mxu0 0.0
    %792 = vmatprep.subr.mxu0 0.0
    %793 = vmatpush1.msra.mxu0 0.0
    %794 = vmatprep.subr.mxu0 0.0
    %795 = vmatpush1.msra.mxu0 0.0
    %796 = vmatprep.subr.mxu0 0.0
    %797 = vmatpush1.msra.mxu0 0.0
    %798 = vmatprep.subr.mxu0 0.0
    %799 = vmatpush1.msra.mxu0 0.0
    %800 = vmatprep.subr.mxu0 0.0
    %801 = vmatpush1.msra.mxu0 0.0
    %802 = vmatprep.subr.mxu0 0.0
    %803 = vmatpush1.msra.mxu0 0.0
    %804 = vmatprep.mubr.f32.mxu0 0.0
    %805 = vmatmul.mubr.f32.gmra.mrb[0].mxu0 %v607
    %v806 = vpop.f32.mrb[0].mxu0
    %v807 = vadd.f32 %v66, %v806
    %v808 = vpop.f32.mrb[0].mxu0
    %809 = vmatprep.mubr.f32.mxu0 0.0
    %810 = vmatmul.mubr.f32.gmra.mrb[0].mxu0 %v609
    %v811 = vpop.f32.mrb[0].mxu0
    %v812 = vadd.f32 %v66, %v811
    %v813 = vpop.f32.mrb[0].mxu0
    %814 = vdwg.mxu0
    %815 = vmatprep.subr.mxu0 0.0
    %816 = vmatpush1.msra.mxu0 %v57
    %817 = vmatprep.subr.mxu0 0.0
    %818 = vmatpush1.msra.mxu0 %v58
    %819 = vmatprep.subr.mxu0 0.0
    %820 = vmatpush1.msra.mxu0 %v59
    %821 = vmatprep.subr.mxu0 0.0
    %822 = vmatpush1.msra.mxu0 %v60
    %823 = vmatprep.subr.mxu0 0.0
    %824 = vmatpush1.msra.mxu0 0.0
    %825 = vmatprep.subr.mxu0 0.0
    %826 = vmatpush1.msra.mxu0 0.0
    %827 = vmatprep.subr.mxu0 0.0
    %828 = vmatpush1.msra.mxu0 0.0
    %829 = vmatprep.subr.mxu0 0.0
    %830 = vmatpush1.msra.mxu0 0.0
    %831 = vmatprep.subr.mxu0 0.0
    %832 = vmatpush1.msra.mxu0 0.0
    %833 = vmatprep.subr.mxu0 0.0
    %834 = vmatpush1.msra.mxu0 0.0
    %835 = vmatprep.subr.mxu0 0.0
    %836 = vmatpush1.msra.mxu0 0.0
    %837 = vmatprep.subr.mxu0 0.0
    %838 = vmatpush1.msra.mxu0 0.0
    %839 = vmatprep.subr.mxu0 0.0
    %840 = vmatpush1.msra.mxu0 0.0
    %841 = vmatprep.subr.mxu0 0.0
    %842 = vmatpush1.msra.mxu0 0.0
    %843 = vmatprep.subr.mxu0 0.0
    %844 = vmatpush1.msra.mxu0 0.0
    %845 = vmatprep.subr.mxu0 0.0
    %846 = vmatpush1.msra.mxu0 0.0
    %847 = vmatprep.subr.mxu0 0.0
    %848 = vmatpush1.msra.mxu0 0.0
    %849 = vmatprep.subr.mxu0 0.0
    %850 = vmatpush1.msra.mxu0 0.0
    %851 = vmatprep.subr.mxu0 0.0
    %852 = vmatpush1.msra.mxu0 0.0
    %853 = vmatprep.subr.mxu0 0.0
    %854 = vmatpush1.msra.mxu0 0.0
    %855 = vmatprep.subr.mxu0 0.0
    %856 = vmatpush1.msra.mxu0 0.0
    %857 = vmatprep.subr.mxu0 0.0
    %858 = vmatpush1.msra.mxu0 0.0
    %859 = vmatprep.subr.mxu0 0.0
    %860 = vmatpush1.msra.mxu0 0.0
    %861 = vmatprep.subr.mxu0 0.0
    %862 = vmatpush1.msra.mxu0 0.0
    %863 = vmatprep.subr.mxu0 0.0
    %864 = vmatpush1.msra.mxu0 0.0
    %865 = vmatprep.subr.mxu0 0.0
    %866 = vmatpush1.msra.mxu0 0.0
    %867 = vmatprep.subr.mxu0 0.0
    %868 = vmatpush1.msra.mxu0 0.0
    %869 = vmatprep.subr.mxu0 0.0
    %870 = vmatpush1.msra.mxu0 0.0
    %871 = vmatprep.subr.mxu0 0.0
    %872 = vmatpush1.msra.mxu0 0.0
    %873 = vmatprep.subr.mxu0 0.0
    %874 = vmatpush1.msra.mxu0 0.0
    %875 = vmatprep.subr.mxu0 0.0
    %876 = vmatpush1.msra.mxu0 0.0
    %877 = vmatprep.subr.mxu0 0.0
    %878 = vmatpush1.msra.mxu0 0.0
    %879 = vmatprep.mubr.f32.mxu0 0.0
    %880 = vmatmul.mubr.f32.gmra.mrb[0].mxu0 %v468
    %v881 = vpop.f32.mrb[0].mxu0
    %v882 = vadd.f32 0.0, %v881
    %v883 = vpop.f32.mrb[0].mxu0
    %884 = vmatprep.mubr.f32.mxu0 0.0
    %885 = vmatmul.mubr.f32.gmra.mrb[0].mxu0 %v468
    %v886 = vpop.f32.mrb[0].mxu0
    %v887 = vadd.f32 0.0, %v886
    %v888 = vpop.f32.mrb[0].mxu0
    %889 = vdwg.mxu0
    %v890 = vadd.f32 %v807, %v882
    %v891 = vadd.f32 %v812, %v887
    %v892 = vmul.f32 %v890, %v38
    %v893 = vmul.f32 %v891, %v38
    %v894 = vxor.u32 %v892, 2147483648
    %v895 = vxor.u32 %v893, 2147483648
    %v896 = vmul.f32 %v894, 1.442695
    %v897 = vpow.pop %v896
    %v898 = vmul.f32 %v895, 1.442695
    %v899 = vpow.pop %v898
    %v900 = vadd.f32 %v897, 1.0
    %v901 = vadd.f32 %v899, 1.0
    %v902 = vrcp.pop %v900
    %v903 = vmul.f32 1.0, %v902
    %v904 = vrcp.pop %v901
    %v905 = vmul.f32 1.0, %v904
    %v906 = vmul.f32 %v903, %v38
    %v907 = vmul.f32 %v905, %v38
    %v908 = vadd.f32 %v906, %v39
    %v909 = vadd.f32 %v907, %v39
    %v910 = vmul.f32 %v908, 0.0
    %v911 = vmul.f32 %v909, 0.0
    %914 = vrot.lane.b32.xlu0 %v908, 64
    %v915 = vpop.permute.xlu0 %914
    %916 = vrot.lane.b32.xlu0 %v909, 64
    %v917 = vpop.permute.xlu0 %916
    %v920 = vmul.f32 %v908, %v915
    %v921 = vmul.f32 %v909, %v917
    %924 = vrot.lane.b32.xlu0 %v920, 32
    %v925 = vpop.permute.xlu0 %924
    %926 = vrot.lane.b32.xlu0 %v921, 32
    %v927 = vpop.permute.xlu0 %926
    %v930 = vadd.f32 %v910, %v925
    %v931 = vadd.f32 %v911, %v927
    %v932 = vtanh.pop %v930
    %v933 = vtanh.pop %v931
    %936 = vrot.lane.b32.xlu0 %v932, 64
    %v937 = vpop.permute.xlu0 %936
    %938 = vrot.lane.b32.xlu0 %v933, 64
    %v939 = vpop.permute.xlu0 %938
    %v942 = vmul.f32 %v908, %v937
    %v943 = vmul.f32 %v909, %v939
    %946 = vrot.lane.b32.xlu0 %v942, 32
    %v947 = vpop.permute.xlu0 %946
    %948 = vrot.lane.b32.xlu0 %v943, 32
    %v949 = vpop.permute.xlu0 %948
    %vm952 = vcmask 130048
    %v954 = vsel %vm952, %v46, 0
    %956 = vmatprep.subr.mxu0 0.0
    %957 = vmatpush1.msra.mxu0 %v947
    %958 = vmatprep.subr.mxu0 0.0
    %959 = vmatpush1.msra.mxu0 %v949
    %960 = vmatprep.subr.mxu0 0.0
    %961 = vmatpush1.msra.mxu0 0.0
    %962 = vmatprep.subr.mxu0 0.0
    %963 = vmatpush1.msra.mxu0 0.0
    %964 = vmatprep.subr.mxu0 0.0
    %965 = vmatpush1.msra.mxu0 0.0
    %966 = vmatprep.subr.mxu0 0.0
    %967 = vmatpush1.msra.mxu0 0.0
    %968 = vmatprep.subr.mxu0 0.0
    %969 = vmatpush1.msra.mxu0 0.0
    %970 = vmatprep.subr.mxu0 0.0
    %971 = vmatpush1.msra.mxu0 0.0
    %972 = vmatprep.subr.mxu0 0.0
    %973 = vmatpush1.msra.mxu0 0.0
    %974 = vmatprep.subr.mxu0 0.0
    %975 = vmatpush1.msra.mxu0 0.0
    %976 = vmatprep.subr.mxu0 0.0
    %977 = vmatpush1.msra.mxu0 0.0
    %978 = vmatprep.subr.mxu0 0.0
    %979 = vmatpush1.msra.mxu0 0.0
    %980 = vmatprep.subr.mxu0 0.0
    %981 = vmatpush1.msra.mxu0 0.0
    %982 = vmatprep.subr.mxu0 0.0
    %983 = vmatpush1.msra.mxu0 0.0
    %984 = vmatprep.subr.mxu0 0.0
    %985 = vmatpush1.msra.mxu0 0.0
    %986 = vmatprep.subr.mxu0 0.0
    %987 = vmatpush1.msra.mxu0 0.0
    %988 = vmatprep.subr.mxu0 0.0
    %989 = vmatpush1.msra.mxu0 0.0
    %990 = vmatprep.subr.mxu0 0.0
    %991 = vmatpush1.msra.mxu0 0.0
    %992 = vmatprep.subr.mxu0 0.0
    %993 = vmatpush1.msra.mxu0 0.0
    %994 = vmatprep.subr.mxu0 0.0
    %995 = vmatpush1.msra.mxu0 0.0
    %996 = vmatprep.subr.mxu0 0.0
    %997 = vmatpush1.msra.mxu0 0.0
    %998 = vmatprep.subr.mxu0 0.0
    %999 = vmatpush1.msra.mxu0 0.0
    %1000 = vmatprep.subr.mxu0 0.0
    %1001 = vmatpush1.msra.mxu0 0.0
    %1002 = vmatprep.subr.mxu0 0.0
    %1003 = vmatpush1.msra.mxu0 0.0
    %1004 = vmatprep.subr.mxu0 0.0
    %1005 = vmatpush1.msra.mxu0 0.0
    %1006 = vmatprep.subr.mxu0 0.0
    %1007 = vmatpush1.msra.mxu0 0.0
    %1008 = vmatprep.subr.mxu0 0.0
    %1009 = vmatpush1.msra.mxu0 0.0
    %1010 = vmatprep.subr.mxu0 0.0
    %1011 = vmatpush1.msra.mxu0 0.0
    %1012 = vmatprep.subr.mxu0 0.0
    %1013 = vmatpush1.msra.mxu0 0.0
    %1014 = vmatprep.subr.mxu0 0.0
    %1015 = vmatpush1.msra.mxu0 0.0
    %1016 = vmatprep.subr.mxu0 0.0
    %1017 = vmatpush1.msra.mxu0 0.0
    %1018 = vmatprep.subr.mxu0 0.0
    %1019 = vmatpush1.msra.mxu0 0.0
    %1020 = vmatprep.mubr.f32.mxu0 0.0
    %1021 = vmatmul.mubr.f32.gmra.mrb[0].mxu0 %v954
    %v1022 = vpop.f32.mrb[0].mxu0
    %v1023 = vadd.f32 0.0, %v1022
    %v1024 = vpop.f32.mrb[0].mxu0
    %1025 = vdwg.mxu0
    %v1026 = vld [vmem:[%s7] sm:$0xff]
    %v1027 = vld [vmem:[%s7 + $0x8] sm:$0xff]
    %v1028 = vld [vmem:[%s7 + $0x10] sm:$0xff]
    %v1029 = vld [vmem:[%s7 + $0x18] sm:$0xff]
    %v1030 = vld [vmem:[%s7 + $0x20] sm:$0xff]
    %v1031 = vld [vmem:[%s7 + $0x28] sm:$0xff]
    %v1032 = vld [vmem:[%s7 + $0x30] sm:$0xff]
    %v1033 = vld [vmem:[%s7 + $0x38] sm:$0xff]
    %v1034 = vld [vmem:[#allocation2 + $0x20] sm:$0xff]
    %v1035 = vld [vmem:[#allocation2 + $0x28] sm:$0xff]
    %1038 = vrot.lane.b32.xlu0 %v738, 32
    %v1039 = vpop.permute.xlu0 %1038
    %1040 = vrot.lane.b32.xlu0 %v739, 32
    %v1041 = vpop.permute.xlu0 %1040
    %v1042 = vsel %vm466, %v1039, 0
    %v1044 = vsel %vm466, %v1041, 0
    %1046 = vmatprep.subr.mxu0 0.0
    %1047 = vmatpush1.msra.mxu0 %v48
    %1048 = vmatprep.subr.mxu0 0.0
    %1049 = vmatpush1.msra.mxu0 %v49
    %1050 = vmatprep.subr.mxu0 0.0
    %1051 = vmatpush1.msra.mxu0 %v50
    %1052 = vmatprep.subr.mxu0 0.0
    %1053 = vmatpush1.msra.mxu0 %v51
    %1054 = vmatprep.subr.mxu0 0.0
    %1055 = vmatpush1.msra.mxu0 0.0
    %1056 = vmatprep.subr.mxu0 0.0
    %1057 = vmatpush1.msra.mxu0 0.0
    %1058 = vmatprep.subr.mxu0 0.0
    %1059 = vmatpush1.msra.mxu0 0.0
    %1060 = vmatprep.subr.mxu0 0.0
    %1061 = vmatpush1.msra.mxu0 0.0
    %1062 = vmatprep.subr.mxu0 0.0
    %1063 = vmatpush1.msra.mxu0 0.0
    %1064 = vmatprep.subr.mxu0 0.0
    %1065 = vmatpush1.msra.mxu0 0.0
    %1066 = vmatprep.subr.mxu0 0.0
    %1067 = vmatpush1.msra.mxu0 0.0
    %1068 = vmatprep.subr.mxu0 0.0
    %1069 = vmatpush1.msra.mxu0 0.0
    %1070 = vmatprep.subr.mxu0 0.0
    %1071 = vmatpush1.msra.mxu0 0.0
    %1072 = vmatprep.subr.mxu0 0.0
    %1073 = vmatpush1.msra.mxu0 0.0
    %1074 = vmatprep.subr.mxu0 0.0
    %1075 = vmatpush1.msra.mxu0 0.0
    %1076 = vmatprep.subr.mxu0 0.0
    %1077 = vmatpush1.msra.mxu0 0.0
    %1078 = vmatprep.subr.mxu0 0.0
    %1079 = vmatpush1.msra.mxu0 0.0
    %1080 = vmatprep.subr.mxu0 0.0
    %1081 = vmatpush1.msra.mxu0 0.0
    %1082 = vmatprep.subr.mxu0 0.0
    %1083 = vmatpush1.msra.mxu0 0.0
    %1084 = vmatprep.subr.mxu0 0.0
    %1085 = vmatpush1.msra.mxu0 0.0
    %1086 = vmatprep.subr.mxu0 0.0
    %1087 = vmatpush1.msra.mxu0 0.0
    %1088 = vmatprep.subr.mxu0 0.0
    %1089 = vmatpush1.msra.mxu0 0.0
    %1090 = vmatprep.subr.mxu0 0.0
    %1091 = vmatpush1.msra.mxu0 0.0
    %1092 = vmatprep.subr.mxu0 0.0
    %1093 = vmatpush1.msra.mxu0 0.0
    %1094 = vmatprep.subr.mxu0 0.0
    %1095 = vmatpush1.msra.mxu0 0.0
    %1096 = vmatprep.subr.mxu0 0.0
    %1097 = vmatpush1.msra.mxu0 0.0
    %1098 = vmatprep.subr.mxu0 0.0
    %1099 = vmatpush1.msra.mxu0 0.0
    %1100 = vmatprep.subr.mxu0 0.0
    %1101 = vmatpush1.msra.mxu0 0.0
    %1102 = vmatprep.subr.mxu0 0.0
    %1103 = vmatpush1.msra.mxu0 0.0
    %1104 = vmatprep.subr.mxu0 0.0
    %1105 = vmatpush1.msra.mxu0 0.0
    %1106 = vmatprep.subr.mxu0 0.0
    %1107 = vmatpush1.msra.mxu0 0.0
    %1108 = vmatprep.subr.mxu0 0.0
    %1109 = vmatpush1.msra.mxu0 0.0
    %1110 = vmatprep.mubr.f32.mxu0 0.0
    %1111 = vmatmul.mubr.f32.gmra.mrb[0].mxu0 %v1042
    %v1112 = vpop.f32.mrb[0].mxu0
    %v1113 = vadd.f32 0.0, %v1112
    %v1114 = vpop.f32.mrb[0].mxu0
    %1115 = vmatprep.mubr.f32.mxu0 0.0
    %1116 = vmatmul.mubr.f32.gmra.mrb[0].mxu0 %v1044
    %v1117 = vpop.f32.mrb[0].mxu0
    %v1118 = vadd.f32 0.0, %v1117
    %v1119 = vpop.f32.mrb[0].mxu0
    %1120 = vdwg.mxu0
    %v1121 = vadd.f32 %v1034, %v1113
    %v1122 = vadd.f32 %v1035, %v1118
    %v1123 = vmul.f32 %v1121, %v38
    %v1124 = vmul.f32 %v1122, %v38
    %v1125 = vxor.u32 %v1123, 2147483648
    %v1126 = vxor.u32 %v1124, 2147483648
    %v1127 = vmul.f32 %v1125, 1.442695
    %v1128 = vpow.pop %v1127
    %v1129 = vmul.f32 %v1126, 1.442695
    %v1130 = vpow.pop %v1129
    %v1131 = vadd.f32 %v1128, 1.0
    %v1132 = vadd.f32 %v1130, 1.0
    %v1133 = vrcp.pop %v1131
    %v1134 = vmul.f32 1.0, %v1133
    %v1135 = vrcp.pop %v1132
    %v1136 = vmul.f32 1.0, %v1135
    %v1137 = vmul.f32 %v1134, %v38
    %v1138 = vmul.f32 %v1136, %v38
    %v1139 = vadd.f32 %v1137, %v39
    %v1140 = vadd.f32 %v1138, %v39
    %v1141 = vmul.f32 %v1139, %v726
    %v1142 = vmul.f32 %v1140, %v727
    %1145 = vrot.lane.b32.xlu0 %v1139, 64
    %v1146 = vpop.permute.xlu0 %1145
    %1147 = vrot.lane.b32.xlu0 %v1140, 64
    %v1148 = vpop.permute.xlu0 %1147
    %v1151 = vmul.f32 %v1139, %v1146
    %v1152 = vmul.f32 %v1140, %v1148
    %1155 = vrot.lane.b32.xlu0 %v1151, 32
    %v1156 = vpop.permute.xlu0 %1155
    %1157 = vrot.lane.b32.xlu0 %v1152, 32
    %v1158 = vpop.permute.xlu0 %1157
    %v1161 = vadd.f32 %v1141, %v1156
    %v1162 = vadd.f32 %v1142, %v1158
    %v1163 = vtanh.pop %v1161
    %v1164 = vtanh.pop %v1162
    %1167 = vrot.lane.b32.xlu0 %v1163, 64
    %v1168 = vpop.permute.xlu0 %1167
    %1169 = vrot.lane.b32.xlu0 %v1164, 64
    %v1170 = vpop.permute.xlu0 %1169
    %v1173 = vmul.f32 %v1139, %v1168
    %v1174 = vmul.f32 %v1140, %v1170
    %1175 = vmatprep.subr.mxu0 0.0
    %1176 = vmatpush1.msra.mxu0 %v53
    %1177 = vmatprep.subr.mxu0 0.0
    %1178 = vmatpush1.msra.mxu0 %v54
    %1179 = vmatprep.subr.mxu0 0.0
    %1180 = vmatpush1.msra.mxu0 %v55
    %1181 = vmatprep.subr.mxu0 0.0
    %1182 = vmatpush1.msra.mxu0 %v56
    %1183 = vmatprep.subr.mxu0 0.0
    %1184 = vmatpush1.msra.mxu0 0.0
    %1185 = vmatprep.subr.mxu0 0.0
    %1186 = vmatpush1.msra.mxu0 0.0
    %1187 = vmatprep.subr.mxu0 0.0
    %1188 = vmatpush1.msra.mxu0 0.0
    %1189 = vmatprep.subr.mxu0 0.0
    %1190 = vmatpush1.msra.mxu0 0.0
    %1191 = vmatprep.subr.mxu0 0.0
    %1192 = vmatpush1.msra.mxu0 0.0
    %1193 = vmatprep.subr.mxu0 0.0
    %1194 = vmatpush1.msra.mxu0 0.0
    %1195 = vmatprep.subr.mxu0 0.0
    %1196 = vmatpush1.msra.mxu0 0.0
    %1197 = vmatprep.subr.mxu0 0.0
    %1198 = vmatpush1.msra.mxu0 0.0
    %1199 = vmatprep.subr.mxu0 0.0
    %1200 = vmatpush1.msra.mxu0 0.0
    %1201 = vmatprep.subr.mxu0 0.0
    %1202 = vmatpush1.msra.mxu0 0.0
    %1203 = vmatprep.subr.mxu0 0.0
    %1204 = vmatpush1.msra.mxu0 0.0
    %1205 = vmatprep.subr.mxu0 0.0
    %1206 = vmatpush1.msra.mxu0 0.0
    %1207 = vmatprep.subr.mxu0 0.0
    %1208 = vmatpush1.msra.mxu0 0.0
    %1209 = vmatprep.subr.mxu0 0.0
    %1210 = vmatpush1.msra.mxu0 0.0
    %1211 = vmatprep.subr.mxu0 0.0
    %1212 = vmatpush1.msra.mxu0 0.0
    %1213 = vmatprep.subr.mxu0 0.0
    %1214 = vmatpush1.msra.mxu0 0.0
    %1215 = vmatprep.subr.mxu0 0.0
    %1216 = vmatpush1.msra.mxu0 0.0
    %1217 = vmatprep.subr.mxu0 0.0
    %1218 = vmatpush1.msra.mxu0 0.0
    %1219 = vmatprep.subr.mxu0 0.0
    %1220 = vmatpush1.msra.mxu0 0.0
    %1221 = vmatprep.subr.mxu0 0.0
    %1222 = vmatpush1.msra.mxu0 0.0
    %1223 = vmatprep.subr.mxu0 0.0
    %1224 = vmatpush1.msra.mxu0 0.0
    %1225 = vmatprep.subr.mxu0 0.0
    %1226 = vmatpush1.msra.mxu0 0.0
    %1227 = vmatprep.subr.mxu0 0.0
    %1228 = vmatpush1.msra.mxu0 0.0
    %1229 = vmatprep.subr.mxu0 0.0
    %1230 = vmatpush1.msra.mxu0 0.0
    %1231 = vmatprep.subr.mxu0 0.0
    %1232 = vmatpush1.msra.mxu0 0.0
    %1233 = vmatprep.subr.mxu0 0.0
    %1234 = vmatpush1.msra.mxu0 0.0
    %1235 = vmatprep.subr.mxu0 0.0
    %1236 = vmatpush1.msra.mxu0 0.0
    %1237 = vmatprep.subr.mxu0 0.0
    %1238 = vmatpush1.msra.mxu0 0.0
    %1239 = vmatprep.mubr.f32.mxu0 0.0
    %1240 = vmatmul.mubr.f32.gmra.mrb[0].mxu0 %v1042
    %v1241 = vpop.f32.mrb[0].mxu0
    %v1242 = vadd.f32 %v66, %v1241
    %v1243 = vpop.f32.mrb[0].mxu0
    %1244 = vmatprep.mubr.f32.mxu0 0.0
    %1245 = vmatmul.mubr.f32.gmra.mrb[0].mxu0 %v1044
    %v1246 = vpop.f32.mrb[0].mxu0
    %v1247 = vadd.f32 %v66, %v1246
    %v1248 = vpop.f32.mrb[0].mxu0
    %1249 = vdwg.mxu0
    %v1250 = vsel %vm466, %v947, 0
    %v1252 = vsel %vm466, %v949, 0
    %1254 = vmatprep.subr.mxu0 0.0
    %1255 = vmatpush1.msra.mxu0 %v57
    %1256 = vmatprep.subr.mxu0 0.0
    %1257 = vmatpush1.msra.mxu0 %v58
    %1258 = vmatprep.subr.mxu0 0.0
    %1259 = vmatpush1.msra.mxu0 %v59
    %1260 = vmatprep.subr.mxu0 0.0
    %1261 = vmatpush1.msra.mxu0 %v60
    %1262 = vmatprep.subr.mxu0 0.0
    %1263 = vmatpush1.msra.mxu0 0.0
    %1264 = vmatprep.subr.mxu0 0.0
    %1265 = vmatpush1.msra.mxu0 0.0
    %1266 = vmatprep.subr.mxu0 0.0
    %1267 = vmatpush1.msra.mxu0 0.0
    %1268 = vmatprep.subr.mxu0 0.0
    %1269 = vmatpush1.msra.mxu0 0.0
    %1270 = vmatprep.subr.mxu0 0.0
    %1271 = vmatpush1.msra.mxu0 0.0
    %1272 = vmatprep.subr.mxu0 0.0
    %1273 = vmatpush1.msra.mxu0 0.0
    %1274 = vmatprep.subr.mxu0 0.0
    %1275 = vmatpush1.msra.mxu0 0.0
    %1276 = vmatprep.subr.mxu0 0.0
    %1277 = vmatpush1.msra.mxu0 0.0
    %1278 = vmatprep.subr.mxu0 0.0
    %1279 = vmatpush1.msra.mxu0 0.0
    %1280 = vmatprep.subr.mxu0 0.0
    %1281 = vmatpush1.msra.mxu0 0.0
    %1282 = vmatprep.subr.mxu0 0.0
    %1283 = vmatpush1.msra.mxu0 0.0
    %1284 = vmatprep.subr.mxu0 0.0
    %1285 = vmatpush1.msra.mxu0 0.0
    %1286 = vmatprep.subr.mxu0 0.0
    %1287 = vmatpush1.msra.mxu0 0.0
    %1288 = vmatprep.subr.mxu0 0.0
    %1289 = vmatpush1.msra.mxu0 0.0
    %1290 = vmatprep.subr.mxu0 0.0
    %1291 = vmatpush1.msra.mxu0 0.0
    %1292 = vmatprep.subr.mxu0 0.0
    %1293 = vmatpush1.msra.mxu0 0.0
    %1294 = vmatprep.subr.mxu0 0.0
    %1295 = vmatpush1.msra.mxu0 0.0
    %1296 = vmatprep.subr.mxu0 0.0
    %1297 = vmatpush1.msra.mxu0 0.0
    %1298 = vmatprep.subr.mxu0 0.0
    %1299 = vmatpush1.msra.mxu0 0.0
    %1300 = vmatprep.subr.mxu0 0.0
    %1301 = vmatpush1.msra.mxu0 0.0
    %1302 = vmatprep.subr.mxu0 0.0
    %1303 = vmatpush1.msra.mxu0 0.0
    %1304 = vmatprep.subr.mxu0 0.0
    %1305 = vmatpush1.msra.mxu0 0.0
    %1306 = vmatprep.subr.mxu0 0.0
    %1307 = vmatpush1.msra.mxu0 0.0
    %1308 = vmatprep.subr.mxu0 0.0
    %1309 = vmatpush1.msra.mxu0 0.0
    %1310 = vmatprep.subr.mxu0 0.0
    %1311 = vmatpush1.msra.mxu0 0.0
    %1312 = vmatprep.subr.mxu0 0.0
    %1313 = vmatpush1.msra.mxu0 0.0
    %1314 = vmatprep.subr.mxu0 0.0
    %1315 = vmatpush1.msra.mxu0 0.0
    %1316 = vmatprep.subr.mxu0 0.0
    %1317 = vmatpush1.msra.mxu0 0.0
    %1318 = vmatprep.mubr.f32.mxu0 0.0
    %1319 = vmatmul.mubr.f32.gmra.mrb[0].mxu0 %v1250
    %v1320 = vpop.f32.mrb[0].mxu0
    %v1321 = vadd.f32 0.0, %v1320
    %v1322 = vpop.f32.mrb[0].mxu0
    %1323 = vmatprep.mubr.f32.mxu0 0.0
    %1324 = vmatmul.mubr.f32.gmra.mrb[0].mxu0 %v1252
    %v1325 = vpop.f32.mrb[0].mxu0
    %v1326 = vadd.f32 0.0, %v1325
    %v1327 = vpop.f32.mrb[0].mxu0
    %1328 = vdwg.mxu0
    %v1329 = vadd.f32 %v1242, %v1321
    %v1330 = vadd.f32 %v1247, %v1326
    %v1331 = vmul.f32 %v1329, %v38
    %v1332 = vmul.f32 %v1330, %v38
    %v1333 = vxor.u32 %v1331, 2147483648
    %v1334 = vxor.u32 %v1332, 2147483648
    %v1335 = vmul.f32 %v1333, 1.442695
    %v1336 = vpow.pop %v1335
    %v1337 = vmul.f32 %v1334, 1.442695
    %v1338 = vpow.pop %v1337
    %v1339 = vadd.f32 %v1336, 1.0
    %v1340 = vadd.f32 %v1338, 1.0
    %v1341 = vrcp.pop %v1339
    %v1342 = vmul.f32 1.0, %v1341
    %v1343 = vrcp.pop %v1340
    %v1344 = vmul.f32 1.0, %v1343
    %v1345 = vmul.f32 %v1342, %v38
    %v1346 = vmul.f32 %v1344, %v38
    %v1347 = vadd.f32 %v1345, %v39
    %v1348 = vadd.f32 %v1346, %v39
    %v1349 = vmul.f32 %v1347, %v930
    %v1350 = vmul.f32 %v1348, %v931
    %1353 = vrot.lane.b32.xlu0 %v1347, 64
    %v1354 = vpop.permute.xlu0 %1353
    %1355 = vrot.lane.b32.xlu0 %v1348, 64
    %v1356 = vpop.permute.xlu0 %1355
    %v1359 = vmul.f32 %v1347, %v1354
    %v1360 = vmul.f32 %v1348, %v1356
    %1363 = vrot.lane.b32.xlu0 %v1359, 32
    %v1364 = vpop.permute.xlu0 %1363
    %1365 = vrot.lane.b32.xlu0 %v1360, 32
    %v1366 = vpop.permute.xlu0 %1365
    %v1369 = vadd.f32 %v1349, %v1364
    %v1370 = vadd.f32 %v1350, %v1366
    %v1371 = vtanh.pop %v1369
    %v1372 = vtanh.pop %v1370
    %1375 = vrot.lane.b32.xlu0 %v1371, 64
    %v1376 = vpop.permute.xlu0 %1375
    %1377 = vrot.lane.b32.xlu0 %v1372, 64
    %v1378 = vpop.permute.xlu0 %1377
    %v1381 = vmul.f32 %v1347, %v1376
    %v1382 = vmul.f32 %v1348, %v1378
    %1385 = vrot.lane.b32.xlu0 %v1381, 32
    %v1386 = vpop.permute.xlu0 %1385
    %1387 = vrot.lane.b32.xlu0 %v1382, 32
    %v1388 = vpop.permute.xlu0 %1387
    %1391 = vmatprep.subr.mxu0 0.0
    %1392 = vmatpush1.msra.mxu0 %v1386
    %1393 = vmatprep.subr.mxu0 0.0
    %1394 = vmatpush1.msra.mxu0 %v1388
    %1395 = vmatprep.subr.mxu0 0.0
    %1396 = vmatpush1.msra.mxu0 0.0
    %1397 = vmatprep.subr.mxu0 0.0
    %1398 = vmatpush1.msra.mxu0 0.0
    %1399 = vmatprep.subr.mxu0 0.0
    %1400 = vmatpush1.msra.mxu0 0.0
    %1401 = vmatprep.subr.mxu0 0.0
    %1402 = vmatpush1.msra.mxu0 0.0
    %1403 = vmatprep.subr.mxu0 0.0
    %1404 = vmatpush1.msra.mxu0 0.0
    %1405 = vmatprep.subr.mxu0 0.0
    %1406 = vmatpush1.msra.mxu0 0.0
    %1407 = vmatprep.subr.mxu0 0.0
    %1408 = vmatpush1.msra.mxu0 0.0
    %1409 = vmatprep.subr.mxu0 0.0
    %1410 = vmatpush1.msra.mxu0 0.0
    %1411 = vmatprep.subr.mxu0 0.0
    %1412 = vmatpush1.msra.mxu0 0.0
    %1413 = vmatprep.subr.mxu0 0.0
    %1414 = vmatpush1.msra.mxu0 0.0
    %1415 = vmatprep.subr.mxu0 0.0
    %1416 = vmatpush1.msra.mxu0 0.0
    %1417 = vmatprep.subr.mxu0 0.0
    %1418 = vmatpush1.msra.mxu0 0.0
    %1419 = vmatprep.subr.mxu0 0.0
    %1420 = vmatpush1.msra.mxu0 0.0
    %1421 = vmatprep.subr.mxu0 0.0
    %1422 = vmatpush1.msra.mxu0 0.0
    %1423 = vmatprep.subr.mxu0 0.0
    %1424 = vmatpush1.msra.mxu0 0.0
    %1425 = vmatprep.subr.mxu0 0.0
    %1426 = vmatpush1.msra.mxu0 0.0
    %1427 = vmatprep.subr.mxu0 0.0
    %1428 = vmatpush1.msra.mxu0 0.0
    %1429 = vmatprep.subr.mxu0 0.0
    %1430 = vmatpush1.msra.mxu0 0.0
    %1431 = vmatprep.subr.mxu0 0.0
    %1432 = vmatpush1.msra.mxu0 0.0
    %1433 = vmatprep.subr.mxu0 0.0
    %1434 = vmatpush1.msra.mxu0 0.0
    %1435 = vmatprep.subr.mxu0 0.0
    %1436 = vmatpush1.msra.mxu0 0.0
    %1437 = vmatprep.subr.mxu0 0.0
    %1438 = vmatpush1.msra.mxu0 0.0
    %1439 = vmatprep.subr.mxu0 0.0
    %1440 = vmatpush1.msra.mxu0 0.0
    %1441 = vmatprep.subr.mxu0 0.0
    %1442 = vmatpush1.msra.mxu0 0.0
    %1443 = vmatprep.subr.mxu0 0.0
    %1444 = vmatpush1.msra.mxu0 0.0
    %1445 = vmatprep.subr.mxu0 0.0
    %1446 = vmatpush1.msra.mxu0 0.0
    %1447 = vmatprep.subr.mxu0 0.0
    %1448 = vmatpush1.msra.mxu0 0.0
    %1449 = vmatprep.subr.mxu0 0.0
    %1450 = vmatpush1.msra.mxu0 0.0
    %1451 = vmatprep.subr.mxu0 0.0
    %1452 = vmatpush1.msra.mxu0 0.0
    %1453 = vmatprep.subr.mxu0 0.0
    %1454 = vmatpush1.msra.mxu0 0.0
    %1455 = vmatprep.mubr.f32.mxu0 0.0
    %1456 = vmatmul.mubr.f32.gmra.mrb[0].mxu0 %v954
    %v1457 = vpop.f32.mrb[0].mxu0
    %v1458 = vadd.f32 0.0, %v1457
    %v1459 = vpop.f32.mrb[0].mxu0
    %1460 = vdwg.mxu0
    %v1461 = vld [vmem:[%s7 + $0x40] sm:$0xff]
    %v1462 = vld [vmem:[%s7 + $0x48] sm:$0xff]
    %v1463 = vld [vmem:[%s7 + $0x50] sm:$0xff]
    %v1464 = vld [vmem:[%s7 + $0x58] sm:$0xff]
    %v1465 = vld [vmem:[%s7 + $0x60] sm:$0xff]
    %v1466 = vld [vmem:[%s7 + $0x68] sm:$0xff]
    %v1467 = vld [vmem:[%s7 + $0x70] sm:$0xff]
    %v1468 = vld [vmem:[%s7 + $0x78] sm:$0xff]
    %v1470 = vsel %vm466, %v1458, 0
    %1472 = vmatprep.subr.mxu0 %v1462
    %1473 = vmatpush1.msra.mxu0 %v1461
    %1474 = vmatprep.subr.mxu0 %v1464
    %1475 = vmatpush1.msra.mxu0 %v1463
    %1476 = vmatprep.subr.mxu0 %v1466
    %1477 = vmatpush1.msra.mxu0 %v1465
    %1478 = vmatprep.subr.mxu0 %v1468
    %1479 = vmatpush1.msra.mxu0 %v1467
    %1480 = vmatprep.subr.mxu0 0.0
    %1481 = vmatpush1.msra.mxu0 0.0
    %1482 = vmatprep.subr.mxu0 0.0
    %1483 = vmatpush1.msra.mxu0 0.0
    %1484 = vmatprep.subr.mxu0 0.0
    %1485 = vmatpush1.msra.mxu0 0.0
    %1486 = vmatprep.subr.mxu0 0.0
    %1487 = vmatpush1.msra.mxu0 0.0
    %1488 = vmatprep.subr.mxu0 0.0
    %1489 = vmatpush1.msra.mxu0 0.0
    %1490 = vmatprep.subr.mxu0 0.0
    %1491 = vmatpush1.msra.mxu0 0.0
    %1492 = vmatprep.subr.mxu0 0.0
    %1493 = vmatpush1.msra.mxu0 0.0
    %1494 = vmatprep.subr.mxu0 0.0
    %1495 = vmatpush1.msra.mxu0 0.0
    %1496 = vmatprep.subr.mxu0 0.0
    %1497 = vmatpush1.msra.mxu0 0.0
    %1498 = vmatprep.subr.mxu0 0.0
    %1499 = vmatpush1.msra.mxu0 0.0
    %1500 = vmatprep.subr.mxu0 0.0
    %1501 = vmatpush1.msra.mxu0 0.0
    %1502 = vmatprep.subr.mxu0 0.0
    %1503 = vmatpush1.msra.mxu0 0.0
    %1504 = vmatprep.subr.mxu0 0.0
    %1505 = vmatpush1.msra.mxu0 0.0
    %1506 = vmatprep.subr.mxu0 0.0
    %1507 = vmatpush1.msra.mxu0 0.0
    %1508 = vmatprep.subr.mxu0 0.0
    %1509 = vmatpush1.msra.mxu0 0.0
    %1510 = vmatprep.subr.mxu0 0.0
    %1511 = vmatpush1.msra.mxu0 0.0
    %1512 = vmatprep.subr.mxu0 0.0
    %1513 = vmatpush1.msra.mxu0 0.0
    %1514 = vmatprep.subr.mxu0 0.0
    %1515 = vmatpush1.msra.mxu0 0.0
    %1516 = vmatprep.subr.mxu0 0.0
    %1517 = vmatpush1.msra.mxu0 0.0
    %1518 = vmatprep.subr.mxu0 0.0
    %1519 = vmatpush1.msra.mxu0 0.0
    %1520 = vmatprep.subr.mxu0 0.0
    %1521 = vmatpush1.msra.mxu0 0.0
    %1522 = vmatprep.subr.mxu0 0.0
    %1523 = vmatpush1.msra.mxu0 0.0
    %1524 = vmatprep.subr.mxu0 0.0
    %1525 = vmatpush1.msra.mxu0 0.0
    %1526 = vmatprep.subr.mxu0 0.0
    %1527 = vmatpush1.msra.mxu0 0.0
    %1528 = vmatprep.subr.mxu0 0.0
    %1529 = vmatpush1.msra.mxu0 0.0
    %1530 = vmatprep.subr.mxu0 0.0
    %1531 = vmatpush1.msra.mxu0 0.0
    %1532 = vmatprep.subr.mxu0 0.0
    %1533 = vmatpush1.msra.mxu0 0.0
    %1534 = vmatprep.subr.mxu0 0.0
    %1535 = vmatpush1.msra.mxu0 0.0
    %1536 = vmatprep.mubr.f32.mxu0 0.0
    %1537 = vmatmul.mubr.f32.gmra.mrb[0].mxu0 %v1470
    %v1538 = vpop.f32.mrb[0].mxu0
    %v1539 = vadd.f32 0.0, %v1538
    %v1540 = vpop.f32.mrb[0].mxu0
    %v1541 = vadd.f32 0.0, %v1540
    %1542 = vdwg.mxu0
    %v1544 = vsel %vm466, %v1023, 0
    %1546 = vmatprep.subr.mxu0 %v1027
    %1547 = vmatpush1.msra.mxu0 %v1026
    %1548 = vmatprep.subr.mxu0 %v1029
    %1549 = vmatpush1.msra.mxu0 %v1028
    %1550 = vmatprep.subr.mxu0 %v1031
    %1551 = vmatpush1.msra.mxu0 %v1030
    %1552 = vmatprep.subr.mxu0 %v1033
    %1553 = vmatpush1.msra.mxu0 %v1032
    %1554 = vmatprep.subr.mxu0 0.0
    %1555 = vmatpush1.msra.mxu0 0.0
    %1556 = vmatprep.subr.mxu0 0.0
    %1557 = vmatpush1.msra.mxu0 0.0
    %1558 = vmatprep.subr.mxu0 0.0
    %1559 = vmatpush1.msra.mxu0 0.0
    %1560 = vmatprep.subr.mxu0 0.0
    %1561 = vmatpush1.msra.mxu0 0.0
    %1562 = vmatprep.subr.mxu0 0.0
    %1563 = vmatpush1.msra.mxu0 0.0
    %1564 = vmatprep.subr.mxu0 0.0
    %1565 = vmatpush1.msra.mxu0 0.0
    %1566 = vmatprep.subr.mxu0 0.0
    %1567 = vmatpush1.msra.mxu0 0.0
    %1568 = vmatprep.subr.mxu0 0.0
    %1569 = vmatpush1.msra.mxu0 0.0
    %1570 = vmatprep.subr.mxu0 0.0
    %1571 = vmatpush1.msra.mxu0 0.0
    %1572 = vmatprep.subr.mxu0 0.0
    %1573 = vmatpush1.msra.mxu0 0.0
    %1574 = vmatprep.subr.mxu0 0.0
    %1575 = vmatpush1.msra.mxu0 0.0
    %1576 = vmatprep.subr.mxu0 0.0
    %1577 = vmatpush1.msra.mxu0 0.0
    %1578 = vmatprep.subr.mxu0 0.0
    %1579 = vmatpush1.msra.mxu0 0.0
    %1580 = vmatprep.subr.mxu0 0.0
    %1581 = vmatpush1.msra.mxu0 0.0
    %1582 = vmatprep.subr.mxu0 0.0
    %1583 = vmatpush1.msra.mxu0 0.0
    %1584 = vmatprep.subr.mxu0 0.0
    %1585 = vmatpush1.msra.mxu0 0.0
    %1586 = vmatprep.subr.mxu0 0.0
    %1587 = vmatpush1.msra.mxu0 0.0
    %1588 = vmatprep.subr.mxu0 0.0
    %1589 = vmatpush1.msra.mxu0 0.0
    %1590 = vmatprep.subr.mxu0 0.0
    %1591 = vmatpush1.msra.mxu0 0.0
    %1592 = vmatprep.subr.mxu0 0.0
    %1593 = vmatpush1.msra.mxu0 0.0
    %1594 = vmatprep.subr.mxu0 0.0
    %1595 = vmatpush1.msra.mxu0 0.0
    %1596 = vmatprep.subr.mxu0 0.0
    %1597 = vmatpush1.msra.mxu0 0.0
    %1598 = vmatprep.subr.mxu0 0.0
    %1599 = vmatpush1.msra.mxu0 0.0
    %1600 = vmatprep.subr.mxu0 0.0
    %1601 = vmatpush1.msra.mxu0 0.0
    %1602 = vmatprep.subr.mxu0 0.0
    %1603 = vmatpush1.msra.mxu0 0.0
    %1604 = vmatprep.subr.mxu0 0.0
    %1605 = vmatpush1.msra.mxu0 0.0
    %1606 = vmatprep.subr.mxu0 0.0
    %1607 = vmatpush1.msra.mxu0 0.0
    %1608 = vmatprep.subr.mxu0 0.0
    %1609 = vmatpush1.msra.mxu0 0.0
    %1610 = vmatprep.mubr.f32.mxu0 0.0
    %1611 = vmatmul.mubr.f32.gmra.mrb[0].mxu0 %v1544
    %v1612 = vpop.f32.mrb[0].mxu0
    %v1613 = vadd.f32 %v1539, %v1612
    %v1614 = vpop.f32.mrb[0].mxu0
    %v1615 = vadd.f32 %v1541, %v1614
    %1616 = vdwg.mxu0
    %v1617 = vld [vmem:[#allocation2 + $0x30] sm:$0xff]
    %v1618 = vld [vmem:[#allocation2 + $0x38] sm:$0xff]
    %1621 = vrot.lane.b32.xlu0 %v1173, 32
    %v1622 = vpop.permute.xlu0 %1621
    %1623 = vrot.lane.b32.xlu0 %v1174, 32
    %v1624 = vpop.permute.xlu0 %1623
    %v1625 = vsel %vm466, %v1622, 0
    %v1627 = vsel %vm466, %v1624, 0
    %1629 = vmatprep.subr.mxu0 0.0
    %1630 = vmatpush1.msra.mxu0 %v48
    %1631 = vmatprep.subr.mxu0 0.0
    %1632 = vmatpush1.msra.mxu0 %v49
    %1633 = vmatprep.subr.mxu0 0.0
    %1634 = vmatpush1.msra.mxu0 %v50
    %1635 = vmatprep.subr.mxu0 0.0
    %1636 = vmatpush1.msra.mxu0 %v51
    %1637 = vmatprep.subr.mxu0 0.0
    %1638 = vmatpush1.msra.mxu0 0.0
    %1639 = vmatprep.subr.mxu0 0.0
    %1640 = vmatpush1.msra.mxu0 0.0
    %1641 = vmatprep.subr.mxu0 0.0
    %1642 = vmatpush1.msra.mxu0 0.0
    %1643 = vmatprep.subr.mxu0 0.0
    %1644 = vmatpush1.msra.mxu0 0.0
    %1645 = vmatprep.subr.mxu0 0.0
    %1646 = vmatpush1.msra.mxu0 0.0
    %1647 = vmatprep.subr.mxu0 0.0
    %1648 = vmatpush1.msra.mxu0 0.0
    %1649 = vmatprep.subr.mxu0 0.0
    %1650 = vmatpush1.msra.mxu0 0.0
    %1651 = vmatprep.subr.mxu0 0.0
    %1652 = vmatpush1.msra.mxu0 0.0
    %1653 = vmatprep.subr.mxu0 0.0
    %1654 = vmatpush1.msra.mxu0 0.0
    %1655 = vmatprep.subr.mxu0 0.0
    %1656 = vmatpush1.msra.mxu0 0.0
    %1657 = vmatprep.subr.mxu0 0.0
    %1658 = vmatpush1.msra.mxu0 0.0
    %1659 = vmatprep.subr.mxu0 0.0
    %1660 = vmatpush1.msra.mxu0 0.0
    %1661 = vmatprep.subr.mxu0 0.0
    %1662 = vmatpush1.msra.mxu0 0.0
    %1663 = vmatprep.subr.mxu0 0.0
    %1664 = vmatpush1.msra.mxu0 0.0
    %1665 = vmatprep.subr.mxu0 0.0
    %1666 = vmatpush1.msra.mxu0 0.0
    %1667 = vmatprep.subr.mxu0 0.0
    %1668 = vmatpush1.msra.mxu0 0.0
    %1669 = vmatprep.subr.mxu0 0.0
    %1670 = vmatpush1.msra.mxu0 0.0
    %1671 = vmatprep.subr.mxu0 0.0
    %1672 = vmatpush1.msra.mxu0 0.0
    %1673 = vmatprep.subr.mxu0 0.0
    %1674 = vmatpush1.msra.mxu0 0.0
    %1675 = vmatprep.subr.mxu0 0.0
    %1676 = vmatpush1.msra.mxu0 0.0
    %1677 = vmatprep.subr.mxu0 0.0
    %1678 = vmatpush1.msra.mxu0 0.0
    %1679 = vmatprep.subr.mxu0 0.0
    %1680 = vmatpush1.msra.mxu0 0.0
    %1681 = vmatprep.subr.mxu0 0.0
    %1682 = vmatpush1.msra.mxu0 0.0
    %1683 = vmatprep.subr.mxu0 0.0
    %1684 = vmatpush1.msra.mxu0 0.0
    %1685 = vmatprep.subr.mxu0 0.0
    %1686 = vmatpush1.msra.mxu0 0.0
    %1687 = vmatprep.subr.mxu0 0.0
    %1688 = vmatpush1.msra.mxu0 0.0
    %1689 = vmatprep.subr.mxu0 0.0
    %1690 = vmatpush1.msra.mxu0 0.0
    %1691 = vmatprep.subr.mxu0 0.0
    %1692 = vmatpush1.msra.mxu0 0.0
    %1693 = vmatprep.mubr.f32.mxu0 0.0
    %1694 = vmatmul.mubr.f32.gmra.mrb[0].mxu0 %v1625
    %v1695 = vpop.f32.mrb[0].mxu0
    %v1696 = vadd.f32 0.0, %v1695
    %v1697 = vpop.f32.mrb[0].mxu0
    %1698 = vmatprep.mubr.f32.mxu0 0.0
    %1699 = vmatmul.mubr.f32.gmra.mrb[0].mxu0 %v1627
    %v1700 = vpop.f32.mrb[0].mxu0
    %v1701 = vadd.f32 0.0, %v1700
    %v1702 = vpop.f32.mrb[0].mxu0
    %1703 = vdwg.mxu0
    %v1704 = vadd.f32 %v1617, %v1696
    %v1705 = vadd.f32 %v1618, %v1701
    %v1706 = vmul.f32 %v1704, %v38
    %v1707 = vmul.f32 %v1705, %v38
    %v1708 = vxor.u32 %v1706, 2147483648
    %v1709 = vxor.u32 %v1707, 2147483648
    %v1710 = vmul.f32 %v1708, 1.442695
    %v1711 = vpow.pop %v1710
    %v1712 = vmul.f32 %v1709, 1.442695
    %v1713 = vpow.pop %v1712
    %v1714 = vadd.f32 %v1711, 1.0
    %v1715 = vadd.f32 %v1713, 1.0
    %v1716 = vrcp.pop %v1714
    %v1717 = vmul.f32 1.0, %v1716
    %v1718 = vrcp.pop %v1715
    %v1719 = vmul.f32 1.0, %v1718
    %v1720 = vmul.f32 %v1717, %v38
    %v1721 = vmul.f32 %v1719, %v38
    %v1722 = vadd.f32 %v1720, %v39
    %v1723 = vadd.f32 %v1721, %v39
    %v1724 = vmul.f32 %v1722, %v1161
    %v1725 = vmul.f32 %v1723, %v1162
    %1728 = vrot.lane.b32.xlu0 %v1722, 64
    %v1729 = vpop.permute.xlu0 %1728
    %1730 = vrot.lane.b32.xlu0 %v1723, 64
    %v1731 = vpop.permute.xlu0 %1730
    %v1734 = vmul.f32 %v1722, %v1729
    %v1735 = vmul.f32 %v1723, %v1731
    %1738 = vrot.lane.b32.xlu0 %v1734, 32
    %v1739 = vpop.permute.xlu0 %1738
    %1740 = vrot.lane.b32.xlu0 %v1735, 32
    %v1741 = vpop.permute.xlu0 %1740
    %v1744 = vadd.f32 %v1724, %v1739
    %v1745 = vadd.f32 %v1725, %v1741
    %v1746 = vtanh.pop %v1744
    %v1747 = vtanh.pop %v1745
    %1750 = vrot.lane.b32.xlu0 %v1746, 64
    %v1751 = vpop.permute.xlu0 %1750
    %1752 = vrot.lane.b32.xlu0 %v1747, 64
    %v1753 = vpop.permute.xlu0 %1752
    %v1756 = vmul.f32 %v1722, %v1751
    %v1757 = vmul.f32 %v1723, %v1753
    %1758 = vmatprep.subr.mxu0 0.0
    %1759 = vmatpush1.msra.mxu0 %v53
    %1760 = vmatprep.subr.mxu0 0.0
    %1761 = vmatpush1.msra.mxu0 %v54
    %1762 = vmatprep.subr.mxu0 0.0
    %1763 = vmatpush1.msra.mxu0 %v55
    %1764 = vmatprep.subr.mxu0 0.0
    %1765 = vmatpush1.msra.mxu0 %v56
    %1766 = vmatprep.subr.mxu0 0.0
    %1767 = vmatpush1.msra.mxu0 0.0
    %1768 = vmatprep.subr.mxu0 0.0
    %1769 = vmatpush1.msra.mxu0 0.0
    %1770 = vmatprep.subr.mxu0 0.0
    %1771 = vmatpush1.msra.mxu0 0.0
    %1772 = vmatprep.subr.mxu0 0.0
    %1773 = vmatpush1.msra.mxu0 0.0
    %1774 = vmatprep.subr.mxu0 0.0
    %1775 = vmatpush1.msra.mxu0 0.0
    %1776 = vmatprep.subr.mxu0 0.0
    %1777 = vmatpush1.msra.mxu0 0.0
    %1778 = vmatprep.subr.mxu0 0.0
    %1779 = vmatpush1.msra.mxu0 0.0
    %1780 = vmatprep.subr.mxu0 0.0
    %1781 = vmatpush1.msra.mxu0 0.0
    %1782 = vmatprep.subr.mxu0 0.0
    %1783 = vmatpush1.msra.mxu0 0.0
    %1784 = vmatprep.subr.mxu0 0.0
    %1785 = vmatpush1.msra.mxu0 0.0
    %1786 = vmatprep.subr.mxu0 0.0
    %1787 = vmatpush1.msra.mxu0 0.0
    %1788 = vmatprep.subr.mxu0 0.0
    %1789 = vmatpush1.msra.mxu0 0.0
    %1790 = vmatprep.subr.mxu0 0.0
    %1791 = vmatpush1.msra.mxu0 0.0
    %1792 = vmatprep.subr.mxu0 0.0
    %1793 = vmatpush1.msra.mxu0 0.0
    %1794 = vmatprep.subr.mxu0 0.0
    %1795 = vmatpush1.msra.mxu0 0.0
    %1796 = vmatprep.subr.mxu0 0.0
    %1797 = vmatpush1.msra.mxu0 0.0
    %1798 = vmatprep.subr.mxu0 0.0
    %1799 = vmatpush1.msra.mxu0 0.0
    %1800 = vmatprep.subr.mxu0 0.0
    %1801 = vmatpush1.msra.mxu0 0.0
    %1802 = vmatprep.subr.mxu0 0.0
    %1803 = vmatpush1.msra.mxu0 0.0
    %1804 = vmatprep.subr.mxu0 0.0
    %1805 = vmatpush1.msra.mxu0 0.0
    %1806 = vmatprep.subr.mxu0 0.0
    %1807 = vmatpush1.msra.mxu0 0.0
    %1808 = vmatprep.subr.mxu0 0.0
    %1809 = vmatpush1.msra.mxu0 0.0
    %1810 = vmatprep.subr.mxu0 0.0
    %1811 = vmatpush1.msra.mxu0 0.0
    %1812 = vmatprep.subr.mxu0 0.0
    %1813 = vmatpush1.msra.mxu0 0.0
    %1814 = vmatprep.subr.mxu0 0.0
    %1815 = vmatpush1.msra.mxu0 0.0
    %1816 = vmatprep.subr.mxu0 0.0
    %1817 = vmatpush1.msra.mxu0 0.0
    %1818 = vmatprep.subr.mxu0 0.0
    %1819 = vmatpush1.msra.mxu0 0.0
    %1820 = vmatprep.subr.mxu0 0.0
    %1821 = vmatpush1.msra.mxu0 0.0
    %1822 = vmatprep.mubr.f32.mxu0 0.0
    %1823 = vmatmul.mubr.f32.gmra.mrb[0].mxu0 %v1625
    %v1824 = vpop.f32.mrb[0].mxu0
    %v1825 = vadd.f32 %v66, %v1824
    %v1826 = vpop.f32.mrb[0].mxu0
    %1827 = vmatprep.mubr.f32.mxu0 0.0
    %1828 = vmatmul.mubr.f32.gmra.mrb[0].mxu0 %v1627
    %v1829 = vpop.f32.mrb[0].mxu0
    %v1830 = vadd.f32 %v66, %v1829
    %v1831 = vpop.f32.mrb[0].mxu0
    %1832 = vdwg.mxu0
    %v1833 = vsel %vm466, %v1386, 0
    %v1835 = vsel %vm466, %v1388, 0
    %1837 = vmatprep.subr.mxu0 0.0
    %1838 = vmatpush1.msra.mxu0 %v57
    %1839 = vmatprep.subr.mxu0 0.0
    %1840 = vmatpush1.msra.mxu0 %v58
    %1841 = vmatprep.subr.mxu0 0.0
    %1842 = vmatpush1.msra.mxu0 %v59
    %1843 = vmatprep.subr.mxu0 0.0
    %1844 = vmatpush1.msra.mxu0 %v60
    %1845 = vmatprep.subr.mxu0 0.0
    %1846 = vmatpush1.msra.mxu0 0.0
    %1847 = vmatprep.subr.mxu0 0.0
    %1848 = vmatpush1.msra.mxu0 0.0
    %1849 = vmatprep.subr.mxu0 0.0
    %1850 = vmatpush1.msra.mxu0 0.0
    %1851 = vmatprep.subr.mxu0 0.0
    %1852 = vmatpush1.msra.mxu0 0.0
    %1853 = vmatprep.subr.mxu0 0.0
    %1854 = vmatpush1.msra.mxu0 0.0
    %1855 = vmatprep.subr.mxu0 0.0
    %1856 = vmatpush1.msra.mxu0 0.0
    %1857 = vmatprep.subr.mxu0 0.0
    %1858 = vmatpush1.msra.mxu0 0.0
    %1859 = vmatprep.subr.mxu0 0.0
    %1860 = vmatpush1.msra.mxu0 0.0
    %1861 = vmatprep.subr.mxu0 0.0
    %1862 = vmatpush1.msra.mxu0 0.0
    %1863 = vmatprep.subr.mxu0 0.0
    %1864 = vmatpush1.msra.mxu0 0.0
    %1865 = vmatprep.subr.mxu0 0.0
    %1866 = vmatpush1.msra.mxu0 0.0
    %1867 = vmatprep.subr.mxu0 0.0
    %1868 = vmatpush1.msra.mxu0 0.0
    %1869 = vmatprep.subr.mxu0 0.0
    %1870 = vmatpush1.msra.mxu0 0.0
    %1871 = vmatprep.subr.mxu0 0.0
    %1872 = vmatpush1.msra.mxu0 0.0
    %1873 = vmatprep.subr.mxu0 0.0
    %1874 = vmatpush1.msra.mxu0 0.0
    %1875 = vmatprep.subr.mxu0 0.0
    %1876 = vmatpush1.msra.mxu0 0.0
    %1877 = vmatprep.subr.mxu0 0.0
    %1878 = vmatpush1.msra.mxu0 0.0
    %1879 = vmatprep.subr.mxu0 0.0
    %1880 = vmatpush1.msra.mxu0 0.0
    %1881 = vmatprep.subr.mxu0 0.0
    %1882 = vmatpush1.msra.mxu0 0.0
    %1883 = vmatprep.subr.mxu0 0.0
    %1884 = vmatpush1.msra.mxu0 0.0
    %1885 = vmatprep.subr.mxu0 0.0
    %1886 = vmatpush1.msra.mxu0 0.0
    %1887 = vmatprep.subr.mxu0 0.0
    %1888 = vmatpush1.msra.mxu0 0.0
    %1889 = vmatprep.subr.mxu0 0.0
    %1890 = vmatpush1.msra.mxu0 0.0
    %1891 = vmatprep.subr.mxu0 0.0
    %1892 = vmatpush1.msra.mxu0 0.0
    %1893 = vmatprep.subr.mxu0 0.0
    %1894 = vmatpush1.msra.mxu0 0.0
    %1895 = vmatprep.subr.mxu0 0.0
    %1896 = vmatpush1.msra.mxu0 0.0
    %1897 = vmatprep.subr.mxu0 0.0
    %1898 = vmatpush1.msra.mxu0 0.0
    %1899 = vmatprep.subr.mxu0 0.0
    %1900 = vmatpush1.msra.mxu0 0.0
    %1901 = vmatprep.mubr.f32.mxu0 0.0
    %1902 = vmatmul.mubr.f32.gmra.mrb[0].mxu0 %v1833
    %v1903 = vpop.f32.mrb[0].mxu0
    %v1904 = vadd.f32 0.0, %v1903
    %v1905 = vpop.f32.mrb[0].mxu0
    %1906 = vmatprep.mubr.f32.mxu0 0.0
    %1907 = vmatmul.mubr.f32.gmra.mrb[0].mxu0 %v1835
    %v1908 = vpop.f32.mrb[0].mxu0
    %v1909 = vadd.f32 0.0, %v1908
    %v1910 = vpop.f32.mrb[0].mxu0
    %1911 = vdwg.mxu0
    %v1912 = vadd.f32 %v1825, %v1904
    %v1913 = vadd.f32 %v1830, %v1909
    %v1914 = vmul.f32 %v1912, %v38
    %v1915 = vmul.f32 %v1913, %v38
    %v1916 = vxor.u32 %v1914, 2147483648
    %v1917 = vxor.u32 %v1915, 2147483648
    %v1918 = vmul.f32 %v1916, 1.442695
    %v1919 = vpow.pop %v1918
    %v1920 = vmul.f32 %v1917, 1.442695
    %v1921 = vpow.pop %v1920
    %v1922 = vadd.f32 %v1919, 1.0
    %v1923 = vadd.f32 %v1921, 1.0
    %v1924 = vrcp.pop %v1922
    %v1925 = vmul.f32 1.0, %v1924
    %v1926 = vrcp.pop %v1923
    %v1927 = vmul.f32 1.0, %v1926
    %v1928 = vmul.f32 %v1925, %v38
    %v1929 = vmul.f32 %v1927, %v38
    %v1930 = vadd.f32 %v1928, %v39
    %v1931 = vadd.f32 %v1929, %v39
    %v1932 = vmul.f32 %v1930, %v1369
    %v1933 = vmul.f32 %v1931, %v1370
    %1936 = vrot.lane.b32.xlu0 %v1930, 64
    %v1937 = vpop.permute.xlu0 %1936
    %1938 = vrot.lane.b32.xlu0 %v1931, 64
    %v1939 = vpop.permute.xlu0 %1938
    %v1942 = vmul.f32 %v1930, %v1937
    %v1943 = vmul.f32 %v1931, %v1939
    %1946 = vrot.lane.b32.xlu0 %v1942, 32
    %v1947 = vpop.permute.xlu0 %1946
    %1948 = vrot.lane.b32.xlu0 %v1943, 32
    %v1949 = vpop.permute.xlu0 %1948
    %v1952 = vadd.f32 %v1932, %v1947
    %v1953 = vadd.f32 %v1933, %v1949
    %v1954 = vtanh.pop %v1952
    %v1955 = vtanh.pop %v1953
    %1958 = vrot.lane.b32.xlu0 %v1954, 64
    %v1959 = vpop.permute.xlu0 %1958
    %1960 = vrot.lane.b32.xlu0 %v1955, 64
    %v1961 = vpop.permute.xlu0 %1960
    %v1964 = vmul.f32 %v1930, %v1959
    %v1965 = vmul.f32 %v1931, %v1961
    %1968 = vrot.lane.b32.xlu0 %v1964, 32
    %v1969 = vpop.permute.xlu0 %1968
    %1970 = vrot.lane.b32.xlu0 %v1965, 32
    %v1971 = vpop.permute.xlu0 %1970
    %1974 = vmatprep.subr.mxu0 0.0
    %1975 = vmatpush1.msra.mxu0 %v1969
    %1976 = vmatprep.subr.mxu0 0.0
    %1977 = vmatpush1.msra.mxu0 %v1971
    %1978 = vmatprep.subr.mxu0 0.0
    %1979 = vmatpush1.msra.mxu0 0.0
    %1980 = vmatprep.subr.mxu0 0.0
    %1981 = vmatpush1.msra.mxu0 0.0
    %1982 = vmatprep.subr.mxu0 0.0
    %1983 = vmatpush1.msra.mxu0 0.0
    %1984 = vmatprep.subr.mxu0 0.0
    %1985 = vmatpush1.msra.mxu0 0.0
    %1986 = vmatprep.subr.mxu0 0.0
    %1987 = vmatpush1.msra.mxu0 0.0
    %1988 = vmatprep.subr.mxu0 0.0
    %1989 = vmatpush1.msra.mxu0 0.0
    %1990 = vmatprep.subr.mxu0 0.0
    %1991 = vmatpush1.msra.mxu0 0.0
    %1992 = vmatprep.subr.mxu0 0.0
    %1993 = vmatpush1.msra.mxu0 0.0
    %1994 = vmatprep.subr.mxu0 0.0
    %1995 = vmatpush1.msra.mxu0 0.0
    %1996 = vmatprep.subr.mxu0 0.0
    %1997 = vmatpush1.msra.mxu0 0.0
    %1998 = vmatprep.subr.mxu0 0.0
    %1999 = vmatpush1.msra.mxu0 0.0
    %2000 = vmatprep.subr.mxu0 0.0
    %2001 = vmatpush1.msra.mxu0 0.0
    %2002 = vmatprep.subr.mxu0 0.0
    %2003 = vmatpush1.msra.mxu0 0.0
    %2004 = vmatprep.subr.mxu0 0.0
    %2005 = vmatpush1.msra.mxu0 0.0
    %2006 = vmatprep.subr.mxu0 0.0
    %2007 = vmatpush1.msra.mxu0 0.0
    %2008 = vmatprep.subr.mxu0 0.0
    %2009 = vmatpush1.msra.mxu0 0.0
    %2010 = vmatprep.subr.mxu0 0.0
    %2011 = vmatpush1.msra.mxu0 0.0
    %2012 = vmatprep.subr.mxu0 0.0
    %2013 = vmatpush1.msra.mxu0 0.0
    %2014 = vmatprep.subr.mxu0 0.0
    %2015 = vmatpush1.msra.mxu0 0.0
    %2016 = vmatprep.subr.mxu0 0.0
    %2017 = vmatpush1.msra.mxu0 0.0
    %2018 = vmatprep.subr.mxu0 0.0
    %2019 = vmatpush1.msra.mxu0 0.0
    %2020 = vmatprep.subr.mxu0 0.0
    %2021 = vmatpush1.msra.mxu0 0.0
    %2022 = vmatprep.subr.mxu0 0.0
    %2023 = vmatpush1.msra.mxu0 0.0
    %2024 = vmatprep.subr.mxu0 0.0
    %2025 = vmatpush1.msra.mxu0 0.0
    %2026 = vmatprep.subr.mxu0 0.0
    %2027 = vmatpush1.msra.mxu0 0.0
    %2028 = vmatprep.subr.mxu0 0.0
    %2029 = vmatpush1.msra.mxu0 0.0
    %2030 = vmatprep.subr.mxu0 0.0
    %2031 = vmatpush1.msra.mxu0 0.0
    %2032 = vmatprep.subr.mxu0 0.0
    %2033 = vmatpush1.msra.mxu0 0.0
    %2034 = vmatprep.subr.mxu0 0.0
    %2035 = vmatpush1.msra.mxu0 0.0
    %2036 = vmatprep.subr.mxu0 0.0
    %2037 = vmatpush1.msra.mxu0 0.0
    %2038 = vmatprep.mubr.f32.mxu0 0.0
    %2039 = vmatmul.mubr.f32.gmra.mrb[0].mxu0 %v954
    %v2040 = vpop.f32.mrb[0].mxu0
    %v2041 = vadd.f32 0.0, %v2040
    %v2042 = vpop.f32.mrb[0].mxu0
    %2043 = vdwg.mxu0
    %v2044 = vld [vmem:[%s7 + $0x80] sm:$0xff]
    %v2045 = vld [vmem:[%s7 + $0x88] sm:$0xff]
    %v2046 = vld [vmem:[%s7 + $0x90] sm:$0xff]
    %v2047 = vld [vmem:[%s7 + $0x98] sm:$0xff]
    %v2048 = vld [vmem:[%s7 + $0xa0] sm:$0xff]
    %v2049 = vld [vmem:[%s7 + $0xa8] sm:$0xff]
    %v2050 = vld [vmem:[%s7 + $0xb0] sm:$0xff]
    %v2051 = vld [vmem:[%s7 + $0xb8] sm:$0xff]
    %v2053 = vsel %vm466, %v2041, 0
    %2055 = vmatprep.subr.mxu0 %v2045
    %2056 = vmatpush1.msra.mxu0 %v2044
    %2057 = vmatprep.subr.mxu0 %v2047
    %2058 = vmatpush1.msra.mxu0 %v2046
    %2059 = vmatprep.subr.mxu0 %v2049
    %2060 = vmatpush1.msra.mxu0 %v2048
    %2061 = vmatprep.subr.mxu0 %v2051
    %2062 = vmatpush1.msra.mxu0 %v2050
    %2063 = vmatprep.subr.mxu0 0.0
    %2064 = vmatpush1.msra.mxu0 0.0
    %2065 = vmatprep.subr.mxu0 0.0
    %2066 = vmatpush1.msra.mxu0 0.0
    %2067 = vmatprep.subr.mxu0 0.0
    %2068 = vmatpush1.msra.mxu0 0.0
    %2069 = vmatprep.subr.mxu0 0.0
    %2070 = vmatpush1.msra.mxu0 0.0
    %2071 = vmatprep.subr.mxu0 0.0
    %2072 = vmatpush1.msra.mxu0 0.0
    %2073 = vmatprep.subr.mxu0 0.0
    %2074 = vmatpush1.msra.mxu0 0.0
    %2075 = vmatprep.subr.mxu0 0.0
    %2076 = vmatpush1.msra.mxu0 0.0
    %2077 = vmatprep.subr.mxu0 0.0
    %2078 = vmatpush1.msra.mxu0 0.0
    %2079 = vmatprep.subr.mxu0 0.0
    %2080 = vmatpush1.msra.mxu0 0.0
    %2081 = vmatprep.subr.mxu0 0.0
    %2082 = vmatpush1.msra.mxu0 0.0
    %2083 = vmatprep.subr.mxu0 0.0
    %2084 = vmatpush1.msra.mxu0 0.0
    %2085 = vmatprep.subr.mxu0 0.0
    %2086 = vmatpush1.msra.mxu0 0.0
    %2087 = vmatprep.subr.mxu0 0.0
    %2088 = vmatpush1.msra.mxu0 0.0
    %2089 = vmatprep.subr.mxu0 0.0
    %2090 = vmatpush1.msra.mxu0 0.0
    %2091 = vmatprep.subr.mxu0 0.0
    %2092 = vmatpush1.msra.mxu0 0.0
    %2093 = vmatprep.subr.mxu0 0.0
    %2094 = vmatpush1.msra.mxu0 0.0
    %2095 = vmatprep.subr.mxu0 0.0
    %2096 = vmatpush1.msra.mxu0 0.0
    %2097 = vmatprep.subr.mxu0 0.0
    %2098 = vmatpush1.msra.mxu0 0.0
    %2099 = vmatprep.subr.mxu0 0.0
    %2100 = vmatpush1.msra.mxu0 0.0
    %2101 = vmatprep.subr.mxu0 0.0
    %2102 = vmatpush1.msra.mxu0 0.0
    %2103 = vmatprep.subr.mxu0 0.0
    %2104 = vmatpush1.msra.mxu0 0.0
    %2105 = vmatprep.subr.mxu0 0.0
    %2106 = vmatpush1.msra.mxu0 0.0
    %2107 = vmatprep.subr.mxu0 0.0
    %2108 = vmatpush1.msra.mxu0 0.0
    %2109 = vmatprep.subr.mxu0 0.0
    %2110 = vmatpush1.msra.mxu0 0.0
    %2111 = vmatprep.subr.mxu0 0.0
    %2112 = vmatpush1.msra.mxu0 0.0
    %2113 = vmatprep.subr.mxu0 0.0
    %2114 = vmatpush1.msra.mxu0 0.0
    %2115 = vmatprep.subr.mxu0 0.0
    %2116 = vmatpush1.msra.mxu0 0.0
    %2117 = vmatprep.subr.mxu0 0.0
    %2118 = vmatpush1.msra.mxu0 0.0
    %2119 = vmatprep.mubr.f32.mxu0 0.0
    %2120 = vmatmul.mubr.f32.gmra.mrb[0].mxu0 %v2053
    %v2121 = vpop.f32.mrb[0].mxu0
    %v2122 = vadd.f32 0.0, %v2121
    %v2123 = vpop.f32.mrb[0].mxu0
    %v2124 = vadd.f32 0.0, %v2123
    %2125 = vdwg.mxu0
    %v2126 = vadd.f32 %v1613, %v2122
    %v2127 = vadd.f32 %v1615, %v2124
    %v2128 = vld [vmem:[#allocation2 + $0x40] sm:$0xff]
    %v2129 = vld [vmem:[#allocation2 + $0x48] sm:$0xff]
    %2132 = vrot.lane.b32.xlu0 %v1756, 32
    %v2133 = vpop.permute.xlu0 %2132
    %2134 = vrot.lane.b32.xlu0 %v1757, 32
    %v2135 = vpop.permute.xlu0 %2134
    %v2136 = vsel %vm466, %v2133, 0
    %v2138 = vsel %vm466, %v2135, 0
    %2140 = vmatprep.subr.mxu0 0.0
    %2141 = vmatpush1.msra.mxu0 %v48
    %2142 = vmatprep.subr.mxu0 0.0
    %2143 = vmatpush1.msra.mxu0 %v49
    %2144 = vmatprep.subr.mxu0 0.0
    %2145 = vmatpush1.msra.mxu0 %v50
    %2146 = vmatprep.subr.mxu0 0.0
    %2147 = vmatpush1.msra.mxu0 %v51
    %2148 = vmatprep.subr.mxu0 0.0
    %2149 = vmatpush1.msra.mxu0 0.0
    %2150 = vmatprep.subr.mxu0 0.0
    %2151 = vmatpush1.msra.mxu0 0.0
    %2152 = vmatprep.subr.mxu0 0.0
    %2153 = vmatpush1.msra.mxu0 0.0
    %2154 = vmatprep.subr.mxu0 0.0
    %2155 = vmatpush1.msra.mxu0 0.0
    %2156 = vmatprep.subr.mxu0 0.0
    %2157 = vmatpush1.msra.mxu0 0.0
    %2158 = vmatprep.subr.mxu0 0.0
    %2159 = vmatpush1.msra.mxu0 0.0
    %2160 = vmatprep.subr.mxu0 0.0
    %2161 = vmatpush1.msra.mxu0 0.0
    %2162 = vmatprep.subr.mxu0 0.0
    %2163 = vmatpush1.msra.mxu0 0.0
    %2164 = vmatprep.subr.mxu0 0.0
    %2165 = vmatpush1.msra.mxu0 0.0
    %2166 = vmatprep.subr.mxu0 0.0
    %2167 = vmatpush1.msra.mxu0 0.0
    %2168 = vmatprep.subr.mxu0 0.0
    %2169 = vmatpush1.msra.mxu0 0.0
    %2170 = vmatprep.subr.mxu0 0.0
    %2171 = vmatpush1.msra.mxu0 0.0
    %2172 = vmatprep.subr.mxu0 0.0
    %2173 = vmatpush1.msra.mxu0 0.0
    %2174 = vmatprep.subr.mxu0 0.0
    %2175 = vmatpush1.msra.mxu0 0.0
    %2176 = vmatprep.subr.mxu0 0.0
    %2177 = vmatpush1.msra.mxu0 0.0
    %2178 = vmatprep.subr.mxu0 0.0
    %2179 = vmatpush1.msra.mxu0 0.0
    %2180 = vmatprep.subr.mxu0 0.0
    %2181 = vmatpush1.msra.mxu0 0.0
    %2182 = vmatprep.subr.mxu0 0.0
    %2183 = vmatpush1.msra.mxu0 0.0
    %2184 = vmatprep.subr.mxu0 0.0
    %2185 = vmatpush1.msra.mxu0 0.0
    %2186 = vmatprep.subr.mxu0 0.0
    %2187 = vmatpush1.msra.mxu0 0.0
    %2188 = vmatprep.subr.mxu0 0.0
    %2189 = vmatpush1.msra.mxu0 0.0
    %2190 = vmatprep.subr.mxu0 0.0
    %2191 = vmatpush1.msra.mxu0 0.0
    %2192 = vmatprep.subr.mxu0 0.0
    %2193 = vmatpush1.msra.mxu0 0.0
    %2194 = vmatprep.subr.mxu0 0.0
    %2195 = vmatpush1.msra.mxu0 0.0
    %2196 = vmatprep.subr.mxu0 0.0
    %2197 = vmatpush1.msra.mxu0 0.0
    %2198 = vmatprep.subr.mxu0 0.0
    %2199 = vmatpush1.msra.mxu0 0.0
    %2200 = vmatprep.subr.mxu0 0.0
    %2201 = vmatpush1.msra.mxu0 0.0
    %2202 = vmatprep.subr.mxu0 0.0
    %2203 = vmatpush1.msra.mxu0 0.0
    %2204 = vmatprep.mubr.f32.mxu0 0.0
    %2205 = vmatmul.mubr.f32.gmra.mrb[0].mxu0 %v2136
    %v2206 = vpop.f32.mrb[0].mxu0
    %v2207 = vadd.f32 0.0, %v2206
    %v2208 = vpop.f32.mrb[0].mxu0
    %2209 = vmatprep.mubr.f32.mxu0 0.0
    %2210 = vmatmul.mubr.f32.gmra.mrb[0].mxu0 %v2138
    %v2211 = vpop.f32.mrb[0].mxu0
    %v2212 = vadd.f32 0.0, %v2211
    %v2213 = vpop.f32.mrb[0].mxu0
    %2214 = vdwg.mxu0
    %v2215 = vadd.f32 %v2128, %v2207
    %v2216 = vadd.f32 %v2129, %v2212
    %v2217 = vmul.f32 %v2215, %v38
    %v2218 = vmul.f32 %v2216, %v38
    %v2219 = vxor.u32 %v2217, 2147483648
    %v2220 = vxor.u32 %v2218, 2147483648
    %v2221 = vmul.f32 %v2219, 1.442695
    %v2222 = vpow.pop %v2221
    %v2223 = vmul.f32 %v2220, 1.442695
    %v2224 = vpow.pop %v2223
    %v2225 = vadd.f32 %v2222, 1.0
    %v2226 = vadd.f32 %v2224, 1.0
    %v2227 = vrcp.pop %v2225
    %v2228 = vmul.f32 1.0, %v2227
    %v2229 = vrcp.pop %v2226
    %v2230 = vmul.f32 1.0, %v2229
    %v2231 = vmul.f32 %v2228, %v38
    %v2232 = vmul.f32 %v2230, %v38
    %v2233 = vadd.f32 %v2231, %v39
    %v2234 = vadd.f32 %v2232, %v39
    %v2235 = vmul.f32 %v2233, %v1744
    %v2236 = vmul.f32 %v2234, %v1745
    %2239 = vrot.lane.b32.xlu0 %v2233, 64
    %v2240 = vpop.permute.xlu0 %2239
    %2241 = vrot.lane.b32.xlu0 %v2234, 64
    %v2242 = vpop.permute.xlu0 %2241
    %v2245 = vmul.f32 %v2233, %v2240
    %v2246 = vmul.f32 %v2234, %v2242
    %2249 = vrot.lane.b32.xlu0 %v2245, 32
    %v2250 = vpop.permute.xlu0 %2249
    %2251 = vrot.lane.b32.xlu0 %v2246, 32
    %v2252 = vpop.permute.xlu0 %2251
    %v2255 = vadd.f32 %v2235, %v2250
    %v2256 = vadd.f32 %v2236, %v2252
    %v2257 = vtanh.pop %v2255
    %v2258 = vtanh.pop %v2256
    %2261 = vrot.lane.b32.xlu0 %v2257, 64
    %v2262 = vpop.permute.xlu0 %2261
    %2263 = vrot.lane.b32.xlu0 %v2258, 64
    %v2264 = vpop.permute.xlu0 %2263
    %v2267 = vmul.f32 %v2233, %v2262
    %v2268 = vmul.f32 %v2234, %v2264
    %2269 = vmatprep.subr.mxu0 0.0
    %2270 = vmatpush1.msra.mxu0 %v53
    %2271 = vmatprep.subr.mxu0 0.0
    %2272 = vmatpush1.msra.mxu0 %v54
    %2273 = vmatprep.subr.mxu0 0.0
    %2274 = vmatpush1.msra.mxu0 %v55
    %2275 = vmatprep.subr.mxu0 0.0
    %2276 = vmatpush1.msra.mxu0 %v56
    %2277 = vmatprep.subr.mxu0 0.0
    %2278 = vmatpush1.msra.mxu0 0.0
    %2279 = vmatprep.subr.mxu0 0.0
    %2280 = vmatpush1.msra.mxu0 0.0
    %2281 = vmatprep.subr.mxu0 0.0
    %2282 = vmatpush1.msra.mxu0 0.0
    %2283 = vmatprep.subr.mxu0 0.0
    %2284 = vmatpush1.msra.mxu0 0.0
    %2285 = vmatprep.subr.mxu0 0.0
    %2286 = vmatpush1.msra.mxu0 0.0
    %2287 = vmatprep.subr.mxu0 0.0
    %2288 = vmatpush1.msra.mxu0 0.0
    %2289 = vmatprep.subr.mxu0 0.0
    %2290 = vmatpush1.msra.mxu0 0.0
    %2291 = vmatprep.subr.mxu0 0.0
    %2292 = vmatpush1.msra.mxu0 0.0
    %2293 = vmatprep.subr.mxu0 0.0
    %2294 = vmatpush1.msra.mxu0 0.0
    %2295 = vmatprep.subr.mxu0 0.0
    %2296 = vmatpush1.msra.mxu0 0.0
    %2297 = vmatprep.subr.mxu0 0.0
    %2298 = vmatpush1.msra.mxu0 0.0
    %2299 = vmatprep.subr.mxu0 0.0
    %2300 = vmatpush1.msra.mxu0 0.0
    %2301 = vmatprep.subr.mxu0 0.0
    %2302 = vmatpush1.msra.mxu0 0.0
    %2303 = vmatprep.subr.mxu0 0.0
    %2304 = vmatpush1.msra.mxu0 0.0
    %2305 = vmatprep.subr.mxu0 0.0
    %2306 = vmatpush1.msra.mxu0 0.0
    %2307 = vmatprep.subr.mxu0 0.0
    %2308 = vmatpush1.msra.mxu0 0.0
    %2309 = vmatprep.subr.mxu0 0.0
    %2310 = vmatpush1.msra.mxu0 0.0
    %2311 = vmatprep.subr.mxu0 0.0
    %2312 = vmatpush1.msra.mxu0 0.0
    %2313 = vmatprep.subr.mxu0 0.0
    %2314 = vmatpush1.msra.mxu0 0.0
    %2315 = vmatprep.subr.mxu0 0.0
    %2316 = vmatpush1.msra.mxu0 0.0
    %2317 = vmatprep.subr.mxu0 0.0
    %2318 = vmatpush1.msra.mxu0 0.0
    %2319 = vmatprep.subr.mxu0 0.0
    %2320 = vmatpush1.msra.mxu0 0.0
    %2321 = vmatprep.subr.mxu0 0.0
    %2322 = vmatpush1.msra.mxu0 0.0
    %2323 = vmatprep.subr.mxu0 0.0
    %2324 = vmatpush1.msra.mxu0 0.0
    %2325 = vmatprep.subr.mxu0 0.0
    %2326 = vmatpush1.msra.mxu0 0.0
    %2327 = vmatprep.subr.mxu0 0.0
    %2328 = vmatpush1.msra.mxu0 0.0
    %2329 = vmatprep.subr.mxu0 0.0
    %2330 = vmatpush1.msra.mxu0 0.0
    %2331 = vmatprep.subr.mxu0 0.0
    %2332 = vmatpush1.msra.mxu0 0.0
    %2333 = vmatprep.mubr.f32.mxu0 0.0
    %2334 = vmatmul.mubr.f32.gmra.mrb[0].mxu0 %v2136
    %v2335 = vpop.f32.mrb[0].mxu0
    %v2336 = vadd.f32 %v66, %v2335
    %v2337 = vpop.f32.mrb[0].mxu0
    %2338 = vmatprep.mubr.f32.mxu0 0.0
    %2339 = vmatmul.mubr.f32.gmra.mrb[0].mxu0 %v2138
    %v2340 = vpop.f32.mrb[0].mxu0
    %v2341 = vadd.f32 %v66, %v2340
    %v2342 = vpop.f32.mrb[0].mxu0
    %2343 = vdwg.mxu0
    %v2344 = vsel %vm466, %v1969, 0
    %v2346 = vsel %vm466, %v1971, 0
    %2348 = vmatprep.subr.mxu0 0.0
    %2349 = vmatpush1.msra.mxu0 %v57
    %2350 = vmatprep.subr.mxu0 0.0
    %2351 = vmatpush1.msra.mxu0 %v58
    %2352 = vmatprep.subr.mxu0 0.0
    %2353 = vmatpush1.msra.mxu0 %v59
    %2354 = vmatprep.subr.mxu0 0.0
    %2355 = vmatpush1.msra.mxu0 %v60
    %2356 = vmatprep.subr.mxu0 0.0
    %2357 = vmatpush1.msra.mxu0 0.0
    %2358 = vmatprep.subr.mxu0 0.0
    %2359 = vmatpush1.msra.mxu0 0.0
    %2360 = vmatprep.subr.mxu0 0.0
    %2361 = vmatpush1.msra.mxu0 0.0
    %2362 = vmatprep.subr.mxu0 0.0
    %2363 = vmatpush1.msra.mxu0 0.0
    %2364 = vmatprep.subr.mxu0 0.0
    %2365 = vmatpush1.msra.mxu0 0.0
    %2366 = vmatprep.subr.mxu0 0.0
    %2367 = vmatpush1.msra.mxu0 0.0
    %2368 = vmatprep.subr.mxu0 0.0
    %2369 = vmatpush1.msra.mxu0 0.0
    %2370 = vmatprep.subr.mxu0 0.0
    %2371 = vmatpush1.msra.mxu0 0.0
    %2372 = vmatprep.subr.mxu0 0.0
    %2373 = vmatpush1.msra.mxu0 0.0
    %2374 = vmatprep.subr.mxu0 0.0
    %2375 = vmatpush1.msra.mxu0 0.0
    %2376 = vmatprep.subr.mxu0 0.0
    %2377 = vmatpush1.msra.mxu0 0.0
    %2378 = vmatprep.subr.mxu0 0.0
    %2379 = vmatpush1.msra.mxu0 0.0
    %2380 = vmatprep.subr.mxu0 0.0
    %2381 = vmatpush1.msra.mxu0 0.0
    %2382 = vmatprep.subr.mxu0 0.0
    %2383 = vmatpush1.msra.mxu0 0.0
    %2384 = vmatprep.subr.mxu0 0.0
    %2385 = vmatpush1.msra.mxu0 0.0
    %2386 = vmatprep.subr.mxu0 0.0
    %2387 = vmatpush1.msra.mxu0 0.0
    %2388 = vmatprep.subr.mxu0 0.0
    %2389 = vmatpush1.msra.mxu0 0.0
    %2390 = vmatprep.subr.mxu0 0.0
    %2391 = vmatpush1.msra.mxu0 0.0
    %2392 = vmatprep.subr.mxu0 0.0
    %2393 = vmatpush1.msra.mxu0 0.0
    %2394 = vmatprep.subr.mxu0 0.0
    %2395 = vmatpush1.msra.mxu0 0.0
    %2396 = vmatprep.subr.mxu0 0.0
    %2397 = vmatpush1.msra.mxu0 0.0
    %2398 = vmatprep.subr.mxu0 0.0
    %2399 = vmatpush1.msra.mxu0 0.0
    %2400 = vmatprep.subr.mxu0 0.0
    %2401 = vmatpush1.msra.mxu0 0.0
    %2402 = vmatprep.subr.mxu0 0.0
    %2403 = vmatpush1.msra.mxu0 0.0
    %2404 = vmatprep.subr.mxu0 0.0
    %2405 = vmatpush1.msra.mxu0 0.0
    %2406 = vmatprep.subr.mxu0 0.0
    %2407 = vmatpush1.msra.mxu0 0.0
    %2408 = vmatprep.subr.mxu0 0.0
    %2409 = vmatpush1.msra.mxu0 0.0
    %2410 = vmatprep.subr.mxu0 0.0
    %2411 = vmatpush1.msra.mxu0 0.0
    %2412 = vmatprep.mubr.f32.mxu0 0.0
    %2413 = vmatmul.mubr.f32.gmra.mrb[0].mxu0 %v2344
    %v2414 = vpop.f32.mrb[0].mxu0
    %v2415 = vadd.f32 0.0, %v2414
    %v2416 = vpop.f32.mrb[0].mxu0
    %2417 = vmatprep.mubr.f32.mxu0 0.0
    %2418 = vmatmul.mubr.f32.gmra.mrb[0].mxu0 %v2346
    %v2419 = vpop.f32.mrb[0].mxu0
    %v2420 = vadd.f32 0.0, %v2419
    %v2421 = vpop.f32.mrb[0].mxu0
    %2422 = vdwg.mxu0
    %v2423 = vadd.f32 %v2336, %v2415
    %v2424 = vadd.f32 %v2341, %v2420
    %v2425 = vmul.f32 %v2423, %v38
    %v2426 = vmul.f32 %v2424, %v38
    %v2427 = vxor.u32 %v2425, 2147483648
    %v2428 = vxor.u32 %v2426, 2147483648
    %v2429 = vmul.f32 %v2427, 1.442695
    %v2430 = vpow.pop %v2429
    %v2431 = vmul.f32 %v2428, 1.442695
    %v2432 = vpow.pop %v2431
    %v2433 = vadd.f32 %v2430, 1.0
    %v2434 = vadd.f32 %v2432, 1.0
    %v2435 = vrcp.pop %v2433
    %v2436 = vmul.f32 1.0, %v2435
    %v2437 = vrcp.pop %v2434
    %v2438 = vmul.f32 1.0, %v2437
    %v2439 = vmul.f32 %v2436, %v38
    %v2440 = vmul.f32 %v2438, %v38
    %v2441 = vadd.f32 %v2439, %v39
    %v2442 = vadd.f32 %v2440, %v39
    %v2443 = vmul.f32 %v2441, %v1952
    %v2444 = vmul.f32 %v2442, %v1953
    %2447 = vrot.lane.b32.xlu0 %v2441, 64
    %v2448 = vpop.permute.xlu0 %2447
    %2449 = vrot.lane.b32.xlu0 %v2442, 64
    %v2450 = vpop.permute.xlu0 %2449
    %v2453 = vmul.f32 %v2441, %v2448
    %v2454 = vmul.f32 %v2442, %v2450
    %2457 = vrot.lane.b32.xlu0 %v2453, 32
    %v2458 = vpop.permute.xlu0 %2457
    %2459 = vrot.lane.b32.xlu0 %v2454, 32
    %v2460 = vpop.permute.xlu0 %2459
    %v2463 = vadd.f32 %v2443, %v2458
    %v2464 = vadd.f32 %v2444, %v2460
    %v2465 = vtanh.pop %v2463
    %v2466 = vtanh.pop %v2464
    %2469 = vrot.lane.b32.xlu0 %v2465, 64
    %v2470 = vpop.permute.xlu0 %2469
    %2471 = vrot.lane.b32.xlu0 %v2466, 64
    %v2472 = vpop.permute.xlu0 %2471
    %v2475 = vmul.f32 %v2441, %v2470
    %v2476 = vmul.f32 %v2442, %v2472
    %2479 = vrot.lane.b32.xlu0 %v2475, 32
    %v2480 = vpop.permute.xlu0 %2479
    %2481 = vrot.lane.b32.xlu0 %v2476, 32
    %v2482 = vpop.permute.xlu0 %2481
    %2485 = vmatprep.subr.mxu0 0.0
    %2486 = vmatpush1.msra.mxu0 %v2480
    %2487 = vmatprep.subr.mxu0 0.0
    %2488 = vmatpush1.msra.mxu0 %v2482
    %2489 = vmatprep.subr.mxu0 0.0
    %2490 = vmatpush1.msra.mxu0 0.0
    %2491 = vmatprep.subr.mxu0 0.0
    %2492 = vmatpush1.msra.mxu0 0.0
    %2493 = vmatprep.subr.mxu0 0.0
    %2494 = vmatpush1.msra.mxu0 0.0
    %2495 = vmatprep.subr.mxu0 0.0
    %2496 = vmatpush1.msra.mxu0 0.0
    %2497 = vmatprep.subr.mxu0 0.0
    %2498 = vmatpush1.msra.mxu0 0.0
    %2499 = vmatprep.subr.mxu0 0.0
    %2500 = vmatpush1.msra.mxu0 0.0
    %2501 = vmatprep.subr.mxu0 0.0
    %2502 = vmatpush1.msra.mxu0 0.0
    %2503 = vmatprep.subr.mxu0 0.0
    %2504 = vmatpush1.msra.mxu0 0.0
    %2505 = vmatprep.subr.mxu0 0.0
    %2506 = vmatpush1.msra.mxu0 0.0
    %2507 = vmatprep.subr.mxu0 0.0
    %2508 = vmatpush1.msra.mxu0 0.0
    %2509 = vmatprep.subr.mxu0 0.0
    %2510 = vmatpush1.msra.mxu0 0.0
    %2511 = vmatprep.subr.mxu0 0.0
    %2512 = vmatpush1.msra.mxu0 0.0
    %2513 = vmatprep.subr.mxu0 0.0
    %2514 = vmatpush1.msra.mxu0 0.0
    %2515 = vmatprep.subr.mxu0 0.0
    %2516 = vmatpush1.msra.mxu0 0.0
    %2517 = vmatprep.subr.mxu0 0.0
    %2518 = vmatpush1.msra.mxu0 0.0
    %2519 = vmatprep.subr.mxu0 0.0
    %2520 = vmatpush1.msra.mxu0 0.0
    %2521 = vmatprep.subr.mxu0 0.0
    %2522 = vmatpush1.msra.mxu0 0.0
    %2523 = vmatprep.subr.mxu0 0.0
    %2524 = vmatpush1.msra.mxu0 0.0
    %2525 = vmatprep.subr.mxu0 0.0
    %2526 = vmatpush1.msra.mxu0 0.0
    %2527 = vmatprep.subr.mxu0 0.0
    %2528 = vmatpush1.msra.mxu0 0.0
    %2529 = vmatprep.subr.mxu0 0.0
    %2530 = vmatpush1.msra.mxu0 0.0
    %2531 = vmatprep.subr.mxu0 0.0
    %2532 = vmatpush1.msra.mxu0 0.0
    %2533 = vmatprep.subr.mxu0 0.0
    %2534 = vmatpush1.msra.mxu0 0.0
    %2535 = vmatprep.subr.mxu0 0.0
    %2536 = vmatpush1.msra.mxu0 0.0
    %2537 = vmatprep.subr.mxu0 0.0
    %2538 = vmatpush1.msra.mxu0 0.0
    %2539 = vmatprep.subr.mxu0 0.0
    %2540 = vmatpush1.msra.mxu0 0.0
    %2541 = vmatprep.subr.mxu0 0.0
    %2542 = vmatpush1.msra.mxu0 0.0
    %2543 = vmatprep.subr.mxu0 0.0
    %2544 = vmatpush1.msra.mxu0 0.0
    %2545 = vmatprep.subr.mxu0 0.0
    %2546 = vmatpush1.msra.mxu0 0.0
    %2547 = vmatprep.subr.mxu0 0.0
    %2548 = vmatpush1.msra.mxu0 0.0
    %2549 = vmatprep.mubr.f32.mxu0 0.0
    %2550 = vmatmul.mubr.f32.gmra.mrb[0].mxu0 %v954
    %v2551 = vpop.f32.mrb[0].mxu0
    %v2552 = vadd.f32 0.0, %v2551
    %v2553 = vpop.f32.mrb[0].mxu0
    %2554 = vdwg.mxu0
    %v2555 = vld [vmem:[%s7 + $0xc0] sm:$0xff]
    %v2556 = vld [vmem:[%s7 + $0xc8] sm:$0xff]
    %v2557 = vld [vmem:[%s7 + $0xd0] sm:$0xff]
    %v2558 = vld [vmem:[%s7 + $0xd8] sm:$0xff]
    %v2559 = vld [vmem:[%s7 + $0xe0] sm:$0xff]
    %v2560 = vld [vmem:[%s7 + $0xe8] sm:$0xff]
    %v2561 = vld [vmem:[%s7 + $0xf0] sm:$0xff]
    %v2562 = vld [vmem:[%s7 + $0xf8] sm:$0xff]
    %v2564 = vsel %vm466, %v2552, 0
    %2566 = vmatprep.subr.mxu0 %v2556
    %2567 = vmatpush1.msra.mxu0 %v2555
    %2568 = vmatprep.subr.mxu0 %v2558
    %2569 = vmatpush1.msra.mxu0 %v2557
    %2570 = vmatprep.subr.mxu0 %v2560
    %2571 = vmatpush1.msra.mxu0 %v2559
    %2572 = vmatprep.subr.mxu0 %v2562
    %2573 = vmatpush1.msra.mxu0 %v2561
    %2574 = vmatprep.subr.mxu0 0.0
    %2575 = vmatpush1.msra.mxu0 0.0
    %2576 = vmatprep.subr.mxu0 0.0
    %2577 = vmatpush1.msra.mxu0 0.0
    %2578 = vmatprep.subr.mxu0 0.0
    %2579 = vmatpush1.msra.mxu0 0.0
    %2580 = vmatprep.subr.mxu0 0.0
    %2581 = vmatpush1.msra.mxu0 0.0
    %2582 = vmatprep.subr.mxu0 0.0
    %2583 = vmatpush1.msra.mxu0 0.0
    %2584 = vmatprep.subr.mxu0 0.0
    %2585 = vmatpush1.msra.mxu0 0.0
    %2586 = vmatprep.subr.mxu0 0.0
    %2587 = vmatpush1.msra.mxu0 0.0
    %2588 = vmatprep.subr.mxu0 0.0
    %2589 = vmatpush1.msra.mxu0 0.0
    %2590 = vmatprep.subr.mxu0 0.0
    %2591 = vmatpush1.msra.mxu0 0.0
    %2592 = vmatprep.subr.mxu0 0.0
    %2593 = vmatpush1.msra.mxu0 0.0
    %2594 = vmatprep.subr.mxu0 0.0
    %2595 = vmatpush1.msra.mxu0 0.0
    %2596 = vmatprep.subr.mxu0 0.0
    %2597 = vmatpush1.msra.mxu0 0.0
    %2598 = vmatprep.subr.mxu0 0.0
    %2599 = vmatpush1.msra.mxu0 0.0
    %2600 = vmatprep.subr.mxu0 0.0
    %2601 = vmatpush1.msra.mxu0 0.0
    %2602 = vmatprep.subr.mxu0 0.0
    %2603 = vmatpush1.msra.mxu0 0.0
    %2604 = vmatprep.subr.mxu0 0.0
    %2605 = vmatpush1.msra.mxu0 0.0
    %2606 = vmatprep.subr.mxu0 0.0
    %2607 = vmatpush1.msra.mxu0 0.0
    %2608 = vmatprep.subr.mxu0 0.0
    %2609 = vmatpush1.msra.mxu0 0.0
    %2610 = vmatprep.subr.mxu0 0.0
    %2611 = vmatpush1.msra.mxu0 0.0
    %2612 = vmatprep.subr.mxu0 0.0
    %2613 = vmatpush1.msra.mxu0 0.0
    %2614 = vmatprep.subr.mxu0 0.0
    %2615 = vmatpush1.msra.mxu0 0.0
    %2616 = vmatprep.subr.mxu0 0.0
    %2617 = vmatpush1.msra.mxu0 0.0
    %2618 = vmatprep.subr.mxu0 0.0
    %2619 = vmatpush1.msra.mxu0 0.0
    %2620 = vmatprep.subr.mxu0 0.0
    %2621 = vmatpush1.msra.mxu0 0.0
    %2622 = vmatprep.subr.mxu0 0.0
    %2623 = vmatpush1.msra.mxu0 0.0
    %2624 = vmatprep.subr.mxu0 0.0
    %2625 = vmatpush1.msra.mxu0 0.0
    %2626 = vmatprep.subr.mxu0 0.0
    %2627 = vmatpush1.msra.mxu0 0.0
    %2628 = vmatprep.subr.mxu0 0.0
    %2629 = vmatpush1.msra.mxu0 0.0
    %2630 = vmatprep.mubr.f32.mxu0 0.0
    %2631 = vmatmul.mubr.f32.gmra.mrb[0].mxu0 %v2564
    %v2632 = vpop.f32.mrb[0].mxu0
    %v2633 = vadd.f32 0.0, %v2632
    %v2634 = vpop.f32.mrb[0].mxu0
    %v2635 = vadd.f32 0.0, %v2634
    %2636 = vdwg.mxu0
    %v2637 = vadd.f32 %v2126, %v2633
    %v2638 = vadd.f32 %v2127, %v2635
    %v2639 = vld [vmem:[#allocation2 + $0x50] sm:$0xff]
    %v2640 = vld [vmem:[#allocation2 + $0x58] sm:$0xff]
    %2643 = vrot.lane.b32.xlu0 %v2267, 32
    %v2644 = vpop.permute.xlu0 %2643
    %2645 = vrot.lane.b32.xlu0 %v2268, 32
    %v2646 = vpop.permute.xlu0 %2645
    %v2647 = vsel %vm466, %v2644, 0
    %v2649 = vsel %vm466, %v2646, 0
    %2651 = vmatprep.subr.mxu0 0.0
    %2652 = vmatpush1.msra.mxu0 %v48
    %2653 = vmatprep.subr.mxu0 0.0
    %2654 = vmatpush1.msra.mxu0 %v49
    %2655 = vmatprep.subr.mxu0 0.0
    %2656 = vmatpush1.msra.mxu0 %v50
    %2657 = vmatprep.subr.mxu0 0.0
    %2658 = vmatpush1.msra.mxu0 %v51
    %2659 = vmatprep.subr.mxu0 0.0
    %2660 = vmatpush1.msra.mxu0 0.0
    %2661 = vmatprep.subr.mxu0 0.0
    %2662 = vmatpush1.msra.mxu0 0.0
    %2663 = vmatprep.subr.mxu0 0.0
    %2664 = vmatpush1.msra.mxu0 0.0
    %2665 = vmatprep.subr.mxu0 0.0
    %2666 = vmatpush1.msra.mxu0 0.0
    %2667 = vmatprep.subr.mxu0 0.0
    %2668 = vmatpush1.msra.mxu0 0.0
    %2669 = vmatprep.subr.mxu0 0.0
    %2670 = vmatpush1.msra.mxu0 0.0
    %2671 = vmatprep.subr.mxu0 0.0
    %2672 = vmatpush1.msra.mxu0 0.0
    %2673 = vmatprep.subr.mxu0 0.0
    %2674 = vmatpush1.msra.mxu0 0.0
    %2675 = vmatprep.subr.mxu0 0.0
    %2676 = vmatpush1.msra.mxu0 0.0
    %2677 = vmatprep.subr.mxu0 0.0
    %2678 = vmatpush1.msra.mxu0 0.0
    %2679 = vmatprep.subr.mxu0 0.0
    %2680 = vmatpush1.msra.mxu0 0.0
    %2681 = vmatprep.subr.mxu0 0.0
    %2682 = vmatpush1.msra.mxu0 0.0
    %2683 = vmatprep.subr.mxu0 0.0
    %2684 = vmatpush1.msra.mxu0 0.0
    %2685 = vmatprep.subr.mxu0 0.0
    %2686 = vmatpush1.msra.mxu0 0.0
    %2687 = vmatprep.subr.mxu0 0.0
    %2688 = vmatpush1.msra.mxu0 0.0
    %2689 = vmatprep.subr.mxu0 0.0
    %2690 = vmatpush1.msra.mxu0 0.0
    %2691 = vmatprep.subr.mxu0 0.0
    %2692 = vmatpush1.msra.mxu0 0.0
    %2693 = vmatprep.subr.mxu0 0.0
    %2694 = vmatpush1.msra.mxu0 0.0
    %2695 = vmatprep.subr.mxu0 0.0
    %2696 = vmatpush1.msra.mxu0 0.0
    %2697 = vmatprep.subr.mxu0 0.0
    %2698 = vmatpush1.msra.mxu0 0.0
    %2699 = vmatprep.subr.mxu0 0.0
    %2700 = vmatpush1.msra.mxu0 0.0
    %2701 = vmatprep.subr.mxu0 0.0
    %2702 = vmatpush1.msra.mxu0 0.0
    %2703 = vmatprep.subr.mxu0 0.0
    %2704 = vmatpush1.msra.mxu0 0.0
    %2705 = vmatprep.subr.mxu0 0.0
    %2706 = vmatpush1.msra.mxu0 0.0
    %2707 = vmatprep.subr.mxu0 0.0
    %2708 = vmatpush1.msra.mxu0 0.0
    %2709 = vmatprep.subr.mxu0 0.0
    %2710 = vmatpush1.msra.mxu0 0.0
    %2711 = vmatprep.subr.mxu0 0.0
    %2712 = vmatpush1.msra.mxu0 0.0
    %2713 = vmatprep.subr.mxu0 0.0
    %2714 = vmatpush1.msra.mxu0 0.0
    %2715 = vmatprep.mubr.f32.mxu0 0.0
    %2716 = vmatmul.mubr.f32.gmra.mrb[0].mxu0 %v2647
    %v2717 = vpop.f32.mrb[0].mxu0
    %v2718 = vadd.f32 0.0, %v2717
    %v2719 = vpop.f32.mrb[0].mxu0
    %2720 = vmatprep.mubr.f32.mxu0 0.0
    %2721 = vmatmul.mubr.f32.gmra.mrb[0].mxu0 %v2649
    %v2722 = vpop.f32.mrb[0].mxu0
    %v2723 = vadd.f32 0.0, %v2722
    %v2724 = vpop.f32.mrb[0].mxu0
    %2725 = vdwg.mxu0
    %v2726 = vadd.f32 %v2639, %v2718
    %v2727 = vadd.f32 %v2640, %v2723
    %v2728 = vmul.f32 %v2726, %v38
    %v2729 = vmul.f32 %v2727, %v38
    %v2730 = vxor.u32 %v2728, 2147483648
    %v2731 = vxor.u32 %v2729, 2147483648
    %v2732 = vmul.f32 %v2730, 1.442695
    %v2733 = vpow.pop %v2732
    %v2734 = vmul.f32 %v2731, 1.442695
    %v2735 = vpow.pop %v2734
    %v2736 = vadd.f32 %v2733, 1.0
    %v2737 = vadd.f32 %v2735, 1.0
    %v2738 = vrcp.pop %v2736
    %v2739 = vmul.f32 1.0, %v2738
    %v2740 = vrcp.pop %v2737
    %v2741 = vmul.f32 1.0, %v2740
    %v2742 = vmul.f32 %v2739, %v38
    %v2743 = vmul.f32 %v2741, %v38
    %v2744 = vadd.f32 %v2742, %v39
    %v2745 = vadd.f32 %v2743, %v39
    %v2746 = vmul.f32 %v2744, %v2255
    %v2747 = vmul.f32 %v2745, %v2256
    %2750 = vrot.lane.b32.xlu0 %v2744, 64
    %v2751 = vpop.permute.xlu0 %2750
    %2752 = vrot.lane.b32.xlu0 %v2745, 64
    %v2753 = vpop.permute.xlu0 %2752
    %v2756 = vmul.f32 %v2744, %v2751
    %v2757 = vmul.f32 %v2745, %v2753
    %2760 = vrot.lane.b32.xlu0 %v2756, 32
    %v2761 = vpop.permute.xlu0 %2760
    %2762 = vrot.lane.b32.xlu0 %v2757, 32
    %v2763 = vpop.permute.xlu0 %2762
    %v2766 = vadd.f32 %v2746, %v2761
    %v2767 = vadd.f32 %v2747, %v2763
    %v2768 = vtanh.pop %v2766
    %v2769 = vtanh.pop %v2767
    %2772 = vrot.lane.b32.xlu0 %v2768, 64
    %v2773 = vpop.permute.xlu0 %2772
    %2774 = vrot.lane.b32.xlu0 %v2769, 64
    %v2775 = vpop.permute.xlu0 %2774
    %v2778 = vmul.f32 %v2744, %v2773
    %v2779 = vmul.f32 %v2745, %v2775
    %2780 = vmatprep.subr.mxu0 0.0
    %2781 = vmatpush1.msra.mxu0 %v53
    %2782 = vmatprep.subr.mxu0 0.0
    %2783 = vmatpush1.msra.mxu0 %v54
    %2784 = vmatprep.subr.mxu0 0.0
    %2785 = vmatpush1.msra.mxu0 %v55
    %2786 = vmatprep.subr.mxu0 0.0
    %2787 = vmatpush1.msra.mxu0 %v56
    %2788 = vmatprep.subr.mxu0 0.0
    %2789 = vmatpush1.msra.mxu0 0.0
    %2790 = vmatprep.subr.mxu0 0.0
    %2791 = vmatpush1.msra.mxu0 0.0
    %2792 = vmatprep.subr.mxu0 0.0
    %2793 = vmatpush1.msra.mxu0 0.0
    %2794 = vmatprep.subr.mxu0 0.0
    %2795 = vmatpush1.msra.mxu0 0.0
    %2796 = vmatprep.subr.mxu0 0.0
    %2797 = vmatpush1.msra.mxu0 0.0
    %2798 = vmatprep.subr.mxu0 0.0
    %2799 = vmatpush1.msra.mxu0 0.0
    %2800 = vmatprep.subr.mxu0 0.0
    %2801 = vmatpush1.msra.mxu0 0.0
    %2802 = vmatprep.subr.mxu0 0.0
    %2803 = vmatpush1.msra.mxu0 0.0
    %2804 = vmatprep.subr.mxu0 0.0
    %2805 = vmatpush1.msra.mxu0 0.0
    %2806 = vmatprep.subr.mxu0 0.0
    %2807 = vmatpush1.msra.mxu0 0.0
    %2808 = vmatprep.subr.mxu0 0.0
    %2809 = vmatpush1.msra.mxu0 0.0
    %2810 = vmatprep.subr.mxu0 0.0
    %2811 = vmatpush1.msra.mxu0 0.0
    %2812 = vmatprep.subr.mxu0 0.0
    %2813 = vmatpush1.msra.mxu0 0.0
    %2814 = vmatprep.subr.mxu0 0.0
    %2815 = vmatpush1.msra.mxu0 0.0
    %2816 = vmatprep.subr.mxu0 0.0
    %2817 = vmatpush1.msra.mxu0 0.0
    %2818 = vmatprep.subr.mxu0 0.0
    %2819 = vmatpush1.msra.mxu0 0.0
    %2820 = vmatprep.subr.mxu0 0.0
    %2821 = vmatpush1.msra.mxu0 0.0
    %2822 = vmatprep.subr.mxu0 0.0
    %2823 = vmatpush1.msra.mxu0 0.0
    %2824 = vmatprep.subr.mxu0 0.0
    %2825 = vmatpush1.msra.mxu0 0.0
    %2826 = vmatprep.subr.mxu0 0.0
    %2827 = vmatpush1.msra.mxu0 0.0
    %2828 = vmatprep.subr.mxu0 0.0
    %2829 = vmatpush1.msra.mxu0 0.0
    %2830 = vmatprep.subr.mxu0 0.0
    %2831 = vmatpush1.msra.mxu0 0.0
    %2832 = vmatprep.subr.mxu0 0.0
    %2833 = vmatpush1.msra.mxu0 0.0
    %2834 = vmatprep.subr.mxu0 0.0
    %2835 = vmatpush1.msra.mxu0 0.0
    %2836 = vmatprep.subr.mxu0 0.0
    %2837 = vmatpush1.msra.mxu0 0.0
    %2838 = vmatprep.subr.mxu0 0.0
    %2839 = vmatpush1.msra.mxu0 0.0
    %2840 = vmatprep.subr.mxu0 0.0
    %2841 = vmatpush1.msra.mxu0 0.0
    %2842 = vmatprep.subr.mxu0 0.0
    %2843 = vmatpush1.msra.mxu0 0.0
    %2844 = vmatprep.mubr.f32.mxu0 0.0
    %2845 = vmatmul.mubr.f32.gmra.mrb[0].mxu0 %v2647
    %v2846 = vpop.f32.mrb[0].mxu0
    %v2847 = vadd.f32 %v66, %v2846
    %v2848 = vpop.f32.mrb[0].mxu0
    %2849 = vmatprep.mubr.f32.mxu0 0.0
    %2850 = vmatmul.mubr.f32.gmra.mrb[0].mxu0 %v2649
    %v2851 = vpop.f32.mrb[0].mxu0
    %v2852 = vadd.f32 %v66, %v2851
    %v2853 = vpop.f32.mrb[0].mxu0
    %2854 = vdwg.mxu0
    %v2855 = vsel %vm466, %v2480, 0
    %v2857 = vsel %vm466, %v2482, 0
    %2859 = vmatprep.subr.mxu0 0.0
    %2860 = vmatpush1.msra.mxu0 %v57
    %2861 = vmatprep.subr.mxu0 0.0
    %2862 = vmatpush1.msra.mxu0 %v58
    %2863 = vmatprep.subr.mxu0 0.0
    %2864 = vmatpush1.msra.mxu0 %v59
    %2865 = vmatprep.subr.mxu0 0.0
    %2866 = vmatpush1.msra.mxu0 %v60
    %2867 = vmatprep.subr.mxu0 0.0
    %2868 = vmatpush1.msra.mxu0 0.0
    %2869 = vmatprep.subr.mxu0 0.0
    %2870 = vmatpush1.msra.mxu0 0.0
    %2871 = vmatprep.subr.mxu0 0.0
    %2872 = vmatpush1.msra.mxu0 0.0
    %2873 = vmatprep.subr.mxu0 0.0
    %2874 = vmatpush1.msra.mxu0 0.0
    %2875 = vmatprep.subr.mxu0 0.0
    %2876 = vmatpush1.msra.mxu0 0.0
    %2877 = vmatprep.subr.mxu0 0.0
    %2878 = vmatpush1.msra.mxu0 0.0
    %2879 = vmatprep.subr.mxu0 0.0
    %2880 = vmatpush1.msra.mxu0 0.0
    %2881 = vmatprep.subr.mxu0 0.0
    %2882 = vmatpush1.msra.mxu0 0.0
    %2883 = vmatprep.subr.mxu0 0.0
    %2884 = vmatpush1.msra.mxu0 0.0
    %2885 = vmatprep.subr.mxu0 0.0
    %2886 = vmatpush1.msra.mxu0 0.0
    %2887 = vmatprep.subr.mxu0 0.0
    %2888 = vmatpush1.msra.mxu0 0.0
    %2889 = vmatprep.subr.mxu0 0.0
    %2890 = vmatpush1.msra.mxu0 0.0
    %2891 = vmatprep.subr.mxu0 0.0
    %2892 = vmatpush1.msra.mxu0 0.0
    %2893 = vmatprep.subr.mxu0 0.0
    %2894 = vmatpush1.msra.mxu0 0.0
    %2895 = vmatprep.subr.mxu0 0.0
    %2896 = vmatpush1.msra.mxu0 0.0
    %2897 = vmatprep.subr.mxu0 0.0
    %2898 = vmatpush1.msra.mxu0 0.0
    %2899 = vmatprep.subr.mxu0 0.0
    %2900 = vmatpush1.msra.mxu0 0.0
    %2901 = vmatprep.subr.mxu0 0.0
    %2902 = vmatpush1.msra.mxu0 0.0
    %2903 = vmatprep.subr.mxu0 0.0
    %2904 = vmatpush1.msra.mxu0 0.0
    %2905 = vmatprep.subr.mxu0 0.0
    %2906 = vmatpush1.msra.mxu0 0.0
    %2907 = vmatprep.subr.mxu0 0.0
    %2908 = vmatpush1.msra.mxu0 0.0
    %2909 = vmatprep.subr.mxu0 0.0
    %2910 = vmatpush1.msra.mxu0 0.0
    %2911 = vmatprep.subr.mxu0 0.0
    %2912 = vmatpush1.msra.mxu0 0.0
    %2913 = vmatprep.subr.mxu0 0.0
    %2914 = vmatpush1.msra.mxu0 0.0
    %2915 = vmatprep.subr.mxu0 0.0
    %2916 = vmatpush1.msra.mxu0 0.0
    %2917 = vmatprep.subr.mxu0 0.0
    %2918 = vmatpush1.msra.mxu0 0.0
    %2919 = vmatprep.subr.mxu0 0.0
    %2920 = vmatpush1.msra.mxu0 0.0
    %2921 = vmatprep.subr.mxu0 0.0
    %2922 = vmatpush1.msra.mxu0 0.0
    %2923 = vmatprep.mubr.f32.mxu0 0.0
    %2924 = vmatmul.mubr.f32.gmra.mrb[0].mxu0 %v2855
    %v2925 = vpop.f32.mrb[0].mxu0
    %v2926 = vadd.f32 0.0, %v2925
    %v2927 = vpop.f32.mrb[0].mxu0
    %2928 = vmatprep.mubr.f32.mxu0 0.0
    %2929 = vmatmul.mubr.f32.gmra.mrb[0].mxu0 %v2857
    %v2930 = vpop.f32.mrb[0].mxu0
    %v2931 = vadd.f32 0.0, %v2930
    %v2932 = vpop.f32.mrb[0].mxu0
    %2933 = vdwg.mxu0
    %v2934 = vadd.f32 %v2847, %v2926
    %v2935 = vadd.f32 %v2852, %v2931
    %v2936 = vmul.f32 %v2934, %v38
    %v2937 = vmul.f32 %v2935, %v38
    %v2938 = vxor.u32 %v2936, 2147483648
    %v2939 = vxor.u32 %v2937, 2147483648
    %v2940 = vmul.f32 %v2938, 1.442695
    %v2941 = vpow.pop %v2940
    %v2942 = vmul.f32 %v2939, 1.442695
    %v2943 = vpow.pop %v2942
    %v2944 = vadd.f32 %v2941, 1.0
    %v2945 = vadd.f32 %v2943, 1.0
    %v2946 = vrcp.pop %v2944
    %v2947 = vmul.f32 1.0, %v2946
    %v2948 = vrcp.pop %v2945
    %v2949 = vmul.f32 1.0, %v2948
    %v2950 = vmul.f32 %v2947, %v38
    %v2951 = vmul.f32 %v2949, %v38
    %v2952 = vadd.f32 %v2950, %v39
    %v2953 = vadd.f32 %v2951, %v39
    %v2954 = vmul.f32 %v2952, %v2463
    %v2955 = vmul.f32 %v2953, %v2464
    %2958 = vrot.lane.b32.xlu0 %v2952, 64
    %v2959 = vpop.permute.xlu0 %2958
    %2960 = vrot.lane.b32.xlu0 %v2953, 64
    %v2961 = vpop.permute.xlu0 %2960
    %v2964 = vmul.f32 %v2952, %v2959
    %v2965 = vmul.f32 %v2953, %v2961
    %2968 = vrot.lane.b32.xlu0 %v2964, 32
    %v2969 = vpop.permute.xlu0 %2968
    %2970 = vrot.lane.b32.xlu0 %v2965, 32
    %v2971 = vpop.permute.xlu0 %2970
    %v2974 = vadd.f32 %v2954, %v2969
    %v2975 = vadd.f32 %v2955, %v2971
    %v2976 = vtanh.pop %v2974
    %v2977 = vtanh.pop %v2975
    %2980 = vrot.lane.b32.xlu0 %v2976, 64
    %v2981 = vpop.permute.xlu0 %2980
    %2982 = vrot.lane.b32.xlu0 %v2977, 64
    %v2983 = vpop.permute.xlu0 %2982
    %v2986 = vmul.f32 %v2952, %v2981
    %v2987 = vmul.f32 %v2953, %v2983
    %2990 = vrot.lane.b32.xlu0 %v2986, 32
    %v2991 = vpop.permute.xlu0 %2990
    %2992 = vrot.lane.b32.xlu0 %v2987, 32
    %v2993 = vpop.permute.xlu0 %2992
    %2996 = vmatprep.subr.mxu0 0.0
    %2997 = vmatpush1.msra.mxu0 %v2991
    %2998 = vmatprep.subr.mxu0 0.0
    %2999 = vmatpush1.msra.mxu0 %v2993
    %3000 = vmatprep.subr.mxu0 0.0
    %3001 = vmatpush1.msra.mxu0 0.0
    %3002 = vmatprep.subr.mxu0 0.0
    %3003 = vmatpush1.msra.mxu0 0.0
    %3004 = vmatprep.subr.mxu0 0.0
    %3005 = vmatpush1.msra.mxu0 0.0
    %3006 = vmatprep.subr.mxu0 0.0
    %3007 = vmatpush1.msra.mxu0 0.0
    %3008 = vmatprep.subr.mxu0 0.0
    %3009 = vmatpush1.msra.mxu0 0.0
    %3010 = vmatprep.subr.mxu0 0.0
    %3011 = vmatpush1.msra.mxu0 0.0
    %3012 = vmatprep.subr.mxu0 0.0
    %3013 = vmatpush1.msra.mxu0 0.0
    %3014 = vmatprep.subr.mxu0 0.0
    %3015 = vmatpush1.msra.mxu0 0.0
    %3016 = vmatprep.subr.mxu0 0.0
    %3017 = vmatpush1.msra.mxu0 0.0
    %3018 = vmatprep.subr.mxu0 0.0
    %3019 = vmatpush1.msra.mxu0 0.0
    %3020 = vmatprep.subr.mxu0 0.0
    %3021 = vmatpush1.msra.mxu0 0.0
    %3022 = vmatprep.subr.mxu0 0.0
    %3023 = vmatpush1.msra.mxu0 0.0
    %3024 = vmatprep.subr.mxu0 0.0
    %3025 = vmatpush1.msra.mxu0 0.0
    %3026 = vmatprep.subr.mxu0 0.0
    %3027 = vmatpush1.msra.mxu0 0.0
    %3028 = vmatprep.subr.mxu0 0.0
    %3029 = vmatpush1.msra.mxu0 0.0
    %3030 = vmatprep.subr.mxu0 0.0
    %3031 = vmatpush1.msra.mxu0 0.0
    %3032 = vmatprep.subr.mxu0 0.0
    %3033 = vmatpush1.msra.mxu0 0.0
    %3034 = vmatprep.subr.mxu0 0.0
    %3035 = vmatpush1.msra.mxu0 0.0
    %3036 = vmatprep.subr.mxu0 0.0
    %3037 = vmatpush1.msra.mxu0 0.0
    %3038 = vmatprep.subr.mxu0 0.0
    %3039 = vmatpush1.msra.mxu0 0.0
    %3040 = vmatprep.subr.mxu0 0.0
    %3041 = vmatpush1.msra.mxu0 0.0
    %3042 = vmatprep.subr.mxu0 0.0
    %3043 = vmatpush1.msra.mxu0 0.0
    %3044 = vmatprep.subr.mxu0 0.0
    %3045 = vmatpush1.msra.mxu0 0.0
    %3046 = vmatprep.subr.mxu0 0.0
    %3047 = vmatpush1.msra.mxu0 0.0
    %3048 = vmatprep.subr.mxu0 0.0
    %3049 = vmatpush1.msra.mxu0 0.0
    %3050 = vmatprep.subr.mxu0 0.0
    %3051 = vmatpush1.msra.mxu0 0.0
    %3052 = vmatprep.subr.mxu0 0.0
    %3053 = vmatpush1.msra.mxu0 0.0
    %3054 = vmatprep.subr.mxu0 0.0
    %3055 = vmatpush1.msra.mxu0 0.0
    %3056 = vmatprep.subr.mxu0 0.0
    %3057 = vmatpush1.msra.mxu0 0.0
    %3058 = vmatprep.subr.mxu0 0.0
    %3059 = vmatpush1.msra.mxu0 0.0
    %3060 = vmatprep.mubr.f32.mxu0 0.0
    %3061 = vmatmul.mubr.f32.gmra.mrb[0].mxu0 %v954
    %v3062 = vpop.f32.mrb[0].mxu0
    %v3063 = vadd.f32 0.0, %v3062
    %v3064 = vpop.f32.mrb[0].mxu0
    %3065 = vdwg.mxu0
    %v3066 = vld [vmem:[%s7 + $0x100] sm:$0xff]
    %v3067 = vld [vmem:[%s7 + $0x108] sm:$0xff]
    %v3068 = vld [vmem:[%s7 + $0x110] sm:$0xff]
    %v3069 = vld [vmem:[%s7 + $0x118] sm:$0xff]
    %v3070 = vld [vmem:[%s7 + $0x120] sm:$0xff]
    %v3071 = vld [vmem:[%s7 + $0x128] sm:$0xff]
    %v3072 = vld [vmem:[%s7 + $0x130] sm:$0xff]
    %v3073 = vld [vmem:[%s7 + $0x138] sm:$0xff]
    %v3075 = vsel %vm466, %v3063, 0
    %3077 = vmatprep.subr.mxu0 %v3067
    %3078 = vmatpush1.msra.mxu0 %v3066
    %3079 = vmatprep.subr.mxu0 %v3069
    %3080 = vmatpush1.msra.mxu0 %v3068
    %3081 = vmatprep.subr.mxu0 %v3071
    %3082 = vmatpush1.msra.mxu0 %v3070
    %3083 = vmatprep.subr.mxu0 %v3073
    %3084 = vmatpush1.msra.mxu0 %v3072
    %3085 = vmatprep.subr.mxu0 0.0
    %3086 = vmatpush1.msra.mxu0 0.0
    %3087 = vmatprep.subr.mxu0 0.0
    %3088 = vmatpush1.msra.mxu0 0.0
    %3089 = vmatprep.subr.mxu0 0.0
    %3090 = vmatpush1.msra.mxu0 0.0
    %3091 = vmatprep.subr.mxu0 0.0
    %3092 = vmatpush1.msra.mxu0 0.0
    %3093 = vmatprep.subr.mxu0 0.0
    %3094 = vmatpush1.msra.mxu0 0.0
    %3095 = vmatprep.subr.mxu0 0.0
    %3096 = vmatpush1.msra.mxu0 0.0
    %3097 = vmatprep.subr.mxu0 0.0
    %3098 = vmatpush1.msra.mxu0 0.0
    %3099 = vmatprep.subr.mxu0 0.0
    %3100 = vmatpush1.msra.mxu0 0.0
    %3101 = vmatprep.subr.mxu0 0.0
    %3102 = vmatpush1.msra.mxu0 0.0
    %3103 = vmatprep.subr.mxu0 0.0
    %3104 = vmatpush1.msra.mxu0 0.0
    %3105 = vmatprep.subr.mxu0 0.0
    %3106 = vmatpush1.msra.mxu0 0.0
    %3107 = vmatprep.subr.mxu0 0.0
    %3108 = vmatpush1.msra.mxu0 0.0
    %3109 = vmatprep.subr.mxu0 0.0
    %3110 = vmatpush1.msra.mxu0 0.0
    %3111 = vmatprep.subr.mxu0 0.0
    %3112 = vmatpush1.msra.mxu0 0.0
    %3113 = vmatprep.subr.mxu0 0.0
    %3114 = vmatpush1.msra.mxu0 0.0
    %3115 = vmatprep.subr.mxu0 0.0
    %3116 = vmatpush1.msra.mxu0 0.0
    %3117 = vmatprep.subr.mxu0 0.0
    %3118 = vmatpush1.msra.mxu0 0.0
    %3119 = vmatprep.subr.mxu0 0.0
    %3120 = vmatpush1.msra.mxu0 0.0
    %3121 = vmatprep.subr.mxu0 0.0
    %3122 = vmatpush1.msra.mxu0 0.0
    %3123 = vmatprep.subr.mxu0 0.0
    %3124 = vmatpush1.msra.mxu0 0.0
    %3125 = vmatprep.subr.mxu0 0.0
    %3126 = vmatpush1.msra.mxu0 0.0
    %3127 = vmatprep.subr.mxu0 0.0
    %3128 = vmatpush1.msra.mxu0 0.0
    %3129 = vmatprep.subr.mxu0 0.0
    %3130 = vmatpush1.msra.mxu0 0.0
    %3131 = vmatprep.subr.mxu0 0.0
    %3132 = vmatpush1.msra.mxu0 0.0
    %3133 = vmatprep.subr.mxu0 0.0
    %3134 = vmatpush1.msra.mxu0 0.0
    %3135 = vmatprep.subr.mxu0 0.0
    %3136 = vmatpush1.msra.mxu0 0.0
    %3137 = vmatprep.subr.mxu0 0.0
    %3138 = vmatpush1.msra.mxu0 0.0
    %3139 = vmatprep.subr.mxu0 0.0
    %3140 = vmatpush1.msra.mxu0 0.0
    %3141 = vmatprep.mubr.f32.mxu0 0.0
    %3142 = vmatmul.mubr.f32.gmra.mrb[0].mxu0 %v3075
    %v3143 = vpop.f32.mrb[0].mxu0
    %v3144 = vadd.f32 0.0, %v3143
    %v3145 = vpop.f32.mrb[0].mxu0
    %v3146 = vadd.f32 0.0, %v3145
    %3147 = vdwg.mxu0
    %v3148 = vadd.f32 %v2637, %v3144
    %v3149 = vadd.f32 %v2638, %v3146
    %v3150 = vld [vmem:[#allocation2 + $0x60] sm:$0xff]
    %v3151 = vld [vmem:[#allocation2 + $0x68] sm:$0xff]
    %3154 = vrot.lane.b32.xlu0 %v2778, 32
    %v3155 = vpop.permute.xlu0 %3154
    %3156 = vrot.lane.b32.xlu0 %v2779, 32
    %v3157 = vpop.permute.xlu0 %3156
    %v3158 = vsel %vm466, %v3155, 0
    %v3160 = vsel %vm466, %v3157, 0
    %3162 = vmatprep.subr.mxu0 0.0
    %3163 = vmatpush1.msra.mxu0 %v48
    %3164 = vmatprep.subr.mxu0 0.0
    %3165 = vmatpush1.msra.mxu0 %v49
    %3166 = vmatprep.subr.mxu0 0.0
    %3167 = vmatpush1.msra.mxu0 %v50
    %3168 = vmatprep.subr.mxu0 0.0
    %3169 = vmatpush1.msra.mxu0 %v51
    %3170 = vmatprep.subr.mxu0 0.0
    %3171 = vmatpush1.msra.mxu0 0.0
    %3172 = vmatprep.subr.mxu0 0.0
    %3173 = vmatpush1.msra.mxu0 0.0
    %3174 = vmatprep.subr.mxu0 0.0
    %3175 = vmatpush1.msra.mxu0 0.0
    %3176 = vmatprep.subr.mxu0 0.0
    %3177 = vmatpush1.msra.mxu0 0.0
    %3178 = vmatprep.subr.mxu0 0.0
    %3179 = vmatpush1.msra.mxu0 0.0
    %3180 = vmatprep.subr.mxu0 0.0
    %3181 = vmatpush1.msra.mxu0 0.0
    %3182 = vmatprep.subr.mxu0 0.0
    %3183 = vmatpush1.msra.mxu0 0.0
    %3184 = vmatprep.subr.mxu0 0.0
    %3185 = vmatpush1.msra.mxu0 0.0
    %3186 = vmatprep.subr.mxu0 0.0
    %3187 = vmatpush1.msra.mxu0 0.0
    %3188 = vmatprep.subr.mxu0 0.0
    %3189 = vmatpush1.msra.mxu0 0.0
    %3190 = vmatprep.subr.mxu0 0.0
    %3191 = vmatpush1.msra.mxu0 0.0
    %3192 = vmatprep.subr.mxu0 0.0
    %3193 = vmatpush1.msra.mxu0 0.0
    %3194 = vmatprep.subr.mxu0 0.0
    %3195 = vmatpush1.msra.mxu0 0.0
    %3196 = vmatprep.subr.mxu0 0.0
    %3197 = vmatpush1.msra.mxu0 0.0
    %3198 = vmatprep.subr.mxu0 0.0
    %3199 = vmatpush1.msra.mxu0 0.0
    %3200 = vmatprep.subr.mxu0 0.0
    %3201 = vmatpush1.msra.mxu0 0.0
    %3202 = vmatprep.subr.mxu0 0.0
    %3203 = vmatpush1.msra.mxu0 0.0
    %3204 = vmatprep.subr.mxu0 0.0
    %3205 = vmatpush1.msra.mxu0 0.0
    %3206 = vmatprep.subr.mxu0 0.0
    %3207 = vmatpush1.msra.mxu0 0.0
    %3208 = vmatprep.subr.mxu0 0.0
    %3209 = vmatpush1.msra.mxu0 0.0
    %3210 = vmatprep.subr.mxu0 0.0
    %3211 = vmatpush1.msra.mxu0 0.0
    %3212 = vmatprep.subr.mxu0 0.0
    %3213 = vmatpush1.msra.mxu0 0.0
    %3214 = vmatprep.subr.mxu0 0.0
    %3215 = vmatpush1.msra.mxu0 0.0
    %3216 = vmatprep.subr.mxu0 0.0
    %3217 = vmatpush1.msra.mxu0 0.0
    %3218 = vmatprep.subr.mxu0 0.0
    %3219 = vmatpush1.msra.mxu0 0.0
    %3220 = vmatprep.subr.mxu0 0.0
    %3221 = vmatpush1.msra.mxu0 0.0
    %3222 = vmatprep.subr.mxu0 0.0
    %3223 = vmatpush1.msra.mxu0 0.0
    %3224 = vmatprep.subr.mxu0 0.0
    %3225 = vmatpush1.msra.mxu0 0.0
    %3226 = vmatprep.mubr.f32.mxu0 0.0
    %3227 = vmatmul.mubr.f32.gmra.mrb[0].mxu0 %v3158
    %v3228 = vpop.f32.mrb[0].mxu0
    %v3229 = vadd.f32 0.0, %v3228
    %v3230 = vpop.f32.mrb[0].mxu0
    %3231 = vmatprep.mubr.f32.mxu0 0.0
    %3232 = vmatmul.mubr.f32.gmra.mrb[0].mxu0 %v3160
    %v3233 = vpop.f32.mrb[0].mxu0
    %v3234 = vadd.f32 0.0, %v3233
    %v3235 = vpop.f32.mrb[0].mxu0
    %3236 = vdwg.mxu0
    %v3237 = vadd.f32 %v3150, %v3229
    %v3238 = vadd.f32 %v3151, %v3234
    %v3239 = vmul.f32 %v3237, %v38
    %v3240 = vmul.f32 %v3238, %v38
    %v3241 = vxor.u32 %v3239, 2147483648
    %v3242 = vxor.u32 %v3240, 2147483648
    %v3243 = vmul.f32 %v3241, 1.442695
    %v3244 = vpow.pop %v3243
    %v3245 = vmul.f32 %v3242, 1.442695
    %v3246 = vpow.pop %v3245
    %v3247 = vadd.f32 %v3244, 1.0
    %v3248 = vadd.f32 %v3246, 1.0
    %v3249 = vrcp.pop %v3247
    %v3250 = vmul.f32 1.0, %v3249
    %v3251 = vrcp.pop %v3248
    %v3252 = vmul.f32 1.0, %v3251
    %v3253 = vmul.f32 %v3250, %v38
    %v3254 = vmul.f32 %v3252, %v38
    %v3255 = vadd.f32 %v3253, %v39
    %v3256 = vadd.f32 %v3254, %v39
    %v3257 = vmul.f32 %v3255, %v2766
    %v3258 = vmul.f32 %v3256, %v2767
    %3261 = vrot.lane.b32.xlu0 %v3255, 64
    %v3262 = vpop.permute.xlu0 %3261
    %3263 = vrot.lane.b32.xlu0 %v3256, 64
    %v3264 = vpop.permute.xlu0 %3263
    %v3267 = vmul.f32 %v3255, %v3262
    %v3268 = vmul.f32 %v3256, %v3264
    %3271 = vrot.lane.b32.xlu0 %v3267, 32
    %v3272 = vpop.permute.xlu0 %3271
    %3273 = vrot.lane.b32.xlu0 %v3268, 32
    %v3274 = vpop.permute.xlu0 %3273
    %v3277 = vadd.f32 %v3257, %v3272
    %v3278 = vadd.f32 %v3258, %v3274
    %v3279 = vtanh.pop %v3277
    %v3280 = vtanh.pop %v3278
    %3283 = vrot.lane.b32.xlu0 %v3279, 64
    %v3284 = vpop.permute.xlu0 %3283
    %3285 = vrot.lane.b32.xlu0 %v3280, 64
    %v3286 = vpop.permute.xlu0 %3285
    %v3289 = vmul.f32 %v3255, %v3284
    %v3290 = vmul.f32 %v3256, %v3286
    %3291 = vmatprep.subr.mxu0 0.0
    %3292 = vmatpush1.msra.mxu0 %v53
    %3293 = vmatprep.subr.mxu0 0.0
    %3294 = vmatpush1.msra.mxu0 %v54
    %3295 = vmatprep.subr.mxu0 0.0
    %3296 = vmatpush1.msra.mxu0 %v55
    %3297 = vmatprep.subr.mxu0 0.0
    %3298 = vmatpush1.msra.mxu0 %v56
    %3299 = vmatprep.subr.mxu0 0.0
    %3300 = vmatpush1.msra.mxu0 0.0
    %3301 = vmatprep.subr.mxu0 0.0
    %3302 = vmatpush1.msra.mxu0 0.0
    %3303 = vmatprep.subr.mxu0 0.0
    %3304 = vmatpush1.msra.mxu0 0.0
    %3305 = vmatprep.subr.mxu0 0.0
    %3306 = vmatpush1.msra.mxu0 0.0
    %3307 = vmatprep.subr.mxu0 0.0
    %3308 = vmatpush1.msra.mxu0 0.0
    %3309 = vmatprep.subr.mxu0 0.0
    %3310 = vmatpush1.msra.mxu0 0.0
    %3311 = vmatprep.subr.mxu0 0.0
    %3312 = vmatpush1.msra.mxu0 0.0
    %3313 = vmatprep.subr.mxu0 0.0
    %3314 = vmatpush1.msra.mxu0 0.0
    %3315 = vmatprep.subr.mxu0 0.0
    %3316 = vmatpush1.msra.mxu0 0.0
    %3317 = vmatprep.subr.mxu0 0.0
    %3318 = vmatpush1.msra.mxu0 0.0
    %3319 = vmatprep.subr.mxu0 0.0
    %3320 = vmatpush1.msra.mxu0 0.0
    %3321 = vmatprep.subr.mxu0 0.0
    %3322 = vmatpush1.msra.mxu0 0.0
    %3323 = vmatprep.subr.mxu0 0.0
    %3324 = vmatpush1.msra.mxu0 0.0
    %3325 = vmatprep.subr.mxu0 0.0
    %3326 = vmatpush1.msra.mxu0 0.0
    %3327 = vmatprep.subr.mxu0 0.0
    %3328 = vmatpush1.msra.mxu0 0.0
    %3329 = vmatprep.subr.mxu0 0.0
    %3330 = vmatpush1.msra.mxu0 0.0
    %3331 = vmatprep.subr.mxu0 0.0
    %3332 = vmatpush1.msra.mxu0 0.0
    %3333 = vmatprep.subr.mxu0 0.0
    %3334 = vmatpush1.msra.mxu0 0.0
    %3335 = vmatprep.subr.mxu0 0.0
    %3336 = vmatpush1.msra.mxu0 0.0
    %3337 = vmatprep.subr.mxu0 0.0
    %3338 = vmatpush1.msra.mxu0 0.0
    %3339 = vmatprep.subr.mxu0 0.0
    %3340 = vmatpush1.msra.mxu0 0.0
    %3341 = vmatprep.subr.mxu0 0.0
    %3342 = vmatpush1.msra.mxu0 0.0
    %3343 = vmatprep.subr.mxu0 0.0
    %3344 = vmatpush1.msra.mxu0 0.0
    %3345 = vmatprep.subr.mxu0 0.0
    %3346 = vmatpush1.msra.mxu0 0.0
    %3347 = vmatprep.subr.mxu0 0.0
    %3348 = vmatpush1.msra.mxu0 0.0
    %3349 = vmatprep.subr.mxu0 0.0
    %3350 = vmatpush1.msra.mxu0 0.0
    %3351 = vmatprep.subr.mxu0 0.0
    %3352 = vmatpush1.msra.mxu0 0.0
    %3353 = vmatprep.subr.mxu0 0.0
    %3354 = vmatpush1.msra.mxu0 0.0
    %3355 = vmatprep.mubr.f32.mxu0 0.0
    %3356 = vmatmul.mubr.f32.gmra.mrb[0].mxu0 %v3158
    %v3357 = vpop.f32.mrb[0].mxu0
    %v3358 = vadd.f32 %v66, %v3357
    %v3359 = vpop.f32.mrb[0].mxu0
    %3360 = vmatprep.mubr.f32.mxu0 0.0
    %3361 = vmatmul.mubr.f32.gmra.mrb[0].mxu0 %v3160
    %v3362 = vpop.f32.mrb[0].mxu0
    %v3363 = vadd.f32 %v66, %v3362
    %v3364 = vpop.f32.mrb[0].mxu0
    %3365 = vdwg.mxu0
    %v3366 = vsel %vm466, %v2991, 0
    %v3368 = vsel %vm466, %v2993, 0
    %3370 = vmatprep.subr.mxu0 0.0
    %3371 = vmatpush1.msra.mxu0 %v57
    %3372 = vmatprep.subr.mxu0 0.0
    %3373 = vmatpush1.msra.mxu0 %v58
    %3374 = vmatprep.subr.mxu0 0.0
    %3375 = vmatpush1.msra.mxu0 %v59
    %3376 = vmatprep.subr.mxu0 0.0
    %3377 = vmatpush1.msra.mxu0 %v60
    %3378 = vmatprep.subr.mxu0 0.0
    %3379 = vmatpush1.msra.mxu0 0.0
    %3380 = vmatprep.subr.mxu0 0.0
    %3381 = vmatpush1.msra.mxu0 0.0
    %3382 = vmatprep.subr.mxu0 0.0
    %3383 = vmatpush1.msra.mxu0 0.0
    %3384 = vmatprep.subr.mxu0 0.0
    %3385 = vmatpush1.msra.mxu0 0.0
    %3386 = vmatprep.subr.mxu0 0.0
    %3387 = vmatpush1.msra.mxu0 0.0
    %3388 = vmatprep.subr.mxu0 0.0
    %3389 = vmatpush1.msra.mxu0 0.0
    %3390 = vmatprep.subr.mxu0 0.0
    %3391 = vmatpush1.msra.mxu0 0.0
    %3392 = vmatprep.subr.mxu0 0.0
    %3393 = vmatpush1.msra.mxu0 0.0
    %3394 = vmatprep.subr.mxu0 0.0
    %3395 = vmatpush1.msra.mxu0 0.0
    %3396 = vmatprep.subr.mxu0 0.0
    %3397 = vmatpush1.msra.mxu0 0.0
    %3398 = vmatprep.subr.mxu0 0.0
    %3399 = vmatpush1.msra.mxu0 0.0
    %3400 = vmatprep.subr.mxu0 0.0
    %3401 = vmatpush1.msra.mxu0 0.0
    %3402 = vmatprep.subr.mxu0 0.0
    %3403 = vmatpush1.msra.mxu0 0.0
    %3404 = vmatprep.subr.mxu0 0.0
    %3405 = vmatpush1.msra.mxu0 0.0
    %3406 = vmatprep.subr.mxu0 0.0
    %3407 = vmatpush1.msra.mxu0 0.0
    %3408 = vmatprep.subr.mxu0 0.0
    %3409 = vmatpush1.msra.mxu0 0.0
    %3410 = vmatprep.subr.mxu0 0.0
    %3411 = vmatpush1.msra.mxu0 0.0
    %3412 = vmatprep.subr.mxu0 0.0
    %3413 = vmatpush1.msra.mxu0 0.0
    %3414 = vmatprep.subr.mxu0 0.0
    %3415 = vmatpush1.msra.mxu0 0.0
    %3416 = vmatprep.subr.mxu0 0.0
    %3417 = vmatpush1.msra.mxu0 0.0
    %3418 = vmatprep.subr.mxu0 0.0
    %3419 = vmatpush1.msra.mxu0 0.0
    %3420 = vmatprep.subr.mxu0 0.0
    %3421 = vmatpush1.msra.mxu0 0.0
    %3422 = vmatprep.subr.mxu0 0.0
    %3423 = vmatpush1.msra.mxu0 0.0
    %3424 = vmatprep.subr.mxu0 0.0
    %3425 = vmatpush1.msra.mxu0 0.0
    %3426 = vmatprep.subr.mxu0 0.0
    %3427 = vmatpush1.msra.mxu0 0.0
    %3428 = vmatprep.subr.mxu0 0.0
    %3429 = vmatpush1.msra.mxu0 0.0
    %3430 = vmatprep.subr.mxu0 0.0
    %3431 = vmatpush1.msra.mxu0 0.0
    %3432 = vmatprep.subr.mxu0 0.0
    %3433 = vmatpush1.msra.mxu0 0.0
    %3434 = vmatprep.mubr.f32.mxu0 0.0
    %3435 = vmatmul.mubr.f32.gmra.mrb[0].mxu0 %v3366
    %v3436 = vpop.f32.mrb[0].mxu0
    %v3437 = vadd.f32 0.0, %v3436
    %v3438 = vpop.f32.mrb[0].mxu0
    %3439 = vmatprep.mubr.f32.mxu0 0.0
    %3440 = vmatmul.mubr.f32.gmra.mrb[0].mxu0 %v3368
    %v3441 = vpop.f32.mrb[0].mxu0
    %v3442 = vadd.f32 0.0, %v3441
    %v3443 = vpop.f32.mrb[0].mxu0
    %3444 = vdwg.mxu0
    %v3445 = vadd.f32 %v3358, %v3437
    %v3446 = vadd.f32 %v3363, %v3442
    %v3447 = vmul.f32 %v3445, %v38
    %v3448 = vmul.f32 %v3446, %v38
    %v3449 = vxor.u32 %v3447, 2147483648
    %v3450 = vxor.u32 %v3448, 2147483648
    %v3451 = vmul.f32 %v3449, 1.442695
    %v3452 = vpow.pop %v3451
    %v3453 = vmul.f32 %v3450, 1.442695
    %v3454 = vpow.pop %v3453
    %v3455 = vadd.f32 %v3452, 1.0
    %v3456 = vadd.f32 %v3454, 1.0
    %v3457 = vrcp.pop %v3455
    %v3458 = vmul.f32 1.0, %v3457
    %v3459 = vrcp.pop %v3456
    %v3460 = vmul.f32 1.0, %v3459
    %v3461 = vmul.f32 %v3458, %v38
    %v3462 = vmul.f32 %v3460, %v38
    %v3463 = vadd.f32 %v3461, %v39
    %v3464 = vadd.f32 %v3462, %v39
    %v3465 = vmul.f32 %v3463, %v2974
    %v3466 = vmul.f32 %v3464, %v2975
    %3469 = vrot.lane.b32.xlu0 %v3463, 64
    %v3470 = vpop.permute.xlu0 %3469
    %3471 = vrot.lane.b32.xlu0 %v3464, 64
    %v3472 = vpop.permute.xlu0 %3471
    %v3475 = vmul.f32 %v3463, %v3470
    %v3476 = vmul.f32 %v3464, %v3472
    %3479 = vrot.lane.b32.xlu0 %v3475, 32
    %v3480 = vpop.permute.xlu0 %3479
    %3481 = vrot.lane.b32.xlu0 %v3476, 32
    %v3482 = vpop.permute.xlu0 %3481
    %v3485 = vadd.f32 %v3465, %v3480
    %v3486 = vadd.f32 %v3466, %v3482
    %v3487 = vtanh.pop %v3485
    %v3488 = vtanh.pop %v3486
    %3491 = vrot.lane.b32.xlu0 %v3487, 64
    %v3492 = vpop.permute.xlu0 %3491
    %3493 = vrot.lane.b32.xlu0 %v3488, 64
    %v3494 = vpop.permute.xlu0 %3493
    %v3497 = vmul.f32 %v3463, %v3492
    %v3498 = vmul.f32 %v3464, %v3494
    %3501 = vrot.lane.b32.xlu0 %v3497, 32
    %v3502 = vpop.permute.xlu0 %3501
    %3503 = vrot.lane.b32.xlu0 %v3498, 32
    %v3504 = vpop.permute.xlu0 %3503
    %3507 = vmatprep.subr.mxu0 0.0
    %3508 = vmatpush1.msra.mxu0 %v3502
    %3509 = vmatprep.subr.mxu0 0.0
    %3510 = vmatpush1.msra.mxu0 %v3504
    %3511 = vmatprep.subr.mxu0 0.0
    %3512 = vmatpush1.msra.mxu0 0.0
    %3513 = vmatprep.subr.mxu0 0.0
    %3514 = vmatpush1.msra.mxu0 0.0
    %3515 = vmatprep.subr.mxu0 0.0
    %3516 = vmatpush1.msra.mxu0 0.0
    %3517 = vmatprep.subr.mxu0 0.0
    %3518 = vmatpush1.msra.mxu0 0.0
    %3519 = vmatprep.subr.mxu0 0.0
    %3520 = vmatpush1.msra.mxu0 0.0
    %3521 = vmatprep.subr.mxu0 0.0
    %3522 = vmatpush1.msra.mxu0 0.0
    %3523 = vmatprep.subr.mxu0 0.0
    %3524 = vmatpush1.msra.mxu0 0.0
    %3525 = vmatprep.subr.mxu0 0.0
    %3526 = vmatpush1.msra.mxu0 0.0
    %3527 = vmatprep.subr.mxu0 0.0
    %3528 = vmatpush1.msra.mxu0 0.0
    %3529 = vmatprep.subr.mxu0 0.0
    %3530 = vmatpush1.msra.mxu0 0.0
    %3531 = vmatprep.subr.mxu0 0.0
    %3532 = vmatpush1.msra.mxu0 0.0
    %3533 = vmatprep.subr.mxu0 0.0
    %3534 = vmatpush1.msra.mxu0 0.0
    %3535 = vmatprep.subr.mxu0 0.0
    %3536 = vmatpush1.msra.mxu0 0.0
    %3537 = vmatprep.subr.mxu0 0.0
    %3538 = vmatpush1.msra.mxu0 0.0
    %3539 = vmatprep.subr.mxu0 0.0
    %3540 = vmatpush1.msra.mxu0 0.0
    %3541 = vmatprep.subr.mxu0 0.0
    %3542 = vmatpush1.msra.mxu0 0.0
    %3543 = vmatprep.subr.mxu0 0.0
    %3544 = vmatpush1.msra.mxu0 0.0
    %3545 = vmatprep.subr.mxu0 0.0
    %3546 = vmatpush1.msra.mxu0 0.0
    %3547 = vmatprep.subr.mxu0 0.0
    %3548 = vmatpush1.msra.mxu0 0.0
    %3549 = vmatprep.subr.mxu0 0.0
    %3550 = vmatpush1.msra.mxu0 0.0
    %3551 = vmatprep.subr.mxu0 0.0
    %3552 = vmatpush1.msra.mxu0 0.0
    %3553 = vmatprep.subr.mxu0 0.0
    %3554 = vmatpush1.msra.mxu0 0.0
    %3555 = vmatprep.subr.mxu0 0.0
    %3556 = vmatpush1.msra.mxu0 0.0
    %3557 = vmatprep.subr.mxu0 0.0
    %3558 = vmatpush1.msra.mxu0 0.0
    %3559 = vmatprep.subr.mxu0 0.0
    %3560 = vmatpush1.msra.mxu0 0.0
    %3561 = vmatprep.subr.mxu0 0.0
    %3562 = vmatpush1.msra.mxu0 0.0
    %3563 = vmatprep.subr.mxu0 0.0
    %3564 = vmatpush1.msra.mxu0 0.0
    %3565 = vmatprep.subr.mxu0 0.0
    %3566 = vmatpush1.msra.mxu0 0.0
    %3567 = vmatprep.subr.mxu0 0.0
    %3568 = vmatpush1.msra.mxu0 0.0
    %3569 = vmatprep.subr.mxu0 0.0
    %3570 = vmatpush1.msra.mxu0 0.0
    %3571 = vmatprep.mubr.f32.mxu0 0.0
    %3572 = vmatmul.mubr.f32.gmra.mrb[0].mxu0 %v954
    %v3573 = vpop.f32.mrb[0].mxu0
    %v3574 = vadd.f32 0.0, %v3573
    %v3575 = vpop.f32.mrb[0].mxu0
    %3576 = vdwg.mxu0
    %v3577 = vld [vmem:[%s7 + $0x140] sm:$0xff]
    %v3578 = vld [vmem:[%s7 + $0x148] sm:$0xff]
    %v3579 = vld [vmem:[%s7 + $0x150] sm:$0xff]
    %v3580 = vld [vmem:[%s7 + $0x158] sm:$0xff]
    %v3581 = vld [vmem:[%s7 + $0x160] sm:$0xff]
    %v3582 = vld [vmem:[%s7 + $0x168] sm:$0xff]
    %v3583 = vld [vmem:[%s7 + $0x170] sm:$0xff]
    %v3584 = vld [vmem:[%s7 + $0x178] sm:$0xff]
    %v3586 = vsel %vm466, %v3574, 0
    %3588 = vmatprep.subr.mxu0 %v3578
    %3589 = vmatpush1.msra.mxu0 %v3577
    %3590 = vmatprep.subr.mxu0 %v3580
    %3591 = vmatpush1.msra.mxu0 %v3579
    %3592 = vmatprep.subr.mxu0 %v3582
    %3593 = vmatpush1.msra.mxu0 %v3581
    %3594 = vmatprep.subr.mxu0 %v3584
    %3595 = vmatpush1.msra.mxu0 %v3583
    %3596 = vmatprep.subr.mxu0 0.0
    %3597 = vmatpush1.msra.mxu0 0.0
    %3598 = vmatprep.subr.mxu0 0.0
    %3599 = vmatpush1.msra.mxu0 0.0
    %3600 = vmatprep.subr.mxu0 0.0
    %3601 = vmatpush1.msra.mxu0 0.0
    %3602 = vmatprep.subr.mxu0 0.0
    %3603 = vmatpush1.msra.mxu0 0.0
    %3604 = vmatprep.subr.mxu0 0.0
    %3605 = vmatpush1.msra.mxu0 0.0
    %3606 = vmatprep.subr.mxu0 0.0
    %3607 = vmatpush1.msra.mxu0 0.0
    %3608 = vmatprep.subr.mxu0 0.0
    %3609 = vmatpush1.msra.mxu0 0.0
    %3610 = vmatprep.subr.mxu0 0.0
    %3611 = vmatpush1.msra.mxu0 0.0
    %3612 = vmatprep.subr.mxu0 0.0
    %3613 = vmatpush1.msra.mxu0 0.0
    %3614 = vmatprep.subr.mxu0 0.0
    %3615 = vmatpush1.msra.mxu0 0.0
    %3616 = vmatprep.subr.mxu0 0.0
    %3617 = vmatpush1.msra.mxu0 0.0
    %3618 = vmatprep.subr.mxu0 0.0
    %3619 = vmatpush1.msra.mxu0 0.0
    %3620 = vmatprep.subr.mxu0 0.0
    %3621 = vmatpush1.msra.mxu0 0.0
    %3622 = vmatprep.subr.mxu0 0.0
    %3623 = vmatpush1.msra.mxu0 0.0
    %3624 = vmatprep.subr.mxu0 0.0
    %3625 = vmatpush1.msra.mxu0 0.0
    %3626 = vmatprep.subr.mxu0 0.0
    %3627 = vmatpush1.msra.mxu0 0.0
    %3628 = vmatprep.subr.mxu0 0.0
    %3629 = vmatpush1.msra.mxu0 0.0
    %3630 = vmatprep.subr.mxu0 0.0
    %3631 = vmatpush1.msra.mxu0 0.0
    %3632 = vmatprep.subr.mxu0 0.0
    %3633 = vmatpush1.msra.mxu0 0.0
    %3634 = vmatprep.subr.mxu0 0.0
    %3635 = vmatpush1.msra.mxu0 0.0
    %3636 = vmatprep.subr.mxu0 0.0
    %3637 = vmatpush1.msra.mxu0 0.0
    %3638 = vmatprep.subr.mxu0 0.0
    %3639 = vmatpush1.msra.mxu0 0.0
    %3640 = vmatprep.subr.mxu0 0.0
    %3641 = vmatpush1.msra.mxu0 0.0
    %3642 = vmatprep.subr.mxu0 0.0
    %3643 = vmatpush1.msra.mxu0 0.0
    %3644 = vmatprep.subr.mxu0 0.0
    %3645 = vmatpush1.msra.mxu0 0.0
    %3646 = vmatprep.subr.mxu0 0.0
    %3647 = vmatpush1.msra.mxu0 0.0
    %3648 = vmatprep.subr.mxu0 0.0
    %3649 = vmatpush1.msra.mxu0 0.0
    %3650 = vmatprep.subr.mxu0 0.0
    %3651 = vmatpush1.msra.mxu0 0.0
    %3652 = vmatprep.mubr.f32.mxu0 0.0
    %3653 = vmatmul.mubr.f32.gmra.mrb[0].mxu0 %v3586
    %v3654 = vpop.f32.mrb[0].mxu0
    %v3655 = vadd.f32 0.0, %v3654
    %v3656 = vpop.f32.mrb[0].mxu0
    %v3657 = vadd.f32 0.0, %v3656
    %3658 = vdwg.mxu0
    %v3659 = vadd.f32 %v3148, %v3655
    %v3660 = vadd.f32 %v3149, %v3657
    %v3661 = vld [vmem:[#allocation2 + $0x70] sm:$0xff]
    %v3662 = vld [vmem:[#allocation2 + $0x78] sm:$0xff]
    %3665 = vrot.lane.b32.xlu0 %v3289, 32
    %v3666 = vpop.permute.xlu0 %3665
    %3667 = vrot.lane.b32.xlu0 %v3290, 32
    %v3668 = vpop.permute.xlu0 %3667
    %v3669 = vsel %vm466, %v3666, 0
    %v3671 = vsel %vm466, %v3668, 0
    %3673 = vmatprep.subr.mxu0 0.0
    %3674 = vmatpush1.msra.mxu0 %v48
    %3675 = vmatprep.subr.mxu0 0.0
    %3676 = vmatpush1.msra.mxu0 %v49
    %3677 = vmatprep.subr.mxu0 0.0
    %3678 = vmatpush1.msra.mxu0 %v50
    %3679 = vmatprep.subr.mxu0 0.0
    %3680 = vmatpush1.msra.mxu0 %v51
    %3681 = vmatprep.subr.mxu0 0.0
    %3682 = vmatpush1.msra.mxu0 0.0
    %3683 = vmatprep.subr.mxu0 0.0
    %3684 = vmatpush1.msra.mxu0 0.0
    %3685 = vmatprep.subr.mxu0 0.0
    %3686 = vmatpush1.msra.mxu0 0.0
    %3687 = vmatprep.subr.mxu0 0.0
    %3688 = vmatpush1.msra.mxu0 0.0
    %3689 = vmatprep.subr.mxu0 0.0
    %3690 = vmatpush1.msra.mxu0 0.0
    %3691 = vmatprep.subr.mxu0 0.0
    %3692 = vmatpush1.msra.mxu0 0.0
    %3693 = vmatprep.subr.mxu0 0.0
    %3694 = vmatpush1.msra.mxu0 0.0
    %3695 = vmatprep.subr.mxu0 0.0
    %3696 = vmatpush1.msra.mxu0 0.0
    %3697 = vmatprep.subr.mxu0 0.0
    %3698 = vmatpush1.msra.mxu0 0.0
    %3699 = vmatprep.subr.mxu0 0.0
    %3700 = vmatpush1.msra.mxu0 0.0
    %3701 = vmatprep.subr.mxu0 0.0
    %3702 = vmatpush1.msra.mxu0 0.0
    %3703 = vmatprep.subr.mxu0 0.0
    %3704 = vmatpush1.msra.mxu0 0.0
    %3705 = vmatprep.subr.mxu0 0.0
    %3706 = vmatpush1.msra.mxu0 0.0
    %3707 = vmatprep.subr.mxu0 0.0
    %3708 = vmatpush1.msra.mxu0 0.0
    %3709 = vmatprep.subr.mxu0 0.0
    %3710 = vmatpush1.msra.mxu0 0.0
    %3711 = vmatprep.subr.mxu0 0.0
    %3712 = vmatpush1.msra.mxu0 0.0
    %3713 = vmatprep.subr.mxu0 0.0
    %3714 = vmatpush1.msra.mxu0 0.0
    %3715 = vmatprep.subr.mxu0 0.0
    %3716 = vmatpush1.msra.mxu0 0.0
    %3717 = vmatprep.subr.mxu0 0.0
    %3718 = vmatpush1.msra.mxu0 0.0
    %3719 = vmatprep.subr.mxu0 0.0
    %3720 = vmatpush1.msra.mxu0 0.0
    %3721 = vmatprep.subr.mxu0 0.0
    %3722 = vmatpush1.msra.mxu0 0.0
    %3723 = vmatprep.subr.mxu0 0.0
    %3724 = vmatpush1.msra.mxu0 0.0
    %3725 = vmatprep.subr.mxu0 0.0
    %3726 = vmatpush1.msra.mxu0 0.0
    %3727 = vmatprep.subr.mxu0 0.0
    %3728 = vmatpush1.msra.mxu0 0.0
    %3729 = vmatprep.subr.mxu0 0.0
    %3730 = vmatpush1.msra.mxu0 0.0
    %3731 = vmatprep.subr.mxu0 0.0
    %3732 = vmatpush1.msra.mxu0 0.0
    %3733 = vmatprep.subr.mxu0 0.0
    %3734 = vmatpush1.msra.mxu0 0.0
    %3735 = vmatprep.subr.mxu0 0.0
    %3736 = vmatpush1.msra.mxu0 0.0
    %3737 = vmatprep.mubr.f32.mxu0 0.0
    %3738 = vmatmul.mubr.f32.gmra.mrb[0].mxu0 %v3669
    %v3739 = vpop.f32.mrb[0].mxu0
    %v3740 = vadd.f32 0.0, %v3739
    %v3741 = vpop.f32.mrb[0].mxu0
    %3742 = vmatprep.mubr.f32.mxu0 0.0
    %3743 = vmatmul.mubr.f32.gmra.mrb[0].mxu0 %v3671
    %v3744 = vpop.f32.mrb[0].mxu0
    %v3745 = vadd.f32 0.0, %v3744
    %v3746 = vpop.f32.mrb[0].mxu0
    %3747 = vdwg.mxu0
    %v3748 = vadd.f32 %v3661, %v3740
    %v3749 = vadd.f32 %v3662, %v3745
    %v3750 = vmul.f32 %v3748, %v38
    %v3751 = vmul.f32 %v3749, %v38
    %v3752 = vxor.u32 %v3750, 2147483648
    %v3753 = vxor.u32 %v3751, 2147483648
    %v3754 = vmul.f32 %v3752, 1.442695
    %v3755 = vpow.pop %v3754
    %v3756 = vmul.f32 %v3753, 1.442695
    %v3757 = vpow.pop %v3756
    %v3758 = vadd.f32 %v3755, 1.0
    %v3759 = vadd.f32 %v3757, 1.0
    %v3760 = vrcp.pop %v3758
    %v3761 = vmul.f32 1.0, %v3760
    %v3762 = vrcp.pop %v3759
    %v3763 = vmul.f32 1.0, %v3762
    %v3764 = vmul.f32 %v3761, %v38
    %v3765 = vmul.f32 %v3763, %v38
    %v3766 = vadd.f32 %v3764, %v39
    %v3767 = vadd.f32 %v3765, %v39
    %v3768 = vmul.f32 %v3766, %v3277
    %v3769 = vmul.f32 %v3767, %v3278
    %3772 = vrot.lane.b32.xlu0 %v3766, 64
    %v3773 = vpop.permute.xlu0 %3772
    %3774 = vrot.lane.b32.xlu0 %v3767, 64
    %v3775 = vpop.permute.xlu0 %3774
    %v3778 = vmul.f32 %v3766, %v3773
    %v3779 = vmul.f32 %v3767, %v3775
    %3782 = vrot.lane.b32.xlu0 %v3778, 32
    %v3783 = vpop.permute.xlu0 %3782
    %3784 = vrot.lane.b32.xlu0 %v3779, 32
    %v3785 = vpop.permute.xlu0 %3784
    %v3788 = vadd.f32 %v3768, %v3783
    %v3789 = vadd.f32 %v3769, %v3785
    %v3790 = vtanh.pop %v3788
    %v3791 = vtanh.pop %v3789
    %3794 = vrot.lane.b32.xlu0 %v3790, 64
    %v3795 = vpop.permute.xlu0 %3794
    %3796 = vrot.lane.b32.xlu0 %v3791, 64
    %v3797 = vpop.permute.xlu0 %3796
    %v3800 = vmul.f32 %v3766, %v3795
    %v3801 = vmul.f32 %v3767, %v3797
    %3802 = vmatprep.subr.mxu0 0.0
    %3803 = vmatpush1.msra.mxu0 %v53
    %3804 = vmatprep.subr.mxu0 0.0
    %3805 = vmatpush1.msra.mxu0 %v54
    %3806 = vmatprep.subr.mxu0 0.0
    %3807 = vmatpush1.msra.mxu0 %v55
    %3808 = vmatprep.subr.mxu0 0.0
    %3809 = vmatpush1.msra.mxu0 %v56
    %3810 = vmatprep.subr.mxu0 0.0
    %3811 = vmatpush1.msra.mxu0 0.0
    %3812 = vmatprep.subr.mxu0 0.0
    %3813 = vmatpush1.msra.mxu0 0.0
    %3814 = vmatprep.subr.mxu0 0.0
    %3815 = vmatpush1.msra.mxu0 0.0
    %3816 = vmatprep.subr.mxu0 0.0
    %3817 = vmatpush1.msra.mxu0 0.0
    %3818 = vmatprep.subr.mxu0 0.0
    %3819 = vmatpush1.msra.mxu0 0.0
    %3820 = vmatprep.subr.mxu0 0.0
    %3821 = vmatpush1.msra.mxu0 0.0
    %3822 = vmatprep.subr.mxu0 0.0
    %3823 = vmatpush1.msra.mxu0 0.0
    %3824 = vmatprep.subr.mxu0 0.0
    %3825 = vmatpush1.msra.mxu0 0.0
    %3826 = vmatprep.subr.mxu0 0.0
    %3827 = vmatpush1.msra.mxu0 0.0
    %3828 = vmatprep.subr.mxu0 0.0
    %3829 = vmatpush1.msra.mxu0 0.0
    %3830 = vmatprep.subr.mxu0 0.0
    %3831 = vmatpush1.msra.mxu0 0.0
    %3832 = vmatprep.subr.mxu0 0.0
    %3833 = vmatpush1.msra.mxu0 0.0
    %3834 = vmatprep.subr.mxu0 0.0
    %3835 = vmatpush1.msra.mxu0 0.0
    %3836 = vmatprep.subr.mxu0 0.0
    %3837 = vmatpush1.msra.mxu0 0.0
    %3838 = vmatprep.subr.mxu0 0.0
    %3839 = vmatpush1.msra.mxu0 0.0
    %3840 = vmatprep.subr.mxu0 0.0
    %3841 = vmatpush1.msra.mxu0 0.0
    %3842 = vmatprep.subr.mxu0 0.0
    %3843 = vmatpush1.msra.mxu0 0.0
    %3844 = vmatprep.subr.mxu0 0.0
    %3845 = vmatpush1.msra.mxu0 0.0
    %3846 = vmatprep.subr.mxu0 0.0
    %3847 = vmatpush1.msra.mxu0 0.0
    %3848 = vmatprep.subr.mxu0 0.0
    %3849 = vmatpush1.msra.mxu0 0.0
    %3850 = vmatprep.subr.mxu0 0.0
    %3851 = vmatpush1.msra.mxu0 0.0
    %3852 = vmatprep.subr.mxu0 0.0
    %3853 = vmatpush1.msra.mxu0 0.0
    %3854 = vmatprep.subr.mxu0 0.0
    %3855 = vmatpush1.msra.mxu0 0.0
    %3856 = vmatprep.subr.mxu0 0.0
    %3857 = vmatpush1.msra.mxu0 0.0
    %3858 = vmatprep.subr.mxu0 0.0
    %3859 = vmatpush1.msra.mxu0 0.0
    %3860 = vmatprep.subr.mxu0 0.0
    %3861 = vmatpush1.msra.mxu0 0.0
    %3862 = vmatprep.subr.mxu0 0.0
    %3863 = vmatpush1.msra.mxu0 0.0
    %3864 = vmatprep.subr.mxu0 0.0
    %3865 = vmatpush1.msra.mxu0 0.0
    %3866 = vmatprep.mubr.f32.mxu0 0.0
    %3867 = vmatmul.mubr.f32.gmra.mrb[0].mxu0 %v3669
    %v3868 = vpop.f32.mrb[0].mxu0
    %v3869 = vadd.f32 %v66, %v3868
    %v3870 = vpop.f32.mrb[0].mxu0
    %3871 = vmatprep.mubr.f32.mxu0 0.0
    %3872 = vmatmul.mubr.f32.gmra.mrb[0].mxu0 %v3671
    %v3873 = vpop.f32.mrb[0].mxu0
    %v3874 = vadd.f32 %v66, %v3873
    %v3875 = vpop.f32.mrb[0].mxu0
    %3876 = vdwg.mxu0
    %v3877 = vsel %vm466, %v3502, 0
    %v3879 = vsel %vm466, %v3504, 0
    %3881 = vmatprep.subr.mxu0 0.0
    %3882 = vmatpush1.msra.mxu0 %v57
    %3883 = vmatprep.subr.mxu0 0.0
    %3884 = vmatpush1.msra.mxu0 %v58
    %3885 = vmatprep.subr.mxu0 0.0
    %3886 = vmatpush1.msra.mxu0 %v59
    %3887 = vmatprep.subr.mxu0 0.0
    %3888 = vmatpush1.msra.mxu0 %v60
    %3889 = vmatprep.subr.mxu0 0.0
    %3890 = vmatpush1.msra.mxu0 0.0
    %3891 = vmatprep.subr.mxu0 0.0
    %3892 = vmatpush1.msra.mxu0 0.0
    %3893 = vmatprep.subr.mxu0 0.0
    %3894 = vmatpush1.msra.mxu0 0.0
    %3895 = vmatprep.subr.mxu0 0.0
    %3896 = vmatpush1.msra.mxu0 0.0
    %3897 = vmatprep.subr.mxu0 0.0
    %3898 = vmatpush1.msra.mxu0 0.0
    %3899 = vmatprep.subr.mxu0 0.0
    %3900 = vmatpush1.msra.mxu0 0.0
    %3901 = vmatprep.subr.mxu0 0.0
    %3902 = vmatpush1.msra.mxu0 0.0
    %3903 = vmatprep.subr.mxu0 0.0
    %3904 = vmatpush1.msra.mxu0 0.0
    %3905 = vmatprep.subr.mxu0 0.0
    %3906 = vmatpush1.msra.mxu0 0.0
    %3907 = vmatprep.subr.mxu0 0.0
    %3908 = vmatpush1.msra.mxu0 0.0
    %3909 = vmatprep.subr.mxu0 0.0
    %3910 = vmatpush1.msra.mxu0 0.0
    %3911 = vmatprep.subr.mxu0 0.0
    %3912 = vmatpush1.msra.mxu0 0.0
    %3913 = vmatprep.subr.mxu0 0.0
    %3914 = vmatpush1.msra.mxu0 0.0
    %3915 = vmatprep.subr.mxu0 0.0
    %3916 = vmatpush1.msra.mxu0 0.0
    %3917 = vmatprep.subr.mxu0 0.0
    %3918 = vmatpush1.msra.mxu0 0.0
    %3919 = vmatprep.subr.mxu0 0.0
    %3920 = vmatpush1.msra.mxu0 0.0
    %3921 = vmatprep.subr.mxu0 0.0
    %3922 = vmatpush1.msra.mxu0 0.0
    %3923 = vmatprep.subr.mxu0 0.0
    %3924 = vmatpush1.msra.mxu0 0.0
    %3925 = vmatprep.subr.mxu0 0.0
    %3926 = vmatpush1.msra.mxu0 0.0
    %3927 = vmatprep.subr.mxu0 0.0
    %3928 = vmatpush1.msra.mxu0 0.0
    %3929 = vmatprep.subr.mxu0 0.0
    %3930 = vmatpush1.msra.mxu0 0.0
    %3931 = vmatprep.subr.mxu0 0.0
    %3932 = vmatpush1.msra.mxu0 0.0
    %3933 = vmatprep.subr.mxu0 0.0
    %3934 = vmatpush1.msra.mxu0 0.0
    %3935 = vmatprep.subr.mxu0 0.0
    %3936 = vmatpush1.msra.mxu0 0.0
    %3937 = vmatprep.subr.mxu0 0.0
    %3938 = vmatpush1.msra.mxu0 0.0
    %3939 = vmatprep.subr.mxu0 0.0
    %3940 = vmatpush1.msra.mxu0 0.0
    %3941 = vmatprep.subr.mxu0 0.0
    %3942 = vmatpush1.msra.mxu0 0.0
    %3943 = vmatprep.subr.mxu0 0.0
    %3944 = vmatpush1.msra.mxu0 0.0
    %3945 = vmatprep.mubr.f32.mxu0 0.0
    %3946 = vmatmul.mubr.f32.gmra.mrb[0].mxu0 %v3877
    %v3947 = vpop.f32.mrb[0].mxu0
    %v3948 = vadd.f32 0.0, %v3947
    %v3949 = vpop.f32.mrb[0].mxu0
    %3950 = vmatprep.mubr.f32.mxu0 0.0
    %3951 = vmatmul.mubr.f32.gmra.mrb[0].mxu0 %v3879
    %v3952 = vpop.f32.mrb[0].mxu0
    %v3953 = vadd.f32 0.0, %v3952
    %v3954 = vpop.f32.mrb[0].mxu0
    %3955 = vdwg.mxu0
    %v3956 = vadd.f32 %v3869, %v3948
    %v3957 = vadd.f32 %v3874, %v3953
    %v3958 = vmul.f32 %v3956, %v38
    %v3959 = vmul.f32 %v3957, %v38
    %v3960 = vxor.u32 %v3958, 2147483648
    %v3961 = vxor.u32 %v3959, 2147483648
    %v3962 = vmul.f32 %v3960, 1.442695
    %v3963 = vpow.pop %v3962
    %v3964 = vmul.f32 %v3961, 1.442695
    %v3965 = vpow.pop %v3964
    %v3966 = vadd.f32 %v3963, 1.0
    %v3967 = vadd.f32 %v3965, 1.0
    %v3968 = vrcp.pop %v3966
    %v3969 = vmul.f32 1.0, %v3968
    %v3970 = vrcp.pop %v3967
    %v3971 = vmul.f32 1.0, %v3970
    %v3972 = vmul.f32 %v3969, %v38
    %v3973 = vmul.f32 %v3971, %v38
    %v3974 = vadd.f32 %v3972, %v39
    %v3975 = vadd.f32 %v3973, %v39
    %v3976 = vmul.f32 %v3974, %v3485
    %v3977 = vmul.f32 %v3975, %v3486
    %3980 = vrot.lane.b32.xlu0 %v3974, 64
    %v3981 = vpop.permute.xlu0 %3980
    %3982 = vrot.lane.b32.xlu0 %v3975, 64
    %v3983 = vpop.permute.xlu0 %3982
    %v3986 = vmul.f32 %v3974, %v3981
    %v3987 = vmul.f32 %v3975, %v3983
    %3990 = vrot.lane.b32.xlu0 %v3986, 32
    %v3991 = vpop.permute.xlu0 %3990
    %3992 = vrot.lane.b32.xlu0 %v3987, 32
    %v3993 = vpop.permute.xlu0 %3992
    %v3996 = vadd.f32 %v3976, %v3991
    %v3997 = vadd.f32 %v3977, %v3993
    %v3998 = vtanh.pop %v3996
    %v3999 = vtanh.pop %v3997
    %4002 = vrot.lane.b32.xlu0 %v3998, 64
    %v4003 = vpop.permute.xlu0 %4002
    %4004 = vrot.lane.b32.xlu0 %v3999, 64
    %v4005 = vpop.permute.xlu0 %4004
    %v4008 = vmul.f32 %v3974, %v4003
    %v4009 = vmul.f32 %v3975, %v4005
    %4012 = vrot.lane.b32.xlu0 %v4008, 32
    %v4013 = vpop.permute.xlu0 %4012
    %4014 = vrot.lane.b32.xlu0 %v4009, 32
    %v4015 = vpop.permute.xlu0 %4014
    %4018 = vmatprep.subr.mxu0 0.0
    %4019 = vmatpush1.msra.mxu0 %v4013
    %4020 = vmatprep.subr.mxu0 0.0
    %4021 = vmatpush1.msra.mxu0 %v4015
    %4022 = vmatprep.subr.mxu0 0.0
    %4023 = vmatpush1.msra.mxu0 0.0
    %4024 = vmatprep.subr.mxu0 0.0
    %4025 = vmatpush1.msra.mxu0 0.0
    %4026 = vmatprep.subr.mxu0 0.0
    %4027 = vmatpush1.msra.mxu0 0.0
    %4028 = vmatprep.subr.mxu0 0.0
    %4029 = vmatpush1.msra.mxu0 0.0
    %4030 = vmatprep.subr.mxu0 0.0
    %4031 = vmatpush1.msra.mxu0 0.0
    %4032 = vmatprep.subr.mxu0 0.0
    %4033 = vmatpush1.msra.mxu0 0.0
    %4034 = vmatprep.subr.mxu0 0.0
    %4035 = vmatpush1.msra.mxu0 0.0
    %4036 = vmatprep.subr.mxu0 0.0
    %4037 = vmatpush1.msra.mxu0 0.0
    %4038 = vmatprep.subr.mxu0 0.0
    %4039 = vmatpush1.msra.mxu0 0.0
    %4040 = vmatprep.subr.mxu0 0.0
    %4041 = vmatpush1.msra.mxu0 0.0
    %4042 = vmatprep.subr.mxu0 0.0
    %4043 = vmatpush1.msra.mxu0 0.0
    %4044 = vmatprep.subr.mxu0 0.0
    %4045 = vmatpush1.msra.mxu0 0.0
    %4046 = vmatprep.subr.mxu0 0.0
    %4047 = vmatpush1.msra.mxu0 0.0
    %4048 = vmatprep.subr.mxu0 0.0
    %4049 = vmatpush1.msra.mxu0 0.0
    %4050 = vmatprep.subr.mxu0 0.0
    %4051 = vmatpush1.msra.mxu0 0.0
    %4052 = vmatprep.subr.mxu0 0.0
    %4053 = vmatpush1.msra.mxu0 0.0
    %4054 = vmatprep.subr.mxu0 0.0
    %4055 = vmatpush1.msra.mxu0 0.0
    %4056 = vmatprep.subr.mxu0 0.0
    %4057 = vmatpush1.msra.mxu0 0.0
    %4058 = vmatprep.subr.mxu0 0.0
    %4059 = vmatpush1.msra.mxu0 0.0
    %4060 = vmatprep.subr.mxu0 0.0
    %4061 = vmatpush1.msra.mxu0 0.0
    %4062 = vmatprep.subr.mxu0 0.0
    %4063 = vmatpush1.msra.mxu0 0.0
    %4064 = vmatprep.subr.mxu0 0.0
    %4065 = vmatpush1.msra.mxu0 0.0
    %4066 = vmatprep.subr.mxu0 0.0
    %4067 = vmatpush1.msra.mxu0 0.0
    %4068 = vmatprep.subr.mxu0 0.0
    %4069 = vmatpush1.msra.mxu0 0.0
    %4070 = vmatprep.subr.mxu0 0.0
    %4071 = vmatpush1.msra.mxu0 0.0
    %4072 = vmatprep.subr.mxu0 0.0
    %4073 = vmatpush1.msra.mxu0 0.0
    %4074 = vmatprep.subr.mxu0 0.0
    %4075 = vmatpush1.msra.mxu0 0.0
    %4076 = vmatprep.subr.mxu0 0.0
    %4077 = vmatpush1.msra.mxu0 0.0
    %4078 = vmatprep.subr.mxu0 0.0
    %4079 = vmatpush1.msra.mxu0 0.0
    %4080 = vmatprep.subr.mxu0 0.0
    %4081 = vmatpush1.msra.mxu0 0.0
    %4082 = vmatprep.mubr.f32.mxu0 0.0
    %4083 = vmatmul.mubr.f32.gmra.mrb[0].mxu0 %v954
    %v4084 = vpop.f32.mrb[0].mxu0
    %v4085 = vadd.f32 0.0, %v4084
    %v4086 = vpop.f32.mrb[0].mxu0
    %4087 = vdwg.mxu0
    %v4088 = vld [vmem:[%s7 + $0x180] sm:$0xff]
    %v4089 = vld [vmem:[%s7 + $0x188] sm:$0xff]
    %v4090 = vld [vmem:[%s7 + $0x190] sm:$0xff]
    %v4091 = vld [vmem:[%s7 + $0x198] sm:$0xff]
    %v4092 = vld [vmem:[%s7 + $0x1a0] sm:$0xff]
    %v4093 = vld [vmem:[%s7 + $0x1a8] sm:$0xff]
    %v4094 = vld [vmem:[%s7 + $0x1b0] sm:$0xff]
    %v4095 = vld [vmem:[%s7 + $0x1b8] sm:$0xff]
    %v4097 = vsel %vm466, %v4085, 0
    %4099 = vmatprep.subr.mxu0 %v4089
    %4100 = vmatpush1.msra.mxu0 %v4088
    %4101 = vmatprep.subr.mxu0 %v4091
    %4102 = vmatpush1.msra.mxu0 %v4090
    %4103 = vmatprep.subr.mxu0 %v4093
    %4104 = vmatpush1.msra.mxu0 %v4092
    %4105 = vmatprep.subr.mxu0 %v4095
    %4106 = vmatpush1.msra.mxu0 %v4094
    %4107 = vmatprep.subr.mxu0 0.0
    %4108 = vmatpush1.msra.mxu0 0.0
    %4109 = vmatprep.subr.mxu0 0.0
    %4110 = vmatpush1.msra.mxu0 0.0
    %4111 = vmatprep.subr.mxu0 0.0
    %4112 = vmatpush1.msra.mxu0 0.0
    %4113 = vmatprep.subr.mxu0 0.0
    %4114 = vmatpush1.msra.mxu0 0.0
    %4115 = vmatprep.subr.mxu0 0.0
    %4116 = vmatpush1.msra.mxu0 0.0
    %4117 = vmatprep.subr.mxu0 0.0
    %4118 = vmatpush1.msra.mxu0 0.0
    %4119 = vmatprep.subr.mxu0 0.0
    %4120 = vmatpush1.msra.mxu0 0.0
    %4121 = vmatprep.subr.mxu0 0.0
    %4122 = vmatpush1.msra.mxu0 0.0
    %4123 = vmatprep.subr.mxu0 0.0
    %4124 = vmatpush1.msra.mxu0 0.0
    %4125 = vmatprep.subr.mxu0 0.0
    %4126 = vmatpush1.msra.mxu0 0.0
    %4127 = vmatprep.subr.mxu0 0.0
    %4128 = vmatpush1.msra.mxu0 0.0
    %4129 = vmatprep.subr.mxu0 0.0
    %4130 = vmatpush1.msra.mxu0 0.0
    %4131 = vmatprep.subr.mxu0 0.0
    %4132 = vmatpush1.msra.mxu0 0.0
    %4133 = vmatprep.subr.mxu0 0.0
    %4134 = vmatpush1.msra.mxu0 0.0
    %4135 = vmatprep.subr.mxu0 0.0
    %4136 = vmatpush1.msra.mxu0 0.0
    %4137 = vmatprep.subr.mxu0 0.0
    %4138 = vmatpush1.msra.mxu0 0.0
    %4139 = vmatprep.subr.mxu0 0.0
    %4140 = vmatpush1.msra.mxu0 0.0
    %4141 = vmatprep.subr.mxu0 0.0
    %4142 = vmatpush1.msra.mxu0 0.0
    %4143 = vmatprep.subr.mxu0 0.0
    %4144 = vmatpush1.msra.mxu0 0.0
    %4145 = vmatprep.subr.mxu0 0.0
    %4146 = vmatpush1.msra.mxu0 0.0
    %4147 = vmatprep.subr.mxu0 0.0
    %4148 = vmatpush1.msra.mxu0 0.0
    %4149 = vmatprep.subr.mxu0 0.0
    %4150 = vmatpush1.msra.mxu0 0.0
    %4151 = vmatprep.subr.mxu0 0.0
    %4152 = vmatpush1.msra.mxu0 0.0
    %4153 = vmatprep.subr.mxu0 0.0
    %4154 = vmatpush1.msra.mxu0 0.0
    %4155 = vmatprep.subr.mxu0 0.0
    %4156 = vmatpush1.msra.mxu0 0.0
    %4157 = vmatprep.subr.mxu0 0.0
    %4158 = vmatpush1.msra.mxu0 0.0
    %4159 = vmatprep.subr.mxu0 0.0
    %4160 = vmatpush1.msra.mxu0 0.0
    %4161 = vmatprep.subr.mxu0 0.0
    %4162 = vmatpush1.msra.mxu0 0.0
    %4163 = vmatprep.mubr.f32.mxu0 0.0
    %4164 = vmatmul.mubr.f32.gmra.mrb[0].mxu0 %v4097
    %v4165 = vpop.f32.mrb[0].mxu0
    %v4166 = vadd.f32 0.0, %v4165
    %v4167 = vpop.f32.mrb[0].mxu0
    %v4168 = vadd.f32 0.0, %v4167
    %4169 = vdwg.mxu0
    %v4170 = vadd.f32 %v3659, %v4166
    %v4171 = vadd.f32 %v3660, %v4168
    %v4172 = vld [vmem:[#allocation2 + $0x80] sm:$0xff]
    %v4173 = vld [vmem:[#allocation2 + $0x88] sm:$0xff]
    %4176 = vrot.lane.b32.xlu0 %v3800, 32
    %v4177 = vpop.permute.xlu0 %4176
    %4178 = vrot.lane.b32.xlu0 %v3801, 32
    %v4179 = vpop.permute.xlu0 %4178
    %v4180 = vsel %vm466, %v4177, 0
    %v4182 = vsel %vm466, %v4179, 0
    %4184 = vmatprep.subr.mxu0 0.0
    %4185 = vmatpush1.msra.mxu0 %v48
    %4186 = vmatprep.subr.mxu0 0.0
    %4187 = vmatpush1.msra.mxu0 %v49
    %4188 = vmatprep.subr.mxu0 0.0
    %4189 = vmatpush1.msra.mxu0 %v50
    %4190 = vmatprep.subr.mxu0 0.0
    %4191 = vmatpush1.msra.mxu0 %v51
    %4192 = vmatprep.subr.mxu0 0.0
    %4193 = vmatpush1.msra.mxu0 0.0
    %4194 = vmatprep.subr.mxu0 0.0
    %4195 = vmatpush1.msra.mxu0 0.0
    %4196 = vmatprep.subr.mxu0 0.0
    %4197 = vmatpush1.msra.mxu0 0.0
    %4198 = vmatprep.subr.mxu0 0.0
    %4199 = vmatpush1.msra.mxu0 0.0
    %4200 = vmatprep.subr.mxu0 0.0
    %4201 = vmatpush1.msra.mxu0 0.0
    %4202 = vmatprep.subr.mxu0 0.0
    %4203 = vmatpush1.msra.mxu0 0.0
    %4204 = vmatprep.subr.mxu0 0.0
    %4205 = vmatpush1.msra.mxu0 0.0
    %4206 = vmatprep.subr.mxu0 0.0
    %4207 = vmatpush1.msra.mxu0 0.0
    %4208 = vmatprep.subr.mxu0 0.0
    %4209 = vmatpush1.msra.mxu0 0.0
    %4210 = vmatprep.subr.mxu0 0.0
    %4211 = vmatpush1.msra.mxu0 0.0
    %4212 = vmatprep.subr.mxu0 0.0
    %4213 = vmatpush1.msra.mxu0 0.0
    %4214 = vmatprep.subr.mxu0 0.0
    %4215 = vmatpush1.msra.mxu0 0.0
    %4216 = vmatprep.subr.mxu0 0.0
    %4217 = vmatpush1.msra.mxu0 0.0
    %4218 = vmatprep.subr.mxu0 0.0
    %4219 = vmatpush1.msra.mxu0 0.0
    %4220 = vmatprep.subr.mxu0 0.0
    %4221 = vmatpush1.msra.mxu0 0.0
    %4222 = vmatprep.subr.mxu0 0.0
    %4223 = vmatpush1.msra.mxu0 0.0
    %4224 = vmatprep.subr.mxu0 0.0
    %4225 = vmatpush1.msra.mxu0 0.0
    %4226 = vmatprep.subr.mxu0 0.0
    %4227 = vmatpush1.msra.mxu0 0.0
    %4228 = vmatprep.subr.mxu0 0.0
    %4229 = vmatpush1.msra.mxu0 0.0
    %4230 = vmatprep.subr.mxu0 0.0
    %4231 = vmatpush1.msra.mxu0 0.0
    %4232 = vmatprep.subr.mxu0 0.0
    %4233 = vmatpush1.msra.mxu0 0.0
    %4234 = vmatprep.subr.mxu0 0.0
    %4235 = vmatpush1.msra.mxu0 0.0
    %4236 = vmatprep.subr.mxu0 0.0
    %4237 = vmatpush1.msra.mxu0 0.0
    %4238 = vmatprep.subr.mxu0 0.0
    %4239 = vmatpush1.msra.mxu0 0.0
    %4240 = vmatprep.subr.mxu0 0.0
    %4241 = vmatpush1.msra.mxu0 0.0
    %4242 = vmatprep.subr.mxu0 0.0
    %4243 = vmatpush1.msra.mxu0 0.0
    %4244 = vmatprep.subr.mxu0 0.0
    %4245 = vmatpush1.msra.mxu0 0.0
    %4246 = vmatprep.subr.mxu0 0.0
    %4247 = vmatpush1.msra.mxu0 0.0
    %4248 = vmatprep.mubr.f32.mxu0 0.0
    %4249 = vmatmul.mubr.f32.gmra.mrb[0].mxu0 %v4180
    %v4250 = vpop.f32.mrb[0].mxu0
    %v4251 = vadd.f32 0.0, %v4250
    %v4252 = vpop.f32.mrb[0].mxu0
    %4253 = vmatprep.mubr.f32.mxu0 0.0
    %4254 = vmatmul.mubr.f32.gmra.mrb[0].mxu0 %v4182
    %v4255 = vpop.f32.mrb[0].mxu0
    %v4256 = vadd.f32 0.0, %v4255
    %v4257 = vpop.f32.mrb[0].mxu0
    %4258 = vdwg.mxu0
    %v4259 = vadd.f32 %v4172, %v4251
    %v4260 = vadd.f32 %v4173, %v4256
    %v4261 = vmul.f32 %v4259, %v38
    %v4262 = vmul.f32 %v4260, %v38
    %v4263 = vxor.u32 %v4261, 2147483648
    %v4264 = vxor.u32 %v4262, 2147483648
    %v4265 = vmul.f32 %v4263, 1.442695
    %v4266 = vpow.pop %v4265
    %v4267 = vmul.f32 %v4264, 1.442695
    %v4268 = vpow.pop %v4267
    %v4269 = vadd.f32 %v4266, 1.0
    %v4270 = vadd.f32 %v4268, 1.0
    %v4271 = vrcp.pop %v4269
    %v4272 = vmul.f32 1.0, %v4271
    %v4273 = vrcp.pop %v4270
    %v4274 = vmul.f32 1.0, %v4273
    %v4275 = vmul.f32 %v4272, %v38
    %v4276 = vmul.f32 %v4274, %v38
    %v4277 = vadd.f32 %v4275, %v39
    %v4278 = vadd.f32 %v4276, %v39
    %v4279 = vmul.f32 %v4277, %v3788
    %v4280 = vmul.f32 %v4278, %v3789
    %4283 = vrot.lane.b32.xlu0 %v4277, 64
    %v4284 = vpop.permute.xlu0 %4283
    %4285 = vrot.lane.b32.xlu0 %v4278, 64
    %v4286 = vpop.permute.xlu0 %4285
    %v4289 = vmul.f32 %v4277, %v4284
    %v4290 = vmul.f32 %v4278, %v4286
    %4293 = vrot.lane.b32.xlu0 %v4289, 32
    %v4294 = vpop.permute.xlu0 %4293
    %4295 = vrot.lane.b32.xlu0 %v4290, 32
    %v4296 = vpop.permute.xlu0 %4295
    %v4299 = vadd.f32 %v4279, %v4294
    %v4300 = vadd.f32 %v4280, %v4296
    %v4301 = vtanh.pop %v4299
    %v4302 = vtanh.pop %v4300
    %4305 = vrot.lane.b32.xlu0 %v4301, 64
    %v4306 = vpop.permute.xlu0 %4305
    %4307 = vrot.lane.b32.xlu0 %v4302, 64
    %v4308 = vpop.permute.xlu0 %4307
    %v4311 = vmul.f32 %v4277, %v4306
    %v4312 = vmul.f32 %v4278, %v4308
    %4313 = vmatprep.subr.mxu0 0.0
    %4314 = vmatpush1.msra.mxu0 %v53
    %4315 = vmatprep.subr.mxu0 0.0
    %4316 = vmatpush1.msra.mxu0 %v54
    %4317 = vmatprep.subr.mxu0 0.0
    %4318 = vmatpush1.msra.mxu0 %v55
    %4319 = vmatprep.subr.mxu0 0.0
    %4320 = vmatpush1.msra.mxu0 %v56
    %4321 = vmatprep.subr.mxu0 0.0
    %4322 = vmatpush1.msra.mxu0 0.0
    %4323 = vmatprep.subr.mxu0 0.0
    %4324 = vmatpush1.msra.mxu0 0.0
    %4325 = vmatprep.subr.mxu0 0.0
    %4326 = vmatpush1.msra.mxu0 0.0
    %4327 = vmatprep.subr.mxu0 0.0
    %4328 = vmatpush1.msra.mxu0 0.0
    %4329 = vmatprep.subr.mxu0 0.0
    %4330 = vmatpush1.msra.mxu0 0.0
    %4331 = vmatprep.subr.mxu0 0.0
    %4332 = vmatpush1.msra.mxu0 0.0
    %4333 = vmatprep.subr.mxu0 0.0
    %4334 = vmatpush1.msra.mxu0 0.0
    %4335 = vmatprep.subr.mxu0 0.0
    %4336 = vmatpush1.msra.mxu0 0.0
    %4337 = vmatprep.subr.mxu0 0.0
    %4338 = vmatpush1.msra.mxu0 0.0
    %4339 = vmatprep.subr.mxu0 0.0
    %4340 = vmatpush1.msra.mxu0 0.0
    %4341 = vmatprep.subr.mxu0 0.0
    %4342 = vmatpush1.msra.mxu0 0.0
    %4343 = vmatprep.subr.mxu0 0.0
    %4344 = vmatpush1.msra.mxu0 0.0
    %4345 = vmatprep.subr.mxu0 0.0
    %4346 = vmatpush1.msra.mxu0 0.0
    %4347 = vmatprep.subr.mxu0 0.0
    %4348 = vmatpush1.msra.mxu0 0.0
    %4349 = vmatprep.subr.mxu0 0.0
    %4350 = vmatpush1.msra.mxu0 0.0
    %4351 = vmatprep.subr.mxu0 0.0
    %4352 = vmatpush1.msra.mxu0 0.0
    %4353 = vmatprep.subr.mxu0 0.0
    %4354 = vmatpush1.msra.mxu0 0.0
    %4355 = vmatprep.subr.mxu0 0.0
    %4356 = vmatpush1.msra.mxu0 0.0
    %4357 = vmatprep.subr.mxu0 0.0
    %4358 = vmatpush1.msra.mxu0 0.0
    %4359 = vmatprep.subr.mxu0 0.0
    %4360 = vmatpush1.msra.mxu0 0.0
    %4361 = vmatprep.subr.mxu0 0.0
    %4362 = vmatpush1.msra.mxu0 0.0
    %4363 = vmatprep.subr.mxu0 0.0
    %4364 = vmatpush1.msra.mxu0 0.0
    %4365 = vmatprep.subr.mxu0 0.0
    %4366 = vmatpush1.msra.mxu0 0.0
    %4367 = vmatprep.subr.mxu0 0.0
    %4368 = vmatpush1.msra.mxu0 0.0
    %4369 = vmatprep.subr.mxu0 0.0
    %4370 = vmatpush1.msra.mxu0 0.0
    %4371 = vmatprep.subr.mxu0 0.0
    %4372 = vmatpush1.msra.mxu0 0.0
    %4373 = vmatprep.subr.mxu0 0.0
    %4374 = vmatpush1.msra.mxu0 0.0
    %4375 = vmatprep.subr.mxu0 0.0
    %4376 = vmatpush1.msra.mxu0 0.0
    %4377 = vmatprep.mubr.f32.mxu0 0.0
    %4378 = vmatmul.mubr.f32.gmra.mrb[0].mxu0 %v4180
    %v4379 = vpop.f32.mrb[0].mxu0
    %v4380 = vadd.f32 %v66, %v4379
    %v4381 = vpop.f32.mrb[0].mxu0
    %4382 = vmatprep.mubr.f32.mxu0 0.0
    %4383 = vmatmul.mubr.f32.gmra.mrb[0].mxu0 %v4182
    %v4384 = vpop.f32.mrb[0].mxu0
    %v4385 = vadd.f32 %v66, %v4384
    %v4386 = vpop.f32.mrb[0].mxu0
    %4387 = vdwg.mxu0
    %v4388 = vsel %vm466, %v4013, 0
    %v4390 = vsel %vm466, %v4015, 0
    %4392 = vmatprep.subr.mxu0 0.0
    %4393 = vmatpush1.msra.mxu0 %v57
    %4394 = vmatprep.subr.mxu0 0.0
    %4395 = vmatpush1.msra.mxu0 %v58
    %4396 = vmatprep.subr.mxu0 0.0
    %4397 = vmatpush1.msra.mxu0 %v59
    %4398 = vmatprep.subr.mxu0 0.0
    %4399 = vmatpush1.msra.mxu0 %v60
    %4400 = vmatprep.subr.mxu0 0.0
    %4401 = vmatpush1.msra.mxu0 0.0
    %4402 = vmatprep.subr.mxu0 0.0
    %4403 = vmatpush1.msra.mxu0 0.0
    %4404 = vmatprep.subr.mxu0 0.0
    %4405 = vmatpush1.msra.mxu0 0.0
    %4406 = vmatprep.subr.mxu0 0.0
    %4407 = vmatpush1.msra.mxu0 0.0
    %4408 = vmatprep.subr.mxu0 0.0
    %4409 = vmatpush1.msra.mxu0 0.0
    %4410 = vmatprep.subr.mxu0 0.0
    %4411 = vmatpush1.msra.mxu0 0.0
    %4412 = vmatprep.subr.mxu0 0.0
    %4413 = vmatpush1.msra.mxu0 0.0
    %4414 = vmatprep.subr.mxu0 0.0
    %4415 = vmatpush1.msra.mxu0 0.0
    %4416 = vmatprep.subr.mxu0 0.0
    %4417 = vmatpush1.msra.mxu0 0.0
    %4418 = vmatprep.subr.mxu0 0.0
    %4419 = vmatpush1.msra.mxu0 0.0
    %4420 = vmatprep.subr.mxu0 0.0
    %4421 = vmatpush1.msra.mxu0 0.0
    %4422 = vmatprep.subr.mxu0 0.0
    %4423 = vmatpush1.msra.mxu0 0.0
    %4424 = vmatprep.subr.mxu0 0.0
    %4425 = vmatpush1.msra.mxu0 0.0
    %4426 = vmatprep.subr.mxu0 0.0
    %4427 = vmatpush1.msra.mxu0 0.0
    %4428 = vmatprep.subr.mxu0 0.0
    %4429 = vmatpush1.msra.mxu0 0.0
    %4430 = vmatprep.subr.mxu0 0.0
    %4431 = vmatpush1.msra.mxu0 0.0
    %4432 = vmatprep.subr.mxu0 0.0
    %4433 = vmatpush1.msra.mxu0 0.0
    %4434 = vmatprep.subr.mxu0 0.0
    %4435 = vmatpush1.msra.mxu0 0.0
    %4436 = vmatprep.subr.mxu0 0.0
    %4437 = vmatpush1.msra.mxu0 0.0
    %4438 = vmatprep.subr.mxu0 0.0
    %4439 = vmatpush1.msra.mxu0 0.0
    %4440 = vmatprep.subr.mxu0 0.0
    %4441 = vmatpush1.msra.mxu0 0.0
    %4442 = vmatprep.subr.mxu0 0.0
    %4443 = vmatpush1.msra.mxu0 0.0
    %4444 = vmatprep.subr.mxu0 0.0
    %4445 = vmatpush1.msra.mxu0 0.0
    %4446 = vmatprep.subr.mxu0 0.0
    %4447 = vmatpush1.msra.mxu0 0.0
    %4448 = vmatprep.subr.mxu0 0.0
    %4449 = vmatpush1.msra.mxu0 0.0
    %4450 = vmatprep.subr.mxu0 0.0
    %4451 = vmatpush1.msra.mxu0 0.0
    %4452 = vmatprep.subr.mxu0 0.0
    %4453 = vmatpush1.msra.mxu0 0.0
    %4454 = vmatprep.subr.mxu0 0.0
    %4455 = vmatpush1.msra.mxu0 0.0
    %4456 = vmatprep.mubr.f32.mxu0 0.0
    %4457 = vmatmul.mubr.f32.gmra.mrb[0].mxu0 %v4388
    %v4458 = vpop.f32.mrb[0].mxu0
    %v4459 = vadd.f32 0.0, %v4458
    %v4460 = vpop.f32.mrb[0].mxu0
    %4461 = vmatprep.mubr.f32.mxu0 0.0
    %4462 = vmatmul.mubr.f32.gmra.mrb[0].mxu0 %v4390
    %v4463 = vpop.f32.mrb[0].mxu0
    %v4464 = vadd.f32 0.0, %v4463
    %v4465 = vpop.f32.mrb[0].mxu0
    %4466 = vdwg.mxu0
    %v4467 = vadd.f32 %v4380, %v4459
    %v4468 = vadd.f32 %v4385, %v4464
    %v4469 = vmul.f32 %v4467, %v38
    %v4470 = vmul.f32 %v4468, %v38
    %v4471 = vxor.u32 %v4469, 2147483648
    %v4472 = vxor.u32 %v4470, 2147483648
    %v4473 = vmul.f32 %v4471, 1.442695
    %v4474 = vpow.pop %v4473
    %v4475 = vmul.f32 %v4472, 1.442695
    %v4476 = vpow.pop %v4475
    %v4477 = vadd.f32 %v4474, 1.0
    %v4478 = vadd.f32 %v4476, 1.0
    %v4479 = vrcp.pop %v4477
    %v4480 = vmul.f32 1.0, %v4479
    %v4481 = vrcp.pop %v4478
    %v4482 = vmul.f32 1.0, %v4481
    %v4483 = vmul.f32 %v4480, %v38
    %v4484 = vmul.f32 %v4482, %v38
    %v4485 = vadd.f32 %v4483, %v39
    %v4486 = vadd.f32 %v4484, %v39
    %v4487 = vmul.f32 %v4485, %v3996
    %v4488 = vmul.f32 %v4486, %v3997
    %4491 = vrot.lane.b32.xlu0 %v4485, 64
    %v4492 = vpop.permute.xlu0 %4491
    %4493 = vrot.lane.b32.xlu0 %v4486, 64
    %v4494 = vpop.permute.xlu0 %4493
    %v4497 = vmul.f32 %v4485, %v4492
    %v4498 = vmul.f32 %v4486, %v4494
    %4501 = vrot.lane.b32.xlu0 %v4497, 32
    %v4502 = vpop.permute.xlu0 %4501
    %4503 = vrot.lane.b32.xlu0 %v4498, 32
    %v4504 = vpop.permute.xlu0 %4503
    %v4507 = vadd.f32 %v4487, %v4502
    %v4508 = vadd.f32 %v4488, %v4504
    %v4509 = vtanh.pop %v4507
    %v4510 = vtanh.pop %v4508
    %4513 = vrot.lane.b32.xlu0 %v4509, 64
    %v4514 = vpop.permute.xlu0 %4513
    %4515 = vrot.lane.b32.xlu0 %v4510, 64
    %v4516 = vpop.permute.xlu0 %4515
    %v4519 = vmul.f32 %v4485, %v4514
    %v4520 = vmul.f32 %v4486, %v4516
    %4523 = vrot.lane.b32.xlu0 %v4519, 32
    %v4524 = vpop.permute.xlu0 %4523
    %4525 = vrot.lane.b32.xlu0 %v4520, 32
    %v4526 = vpop.permute.xlu0 %4525
    %4529 = vmatprep.subr.mxu0 0.0
    %4530 = vmatpush1.msra.mxu0 %v4524
    %4531 = vmatprep.subr.mxu0 0.0
    %4532 = vmatpush1.msra.mxu0 %v4526
    %4533 = vmatprep.subr.mxu0 0.0
    %4534 = vmatpush1.msra.mxu0 0.0
    %4535 = vmatprep.subr.mxu0 0.0
    %4536 = vmatpush1.msra.mxu0 0.0
    %4537 = vmatprep.subr.mxu0 0.0
    %4538 = vmatpush1.msra.mxu0 0.0
    %4539 = vmatprep.subr.mxu0 0.0
    %4540 = vmatpush1.msra.mxu0 0.0
    %4541 = vmatprep.subr.mxu0 0.0
    %4542 = vmatpush1.msra.mxu0 0.0
    %4543 = vmatprep.subr.mxu0 0.0
    %4544 = vmatpush1.msra.mxu0 0.0
    %4545 = vmatprep.subr.mxu0 0.0
    %4546 = vmatpush1.msra.mxu0 0.0
    %4547 = vmatprep.subr.mxu0 0.0
    %4548 = vmatpush1.msra.mxu0 0.0
    %4549 = vmatprep.subr.mxu0 0.0
    %4550 = vmatpush1.msra.mxu0 0.0
    %4551 = vmatprep.subr.mxu0 0.0
    %4552 = vmatpush1.msra.mxu0 0.0
    %4553 = vmatprep.subr.mxu0 0.0
    %4554 = vmatpush1.msra.mxu0 0.0
    %4555 = vmatprep.subr.mxu0 0.0
    %4556 = vmatpush1.msra.mxu0 0.0
    %4557 = vmatprep.subr.mxu0 0.0
    %4558 = vmatpush1.msra.mxu0 0.0
    %4559 = vmatprep.subr.mxu0 0.0
    %4560 = vmatpush1.msra.mxu0 0.0
    %4561 = vmatprep.subr.mxu0 0.0
    %4562 = vmatpush1.msra.mxu0 0.0
    %4563 = vmatprep.subr.mxu0 0.0
    %4564 = vmatpush1.msra.mxu0 0.0
    %4565 = vmatprep.subr.mxu0 0.0
    %4566 = vmatpush1.msra.mxu0 0.0
    %4567 = vmatprep.subr.mxu0 0.0
    %4568 = vmatpush1.msra.mxu0 0.0
    %4569 = vmatprep.subr.mxu0 0.0
    %4570 = vmatpush1.msra.mxu0 0.0
    %4571 = vmatprep.subr.mxu0 0.0
    %4572 = vmatpush1.msra.mxu0 0.0
    %4573 = vmatprep.subr.mxu0 0.0
    %4574 = vmatpush1.msra.mxu0 0.0
    %4575 = vmatprep.subr.mxu0 0.0
    %4576 = vmatpush1.msra.mxu0 0.0
    %4577 = vmatprep.subr.mxu0 0.0
    %4578 = vmatpush1.msra.mxu0 0.0
    %4579 = vmatprep.subr.mxu0 0.0
    %4580 = vmatpush1.msra.mxu0 0.0
    %4581 = vmatprep.subr.mxu0 0.0
    %4582 = vmatpush1.msra.mxu0 0.0
    %4583 = vmatprep.subr.mxu0 0.0
    %4584 = vmatpush1.msra.mxu0 0.0
    %4585 = vmatprep.subr.mxu0 0.0
    %4586 = vmatpush1.msra.mxu0 0.0
    %4587 = vmatprep.subr.mxu0 0.0
    %4588 = vmatpush1.msra.mxu0 0.0
    %4589 = vmatprep.subr.mxu0 0.0
    %4590 = vmatpush1.msra.mxu0 0.0
    %4591 = vmatprep.subr.mxu0 0.0
    %4592 = vmatpush1.msra.mxu0 0.0
    %4593 = vmatprep.mubr.f32.mxu0 0.0
    %4594 = vmatmul.mubr.f32.gmra.mrb[0].mxu0 %v954
    %v4595 = vpop.f32.mrb[0].mxu0
    %v4596 = vadd.f32 0.0, %v4595
    %v4597 = vpop.f32.mrb[0].mxu0
    %4598 = vdwg.mxu0
    %v4599 = vld [vmem:[%s7 + $0x1c0] sm:$0xff]
    %v4600 = vld [vmem:[%s7 + $0x1c8] sm:$0xff]
    %v4601 = vld [vmem:[%s7 + $0x1d0] sm:$0xff]
    %v4602 = vld [vmem:[%s7 + $0x1d8] sm:$0xff]
    %v4603 = vld [vmem:[%s7 + $0x1e0] sm:$0xff]
    %v4604 = vld [vmem:[%s7 + $0x1e8] sm:$0xff]
    %v4605 = vld [vmem:[%s7 + $0x1f0] sm:$0xff]
    %v4606 = vld [vmem:[%s7 + $0x1f8] sm:$0xff]
    %v4608 = vsel %vm466, %v4596, 0
    %4610 = vmatprep.subr.mxu0 %v4600
    %4611 = vmatpush1.msra.mxu0 %v4599
    %4612 = vmatprep.subr.mxu0 %v4602
    %4613 = vmatpush1.msra.mxu0 %v4601
    %4614 = vmatprep.subr.mxu0 %v4604
    %4615 = vmatpush1.msra.mxu0 %v4603
    %4616 = vmatprep.subr.mxu0 %v4606
    %4617 = vmatpush1.msra.mxu0 %v4605
    %4618 = vmatprep.subr.mxu0 0.0
    %4619 = vmatpush1.msra.mxu0 0.0
    %4620 = vmatprep.subr.mxu0 0.0
    %4621 = vmatpush1.msra.mxu0 0.0
    %4622 = vmatprep.subr.mxu0 0.0
    %4623 = vmatpush1.msra.mxu0 0.0
    %4624 = vmatprep.subr.mxu0 0.0
    %4625 = vmatpush1.msra.mxu0 0.0
    %4626 = vmatprep.subr.mxu0 0.0
    %4627 = vmatpush1.msra.mxu0 0.0
    %4628 = vmatprep.subr.mxu0 0.0
    %4629 = vmatpush1.msra.mxu0 0.0
    %4630 = vmatprep.subr.mxu0 0.0
    %4631 = vmatpush1.msra.mxu0 0.0
    %4632 = vmatprep.subr.mxu0 0.0
    %4633 = vmatpush1.msra.mxu0 0.0
    %4634 = vmatprep.subr.mxu0 0.0
    %4635 = vmatpush1.msra.mxu0 0.0
    %4636 = vmatprep.subr.mxu0 0.0
    %4637 = vmatpush1.msra.mxu0 0.0
    %4638 = vmatprep.subr.mxu0 0.0
    %4639 = vmatpush1.msra.mxu0 0.0
    %4640 = vmatprep.subr.mxu0 0.0
    %4641 = vmatpush1.msra.mxu0 0.0
    %4642 = vmatprep.subr.mxu0 0.0
    %4643 = vmatpush1.msra.mxu0 0.0
    %4644 = vmatprep.subr.mxu0 0.0
    %4645 = vmatpush1.msra.mxu0 0.0
    %4646 = vmatprep.subr.mxu0 0.0
    %4647 = vmatpush1.msra.mxu0 0.0
    %4648 = vmatprep.subr.mxu0 0.0
    %4649 = vmatpush1.msra.mxu0 0.0
    %4650 = vmatprep.subr.mxu0 0.0
    %4651 = vmatpush1.msra.mxu0 0.0
    %4652 = vmatprep.subr.mxu0 0.0
    %4653 = vmatpush1.msra.mxu0 0.0
    %4654 = vmatprep.subr.mxu0 0.0
    %4655 = vmatpush1.msra.mxu0 0.0
    %4656 = vmatprep.subr.mxu0 0.0
    %4657 = vmatpush1.msra.mxu0 0.0
    %4658 = vmatprep.subr.mxu0 0.0
    %4659 = vmatpush1.msra.mxu0 0.0
    %4660 = vmatprep.subr.mxu0 0.0
    %4661 = vmatpush1.msra.mxu0 0.0
    %4662 = vmatprep.subr.mxu0 0.0
    %4663 = vmatpush1.msra.mxu0 0.0
    %4664 = vmatprep.subr.mxu0 0.0
    %4665 = vmatpush1.msra.mxu0 0.0
    %4666 = vmatprep.subr.mxu0 0.0
    %4667 = vmatpush1.msra.mxu0 0.0
    %4668 = vmatprep.subr.mxu0 0.0
    %4669 = vmatpush1.msra.mxu0 0.0
    %4670 = vmatprep.subr.mxu0 0.0
    %4671 = vmatpush1.msra.mxu0 0.0
    %4672 = vmatprep.subr.mxu0 0.0
    %4673 = vmatpush1.msra.mxu0 0.0
    %4674 = vmatprep.mubr.f32.mxu0 0.0
    %4675 = vmatmul.mubr.f32.gmra.mrb[0].mxu0 %v4608
    %v4676 = vpop.f32.mrb[0].mxu0
    %v4677 = vadd.f32 0.0, %v4676
    %v4678 = vpop.f32.mrb[0].mxu0
    %v4679 = vadd.f32 0.0, %v4678
    %4680 = vdwg.mxu0
    %v4681 = vadd.f32 %v4170, %v4677
    %v4682 = vadd.f32 %v4171, %v4679
    %v4683 = vld [vmem:[#allocation2 + $0x90] sm:$0xff]
    %v4684 = vld [vmem:[#allocation2 + $0x98] sm:$0xff]
    %4687 = vrot.lane.b32.xlu0 %v4311, 32
    %v4688 = vpop.permute.xlu0 %4687
    %4689 = vrot.lane.b32.xlu0 %v4312, 32
    %v4690 = vpop.permute.xlu0 %4689
    %v4691 = vsel %vm466, %v4688, 0
    %v4693 = vsel %vm466, %v4690, 0
    %4695 = vmatprep.subr.mxu0 0.0
    %4696 = vmatpush1.msra.mxu0 %v48
    %4697 = vmatprep.subr.mxu0 0.0
    %4698 = vmatpush1.msra.mxu0 %v49
    %4699 = vmatprep.subr.mxu0 0.0
    %4700 = vmatpush1.msra.mxu0 %v50
    %4701 = vmatprep.subr.mxu0 0.0
    %4702 = vmatpush1.msra.mxu0 %v51
    %4703 = vmatprep.subr.mxu0 0.0
    %4704 = vmatpush1.msra.mxu0 0.0
    %4705 = vmatprep.subr.mxu0 0.0
    %4706 = vmatpush1.msra.mxu0 0.0
    %4707 = vmatprep.subr.mxu0 0.0
    %4708 = vmatpush1.msra.mxu0 0.0
    %4709 = vmatprep.subr.mxu0 0.0
    %4710 = vmatpush1.msra.mxu0 0.0
    %4711 = vmatprep.subr.mxu0 0.0
    %4712 = vmatpush1.msra.mxu0 0.0
    %4713 = vmatprep.subr.mxu0 0.0
    %4714 = vmatpush1.msra.mxu0 0.0
    %4715 = vmatprep.subr.mxu0 0.0
    %4716 = vmatpush1.msra.mxu0 0.0
    %4717 = vmatprep.subr.mxu0 0.0
    %4718 = vmatpush1.msra.mxu0 0.0
    %4719 = vmatprep.subr.mxu0 0.0
    %4720 = vmatpush1.msra.mxu0 0.0
    %4721 = vmatprep.subr.mxu0 0.0
    %4722 = vmatpush1.msra.mxu0 0.0
    %4723 = vmatprep.subr.mxu0 0.0
    %4724 = vmatpush1.msra.mxu0 0.0
    %4725 = vmatprep.subr.mxu0 0.0
    %4726 = vmatpush1.msra.mxu0 0.0
    %4727 = vmatprep.subr.mxu0 0.0
    %4728 = vmatpush1.msra.mxu0 0.0
    %4729 = vmatprep.subr.mxu0 0.0
    %4730 = vmatpush1.msra.mxu0 0.0
    %4731 = vmatprep.subr.mxu0 0.0
    %4732 = vmatpush1.msra.mxu0 0.0
    %4733 = vmatprep.subr.mxu0 0.0
    %4734 = vmatpush1.msra.mxu0 0.0
    %4735 = vmatprep.subr.mxu0 0.0
    %4736 = vmatpush1.msra.mxu0 0.0
    %4737 = vmatprep.subr.mxu0 0.0
    %4738 = vmatpush1.msra.mxu0 0.0
    %4739 = vmatprep.subr.mxu0 0.0
    %4740 = vmatpush1.msra.mxu0 0.0
    %4741 = vmatprep.subr.mxu0 0.0
    %4742 = vmatpush1.msra.mxu0 0.0
    %4743 = vmatprep.subr.mxu0 0.0
    %4744 = vmatpush1.msra.mxu0 0.0
    %4745 = vmatprep.subr.mxu0 0.0
    %4746 = vmatpush1.msra.mxu0 0.0
    %4747 = vmatprep.subr.mxu0 0.0
    %4748 = vmatpush1.msra.mxu0 0.0
    %4749 = vmatprep.subr.mxu0 0.0
    %4750 = vmatpush1.msra.mxu0 0.0
    %4751 = vmatprep.subr.mxu0 0.0
    %4752 = vmatpush1.msra.mxu0 0.0
    %4753 = vmatprep.subr.mxu0 0.0
    %4754 = vmatpush1.msra.mxu0 0.0
    %4755 = vmatprep.subr.mxu0 0.0
    %4756 = vmatpush1.msra.mxu0 0.0
    %4757 = vmatprep.subr.mxu0 0.0
    %4758 = vmatpush1.msra.mxu0 0.0
    %4759 = vmatprep.mubr.f32.mxu0 0.0
    %4760 = vmatmul.mubr.f32.gmra.mrb[0].mxu0 %v4691
    %v4761 = vpop.f32.mrb[0].mxu0
    %v4762 = vadd.f32 0.0, %v4761
    %v4763 = vpop.f32.mrb[0].mxu0
    %4764 = vmatprep.mubr.f32.mxu0 0.0
    %4765 = vmatmul.mubr.f32.gmra.mrb[0].mxu0 %v4693
    %v4766 = vpop.f32.mrb[0].mxu0
    %v4767 = vadd.f32 0.0, %v4766
    %v4768 = vpop.f32.mrb[0].mxu0
    %4769 = vdwg.mxu0
    %v4770 = vadd.f32 %v4683, %v4762
    %v4771 = vadd.f32 %v4684, %v4767
    %v4772 = vmul.f32 %v4770, %v38
    %v4773 = vmul.f32 %v4771, %v38
    %v4774 = vxor.u32 %v4772, 2147483648
    %v4775 = vxor.u32 %v4773, 2147483648
    %v4776 = vmul.f32 %v4774, 1.442695
    %v4777 = vpow.pop %v4776
    %v4778 = vmul.f32 %v4775, 1.442695
    %v4779 = vpow.pop %v4778
    %v4780 = vadd.f32 %v4777, 1.0
    %v4781 = vadd.f32 %v4779, 1.0
    %v4782 = vrcp.pop %v4780
    %v4783 = vmul.f32 1.0, %v4782
    %v4784 = vrcp.pop %v4781
    %v4785 = vmul.f32 1.0, %v4784
    %v4786 = vmul.f32 %v4783, %v38
    %v4787 = vmul.f32 %v4785, %v38
    %v4788 = vadd.f32 %v4786, %v39
    %v4789 = vadd.f32 %v4787, %v39
    %v4790 = vmul.f32 %v4788, %v4299
    %v4791 = vmul.f32 %v4789, %v4300
    %4794 = vrot.lane.b32.xlu0 %v4788, 64
    %v4795 = vpop.permute.xlu0 %4794
    %4796 = vrot.lane.b32.xlu0 %v4789, 64
    %v4797 = vpop.permute.xlu0 %4796
    %v4800 = vmul.f32 %v4788, %v4795
    %v4801 = vmul.f32 %v4789, %v4797
    %4804 = vrot.lane.b32.xlu0 %v4800, 32
    %v4805 = vpop.permute.xlu0 %4804
    %4806 = vrot.lane.b32.xlu0 %v4801, 32
    %v4807 = vpop.permute.xlu0 %4806
    %v4810 = vadd.f32 %v4790, %v4805
    %v4811 = vadd.f32 %v4791, %v4807
    %v4812 = vtanh.pop %v4810
    %v4813 = vtanh.pop %v4811
    %4816 = vrot.lane.b32.xlu0 %v4812, 64
    %v4817 = vpop.permute.xlu0 %4816
    %4818 = vrot.lane.b32.xlu0 %v4813, 64
    %v4819 = vpop.permute.xlu0 %4818
    %v4822 = vmul.f32 %v4788, %v4817
    %v4823 = vmul.f32 %v4789, %v4819
    %4824 = vmatprep.subr.mxu0 0.0
    %4825 = vmatpush1.msra.mxu0 %v53
    %4826 = vmatprep.subr.mxu0 0.0
    %4827 = vmatpush1.msra.mxu0 %v54
    %4828 = vmatprep.subr.mxu0 0.0
    %4829 = vmatpush1.msra.mxu0 %v55
    %4830 = vmatprep.subr.mxu0 0.0
    %4831 = vmatpush1.msra.mxu0 %v56
    %4832 = vmatprep.subr.mxu0 0.0
    %4833 = vmatpush1.msra.mxu0 0.0
    %4834 = vmatprep.subr.mxu0 0.0
    %4835 = vmatpush1.msra.mxu0 0.0
    %4836 = vmatprep.subr.mxu0 0.0
    %4837 = vmatpush1.msra.mxu0 0.0
    %4838 = vmatprep.subr.mxu0 0.0
    %4839 = vmatpush1.msra.mxu0 0.0
    %4840 = vmatprep.subr.mxu0 0.0
    %4841 = vmatpush1.msra.mxu0 0.0
    %4842 = vmatprep.subr.mxu0 0.0
    %4843 = vmatpush1.msra.mxu0 0.0
    %4844 = vmatprep.subr.mxu0 0.0
    %4845 = vmatpush1.msra.mxu0 0.0
    %4846 = vmatprep.subr.mxu0 0.0
    %4847 = vmatpush1.msra.mxu0 0.0
    %4848 = vmatprep.subr.mxu0 0.0
    %4849 = vmatpush1.msra.mxu0 0.0
    %4850 = vmatprep.subr.mxu0 0.0
    %4851 = vmatpush1.msra.mxu0 0.0
    %4852 = vmatprep.subr.mxu0 0.0
    %4853 = vmatpush1.msra.mxu0 0.0
    %4854 = vmatprep.subr.mxu0 0.0
    %4855 = vmatpush1.msra.mxu0 0.0
    %4856 = vmatprep.subr.mxu0 0.0
    %4857 = vmatpush1.msra.mxu0 0.0
    %4858 = vmatprep.subr.mxu0 0.0
    %4859 = vmatpush1.msra.mxu0 0.0
    %4860 = vmatprep.subr.mxu0 0.0
    %4861 = vmatpush1.msra.mxu0 0.0
    %4862 = vmatprep.subr.mxu0 0.0
    %4863 = vmatpush1.msra.mxu0 0.0
    %4864 = vmatprep.subr.mxu0 0.0
    %4865 = vmatpush1.msra.mxu0 0.0
    %4866 = vmatprep.subr.mxu0 0.0
    %4867 = vmatpush1.msra.mxu0 0.0
    %4868 = vmatprep.subr.mxu0 0.0
    %4869 = vmatpush1.msra.mxu0 0.0
    %4870 = vmatprep.subr.mxu0 0.0
    %4871 = vmatpush1.msra.mxu0 0.0
    %4872 = vmatprep.subr.mxu0 0.0
    %4873 = vmatpush1.msra.mxu0 0.0
    %4874 = vmatprep.subr.mxu0 0.0
    %4875 = vmatpush1.msra.mxu0 0.0
    %4876 = vmatprep.subr.mxu0 0.0
    %4877 = vmatpush1.msra.mxu0 0.0
    %4878 = vmatprep.subr.mxu0 0.0
    %4879 = vmatpush1.msra.mxu0 0.0
    %4880 = vmatprep.subr.mxu0 0.0
    %4881 = vmatpush1.msra.mxu0 0.0
    %4882 = vmatprep.subr.mxu0 0.0
    %4883 = vmatpush1.msra.mxu0 0.0
    %4884 = vmatprep.subr.mxu0 0.0
    %4885 = vmatpush1.msra.mxu0 0.0
    %4886 = vmatprep.subr.mxu0 0.0
    %4887 = vmatpush1.msra.mxu0 0.0
    %4888 = vmatprep.mubr.f32.mxu0 0.0
    %4889 = vmatmul.mubr.f32.gmra.mrb[0].mxu0 %v4691
    %v4890 = vpop.f32.mrb[0].mxu0
    %v4891 = vadd.f32 %v66, %v4890
    %v4892 = vpop.f32.mrb[0].mxu0
    %4893 = vmatprep.mubr.f32.mxu0 0.0
    %4894 = vmatmul.mubr.f32.gmra.mrb[0].mxu0 %v4693
    %v4895 = vpop.f32.mrb[0].mxu0
    %v4896 = vadd.f32 %v66, %v4895
    %v4897 = vpop.f32.mrb[0].mxu0
    %4898 = vdwg.mxu0
    %v4899 = vsel %vm466, %v4524, 0
    %v4901 = vsel %vm466, %v4526, 0
    %4903 = vmatprep.subr.mxu0 0.0
    %4904 = vmatpush1.msra.mxu0 %v57
    %4905 = vmatprep.subr.mxu0 0.0
    %4906 = vmatpush1.msra.mxu0 %v58
    %4907 = vmatprep.subr.mxu0 0.0
    %4908 = vmatpush1.msra.mxu0 %v59
    %4909 = vmatprep.subr.mxu0 0.0
    %4910 = vmatpush1.msra.mxu0 %v60
    %4911 = vmatprep.subr.mxu0 0.0
    %4912 = vmatpush1.msra.mxu0 0.0
    %4913 = vmatprep.subr.mxu0 0.0
    %4914 = vmatpush1.msra.mxu0 0.0
    %4915 = vmatprep.subr.mxu0 0.0
    %4916 = vmatpush1.msra.mxu0 0.0
    %4917 = vmatprep.subr.mxu0 0.0
    %4918 = vmatpush1.msra.mxu0 0.0
    %4919 = vmatprep.subr.mxu0 0.0
    %4920 = vmatpush1.msra.mxu0 0.0
    %4921 = vmatprep.subr.mxu0 0.0
    %4922 = vmatpush1.msra.mxu0 0.0
    %4923 = vmatprep.subr.mxu0 0.0
    %4924 = vmatpush1.msra.mxu0 0.0
    %4925 = vmatprep.subr.mxu0 0.0
    %4926 = vmatpush1.msra.mxu0 0.0
    %4927 = vmatprep.subr.mxu0 0.0
    %4928 = vmatpush1.msra.mxu0 0.0
    %4929 = vmatprep.subr.mxu0 0.0
    %4930 = vmatpush1.msra.mxu0 0.0
    %4931 = vmatprep.subr.mxu0 0.0
    %4932 = vmatpush1.msra.mxu0 0.0
    %4933 = vmatprep.subr.mxu0 0.0
    %4934 = vmatpush1.msra.mxu0 0.0
    %4935 = vmatprep.subr.mxu0 0.0
    %4936 = vmatpush1.msra.mxu0 0.0
    %4937 = vmatprep.subr.mxu0 0.0
    %4938 = vmatpush1.msra.mxu0 0.0
    %4939 = vmatprep.subr.mxu0 0.0
    %4940 = vmatpush1.msra.mxu0 0.0
    %4941 = vmatprep.subr.mxu0 0.0
    %4942 = vmatpush1.msra.mxu0 0.0
    %4943 = vmatprep.subr.mxu0 0.0
    %4944 = vmatpush1.msra.mxu0 0.0
    %4945 = vmatprep.subr.mxu0 0.0
    %4946 = vmatpush1.msra.mxu0 0.0
    %4947 = vmatprep.subr.mxu0 0.0
    %4948 = vmatpush1.msra.mxu0 0.0
    %4949 = vmatprep.subr.mxu0 0.0
    %4950 = vmatpush1.msra.mxu0 0.0
    %4951 = vmatprep.subr.mxu0 0.0
    %4952 = vmatpush1.msra.mxu0 0.0
    %4953 = vmatprep.subr.mxu0 0.0
    %4954 = vmatpush1.msra.mxu0 0.0
    %4955 = vmatprep.subr.mxu0 0.0
    %4956 = vmatpush1.msra.mxu0 0.0
    %4957 = vmatprep.subr.mxu0 0.0
    %4958 = vmatpush1.msra.mxu0 0.0
    %4959 = vmatprep.subr.mxu0 0.0
    %4960 = vmatpush1.msra.mxu0 0.0
    %4961 = vmatprep.subr.mxu0 0.0
    %4962 = vmatpush1.msra.mxu0 0.0
    %4963 = vmatprep.subr.mxu0 0.0
    %4964 = vmatpush1.msra.mxu0 0.0
    %4965 = vmatprep.subr.mxu0 0.0
    %4966 = vmatpush1.msra.mxu0 0.0
    %4967 = vmatprep.mubr.f32.mxu0 0.0
    %4968 = vmatmul.mubr.f32.gmra.mrb[0].mxu0 %v4899
    %v4969 = vpop.f32.mrb[0].mxu0
    %v4970 = vadd.f32 0.0, %v4969
    %v4971 = vpop.f32.mrb[0].mxu0
    %4972 = vmatprep.mubr.f32.mxu0 0.0
    %4973 = vmatmul.mubr.f32.gmra.mrb[0].mxu0 %v4901
    %v4974 = vpop.f32.mrb[0].mxu0
    %v4975 = vadd.f32 0.0, %v4974
    %v4976 = vpop.f32.mrb[0].mxu0
    %4977 = vdwg.mxu0
    %v4978 = vadd.f32 %v4891, %v4970
    %v4979 = vadd.f32 %v4896, %v4975
    %v4980 = vmul.f32 %v4978, %v38
    %v4981 = vmul.f32 %v4979, %v38
    %v4982 = vxor.u32 %v4980, 2147483648
    %v4983 = vxor.u32 %v4981, 2147483648
    %v4984 = vmul.f32 %v4982, 1.442695
    %v4985 = vpow.pop %v4984
    %v4986 = vmul.f32 %v4983, 1.442695
    %v4987 = vpow.pop %v4986
    %v4988 = vadd.f32 %v4985, 1.0
    %v4989 = vadd.f32 %v4987, 1.0
    %v4990 = vrcp.pop %v4988
    %v4991 = vmul.f32 1.0, %v4990
    %v4992 = vrcp.pop %v4989
    %v4993 = vmul.f32 1.0, %v4992
    %v4994 = vmul.f32 %v4991, %v38
    %v4995 = vmul.f32 %v4993, %v38
    %v4996 = vadd.f32 %v4994, %v39
    %v4997 = vadd.f32 %v4995, %v39
    %v4998 = vmul.f32 %v4996, %v4507
    %v4999 = vmul.f32 %v4997, %v4508
    %5002 = vrot.lane.b32.xlu0 %v4996, 64
    %v5003 = vpop.permute.xlu0 %5002
    %5004 = vrot.lane.b32.xlu0 %v4997, 64
    %v5005 = vpop.permute.xlu0 %5004
    %v5008 = vmul.f32 %v4996, %v5003
    %v5009 = vmul.f32 %v4997, %v5005
    %5012 = vrot.lane.b32.xlu0 %v5008, 32
    %v5013 = vpop.permute.xlu0 %5012
    %5014 = vrot.lane.b32.xlu0 %v5009, 32
    %v5015 = vpop.permute.xlu0 %5014
    %v5018 = vadd.f32 %v4998, %v5013
    %v5019 = vadd.f32 %v4999, %v5015
    %v5020 = vtanh.pop %v5018
    %v5021 = vtanh.pop %v5019
    %5024 = vrot.lane.b32.xlu0 %v5020, 64
    %v5025 = vpop.permute.xlu0 %5024
    %5026 = vrot.lane.b32.xlu0 %v5021, 64
    %v5027 = vpop.permute.xlu0 %5026
    %v5030 = vmul.f32 %v4996, %v5025
    %v5031 = vmul.f32 %v4997, %v5027
    %5034 = vrot.lane.b32.xlu0 %v5030, 32
    %v5035 = vpop.permute.xlu0 %5034
    %5036 = vrot.lane.b32.xlu0 %v5031, 32
    %v5037 = vpop.permute.xlu0 %5036
    %5040 = vmatprep.subr.mxu0 0.0
    %5041 = vmatpush1.msra.mxu0 %v5035
    %5042 = vmatprep.subr.mxu0 0.0
    %5043 = vmatpush1.msra.mxu0 %v5037
    %5044 = vmatprep.subr.mxu0 0.0
    %5045 = vmatpush1.msra.mxu0 0.0
    %5046 = vmatprep.subr.mxu0 0.0
    %5047 = vmatpush1.msra.mxu0 0.0
    %5048 = vmatprep.subr.mxu0 0.0
    %5049 = vmatpush1.msra.mxu0 0.0
    %5050 = vmatprep.subr.mxu0 0.0
    %5051 = vmatpush1.msra.mxu0 0.0
    %5052 = vmatprep.subr.mxu0 0.0
    %5053 = vmatpush1.msra.mxu0 0.0
    %5054 = vmatprep.subr.mxu0 0.0
    %5055 = vmatpush1.msra.mxu0 0.0
    %5056 = vmatprep.subr.mxu0 0.0
    %5057 = vmatpush1.msra.mxu0 0.0
    %5058 = vmatprep.subr.mxu0 0.0
    %5059 = vmatpush1.msra.mxu0 0.0
    %5060 = vmatprep.subr.mxu0 0.0
    %5061 = vmatpush1.msra.mxu0 0.0
    %5062 = vmatprep.subr.mxu0 0.0
    %5063 = vmatpush1.msra.mxu0 0.0
    %5064 = vmatprep.subr.mxu0 0.0
    %5065 = vmatpush1.msra.mxu0 0.0
    %5066 = vmatprep.subr.mxu0 0.0
    %5067 = vmatpush1.msra.mxu0 0.0
    %5068 = vmatprep.subr.mxu0 0.0
    %5069 = vmatpush1.msra.mxu0 0.0
    %5070 = vmatprep.subr.mxu0 0.0
    %5071 = vmatpush1.msra.mxu0 0.0
    %5072 = vmatprep.subr.mxu0 0.0
    %5073 = vmatpush1.msra.mxu0 0.0
    %5074 = vmatprep.subr.mxu0 0.0
    %5075 = vmatpush1.msra.mxu0 0.0
    %5076 = vmatprep.subr.mxu0 0.0
    %5077 = vmatpush1.msra.mxu0 0.0
    %5078 = vmatprep.subr.mxu0 0.0
    %5079 = vmatpush1.msra.mxu0 0.0
    %5080 = vmatprep.subr.mxu0 0.0
    %5081 = vmatpush1.msra.mxu0 0.0
    %5082 = vmatprep.subr.mxu0 0.0
    %5083 = vmatpush1.msra.mxu0 0.0
    %5084 = vmatprep.subr.mxu0 0.0
    %5085 = vmatpush1.msra.mxu0 0.0
    %5086 = vmatprep.subr.mxu0 0.0
    %5087 = vmatpush1.msra.mxu0 0.0
    %5088 = vmatprep.subr.mxu0 0.0
    %5089 = vmatpush1.msra.mxu0 0.0
    %5090 = vmatprep.subr.mxu0 0.0
    %5091 = vmatpush1.msra.mxu0 0.0
    %5092 = vmatprep.subr.mxu0 0.0
    %5093 = vmatpush1.msra.mxu0 0.0
    %5094 = vmatprep.subr.mxu0 0.0
    %5095 = vmatpush1.msra.mxu0 0.0
    %5096 = vmatprep.subr.mxu0 0.0
    %5097 = vmatpush1.msra.mxu0 0.0
    %5098 = vmatprep.subr.mxu0 0.0
    %5099 = vmatpush1.msra.mxu0 0.0
    %5100 = vmatprep.subr.mxu0 0.0
    %5101 = vmatpush1.msra.mxu0 0.0
    %5102 = vmatprep.subr.mxu0 0.0
    %5103 = vmatpush1.msra.mxu0 0.0
    %5104 = vmatprep.mubr.f32.mxu0 0.0
    %5105 = vmatmul.mubr.f32.gmra.mrb[0].mxu0 %v954
    %v5106 = vpop.f32.mrb[0].mxu0
    %v5107 = vadd.f32 0.0, %v5106
    %v5108 = vpop.f32.mrb[0].mxu0
    %5109 = vdwg.mxu0
    %v5110 = vld [vmem:[%s7 + $0x200] sm:$0xff]
    %v5111 = vld [vmem:[%s7 + $0x208] sm:$0xff]
    %v5112 = vld [vmem:[%s7 + $0x210] sm:$0xff]
    %v5113 = vld [vmem:[%s7 + $0x218] sm:$0xff]
    %v5114 = vld [vmem:[%s7 + $0x220] sm:$0xff]
    %v5115 = vld [vmem:[%s7 + $0x228] sm:$0xff]
    %v5116 = vld [vmem:[%s7 + $0x230] sm:$0xff]
    %v5117 = vld [vmem:[%s7 + $0x238] sm:$0xff]
    %v5119 = vsel %vm466, %v5107, 0
    %5121 = vmatprep.subr.mxu0 %v5111
    %5122 = vmatpush1.msra.mxu0 %v5110
    %5123 = vmatprep.subr.mxu0 %v5113
    %5124 = vmatpush1.msra.mxu0 %v5112
    %5125 = vmatprep.subr.mxu0 %v5115
    %5126 = vmatpush1.msra.mxu0 %v5114
    %5127 = vmatprep.subr.mxu0 %v5117
    %5128 = vmatpush1.msra.mxu0 %v5116
    %5129 = vmatprep.subr.mxu0 0.0
    %5130 = vmatpush1.msra.mxu0 0.0
    %5131 = vmatprep.subr.mxu0 0.0
    %5132 = vmatpush1.msra.mxu0 0.0
    %5133 = vmatprep.subr.mxu0 0.0
    %5134 = vmatpush1.msra.mxu0 0.0
    %5135 = vmatprep.subr.mxu0 0.0
    %5136 = vmatpush1.msra.mxu0 0.0
    %5137 = vmatprep.subr.mxu0 0.0
    %5138 = vmatpush1.msra.mxu0 0.0
    %5139 = vmatprep.subr.mxu0 0.0
    %5140 = vmatpush1.msra.mxu0 0.0
    %5141 = vmatprep.subr.mxu0 0.0
    %5142 = vmatpush1.msra.mxu0 0.0
    %5143 = vmatprep.subr.mxu0 0.0
    %5144 = vmatpush1.msra.mxu0 0.0
    %5145 = vmatprep.subr.mxu0 0.0
    %5146 = vmatpush1.msra.mxu0 0.0
    %5147 = vmatprep.subr.mxu0 0.0
    %5148 = vmatpush1.msra.mxu0 0.0
    %5149 = vmatprep.subr.mxu0 0.0
    %5150 = vmatpush1.msra.mxu0 0.0
    %5151 = vmatprep.subr.mxu0 0.0
    %5152 = vmatpush1.msra.mxu0 0.0
    %5153 = vmatprep.subr.mxu0 0.0
    %5154 = vmatpush1.msra.mxu0 0.0
    %5155 = vmatprep.subr.mxu0 0.0
    %5156 = vmatpush1.msra.mxu0 0.0
    %5157 = vmatprep.subr.mxu0 0.0
    %5158 = vmatpush1.msra.mxu0 0.0
    %5159 = vmatprep.subr.mxu0 0.0
    %5160 = vmatpush1.msra.mxu0 0.0
    %5161 = vmatprep.subr.mxu0 0.0
    %5162 = vmatpush1.msra.mxu0 0.0
    %5163 = vmatprep.subr.mxu0 0.0
    %5164 = vmatpush1.msra.mxu0 0.0
    %5165 = vmatprep.subr.mxu0 0.0
    %5166 = vmatpush1.msra.mxu0 0.0
    %5167 = vmatprep.subr.mxu0 0.0
    %5168 = vmatpush1.msra.mxu0 0.0
    %5169 = vmatprep.subr.mxu0 0.0
    %5170 = vmatpush1.msra.mxu0 0.0
    %5171 = vmatprep.subr.mxu0 0.0
    %5172 = vmatpush1.msra.mxu0 0.0
    %5173 = vmatprep.subr.mxu0 0.0
    %5174 = vmatpush1.msra.mxu0 0.0
    %5175 = vmatprep.subr.mxu0 0.0
    %5176 = vmatpush1.msra.mxu0 0.0
    %5177 = vmatprep.subr.mxu0 0.0
    %5178 = vmatpush1.msra.mxu0 0.0
    %5179 = vmatprep.subr.mxu0 0.0
    %5180 = vmatpush1.msra.mxu0 0.0
    %5181 = vmatprep.subr.mxu0 0.0
    %5182 = vmatpush1.msra.mxu0 0.0
    %5183 = vmatprep.subr.mxu0 0.0
    %5184 = vmatpush1.msra.mxu0 0.0
    %5185 = vmatprep.mubr.f32.mxu0 0.0
    %5186 = vmatmul.mubr.f32.gmra.mrb[0].mxu0 %v5119
    %v5187 = vpop.f32.mrb[0].mxu0
    %v5188 = vadd.f32 0.0, %v5187
    %v5189 = vpop.f32.mrb[0].mxu0
    %v5190 = vadd.f32 0.0, %v5189
    %5191 = vdwg.mxu0
    %v5192 = vadd.f32 %v4681, %v5188
    %v5193 = vadd.f32 %v4682, %v5190
    %v5194 = vld [vmem:[#allocation2 + $0xa0] sm:$0xff]
    %v5195 = vld [vmem:[#allocation2 + $0xa8] sm:$0xff]
    %5198 = vrot.lane.b32.xlu0 %v4822, 32
    %v5199 = vpop.permute.xlu0 %5198
    %5200 = vrot.lane.b32.xlu0 %v4823, 32
    %v5201 = vpop.permute.xlu0 %5200
    %v5202 = vsel %vm466, %v5199, 0
    %v5204 = vsel %vm466, %v5201, 0
    %5206 = vmatprep.subr.mxu0 0.0
    %5207 = vmatpush1.msra.mxu0 %v48
    %5208 = vmatprep.subr.mxu0 0.0
    %5209 = vmatpush1.msra.mxu0 %v49
    %5210 = vmatprep.subr.mxu0 0.0
    %5211 = vmatpush1.msra.mxu0 %v50
    %5212 = vmatprep.subr.mxu0 0.0
    %5213 = vmatpush1.msra.mxu0 %v51
    %5214 = vmatprep.subr.mxu0 0.0
    %5215 = vmatpush1.msra.mxu0 0.0
    %5216 = vmatprep.subr.mxu0 0.0
    %5217 = vmatpush1.msra.mxu0 0.0
    %5218 = vmatprep.subr.mxu0 0.0
    %5219 = vmatpush1.msra.mxu0 0.0
    %5220 = vmatprep.subr.mxu0 0.0
    %5221 = vmatpush1.msra.mxu0 0.0
    %5222 = vmatprep.subr.mxu0 0.0
    %5223 = vmatpush1.msra.mxu0 0.0
    %5224 = vmatprep.subr.mxu0 0.0
    %5225 = vmatpush1.msra.mxu0 0.0
    %5226 = vmatprep.subr.mxu0 0.0
    %5227 = vmatpush1.msra.mxu0 0.0
    %5228 = vmatprep.subr.mxu0 0.0
    %5229 = vmatpush1.msra.mxu0 0.0
    %5230 = vmatprep.subr.mxu0 0.0
    %5231 = vmatpush1.msra.mxu0 0.0
    %5232 = vmatprep.subr.mxu0 0.0
    %5233 = vmatpush1.msra.mxu0 0.0
    %5234 = vmatprep.subr.mxu0 0.0
    %5235 = vmatpush1.msra.mxu0 0.0
    %5236 = vmatprep.subr.mxu0 0.0
    %5237 = vmatpush1.msra.mxu0 0.0
    %5238 = vmatprep.subr.mxu0 0.0
    %5239 = vmatpush1.msra.mxu0 0.0
    %5240 = vmatprep.subr.mxu0 0.0
    %5241 = vmatpush1.msra.mxu0 0.0
    %5242 = vmatprep.subr.mxu0 0.0
    %5243 = vmatpush1.msra.mxu0 0.0
    %5244 = vmatprep.subr.mxu0 0.0
    %5245 = vmatpush1.msra.mxu0 0.0
    %5246 = vmatprep.subr.mxu0 0.0
    %5247 = vmatpush1.msra.mxu0 0.0
    %5248 = vmatprep.subr.mxu0 0.0
    %5249 = vmatpush1.msra.mxu0 0.0
    %5250 = vmatprep.subr.mxu0 0.0
    %5251 = vmatpush1.msra.mxu0 0.0
    %5252 = vmatprep.subr.mxu0 0.0
    %5253 = vmatpush1.msra.mxu0 0.0
    %5254 = vmatprep.subr.mxu0 0.0
    %5255 = vmatpush1.msra.mxu0 0.0
    %5256 = vmatprep.subr.mxu0 0.0
    %5257 = vmatpush1.msra.mxu0 0.0
    %5258 = vmatprep.subr.mxu0 0.0
    %5259 = vmatpush1.msra.mxu0 0.0
    %5260 = vmatprep.subr.mxu0 0.0
    %5261 = vmatpush1.msra.mxu0 0.0
    %5262 = vmatprep.subr.mxu0 0.0
    %5263 = vmatpush1.msra.mxu0 0.0
    %5264 = vmatprep.subr.mxu0 0.0
    %5265 = vmatpush1.msra.mxu0 0.0
    %5266 = vmatprep.subr.mxu0 0.0
    %5267 = vmatpush1.msra.mxu0 0.0
    %5268 = vmatprep.subr.mxu0 0.0
    %5269 = vmatpush1.msra.mxu0 0.0
    %5270 = vmatprep.mubr.f32.mxu0 0.0
    %5271 = vmatmul.mubr.f32.gmra.mrb[0].mxu0 %v5202
    %v5272 = vpop.f32.mrb[0].mxu0
    %v5273 = vadd.f32 0.0, %v5272
    %v5274 = vpop.f32.mrb[0].mxu0
    %5275 = vmatprep.mubr.f32.mxu0 0.0
    %5276 = vmatmul.mubr.f32.gmra.mrb[0].mxu0 %v5204
    %v5277 = vpop.f32.mrb[0].mxu0
    %v5278 = vadd.f32 0.0, %v5277
    %v5279 = vpop.f32.mrb[0].mxu0
    %5280 = vdwg.mxu0
    %v5281 = vadd.f32 %v5194, %v5273
    %v5282 = vadd.f32 %v5195, %v5278
    %v5283 = vmul.f32 %v5281, %v38
    %v5284 = vmul.f32 %v5282, %v38
    %v5285 = vxor.u32 %v5283, 2147483648
    %v5286 = vxor.u32 %v5284, 2147483648
    %v5287 = vmul.f32 %v5285, 1.442695
    %v5288 = vpow.pop %v5287
    %v5289 = vmul.f32 %v5286, 1.442695
    %v5290 = vpow.pop %v5289
    %v5291 = vadd.f32 %v5288, 1.0
    %v5292 = vadd.f32 %v5290, 1.0
    %v5293 = vrcp.pop %v5291
    %v5294 = vmul.f32 1.0, %v5293
    %v5295 = vrcp.pop %v5292
    %v5296 = vmul.f32 1.0, %v5295
    %v5297 = vmul.f32 %v5294, %v38
    %v5298 = vmul.f32 %v5296, %v38
    %v5299 = vadd.f32 %v5297, %v39
    %v5300 = vadd.f32 %v5298, %v39
    %v5301 = vmul.f32 %v5299, %v4810
    %v5302 = vmul.f32 %v5300, %v4811
    %5305 = vrot.lane.b32.xlu0 %v5299, 64
    %v5306 = vpop.permute.xlu0 %5305
    %5307 = vrot.lane.b32.xlu0 %v5300, 64
    %v5308 = vpop.permute.xlu0 %5307
    %v5311 = vmul.f32 %v5299, %v5306
    %v5312 = vmul.f32 %v5300, %v5308
    %5315 = vrot.lane.b32.xlu0 %v5311, 32
    %v5316 = vpop.permute.xlu0 %5315
    %5317 = vrot.lane.b32.xlu0 %v5312, 32
    %v5318 = vpop.permute.xlu0 %5317
    %v5321 = vadd.f32 %v5301, %v5316
    %v5322 = vadd.f32 %v5302, %v5318
    %v5323 = vtanh.pop %v5321
    %v5324 = vtanh.pop %v5322
    %5327 = vrot.lane.b32.xlu0 %v5323, 64
    %v5328 = vpop.permute.xlu0 %5327
    %5329 = vrot.lane.b32.xlu0 %v5324, 64
    %v5330 = vpop.permute.xlu0 %5329
    %v5333 = vmul.f32 %v5299, %v5328
    %v5334 = vmul.f32 %v5300, %v5330
    %5335 = vmatprep.subr.mxu0 0.0
    %5336 = vmatpush1.msra.mxu0 %v53
    %5337 = vmatprep.subr.mxu0 0.0
    %5338 = vmatpush1.msra.mxu0 %v54
    %5339 = vmatprep.subr.mxu0 0.0
    %5340 = vmatpush1.msra.mxu0 %v55
    %5341 = vmatprep.subr.mxu0 0.0
    %5342 = vmatpush1.msra.mxu0 %v56
    %5343 = vmatprep.subr.mxu0 0.0
    %5344 = vmatpush1.msra.mxu0 0.0
    %5345 = vmatprep.subr.mxu0 0.0
    %5346 = vmatpush1.msra.mxu0 0.0
    %5347 = vmatprep.subr.mxu0 0.0
    %5348 = vmatpush1.msra.mxu0 0.0
    %5349 = vmatprep.subr.mxu0 0.0
    %5350 = vmatpush1.msra.mxu0 0.0
    %5351 = vmatprep.subr.mxu0 0.0
    %5352 = vmatpush1.msra.mxu0 0.0
    %5353 = vmatprep.subr.mxu0 0.0
    %5354 = vmatpush1.msra.mxu0 0.0
    %5355 = vmatprep.subr.mxu0 0.0
    %5356 = vmatpush1.msra.mxu0 0.0
    %5357 = vmatprep.subr.mxu0 0.0
    %5358 = vmatpush1.msra.mxu0 0.0
    %5359 = vmatprep.subr.mxu0 0.0
    %5360 = vmatpush1.msra.mxu0 0.0
    %5361 = vmatprep.subr.mxu0 0.0
    %5362 = vmatpush1.msra.mxu0 0.0
    %5363 = vmatprep.subr.mxu0 0.0
    %5364 = vmatpush1.msra.mxu0 0.0
    %5365 = vmatprep.subr.mxu0 0.0
    %5366 = vmatpush1.msra.mxu0 0.0
    %5367 = vmatprep.subr.mxu0 0.0
    %5368 = vmatpush1.msra.mxu0 0.0
    %5369 = vmatprep.subr.mxu0 0.0
    %5370 = vmatpush1.msra.mxu0 0.0
    %5371 = vmatprep.subr.mxu0 0.0
    %5372 = vmatpush1.msra.mxu0 0.0
    %5373 = vmatprep.subr.mxu0 0.0
    %5374 = vmatpush1.msra.mxu0 0.0
    %5375 = vmatprep.subr.mxu0 0.0
    %5376 = vmatpush1.msra.mxu0 0.0
    %5377 = vmatprep.subr.mxu0 0.0
    %5378 = vmatpush1.msra.mxu0 0.0
    %5379 = vmatprep.subr.mxu0 0.0
    %5380 = vmatpush1.msra.mxu0 0.0
    %5381 = vmatprep.subr.mxu0 0.0
    %5382 = vmatpush1.msra.mxu0 0.0
    %5383 = vmatprep.subr.mxu0 0.0
    %5384 = vmatpush1.msra.mxu0 0.0
    %5385 = vmatprep.subr.mxu0 0.0
    %5386 = vmatpush1.msra.mxu0 0.0
    %5387 = vmatprep.subr.mxu0 0.0
    %5388 = vmatpush1.msra.mxu0 0.0
    %5389 = vmatprep.subr.mxu0 0.0
    %5390 = vmatpush1.msra.mxu0 0.0
    %5391 = vmatprep.subr.mxu0 0.0
    %5392 = vmatpush1.msra.mxu0 0.0
    %5393 = vmatprep.subr.mxu0 0.0
    %5394 = vmatpush1.msra.mxu0 0.0
    %5395 = vmatprep.subr.mxu0 0.0
    %5396 = vmatpush1.msra.mxu0 0.0
    %5397 = vmatprep.subr.mxu0 0.0
    %5398 = vmatpush1.msra.mxu0 0.0
    %5399 = vmatprep.mubr.f32.mxu0 0.0
    %5400 = vmatmul.mubr.f32.gmra.mrb[0].mxu0 %v5202
    %v5401 = vpop.f32.mrb[0].mxu0
    %v5402 = vadd.f32 %v66, %v5401
    %v5403 = vpop.f32.mrb[0].mxu0
    %5404 = vmatprep.mubr.f32.mxu0 0.0
    %5405 = vmatmul.mubr.f32.gmra.mrb[0].mxu0 %v5204
    %v5406 = vpop.f32.mrb[0].mxu0
    %v5407 = vadd.f32 %v66, %v5406
    %v5408 = vpop.f32.mrb[0].mxu0
    %5409 = vdwg.mxu0
    %v5410 = vsel %vm466, %v5035, 0
    %v5412 = vsel %vm466, %v5037, 0
    %5414 = vmatprep.subr.mxu0 0.0
    %5415 = vmatpush1.msra.mxu0 %v57
    %5416 = vmatprep.subr.mxu0 0.0
    %5417 = vmatpush1.msra.mxu0 %v58
    %5418 = vmatprep.subr.mxu0 0.0
    %5419 = vmatpush1.msra.mxu0 %v59
    %5420 = vmatprep.subr.mxu0 0.0
    %5421 = vmatpush1.msra.mxu0 %v60
    %5422 = vmatprep.subr.mxu0 0.0
    %5423 = vmatpush1.msra.mxu0 0.0
    %5424 = vmatprep.subr.mxu0 0.0
    %5425 = vmatpush1.msra.mxu0 0.0
    %5426 = vmatprep.subr.mxu0 0.0
    %5427 = vmatpush1.msra.mxu0 0.0
    %5428 = vmatprep.subr.mxu0 0.0
    %5429 = vmatpush1.msra.mxu0 0.0
    %5430 = vmatprep.subr.mxu0 0.0
    %5431 = vmatpush1.msra.mxu0 0.0
    %5432 = vmatprep.subr.mxu0 0.0
    %5433 = vmatpush1.msra.mxu0 0.0
    %5434 = vmatprep.subr.mxu0 0.0
    %5435 = vmatpush1.msra.mxu0 0.0
    %5436 = vmatprep.subr.mxu0 0.0
    %5437 = vmatpush1.msra.mxu0 0.0
    %5438 = vmatprep.subr.mxu0 0.0
    %5439 = vmatpush1.msra.mxu0 0.0
    %5440 = vmatprep.subr.mxu0 0.0
    %5441 = vmatpush1.msra.mxu0 0.0
    %5442 = vmatprep.subr.mxu0 0.0
    %5443 = vmatpush1.msra.mxu0 0.0
    %5444 = vmatprep.subr.mxu0 0.0
    %5445 = vmatpush1.msra.mxu0 0.0
    %5446 = vmatprep.subr.mxu0 0.0
    %5447 = vmatpush1.msra.mxu0 0.0
    %5448 = vmatprep.subr.mxu0 0.0
    %5449 = vmatpush1.msra.mxu0 0.0
    %5450 = vmatprep.subr.mxu0 0.0
    %5451 = vmatpush1.msra.mxu0 0.0
    %5452 = vmatprep.subr.mxu0 0.0
    %5453 = vmatpush1.msra.mxu0 0.0
    %5454 = vmatprep.subr.mxu0 0.0
    %5455 = vmatpush1.msra.mxu0 0.0
    %5456 = vmatprep.subr.mxu0 0.0
    %5457 = vmatpush1.msra.mxu0 0.0
    %5458 = vmatprep.subr.mxu0 0.0
    %5459 = vmatpush1.msra.mxu0 0.0
    %5460 = vmatprep.subr.mxu0 0.0
    %5461 = vmatpush1.msra.mxu0 0.0
    %5462 = vmatprep.subr.mxu0 0.0
    %5463 = vmatpush1.msra.mxu0 0.0
    %5464 = vmatprep.subr.mxu0 0.0
    %5465 = vmatpush1.msra.mxu0 0.0
    %5466 = vmatprep.subr.mxu0 0.0
    %5467 = vmatpush1.msra.mxu0 0.0
    %5468 = vmatprep.subr.mxu0 0.0
    %5469 = vmatpush1.msra.mxu0 0.0
    %5470 = vmatprep.subr.mxu0 0.0
    %5471 = vmatpush1.msra.mxu0 0.0
    %5472 = vmatprep.subr.mxu0 0.0
    %5473 = vmatpush1.msra.mxu0 0.0
    %5474 = vmatprep.subr.mxu0 0.0
    %5475 = vmatpush1.msra.mxu0 0.0
    %5476 = vmatprep.subr.mxu0 0.0
    %5477 = vmatpush1.msra.mxu0 0.0
    %5478 = vmatprep.mubr.f32.mxu0 0.0
    %5479 = vmatmul.mubr.f32.gmra.mrb[0].mxu0 %v5410
    %v5480 = vpop.f32.mrb[0].mxu0
    %v5481 = vadd.f32 0.0, %v5480
    %v5482 = vpop.f32.mrb[0].mxu0
    %5483 = vmatprep.mubr.f32.mxu0 0.0
    %5484 = vmatmul.mubr.f32.gmra.mrb[0].mxu0 %v5412
    %v5485 = vpop.f32.mrb[0].mxu0
    %v5486 = vadd.f32 0.0, %v5485
    %v5487 = vpop.f32.mrb[0].mxu0
    %5488 = vdwg.mxu0
    %v5489 = vadd.f32 %v5402, %v5481
    %v5490 = vadd.f32 %v5407, %v5486
    %v5491 = vmul.f32 %v5489, %v38
    %v5492 = vmul.f32 %v5490, %v38
    %v5493 = vxor.u32 %v5491, 2147483648
    %v5494 = vxor.u32 %v5492, 2147483648
    %v5495 = vmul.f32 %v5493, 1.442695
    %v5496 = vpow.pop %v5495
    %v5497 = vmul.f32 %v5494, 1.442695
    %v5498 = vpow.pop %v5497
    %v5499 = vadd.f32 %v5496, 1.0
    %v5500 = vadd.f32 %v5498, 1.0
    %v5501 = vrcp.pop %v5499
    %v5502 = vmul.f32 1.0, %v5501
    %v5503 = vrcp.pop %v5500
    %v5504 = vmul.f32 1.0, %v5503
    %v5505 = vmul.f32 %v5502, %v38
    %v5506 = vmul.f32 %v5504, %v38
    %v5507 = vadd.f32 %v5505, %v39
    %v5508 = vadd.f32 %v5506, %v39
    %v5509 = vmul.f32 %v5507, %v5018
    %v5510 = vmul.f32 %v5508, %v5019
    %5513 = vrot.lane.b32.xlu0 %v5507, 64
    %v5514 = vpop.permute.xlu0 %5513
    %5515 = vrot.lane.b32.xlu0 %v5508, 64
    %v5516 = vpop.permute.xlu0 %5515
    %v5519 = vmul.f32 %v5507, %v5514
    %v5520 = vmul.f32 %v5508, %v5516
    %5523 = vrot.lane.b32.xlu0 %v5519, 32
    %v5524 = vpop.permute.xlu0 %5523
    %5525 = vrot.lane.b32.xlu0 %v5520, 32
    %v5526 = vpop.permute.xlu0 %5525
    %v5529 = vadd.f32 %v5509, %v5524
    %v5530 = vadd.f32 %v5510, %v5526
    %v5531 = vtanh.pop %v5529
    %v5532 = vtanh.pop %v5530
    %5535 = vrot.lane.b32.xlu0 %v5531, 64
    %v5536 = vpop.permute.xlu0 %5535
    %5537 = vrot.lane.b32.xlu0 %v5532, 64
    %v5538 = vpop.permute.xlu0 %5537
    %v5541 = vmul.f32 %v5507, %v5536
    %v5542 = vmul.f32 %v5508, %v5538
    %5545 = vrot.lane.b32.xlu0 %v5541, 32
    %v5546 = vpop.permute.xlu0 %5545
    %5547 = vrot.lane.b32.xlu0 %v5542, 32
    %v5548 = vpop.permute.xlu0 %5547
    %5551 = vmatprep.subr.mxu0 0.0
    %5552 = vmatpush1.msra.mxu0 %v5546
    %5553 = vmatprep.subr.mxu0 0.0
    %5554 = vmatpush1.msra.mxu0 %v5548
    %5555 = vmatprep.subr.mxu0 0.0
    %5556 = vmatpush1.msra.mxu0 0.0
    %5557 = vmatprep.subr.mxu0 0.0
    %5558 = vmatpush1.msra.mxu0 0.0
    %5559 = vmatprep.subr.mxu0 0.0
    %5560 = vmatpush1.msra.mxu0 0.0
    %5561 = vmatprep.subr.mxu0 0.0
    %5562 = vmatpush1.msra.mxu0 0.0
    %5563 = vmatprep.subr.mxu0 0.0
    %5564 = vmatpush1.msra.mxu0 0.0
    %5565 = vmatprep.subr.mxu0 0.0
    %5566 = vmatpush1.msra.mxu0 0.0
    %5567 = vmatprep.subr.mxu0 0.0
    %5568 = vmatpush1.msra.mxu0 0.0
    %5569 = vmatprep.subr.mxu0 0.0
    %5570 = vmatpush1.msra.mxu0 0.0
    %5571 = vmatprep.subr.mxu0 0.0
    %5572 = vmatpush1.msra.mxu0 0.0
    %5573 = vmatprep.subr.mxu0 0.0
    %5574 = vmatpush1.msra.mxu0 0.0
    %5575 = vmatprep.subr.mxu0 0.0
    %5576 = vmatpush1.msra.mxu0 0.0
    %5577 = vmatprep.subr.mxu0 0.0
    %5578 = vmatpush1.msra.mxu0 0.0
    %5579 = vmatprep.subr.mxu0 0.0
    %5580 = vmatpush1.msra.mxu0 0.0
    %5581 = vmatprep.subr.mxu0 0.0
    %5582 = vmatpush1.msra.mxu0 0.0
    %5583 = vmatprep.subr.mxu0 0.0
    %5584 = vmatpush1.msra.mxu0 0.0
    %5585 = vmatprep.subr.mxu0 0.0
    %5586 = vmatpush1.msra.mxu0 0.0
    %5587 = vmatprep.subr.mxu0 0.0
    %5588 = vmatpush1.msra.mxu0 0.0
    %5589 = vmatprep.subr.mxu0 0.0
    %5590 = vmatpush1.msra.mxu0 0.0
    %5591 = vmatprep.subr.mxu0 0.0
    %5592 = vmatpush1.msra.mxu0 0.0
    %5593 = vmatprep.subr.mxu0 0.0
    %5594 = vmatpush1.msra.mxu0 0.0
    %5595 = vmatprep.subr.mxu0 0.0
    %5596 = vmatpush1.msra.mxu0 0.0
    %5597 = vmatprep.subr.mxu0 0.0
    %5598 = vmatpush1.msra.mxu0 0.0
    %5599 = vmatprep.subr.mxu0 0.0
    %5600 = vmatpush1.msra.mxu0 0.0
    %5601 = vmatprep.subr.mxu0 0.0
    %5602 = vmatpush1.msra.mxu0 0.0
    %5603 = vmatprep.subr.mxu0 0.0
    %5604 = vmatpush1.msra.mxu0 0.0
    %5605 = vmatprep.subr.mxu0 0.0
    %5606 = vmatpush1.msra.mxu0 0.0
    %5607 = vmatprep.subr.mxu0 0.0
    %5608 = vmatpush1.msra.mxu0 0.0
    %5609 = vmatprep.subr.mxu0 0.0
    %5610 = vmatpush1.msra.mxu0 0.0
    %5611 = vmatprep.subr.mxu0 0.0
    %5612 = vmatpush1.msra.mxu0 0.0
    %5613 = vmatprep.subr.mxu0 0.0
    %5614 = vmatpush1.msra.mxu0 0.0
    %5615 = vmatprep.mubr.f32.mxu0 0.0
    %5616 = vmatmul.mubr.f32.gmra.mrb[0].mxu0 %v954
    %v5617 = vpop.f32.mrb[0].mxu0
    %v5618 = vadd.f32 0.0, %v5617
    %v5619 = vpop.f32.mrb[0].mxu0
    %5620 = vdwg.mxu0
    %v5621 = vld [vmem:[%s7 + $0x240] sm:$0xff]
    %v5622 = vld [vmem:[%s7 + $0x248] sm:$0xff]
    %v5623 = vld [vmem:[%s7 + $0x250] sm:$0xff]
    %v5624 = vld [vmem:[%s7 + $0x258] sm:$0xff]
    %v5625 = vld [vmem:[%s7 + $0x260] sm:$0xff]
    %v5626 = vld [vmem:[%s7 + $0x268] sm:$0xff]
    %v5627 = vld [vmem:[%s7 + $0x270] sm:$0xff]
    %v5628 = vld [vmem:[%s7 + $0x278] sm:$0xff]
    %v5630 = vsel %vm466, %v5618, 0
    %5632 = vmatprep.subr.mxu0 %v5622
    %5633 = vmatpush1.msra.mxu0 %v5621
    %5634 = vmatprep.subr.mxu0 %v5624
    %5635 = vmatpush1.msra.mxu0 %v5623
    %5636 = vmatprep.subr.mxu0 %v5626
    %5637 = vmatpush1.msra.mxu0 %v5625
    %5638 = vmatprep.subr.mxu0 %v5628
    %5639 = vmatpush1.msra.mxu0 %v5627
    %5640 = vmatprep.subr.mxu0 0.0
    %5641 = vmatpush1.msra.mxu0 0.0
    %5642 = vmatprep.subr.mxu0 0.0
    %5643 = vmatpush1.msra.mxu0 0.0
    %5644 = vmatprep.subr.mxu0 0.0
    %5645 = vmatpush1.msra.mxu0 0.0
    %5646 = vmatprep.subr.mxu0 0.0
    %5647 = vmatpush1.msra.mxu0 0.0
    %5648 = vmatprep.subr.mxu0 0.0
    %5649 = vmatpush1.msra.mxu0 0.0
    %5650 = vmatprep.subr.mxu0 0.0
    %5651 = vmatpush1.msra.mxu0 0.0
    %5652 = vmatprep.subr.mxu0 0.0
    %5653 = vmatpush1.msra.mxu0 0.0
    %5654 = vmatprep.subr.mxu0 0.0
    %5655 = vmatpush1.msra.mxu0 0.0
    %5656 = vmatprep.subr.mxu0 0.0
    %5657 = vmatpush1.msra.mxu0 0.0
    %5658 = vmatprep.subr.mxu0 0.0
    %5659 = vmatpush1.msra.mxu0 0.0
    %5660 = vmatprep.subr.mxu0 0.0
    %5661 = vmatpush1.msra.mxu0 0.0
    %5662 = vmatprep.subr.mxu0 0.0
    %5663 = vmatpush1.msra.mxu0 0.0
    %5664 = vmatprep.subr.mxu0 0.0
    %5665 = vmatpush1.msra.mxu0 0.0
    %5666 = vmatprep.subr.mxu0 0.0
    %5667 = vmatpush1.msra.mxu0 0.0
    %5668 = vmatprep.subr.mxu0 0.0
    %5669 = vmatpush1.msra.mxu0 0.0
    %5670 = vmatprep.subr.mxu0 0.0
    %5671 = vmatpush1.msra.mxu0 0.0
    %5672 = vmatprep.subr.mxu0 0.0
    %5673 = vmatpush1.msra.mxu0 0.0
    %5674 = vmatprep.subr.mxu0 0.0
    %5675 = vmatpush1.msra.mxu0 0.0
    %5676 = vmatprep.subr.mxu0 0.0
    %5677 = vmatpush1.msra.mxu0 0.0
    %5678 = vmatprep.subr.mxu0 0.0
    %5679 = vmatpush1.msra.mxu0 0.0
    %5680 = vmatprep.subr.mxu0 0.0
    %5681 = vmatpush1.msra.mxu0 0.0
    %5682 = vmatprep.subr.mxu0 0.0
    %5683 = vmatpush1.msra.mxu0 0.0
    %5684 = vmatprep.subr.mxu0 0.0
    %5685 = vmatpush1.msra.mxu0 0.0
    %5686 = vmatprep.subr.mxu0 0.0
    %5687 = vmatpush1.msra.mxu0 0.0
    %5688 = vmatprep.subr.mxu0 0.0
    %5689 = vmatpush1.msra.mxu0 0.0
    %5690 = vmatprep.subr.mxu0 0.0
    %5691 = vmatpush1.msra.mxu0 0.0
    %5692 = vmatprep.subr.mxu0 0.0
    %5693 = vmatpush1.msra.mxu0 0.0
    %5694 = vmatprep.subr.mxu0 0.0
    %5695 = vmatpush1.msra.mxu0 0.0
    %5696 = vmatprep.mubr.f32.mxu0 0.0
    %5697 = vmatmul.mubr.f32.gmra.mrb[0].mxu0 %v5630
    %v5698 = vpop.f32.mrb[0].mxu0
    %v5699 = vadd.f32 0.0, %v5698
    %v5700 = vpop.f32.mrb[0].mxu0
    %v5701 = vadd.f32 0.0, %v5700
    %5702 = vdwg.mxu0
    %v5703 = vadd.f32 %v5192, %v5699
    %v5704 = vadd.f32 %v5193, %v5701
    %v5705 = vld [vmem:[#allocation2 + $0xb0] sm:$0xff]
    %v5706 = vld [vmem:[#allocation2 + $0xb8] sm:$0xff]
    %5709 = vrot.lane.b32.xlu0 %v5333, 32
    %v5710 = vpop.permute.xlu0 %5709
    %5711 = vrot.lane.b32.xlu0 %v5334, 32
    %v5712 = vpop.permute.xlu0 %5711
    %v5713 = vsel %vm466, %v5710, 0
    %v5715 = vsel %vm466, %v5712, 0
    %5717 = vmatprep.subr.mxu0 0.0
    %5718 = vmatpush1.msra.mxu0 %v48
    %5719 = vmatprep.subr.mxu0 0.0
    %5720 = vmatpush1.msra.mxu0 %v49
    %5721 = vmatprep.subr.mxu0 0.0
    %5722 = vmatpush1.msra.mxu0 %v50
    %5723 = vmatprep.subr.mxu0 0.0
    %5724 = vmatpush1.msra.mxu0 %v51
    %5725 = vmatprep.subr.mxu0 0.0
    %5726 = vmatpush1.msra.mxu0 0.0
    %5727 = vmatprep.subr.mxu0 0.0
    %5728 = vmatpush1.msra.mxu0 0.0
    %5729 = vmatprep.subr.mxu0 0.0
    %5730 = vmatpush1.msra.mxu0 0.0
    %5731 = vmatprep.subr.mxu0 0.0
    %5732 = vmatpush1.msra.mxu0 0.0
    %5733 = vmatprep.subr.mxu0 0.0
    %5734 = vmatpush1.msra.mxu0 0.0
    %5735 = vmatprep.subr.mxu0 0.0
    %5736 = vmatpush1.msra.mxu0 0.0
    %5737 = vmatprep.subr.mxu0 0.0
    %5738 = vmatpush1.msra.mxu0 0.0
    %5739 = vmatprep.subr.mxu0 0.0
    %5740 = vmatpush1.msra.mxu0 0.0
    %5741 = vmatprep.subr.mxu0 0.0
    %5742 = vmatpush1.msra.mxu0 0.0
    %5743 = vmatprep.subr.mxu0 0.0
    %5744 = vmatpush1.msra.mxu0 0.0
    %5745 = vmatprep.subr.mxu0 0.0
    %5746 = vmatpush1.msra.mxu0 0.0
    %5747 = vmatprep.subr.mxu0 0.0
    %5748 = vmatpush1.msra.mxu0 0.0
    %5749 = vmatprep.subr.mxu0 0.0
    %5750 = vmatpush1.msra.mxu0 0.0
    %5751 = vmatprep.subr.mxu0 0.0
    %5752 = vmatpush1.msra.mxu0 0.0
    %5753 = vmatprep.subr.mxu0 0.0
    %5754 = vmatpush1.msra.mxu0 0.0
    %5755 = vmatprep.subr.mxu0 0.0
    %5756 = vmatpush1.msra.mxu0 0.0
    %5757 = vmatprep.subr.mxu0 0.0
    %5758 = vmatpush1.msra.mxu0 0.0
    %5759 = vmatprep.subr.mxu0 0.0
    %5760 = vmatpush1.msra.mxu0 0.0
    %5761 = vmatprep.subr.mxu0 0.0
    %5762 = vmatpush1.msra.mxu0 0.0
    %5763 = vmatprep.subr.mxu0 0.0
    %5764 = vmatpush1.msra.mxu0 0.0
    %5765 = vmatprep.subr.mxu0 0.0
    %5766 = vmatpush1.msra.mxu0 0.0
    %5767 = vmatprep.subr.mxu0 0.0
    %5768 = vmatpush1.msra.mxu0 0.0
    %5769 = vmatprep.subr.mxu0 0.0
    %5770 = vmatpush1.msra.mxu0 0.0
    %5771 = vmatprep.subr.mxu0 0.0
    %5772 = vmatpush1.msra.mxu0 0.0
    %5773 = vmatprep.subr.mxu0 0.0
    %5774 = vmatpush1.msra.mxu0 0.0
    %5775 = vmatprep.subr.mxu0 0.0
    %5776 = vmatpush1.msra.mxu0 0.0
    %5777 = vmatprep.subr.mxu0 0.0
    %5778 = vmatpush1.msra.mxu0 0.0
    %5779 = vmatprep.subr.mxu0 0.0
    %5780 = vmatpush1.msra.mxu0 0.0
    %5781 = vmatprep.mubr.f32.mxu0 0.0
    %5782 = vmatmul.mubr.f32.gmra.mrb[0].mxu0 %v5713
    %v5783 = vpop.f32.mrb[0].mxu0
    %v5784 = vadd.f32 0.0, %v5783
    %v5785 = vpop.f32.mrb[0].mxu0
    %5786 = vmatprep.mubr.f32.mxu0 0.0
    %5787 = vmatmul.mubr.f32.gmra.mrb[0].mxu0 %v5715
    %v5788 = vpop.f32.mrb[0].mxu0
    %v5789 = vadd.f32 0.0, %v5788
    %v5790 = vpop.f32.mrb[0].mxu0
    %5791 = vdwg.mxu0
    %v5792 = vadd.f32 %v5705, %v5784
    %v5793 = vadd.f32 %v5706, %v5789
    %v5794 = vmul.f32 %v5792, %v38
    %v5795 = vmul.f32 %v5793, %v38
    %v5796 = vxor.u32 %v5794, 2147483648
    %v5797 = vxor.u32 %v5795, 2147483648
    %v5798 = vmul.f32 %v5796, 1.442695
    %v5799 = vpow.pop %v5798
    %v5800 = vmul.f32 %v5797, 1.442695
    %v5801 = vpow.pop %v5800
    %v5802 = vadd.f32 %v5799, 1.0
    %v5803 = vadd.f32 %v5801, 1.0
    %v5804 = vrcp.pop %v5802
    %v5805 = vmul.f32 1.0, %v5804
    %v5806 = vrcp.pop %v5803
    %v5807 = vmul.f32 1.0, %v5806
    %v5808 = vmul.f32 %v5805, %v38
    %v5809 = vmul.f32 %v5807, %v38
    %v5810 = vadd.f32 %v5808, %v39
    %v5811 = vadd.f32 %v5809, %v39
    %v5812 = vmul.f32 %v5810, %v5321
    %v5813 = vmul.f32 %v5811, %v5322
    %5816 = vrot.lane.b32.xlu0 %v5810, 64
    %v5817 = vpop.permute.xlu0 %5816
    %5818 = vrot.lane.b32.xlu0 %v5811, 64
    %v5819 = vpop.permute.xlu0 %5818
    %v5822 = vmul.f32 %v5810, %v5817
    %v5823 = vmul.f32 %v5811, %v5819
    %5826 = vrot.lane.b32.xlu0 %v5822, 32
    %v5827 = vpop.permute.xlu0 %5826
    %5828 = vrot.lane.b32.xlu0 %v5823, 32
    %v5829 = vpop.permute.xlu0 %5828
    %v5832 = vadd.f32 %v5812, %v5827
    %v5833 = vadd.f32 %v5813, %v5829
    %v5834 = vtanh.pop %v5832
    %v5835 = vtanh.pop %v5833
    %5838 = vrot.lane.b32.xlu0 %v5834, 64
    %v5839 = vpop.permute.xlu0 %5838
    %5840 = vrot.lane.b32.xlu0 %v5835, 64
    %v5841 = vpop.permute.xlu0 %5840
    %v5844 = vmul.f32 %v5810, %v5839
    %v5845 = vmul.f32 %v5811, %v5841
    %5846 = vmatprep.subr.mxu0 0.0
    %5847 = vmatpush1.msra.mxu0 %v53
    %5848 = vmatprep.subr.mxu0 0.0
    %5849 = vmatpush1.msra.mxu0 %v54
    %5850 = vmatprep.subr.mxu0 0.0
    %5851 = vmatpush1.msra.mxu0 %v55
    %5852 = vmatprep.subr.mxu0 0.0
    %5853 = vmatpush1.msra.mxu0 %v56
    %5854 = vmatprep.subr.mxu0 0.0
    %5855 = vmatpush1.msra.mxu0 0.0
    %5856 = vmatprep.subr.mxu0 0.0
    %5857 = vmatpush1.msra.mxu0 0.0
    %5858 = vmatprep.subr.mxu0 0.0
    %5859 = vmatpush1.msra.mxu0 0.0
    %5860 = vmatprep.subr.mxu0 0.0
    %5861 = vmatpush1.msra.mxu0 0.0
    %5862 = vmatprep.subr.mxu0 0.0
    %5863 = vmatpush1.msra.mxu0 0.0
    %5864 = vmatprep.subr.mxu0 0.0
    %5865 = vmatpush1.msra.mxu0 0.0
    %5866 = vmatprep.subr.mxu0 0.0
    %5867 = vmatpush1.msra.mxu0 0.0
    %5868 = vmatprep.subr.mxu0 0.0
    %5869 = vmatpush1.msra.mxu0 0.0
    %5870 = vmatprep.subr.mxu0 0.0
    %5871 = vmatpush1.msra.mxu0 0.0
    %5872 = vmatprep.subr.mxu0 0.0
    %5873 = vmatpush1.msra.mxu0 0.0
    %5874 = vmatprep.subr.mxu0 0.0
    %5875 = vmatpush1.msra.mxu0 0.0
    %5876 = vmatprep.subr.mxu0 0.0
    %5877 = vmatpush1.msra.mxu0 0.0
    %5878 = vmatprep.subr.mxu0 0.0
    %5879 = vmatpush1.msra.mxu0 0.0
    %5880 = vmatprep.subr.mxu0 0.0
    %5881 = vmatpush1.msra.mxu0 0.0
    %5882 = vmatprep.subr.mxu0 0.0
    %5883 = vmatpush1.msra.mxu0 0.0
    %5884 = vmatprep.subr.mxu0 0.0
    %5885 = vmatpush1.msra.mxu0 0.0
    %5886 = vmatprep.subr.mxu0 0.0
    %5887 = vmatpush1.msra.mxu0 0.0
    %5888 = vmatprep.subr.mxu0 0.0
    %5889 = vmatpush1.msra.mxu0 0.0
    %5890 = vmatprep.subr.mxu0 0.0
    %5891 = vmatpush1.msra.mxu0 0.0
    %5892 = vmatprep.subr.mxu0 0.0
    %5893 = vmatpush1.msra.mxu0 0.0
    %5894 = vmatprep.subr.mxu0 0.0
    %5895 = vmatpush1.msra.mxu0 0.0
    %5896 = vmatprep.subr.mxu0 0.0
    %5897 = vmatpush1.msra.mxu0 0.0
    %5898 = vmatprep.subr.mxu0 0.0
    %5899 = vmatpush1.msra.mxu0 0.0
    %5900 = vmatprep.subr.mxu0 0.0
    %5901 = vmatpush1.msra.mxu0 0.0
    %5902 = vmatprep.subr.mxu0 0.0
    %5903 = vmatpush1.msra.mxu0 0.0
    %5904 = vmatprep.subr.mxu0 0.0
    %5905 = vmatpush1.msra.mxu0 0.0
    %5906 = vmatprep.subr.mxu0 0.0
    %5907 = vmatpush1.msra.mxu0 0.0
    %5908 = vmatprep.subr.mxu0 0.0
    %5909 = vmatpush1.msra.mxu0 0.0
    %5910 = vmatprep.mubr.f32.mxu0 0.0
    %5911 = vmatmul.mubr.f32.gmra.mrb[0].mxu0 %v5713
    %v5912 = vpop.f32.mrb[0].mxu0
    %v5913 = vadd.f32 %v66, %v5912
    %v5914 = vpop.f32.mrb[0].mxu0
    %5915 = vmatprep.mubr.f32.mxu0 0.0
    %5916 = vmatmul.mubr.f32.gmra.mrb[0].mxu0 %v5715
    %v5917 = vpop.f32.mrb[0].mxu0
    %v5918 = vadd.f32 %v66, %v5917
    %v5919 = vpop.f32.mrb[0].mxu0
    %5920 = vdwg.mxu0
    %v5921 = vsel %vm466, %v5546, 0
    %v5923 = vsel %vm466, %v5548, 0
    %5925 = vmatprep.subr.mxu0 0.0
    %5926 = vmatpush1.msra.mxu0 %v57
    %5927 = vmatprep.subr.mxu0 0.0
    %5928 = vmatpush1.msra.mxu0 %v58
    %5929 = vmatprep.subr.mxu0 0.0
    %5930 = vmatpush1.msra.mxu0 %v59
    %5931 = vmatprep.subr.mxu0 0.0
    %5932 = vmatpush1.msra.mxu0 %v60
    %5933 = vmatprep.subr.mxu0 0.0
    %5934 = vmatpush1.msra.mxu0 0.0
    %5935 = vmatprep.subr.mxu0 0.0
    %5936 = vmatpush1.msra.mxu0 0.0
    %5937 = vmatprep.subr.mxu0 0.0
    %5938 = vmatpush1.msra.mxu0 0.0
    %5939 = vmatprep.subr.mxu0 0.0
    %5940 = vmatpush1.msra.mxu0 0.0
    %5941 = vmatprep.subr.mxu0 0.0
    %5942 = vmatpush1.msra.mxu0 0.0
    %5943 = vmatprep.subr.mxu0 0.0
    %5944 = vmatpush1.msra.mxu0 0.0
    %5945 = vmatprep.subr.mxu0 0.0
    %5946 = vmatpush1.msra.mxu0 0.0
    %5947 = vmatprep.subr.mxu0 0.0
    %5948 = vmatpush1.msra.mxu0 0.0
    %5949 = vmatprep.subr.mxu0 0.0
    %5950 = vmatpush1.msra.mxu0 0.0
    %5951 = vmatprep.subr.mxu0 0.0
    %5952 = vmatpush1.msra.mxu0 0.0
    %5953 = vmatprep.subr.mxu0 0.0
    %5954 = vmatpush1.msra.mxu0 0.0
    %5955 = vmatprep.subr.mxu0 0.0
    %5956 = vmatpush1.msra.mxu0 0.0
    %5957 = vmatprep.subr.mxu0 0.0
    %5958 = vmatpush1.msra.mxu0 0.0
    %5959 = vmatprep.subr.mxu0 0.0
    %5960 = vmatpush1.msra.mxu0 0.0
    %5961 = vmatprep.subr.mxu0 0.0
    %5962 = vmatpush1.msra.mxu0 0.0
    %5963 = vmatprep.subr.mxu0 0.0
    %5964 = vmatpush1.msra.mxu0 0.0
    %5965 = vmatprep.subr.mxu0 0.0
    %5966 = vmatpush1.msra.mxu0 0.0
    %5967 = vmatprep.subr.mxu0 0.0
    %5968 = vmatpush1.msra.mxu0 0.0
    %5969 = vmatprep.subr.mxu0 0.0
    %5970 = vmatpush1.msra.mxu0 0.0
    %5971 = vmatprep.subr.mxu0 0.0
    %5972 = vmatpush1.msra.mxu0 0.0
    %5973 = vmatprep.subr.mxu0 0.0
    %5974 = vmatpush1.msra.mxu0 0.0
    %5975 = vmatprep.subr.mxu0 0.0
    %5976 = vmatpush1.msra.mxu0 0.0
    %5977 = vmatprep.subr.mxu0 0.0
    %5978 = vmatpush1.msra.mxu0 0.0
    %5979 = vmatprep.subr.mxu0 0.0
    %5980 = vmatpush1.msra.mxu0 0.0
    %5981 = vmatprep.subr.mxu0 0.0
    %5982 = vmatpush1.msra.mxu0 0.0
    %5983 = vmatprep.subr.mxu0 0.0
    %5984 = vmatpush1.msra.mxu0 0.0
    %5985 = vmatprep.subr.mxu0 0.0
    %5986 = vmatpush1.msra.mxu0 0.0
    %5987 = vmatprep.subr.mxu0 0.0
    %5988 = vmatpush1.msra.mxu0 0.0
    %5989 = vmatprep.mubr.f32.mxu0 0.0
    %5990 = vmatmul.mubr.f32.gmra.mrb[0].mxu0 %v5921
    %v5991 = vpop.f32.mrb[0].mxu0
    %v5992 = vadd.f32 0.0, %v5991
    %v5993 = vpop.f32.mrb[0].mxu0
    %5994 = vmatprep.mubr.f32.mxu0 0.0
    %5995 = vmatmul.mubr.f32.gmra.mrb[0].mxu0 %v5923
    %v5996 = vpop.f32.mrb[0].mxu0
    %v5997 = vadd.f32 0.0, %v5996
    %v5998 = vpop.f32.mrb[0].mxu0
    %5999 = vdwg.mxu0
    %v6000 = vadd.f32 %v5913, %v5992
    %v6001 = vadd.f32 %v5918, %v5997
    %v6002 = vmul.f32 %v6000, %v38
    %v6003 = vmul.f32 %v6001, %v38
    %v6004 = vxor.u32 %v6002, 2147483648
    %v6005 = vxor.u32 %v6003, 2147483648
    %v6006 = vmul.f32 %v6004, 1.442695
    %v6007 = vpow.pop %v6006
    %v6008 = vmul.f32 %v6005, 1.442695
    %v6009 = vpow.pop %v6008
    %v6010 = vadd.f32 %v6007, 1.0
    %v6011 = vadd.f32 %v6009, 1.0
    %v6012 = vrcp.pop %v6010
    %v6013 = vmul.f32 1.0, %v6012
    %v6014 = vrcp.pop %v6011
    %v6015 = vmul.f32 1.0, %v6014
    %v6016 = vmul.f32 %v6013, %v38
    %v6017 = vmul.f32 %v6015, %v38
    %v6018 = vadd.f32 %v6016, %v39
    %v6019 = vadd.f32 %v6017, %v39
    %v6020 = vmul.f32 %v6018, %v5529
    %v6021 = vmul.f32 %v6019, %v5530
    %6024 = vrot.lane.b32.xlu0 %v6018, 64
    %v6025 = vpop.permute.xlu0 %6024
    %6026 = vrot.lane.b32.xlu0 %v6019, 64
    %v6027 = vpop.permute.xlu0 %6026
    %v6030 = vmul.f32 %v6018, %v6025
    %v6031 = vmul.f32 %v6019, %v6027
    %6034 = vrot.lane.b32.xlu0 %v6030, 32
    %v6035 = vpop.permute.xlu0 %6034
    %6036 = vrot.lane.b32.xlu0 %v6031, 32
    %v6037 = vpop.permute.xlu0 %6036
    %v6040 = vadd.f32 %v6020, %v6035
    %v6041 = vadd.f32 %v6021, %v6037
    %v6042 = vtanh.pop %v6040
    %v6043 = vtanh.pop %v6041
    %6046 = vrot.lane.b32.xlu0 %v6042, 64
    %v6047 = vpop.permute.xlu0 %6046
    %6048 = vrot.lane.b32.xlu0 %v6043, 64
    %v6049 = vpop.permute.xlu0 %6048
    %v6052 = vmul.f32 %v6018, %v6047
    %v6053 = vmul.f32 %v6019, %v6049
    %6056 = vrot.lane.b32.xlu0 %v6052, 32
    %v6057 = vpop.permute.xlu0 %6056
    %6058 = vrot.lane.b32.xlu0 %v6053, 32
    %v6059 = vpop.permute.xlu0 %6058
    %6062 = vmatprep.subr.mxu0 0.0
    %6063 = vmatpush1.msra.mxu0 %v6057
    %6064 = vmatprep.subr.mxu0 0.0
    %6065 = vmatpush1.msra.mxu0 %v6059
    %6066 = vmatprep.subr.mxu0 0.0
    %6067 = vmatpush1.msra.mxu0 0.0
    %6068 = vmatprep.subr.mxu0 0.0
    %6069 = vmatpush1.msra.mxu0 0.0
    %6070 = vmatprep.subr.mxu0 0.0
    %6071 = vmatpush1.msra.mxu0 0.0
    %6072 = vmatprep.subr.mxu0 0.0
    %6073 = vmatpush1.msra.mxu0 0.0
    %6074 = vmatprep.subr.mxu0 0.0
    %6075 = vmatpush1.msra.mxu0 0.0
    %6076 = vmatprep.subr.mxu0 0.0
    %6077 = vmatpush1.msra.mxu0 0.0
    %6078 = vmatprep.subr.mxu0 0.0
    %6079 = vmatpush1.msra.mxu0 0.0
    %6080 = vmatprep.subr.mxu0 0.0
    %6081 = vmatpush1.msra.mxu0 0.0
    %6082 = vmatprep.subr.mxu0 0.0
    %6083 = vmatpush1.msra.mxu0 0.0
    %6084 = vmatprep.subr.mxu0 0.0
    %6085 = vmatpush1.msra.mxu0 0.0
    %6086 = vmatprep.subr.mxu0 0.0
    %6087 = vmatpush1.msra.mxu0 0.0
    %6088 = vmatprep.subr.mxu0 0.0
    %6089 = vmatpush1.msra.mxu0 0.0
    %6090 = vmatprep.subr.mxu0 0.0
    %6091 = vmatpush1.msra.mxu0 0.0
    %6092 = vmatprep.subr.mxu0 0.0
    %6093 = vmatpush1.msra.mxu0 0.0
    %6094 = vmatprep.subr.mxu0 0.0
    %6095 = vmatpush1.msra.mxu0 0.0
    %6096 = vmatprep.subr.mxu0 0.0
    %6097 = vmatpush1.msra.mxu0 0.0
    %6098 = vmatprep.subr.mxu0 0.0
    %6099 = vmatpush1.msra.mxu0 0.0
    %6100 = vmatprep.subr.mxu0 0.0
    %6101 = vmatpush1.msra.mxu0 0.0
    %6102 = vmatprep.subr.mxu0 0.0
    %6103 = vmatpush1.msra.mxu0 0.0
    %6104 = vmatprep.subr.mxu0 0.0
    %6105 = vmatpush1.msra.mxu0 0.0
    %6106 = vmatprep.subr.mxu0 0.0
    %6107 = vmatpush1.msra.mxu0 0.0
    %6108 = vmatprep.subr.mxu0 0.0
    %6109 = vmatpush1.msra.mxu0 0.0
    %6110 = vmatprep.subr.mxu0 0.0
    %6111 = vmatpush1.msra.mxu0 0.0
    %6112 = vmatprep.subr.mxu0 0.0
    %6113 = vmatpush1.msra.mxu0 0.0
    %6114 = vmatprep.subr.mxu0 0.0
    %6115 = vmatpush1.msra.mxu0 0.0
    %6116 = vmatprep.subr.mxu0 0.0
    %6117 = vmatpush1.msra.mxu0 0.0
    %6118 = vmatprep.subr.mxu0 0.0
    %6119 = vmatpush1.msra.mxu0 0.0
    %6120 = vmatprep.subr.mxu0 0.0
    %6121 = vmatpush1.msra.mxu0 0.0
    %6122 = vmatprep.subr.mxu0 0.0
    %6123 = vmatpush1.msra.mxu0 0.0
    %6124 = vmatprep.subr.mxu0 0.0
    %6125 = vmatpush1.msra.mxu0 0.0
    %6126 = vmatprep.mubr.f32.mxu0 0.0
    %6127 = vmatmul.mubr.f32.gmra.mrb[0].mxu0 %v954
    %v6128 = vpop.f32.mrb[0].mxu0
    %v6129 = vadd.f32 0.0, %v6128
    %v6130 = vpop.f32.mrb[0].mxu0
    %6131 = vdwg.mxu0
    %v6132 = vld [vmem:[%s7 + $0x280] sm:$0xff]
    %v6133 = vld [vmem:[%s7 + $0x288] sm:$0xff]
    %v6134 = vld [vmem:[%s7 + $0x290] sm:$0xff]
    %v6135 = vld [vmem:[%s7 + $0x298] sm:$0xff]
    %v6136 = vld [vmem:[%s7 + $0x2a0] sm:$0xff]
    %v6137 = vld [vmem:[%s7 + $0x2a8] sm:$0xff]
    %v6138 = vld [vmem:[%s7 + $0x2b0] sm:$0xff]
    %v6139 = vld [vmem:[%s7 + $0x2b8] sm:$0xff]
    %v6141 = vsel %vm466, %v6129, 0
    %6143 = vmatprep.subr.mxu0 %v6133
    %6144 = vmatpush1.msra.mxu0 %v6132
    %6145 = vmatprep.subr.mxu0 %v6135
    %6146 = vmatpush1.msra.mxu0 %v6134
    %6147 = vmatprep.subr.mxu0 %v6137
    %6148 = vmatpush1.msra.mxu0 %v6136
    %6149 = vmatprep.subr.mxu0 %v6139
    %6150 = vmatpush1.msra.mxu0 %v6138
    %6151 = vmatprep.subr.mxu0 0.0
    %6152 = vmatpush1.msra.mxu0 0.0
    %6153 = vmatprep.subr.mxu0 0.0
    %6154 = vmatpush1.msra.mxu0 0.0
    %6155 = vmatprep.subr.mxu0 0.0
    %6156 = vmatpush1.msra.mxu0 0.0
    %6157 = vmatprep.subr.mxu0 0.0
    %6158 = vmatpush1.msra.mxu0 0.0
    %6159 = vmatprep.subr.mxu0 0.0
    %6160 = vmatpush1.msra.mxu0 0.0
    %6161 = vmatprep.subr.mxu0 0.0
    %6162 = vmatpush1.msra.mxu0 0.0
    %6163 = vmatprep.subr.mxu0 0.0
    %6164 = vmatpush1.msra.mxu0 0.0
    %6165 = vmatprep.subr.mxu0 0.0
    %6166 = vmatpush1.msra.mxu0 0.0
    %6167 = vmatprep.subr.mxu0 0.0
    %6168 = vmatpush1.msra.mxu0 0.0
    %6169 = vmatprep.subr.mxu0 0.0
    %6170 = vmatpush1.msra.mxu0 0.0
    %6171 = vmatprep.subr.mxu0 0.0
    %6172 = vmatpush1.msra.mxu0 0.0
    %6173 = vmatprep.subr.mxu0 0.0
    %6174 = vmatpush1.msra.mxu0 0.0
    %6175 = vmatprep.subr.mxu0 0.0
    %6176 = vmatpush1.msra.mxu0 0.0
    %6177 = vmatprep.subr.mxu0 0.0
    %6178 = vmatpush1.msra.mxu0 0.0
    %6179 = vmatprep.subr.mxu0 0.0
    %6180 = vmatpush1.msra.mxu0 0.0
    %6181 = vmatprep.subr.mxu0 0.0
    %6182 = vmatpush1.msra.mxu0 0.0
    %6183 = vmatprep.subr.mxu0 0.0
    %6184 = vmatpush1.msra.mxu0 0.0
    %6185 = vmatprep.subr.mxu0 0.0
    %6186 = vmatpush1.msra.mxu0 0.0
    %6187 = vmatprep.subr.mxu0 0.0
    %6188 = vmatpush1.msra.mxu0 0.0
    %6189 = vmatprep.subr.mxu0 0.0
    %6190 = vmatpush1.msra.mxu0 0.0
    %6191 = vmatprep.subr.mxu0 0.0
    %6192 = vmatpush1.msra.mxu0 0.0
    %6193 = vmatprep.subr.mxu0 0.0
    %6194 = vmatpush1.msra.mxu0 0.0
    %6195 = vmatprep.subr.mxu0 0.0
    %6196 = vmatpush1.msra.mxu0 0.0
    %6197 = vmatprep.subr.mxu0 0.0
    %6198 = vmatpush1.msra.mxu0 0.0
    %6199 = vmatprep.subr.mxu0 0.0
    %6200 = vmatpush1.msra.mxu0 0.0
    %6201 = vmatprep.subr.mxu0 0.0
    %6202 = vmatpush1.msra.mxu0 0.0
    %6203 = vmatprep.subr.mxu0 0.0
    %6204 = vmatpush1.msra.mxu0 0.0
    %6205 = vmatprep.subr.mxu0 0.0
    %6206 = vmatpush1.msra.mxu0 0.0
    %6207 = vmatprep.mubr.f32.mxu0 0.0
    %6208 = vmatmul.mubr.f32.gmra.mrb[0].mxu0 %v6141
    %v6209 = vpop.f32.mrb[0].mxu0
    %v6210 = vadd.f32 0.0, %v6209
    %v6211 = vpop.f32.mrb[0].mxu0
    %v6212 = vadd.f32 0.0, %v6211
    %6213 = vdwg.mxu0
    %v6214 = vadd.f32 %v5703, %v6210
    %v6215 = vadd.f32 %v5704, %v6212
    %v6216 = vld [vmem:[#allocation2 + $0xc0] sm:$0xff]
    %v6217 = vld [vmem:[#allocation2 + $0xc8] sm:$0xff]
    %6220 = vrot.lane.b32.xlu0 %v5844, 32
    %v6221 = vpop.permute.xlu0 %6220
    %6222 = vrot.lane.b32.xlu0 %v5845, 32
    %v6223 = vpop.permute.xlu0 %6222
    %v6224 = vsel %vm466, %v6221, 0
    %v6226 = vsel %vm466, %v6223, 0
    %6228 = vmatprep.subr.mxu0 0.0
    %6229 = vmatpush1.msra.mxu0 %v48
    %6230 = vmatprep.subr.mxu0 0.0
    %6231 = vmatpush1.msra.mxu0 %v49
    %6232 = vmatprep.subr.mxu0 0.0
    %6233 = vmatpush1.msra.mxu0 %v50
    %6234 = vmatprep.subr.mxu0 0.0
    %6235 = vmatpush1.msra.mxu0 %v51
    %6236 = vmatprep.subr.mxu0 0.0
    %6237 = vmatpush1.msra.mxu0 0.0
    %6238 = vmatprep.subr.mxu0 0.0
    %6239 = vmatpush1.msra.mxu0 0.0
    %6240 = vmatprep.subr.mxu0 0.0
    %6241 = vmatpush1.msra.mxu0 0.0
    %6242 = vmatprep.subr.mxu0 0.0
    %6243 = vmatpush1.msra.mxu0 0.0
    %6244 = vmatprep.subr.mxu0 0.0
    %6245 = vmatpush1.msra.mxu0 0.0
    %6246 = vmatprep.subr.mxu0 0.0
    %6247 = vmatpush1.msra.mxu0 0.0
    %6248 = vmatprep.subr.mxu0 0.0
    %6249 = vmatpush1.msra.mxu0 0.0
    %6250 = vmatprep.subr.mxu0 0.0
    %6251 = vmatpush1.msra.mxu0 0.0
    %6252 = vmatprep.subr.mxu0 0.0
    %6253 = vmatpush1.msra.mxu0 0.0
    %6254 = vmatprep.subr.mxu0 0.0
    %6255 = vmatpush1.msra.mxu0 0.0
    %6256 = vmatprep.subr.mxu0 0.0
    %6257 = vmatpush1.msra.mxu0 0.0
    %6258 = vmatprep.subr.mxu0 0.0
    %6259 = vmatpush1.msra.mxu0 0.0
    %6260 = vmatprep.subr.mxu0 0.0
    %6261 = vmatpush1.msra.mxu0 0.0
    %6262 = vmatprep.subr.mxu0 0.0
    %6263 = vmatpush1.msra.mxu0 0.0
    %6264 = vmatprep.subr.mxu0 0.0
    %6265 = vmatpush1.msra.mxu0 0.0
    %6266 = vmatprep.subr.mxu0 0.0
    %6267 = vmatpush1.msra.mxu0 0.0
    %6268 = vmatprep.subr.mxu0 0.0
    %6269 = vmatpush1.msra.mxu0 0.0
    %6270 = vmatprep.subr.mxu0 0.0
    %6271 = vmatpush1.msra.mxu0 0.0
    %6272 = vmatprep.subr.mxu0 0.0
    %6273 = vmatpush1.msra.mxu0 0.0
    %6274 = vmatprep.subr.mxu0 0.0
    %6275 = vmatpush1.msra.mxu0 0.0
    %6276 = vmatprep.subr.mxu0 0.0
    %6277 = vmatpush1.msra.mxu0 0.0
    %6278 = vmatprep.subr.mxu0 0.0
    %6279 = vmatpush1.msra.mxu0 0.0
    %6280 = vmatprep.subr.mxu0 0.0
    %6281 = vmatpush1.msra.mxu0 0.0
    %6282 = vmatprep.subr.mxu0 0.0
    %6283 = vmatpush1.msra.mxu0 0.0
    %6284 = vmatprep.subr.mxu0 0.0
    %6285 = vmatpush1.msra.mxu0 0.0
    %6286 = vmatprep.subr.mxu0 0.0
    %6287 = vmatpush1.msra.mxu0 0.0
    %6288 = vmatprep.subr.mxu0 0.0
    %6289 = vmatpush1.msra.mxu0 0.0
    %6290 = vmatprep.subr.mxu0 0.0
    %6291 = vmatpush1.msra.mxu0 0.0
    %6292 = vmatprep.mubr.f32.mxu0 0.0
    %6293 = vmatmul.mubr.f32.gmra.mrb[0].mxu0 %v6224
    %v6294 = vpop.f32.mrb[0].mxu0
    %v6295 = vadd.f32 0.0, %v6294
    %v6296 = vpop.f32.mrb[0].mxu0
    %6297 = vmatprep.mubr.f32.mxu0 0.0
    %6298 = vmatmul.mubr.f32.gmra.mrb[0].mxu0 %v6226
    %v6299 = vpop.f32.mrb[0].mxu0
    %v6300 = vadd.f32 0.0, %v6299
    %v6301 = vpop.f32.mrb[0].mxu0
    %6302 = vdwg.mxu0
    %v6303 = vadd.f32 %v6216, %v6295
    %v6304 = vadd.f32 %v6217, %v6300
    %v6305 = vmul.f32 %v6303, %v38
    %v6306 = vmul.f32 %v6304, %v38
    %v6307 = vxor.u32 %v6305, 2147483648
    %v6308 = vxor.u32 %v6306, 2147483648
    %v6309 = vmul.f32 %v6307, 1.442695
    %v6310 = vpow.pop %v6309
    %v6311 = vmul.f32 %v6308, 1.442695
    %v6312 = vpow.pop %v6311
    %v6313 = vadd.f32 %v6310, 1.0
    %v6314 = vadd.f32 %v6312, 1.0
    %v6315 = vrcp.pop %v6313
    %v6316 = vmul.f32 1.0, %v6315
    %v6317 = vrcp.pop %v6314
    %v6318 = vmul.f32 1.0, %v6317
    %v6319 = vmul.f32 %v6316, %v38
    %v6320 = vmul.f32 %v6318, %v38
    %v6321 = vadd.f32 %v6319, %v39
    %v6322 = vadd.f32 %v6320, %v39
    %v6323 = vmul.f32 %v6321, %v5832
    %v6324 = vmul.f32 %v6322, %v5833
    %6327 = vrot.lane.b32.xlu0 %v6321, 64
    %v6328 = vpop.permute.xlu0 %6327
    %6329 = vrot.lane.b32.xlu0 %v6322, 64
    %v6330 = vpop.permute.xlu0 %6329
    %v6333 = vmul.f32 %v6321, %v6328
    %v6334 = vmul.f32 %v6322, %v6330
    %6337 = vrot.lane.b32.xlu0 %v6333, 32
    %v6338 = vpop.permute.xlu0 %6337
    %6339 = vrot.lane.b32.xlu0 %v6334, 32
    %v6340 = vpop.permute.xlu0 %6339
    %v6343 = vadd.f32 %v6323, %v6338
    %v6344 = vadd.f32 %v6324, %v6340
    %v6345 = vtanh.pop %v6343
    %v6346 = vtanh.pop %v6344
    %6349 = vrot.lane.b32.xlu0 %v6345, 64
    %v6350 = vpop.permute.xlu0 %6349
    %6351 = vrot.lane.b32.xlu0 %v6346, 64
    %v6352 = vpop.permute.xlu0 %6351
    %v6355 = vmul.f32 %v6321, %v6350
    %v6356 = vmul.f32 %v6322, %v6352
    %6357 = vmatprep.subr.mxu0 0.0
    %6358 = vmatpush1.msra.mxu0 %v53
    %6359 = vmatprep.subr.mxu0 0.0
    %6360 = vmatpush1.msra.mxu0 %v54
    %6361 = vmatprep.subr.mxu0 0.0
    %6362 = vmatpush1.msra.mxu0 %v55
    %6363 = vmatprep.subr.mxu0 0.0
    %6364 = vmatpush1.msra.mxu0 %v56
    %6365 = vmatprep.subr.mxu0 0.0
    %6366 = vmatpush1.msra.mxu0 0.0
    %6367 = vmatprep.subr.mxu0 0.0
    %6368 = vmatpush1.msra.mxu0 0.0
    %6369 = vmatprep.subr.mxu0 0.0
    %6370 = vmatpush1.msra.mxu0 0.0
    %6371 = vmatprep.subr.mxu0 0.0
    %6372 = vmatpush1.msra.mxu0 0.0
    %6373 = vmatprep.subr.mxu0 0.0
    %6374 = vmatpush1.msra.mxu0 0.0
    %6375 = vmatprep.subr.mxu0 0.0
    %6376 = vmatpush1.msra.mxu0 0.0
    %6377 = vmatprep.subr.mxu0 0.0
    %6378 = vmatpush1.msra.mxu0 0.0
    %6379 = vmatprep.subr.mxu0 0.0
    %6380 = vmatpush1.msra.mxu0 0.0
    %6381 = vmatprep.subr.mxu0 0.0
    %6382 = vmatpush1.msra.mxu0 0.0
    %6383 = vmatprep.subr.mxu0 0.0
    %6384 = vmatpush1.msra.mxu0 0.0
    %6385 = vmatprep.subr.mxu0 0.0
    %6386 = vmatpush1.msra.mxu0 0.0
    %6387 = vmatprep.subr.mxu0 0.0
    %6388 = vmatpush1.msra.mxu0 0.0
    %6389 = vmatprep.subr.mxu0 0.0
    %6390 = vmatpush1.msra.mxu0 0.0
    %6391 = vmatprep.subr.mxu0 0.0
    %6392 = vmatpush1.msra.mxu0 0.0
    %6393 = vmatprep.subr.mxu0 0.0
    %6394 = vmatpush1.msra.mxu0 0.0
    %6395 = vmatprep.subr.mxu0 0.0
    %6396 = vmatpush1.msra.mxu0 0.0
    %6397 = vmatprep.subr.mxu0 0.0
    %6398 = vmatpush1.msra.mxu0 0.0
    %6399 = vmatprep.subr.mxu0 0.0
    %6400 = vmatpush1.msra.mxu0 0.0
    %6401 = vmatprep.subr.mxu0 0.0
    %6402 = vmatpush1.msra.mxu0 0.0
    %6403 = vmatprep.subr.mxu0 0.0
    %6404 = vmatpush1.msra.mxu0 0.0
    %6405 = vmatprep.subr.mxu0 0.0
    %6406 = vmatpush1.msra.mxu0 0.0
    %6407 = vmatprep.subr.mxu0 0.0
    %6408 = vmatpush1.msra.mxu0 0.0
    %6409 = vmatprep.subr.mxu0 0.0
    %6410 = vmatpush1.msra.mxu0 0.0
    %6411 = vmatprep.subr.mxu0 0.0
    %6412 = vmatpush1.msra.mxu0 0.0
    %6413 = vmatprep.subr.mxu0 0.0
    %6414 = vmatpush1.msra.mxu0 0.0
    %6415 = vmatprep.subr.mxu0 0.0
    %6416 = vmatpush1.msra.mxu0 0.0
    %6417 = vmatprep.subr.mxu0 0.0
    %6418 = vmatpush1.msra.mxu0 0.0
    %6419 = vmatprep.subr.mxu0 0.0
    %6420 = vmatpush1.msra.mxu0 0.0
    %6421 = vmatprep.mubr.f32.mxu0 0.0
    %6422 = vmatmul.mubr.f32.gmra.mrb[0].mxu0 %v6224
    %v6423 = vpop.f32.mrb[0].mxu0
    %v6424 = vadd.f32 %v66, %v6423
    %v6425 = vpop.f32.mrb[0].mxu0
    %6426 = vmatprep.mubr.f32.mxu0 0.0
    %6427 = vmatmul.mubr.f32.gmra.mrb[0].mxu0 %v6226
    %v6428 = vpop.f32.mrb[0].mxu0
    %v6429 = vadd.f32 %v66, %v6428
    %v6430 = vpop.f32.mrb[0].mxu0
    %6431 = vdwg.mxu0
    %v6432 = vsel %vm466, %v6057, 0
    %v6434 = vsel %vm466, %v6059, 0
    %6436 = vmatprep.subr.mxu0 0.0
    %6437 = vmatpush1.msra.mxu0 %v57
    %6438 = vmatprep.subr.mxu0 0.0
    %6439 = vmatpush1.msra.mxu0 %v58
    %6440 = vmatprep.subr.mxu0 0.0
    %6441 = vmatpush1.msra.mxu0 %v59
    %6442 = vmatprep.subr.mxu0 0.0
    %6443 = vmatpush1.msra.mxu0 %v60
    %6444 = vmatprep.subr.mxu0 0.0
    %6445 = vmatpush1.msra.mxu0 0.0
    %6446 = vmatprep.subr.mxu0 0.0
    %6447 = vmatpush1.msra.mxu0 0.0
    %6448 = vmatprep.subr.mxu0 0.0
    %6449 = vmatpush1.msra.mxu0 0.0
    %6450 = vmatprep.subr.mxu0 0.0
    %6451 = vmatpush1.msra.mxu0 0.0
    %6452 = vmatprep.subr.mxu0 0.0
    %6453 = vmatpush1.msra.mxu0 0.0
    %6454 = vmatprep.subr.mxu0 0.0
    %6455 = vmatpush1.msra.mxu0 0.0
    %6456 = vmatprep.subr.mxu0 0.0
    %6457 = vmatpush1.msra.mxu0 0.0
    %6458 = vmatprep.subr.mxu0 0.0
    %6459 = vmatpush1.msra.mxu0 0.0
    %6460 = vmatprep.subr.mxu0 0.0
    %6461 = vmatpush1.msra.mxu0 0.0
    %6462 = vmatprep.subr.mxu0 0.0
    %6463 = vmatpush1.msra.mxu0 0.0
    %6464 = vmatprep.subr.mxu0 0.0
    %6465 = vmatpush1.msra.mxu0 0.0
    %6466 = vmatprep.subr.mxu0 0.0
    %6467 = vmatpush1.msra.mxu0 0.0
    %6468 = vmatprep.subr.mxu0 0.0
    %6469 = vmatpush1.msra.mxu0 0.0
    %6470 = vmatprep.subr.mxu0 0.0
    %6471 = vmatpush1.msra.mxu0 0.0
    %6472 = vmatprep.subr.mxu0 0.0
    %6473 = vmatpush1.msra.mxu0 0.0
    %6474 = vmatprep.subr.mxu0 0.0
    %6475 = vmatpush1.msra.mxu0 0.0
    %6476 = vmatprep.subr.mxu0 0.0
    %6477 = vmatpush1.msra.mxu0 0.0
    %6478 = vmatprep.subr.mxu0 0.0
    %6479 = vmatpush1.msra.mxu0 0.0
    %6480 = vmatprep.subr.mxu0 0.0
    %6481 = vmatpush1.msra.mxu0 0.0
    %6482 = vmatprep.subr.mxu0 0.0
    %6483 = vmatpush1.msra.mxu0 0.0
    %6484 = vmatprep.subr.mxu0 0.0
    %6485 = vmatpush1.msra.mxu0 0.0
    %6486 = vmatprep.subr.mxu0 0.0
    %6487 = vmatpush1.msra.mxu0 0.0
    %6488 = vmatprep.subr.mxu0 0.0
    %6489 = vmatpush1.msra.mxu0 0.0
    %6490 = vmatprep.subr.mxu0 0.0
    %6491 = vmatpush1.msra.mxu0 0.0
    %6492 = vmatprep.subr.mxu0 0.0
    %6493 = vmatpush1.msra.mxu0 0.0
    %6494 = vmatprep.subr.mxu0 0.0
    %6495 = vmatpush1.msra.mxu0 0.0
    %6496 = vmatprep.subr.mxu0 0.0
    %6497 = vmatpush1.msra.mxu0 0.0
    %6498 = vmatprep.subr.mxu0 0.0
    %6499 = vmatpush1.msra.mxu0 0.0
    %6500 = vmatprep.mubr.f32.mxu0 0.0
    %6501 = vmatmul.mubr.f32.gmra.mrb[0].mxu0 %v6432
    %v6502 = vpop.f32.mrb[0].mxu0
    %v6503 = vadd.f32 0.0, %v6502
    %v6504 = vpop.f32.mrb[0].mxu0
    %6505 = vmatprep.mubr.f32.mxu0 0.0
    %6506 = vmatmul.mubr.f32.gmra.mrb[0].mxu0 %v6434
    %v6507 = vpop.f32.mrb[0].mxu0
    %v6508 = vadd.f32 0.0, %v6507
    %v6509 = vpop.f32.mrb[0].mxu0
    %6510 = vdwg.mxu0
    %v6511 = vadd.f32 %v6424, %v6503
    %v6512 = vadd.f32 %v6429, %v6508
    %v6513 = vmul.f32 %v6511, %v38
    %v6514 = vmul.f32 %v6512, %v38
    %v6515 = vxor.u32 %v6513, 2147483648
    %v6516 = vxor.u32 %v6514, 2147483648
    %v6517 = vmul.f32 %v6515, 1.442695
    %v6518 = vpow.pop %v6517
    %v6519 = vmul.f32 %v6516, 1.442695
    %v6520 = vpow.pop %v6519
    %v6521 = vadd.f32 %v6518, 1.0
    %v6522 = vadd.f32 %v6520, 1.0
    %v6523 = vrcp.pop %v6521
    %v6524 = vmul.f32 1.0, %v6523
    %v6525 = vrcp.pop %v6522
    %v6526 = vmul.f32 1.0, %v6525
    %v6527 = vmul.f32 %v6524, %v38
    %v6528 = vmul.f32 %v6526, %v38
    %v6529 = vadd.f32 %v6527, %v39
    %v6530 = vadd.f32 %v6528, %v39
    %v6531 = vmul.f32 %v6529, %v6040
    %v6532 = vmul.f32 %v6530, %v6041
    %6535 = vrot.lane.b32.xlu0 %v6529, 64
    %v6536 = vpop.permute.xlu0 %6535
    %6537 = vrot.lane.b32.xlu0 %v6530, 64
    %v6538 = vpop.permute.xlu0 %6537
    %v6541 = vmul.f32 %v6529, %v6536
    %v6542 = vmul.f32 %v6530, %v6538
    %6545 = vrot.lane.b32.xlu0 %v6541, 32
    %v6546 = vpop.permute.xlu0 %6545
    %6547 = vrot.lane.b32.xlu0 %v6542, 32
    %v6548 = vpop.permute.xlu0 %6547
    %v6551 = vadd.f32 %v6531, %v6546
    %v6552 = vadd.f32 %v6532, %v6548
    %v6553 = vtanh.pop %v6551
    %v6554 = vtanh.pop %v6552
    %6557 = vrot.lane.b32.xlu0 %v6553, 64
    %v6558 = vpop.permute.xlu0 %6557
    %6559 = vrot.lane.b32.xlu0 %v6554, 64
    %v6560 = vpop.permute.xlu0 %6559
    %v6563 = vmul.f32 %v6529, %v6558
    %v6564 = vmul.f32 %v6530, %v6560
    %6567 = vrot.lane.b32.xlu0 %v6563, 32
    %v6568 = vpop.permute.xlu0 %6567
    %6569 = vrot.lane.b32.xlu0 %v6564, 32
    %v6570 = vpop.permute.xlu0 %6569
    %6573 = vmatprep.subr.mxu0 0.0
    %6574 = vmatpush1.msra.mxu0 %v6568
    %6575 = vmatprep.subr.mxu0 0.0
    %6576 = vmatpush1.msra.mxu0 %v6570
    %6577 = vmatprep.subr.mxu0 0.0
    %6578 = vmatpush1.msra.mxu0 0.0
    %6579 = vmatprep.subr.mxu0 0.0
    %6580 = vmatpush1.msra.mxu0 0.0
    %6581 = vmatprep.subr.mxu0 0.0
    %6582 = vmatpush1.msra.mxu0 0.0
    %6583 = vmatprep.subr.mxu0 0.0
    %6584 = vmatpush1.msra.mxu0 0.0
    %6585 = vmatprep.subr.mxu0 0.0
    %6586 = vmatpush1.msra.mxu0 0.0
    %6587 = vmatprep.subr.mxu0 0.0
    %6588 = vmatpush1.msra.mxu0 0.0
    %6589 = vmatprep.subr.mxu0 0.0
    %6590 = vmatpush1.msra.mxu0 0.0
    %6591 = vmatprep.subr.mxu0 0.0
    %6592 = vmatpush1.msra.mxu0 0.0
    %6593 = vmatprep.subr.mxu0 0.0
    %6594 = vmatpush1.msra.mxu0 0.0
    %6595 = vmatprep.subr.mxu0 0.0
    %6596 = vmatpush1.msra.mxu0 0.0
    %6597 = vmatprep.subr.mxu0 0.0
    %6598 = vmatpush1.msra.mxu0 0.0
    %6599 = vmatprep.subr.mxu0 0.0
    %6600 = vmatpush1.msra.mxu0 0.0
    %6601 = vmatprep.subr.mxu0 0.0
    %6602 = vmatpush1.msra.mxu0 0.0
    %6603 = vmatprep.subr.mxu0 0.0
    %6604 = vmatpush1.msra.mxu0 0.0
    %6605 = vmatprep.subr.mxu0 0.0
    %6606 = vmatpush1.msra.mxu0 0.0
    %6607 = vmatprep.subr.mxu0 0.0
    %6608 = vmatpush1.msra.mxu0 0.0
    %6609 = vmatprep.subr.mxu0 0.0
    %6610 = vmatpush1.msra.mxu0 0.0
    %6611 = vmatprep.subr.mxu0 0.0
    %6612 = vmatpush1.msra.mxu0 0.0
    %6613 = vmatprep.subr.mxu0 0.0
    %6614 = vmatpush1.msra.mxu0 0.0
    %6615 = vmatprep.subr.mxu0 0.0
    %6616 = vmatpush1.msra.mxu0 0.0
    %6617 = vmatprep.subr.mxu0 0.0
    %6618 = vmatpush1.msra.mxu0 0.0
    %6619 = vmatprep.subr.mxu0 0.0
    %6620 = vmatpush1.msra.mxu0 0.0
    %6621 = vmatprep.subr.mxu0 0.0
    %6622 = vmatpush1.msra.mxu0 0.0
    %6623 = vmatprep.subr.mxu0 0.0
    %6624 = vmatpush1.msra.mxu0 0.0
    %6625 = vmatprep.subr.mxu0 0.0
    %6626 = vmatpush1.msra.mxu0 0.0
    %6627 = vmatprep.subr.mxu0 0.0
    %6628 = vmatpush1.msra.mxu0 0.0
    %6629 = vmatprep.subr.mxu0 0.0
    %6630 = vmatpush1.msra.mxu0 0.0
    %6631 = vmatprep.subr.mxu0 0.0
    %6632 = vmatpush1.msra.mxu0 0.0
    %6633 = vmatprep.subr.mxu0 0.0
    %6634 = vmatpush1.msra.mxu0 0.0
    %6635 = vmatprep.subr.mxu0 0.0
    %6636 = vmatpush1.msra.mxu0 0.0
    %6637 = vmatprep.mubr.f32.mxu0 0.0
    %6638 = vmatmul.mubr.f32.gmra.mrb[0].mxu0 %v954
    %v6639 = vpop.f32.mrb[0].mxu0
    %v6640 = vadd.f32 0.0, %v6639
    %v6641 = vpop.f32.mrb[0].mxu0
    %6642 = vdwg.mxu0
    %v6643 = vld [vmem:[%s7 + $0x2c0] sm:$0xff]
    %v6644 = vld [vmem:[%s7 + $0x2c8] sm:$0xff]
    %v6645 = vld [vmem:[%s7 + $0x2d0] sm:$0xff]
    %v6646 = vld [vmem:[%s7 + $0x2d8] sm:$0xff]
    %v6647 = vld [vmem:[%s7 + $0x2e0] sm:$0xff]
    %v6648 = vld [vmem:[%s7 + $0x2e8] sm:$0xff]
    %v6649 = vld [vmem:[%s7 + $0x2f0] sm:$0xff]
    %v6650 = vld [vmem:[%s7 + $0x2f8] sm:$0xff]
    %v6652 = vsel %vm466, %v6640, 0
    %6654 = vmatprep.subr.mxu0 %v6644
    %6655 = vmatpush1.msra.mxu0 %v6643
    %6656 = vmatprep.subr.mxu0 %v6646
    %6657 = vmatpush1.msra.mxu0 %v6645
    %6658 = vmatprep.subr.mxu0 %v6648
    %6659 = vmatpush1.msra.mxu0 %v6647
    %6660 = vmatprep.subr.mxu0 %v6650
    %6661 = vmatpush1.msra.mxu0 %v6649
    %6662 = vmatprep.subr.mxu0 0.0
    %6663 = vmatpush1.msra.mxu0 0.0
    %6664 = vmatprep.subr.mxu0 0.0
    %6665 = vmatpush1.msra.mxu0 0.0
    %6666 = vmatprep.subr.mxu0 0.0
    %6667 = vmatpush1.msra.mxu0 0.0
    %6668 = vmatprep.subr.mxu0 0.0
    %6669 = vmatpush1.msra.mxu0 0.0
    %6670 = vmatprep.subr.mxu0 0.0
    %6671 = vmatpush1.msra.mxu0 0.0
    %6672 = vmatprep.subr.mxu0 0.0
    %6673 = vmatpush1.msra.mxu0 0.0
    %6674 = vmatprep.subr.mxu0 0.0
    %6675 = vmatpush1.msra.mxu0 0.0
    %6676 = vmatprep.subr.mxu0 0.0
    %6677 = vmatpush1.msra.mxu0 0.0
    %6678 = vmatprep.subr.mxu0 0.0
    %6679 = vmatpush1.msra.mxu0 0.0
    %6680 = vmatprep.subr.mxu0 0.0
    %6681 = vmatpush1.msra.mxu0 0.0
    %6682 = vmatprep.subr.mxu0 0.0
    %6683 = vmatpush1.msra.mxu0 0.0
    %6684 = vmatprep.subr.mxu0 0.0
    %6685 = vmatpush1.msra.mxu0 0.0
    %6686 = vmatprep.subr.mxu0 0.0
    %6687 = vmatpush1.msra.mxu0 0.0
    %6688 = vmatprep.subr.mxu0 0.0
    %6689 = vmatpush1.msra.mxu0 0.0
    %6690 = vmatprep.subr.mxu0 0.0
    %6691 = vmatpush1.msra.mxu0 0.0
    %6692 = vmatprep.subr.mxu0 0.0
    %6693 = vmatpush1.msra.mxu0 0.0
    %6694 = vmatprep.subr.mxu0 0.0
    %6695 = vmatpush1.msra.mxu0 0.0
    %6696 = vmatprep.subr.mxu0 0.0
    %6697 = vmatpush1.msra.mxu0 0.0
    %6698 = vmatprep.subr.mxu0 0.0
    %6699 = vmatpush1.msra.mxu0 0.0
    %6700 = vmatprep.subr.mxu0 0.0
    %6701 = vmatpush1.msra.mxu0 0.0
    %6702 = vmatprep.subr.mxu0 0.0
    %6703 = vmatpush1.msra.mxu0 0.0
    %6704 = vmatprep.subr.mxu0 0.0
    %6705 = vmatpush1.msra.mxu0 0.0
    %6706 = vmatprep.subr.mxu0 0.0
    %6707 = vmatpush1.msra.mxu0 0.0
    %6708 = vmatprep.subr.mxu0 0.0
    %6709 = vmatpush1.msra.mxu0 0.0
    %6710 = vmatprep.subr.mxu0 0.0
    %6711 = vmatpush1.msra.mxu0 0.0
    %6712 = vmatprep.subr.mxu0 0.0
    %6713 = vmatpush1.msra.mxu0 0.0
    %6714 = vmatprep.subr.mxu0 0.0
    %6715 = vmatpush1.msra.mxu0 0.0
    %6716 = vmatprep.subr.mxu0 0.0
    %6717 = vmatpush1.msra.mxu0 0.0
    %6718 = vmatprep.mubr.f32.mxu0 0.0
    %6719 = vmatmul.mubr.f32.gmra.mrb[0].mxu0 %v6652
    %v6720 = vpop.f32.mrb[0].mxu0
    %v6721 = vadd.f32 0.0, %v6720
    %v6722 = vpop.f32.mrb[0].mxu0
    %v6723 = vadd.f32 0.0, %v6722
    %6724 = vdwg.mxu0
    %v6725 = vadd.f32 %v6214, %v6721
    %v6726 = vadd.f32 %v6215, %v6723
    %v6727 = vld [vmem:[#allocation2 + $0xd0] sm:$0xff]
    %v6728 = vld [vmem:[#allocation2 + $0xd8] sm:$0xff]
    %6731 = vrot.lane.b32.xlu0 %v6355, 32
    %v6732 = vpop.permute.xlu0 %6731
    %6733 = vrot.lane.b32.xlu0 %v6356, 32
    %v6734 = vpop.permute.xlu0 %6733
    %v6735 = vsel %vm466, %v6732, 0
    %v6737 = vsel %vm466, %v6734, 0
    %6739 = vmatprep.subr.mxu0 0.0
    %6740 = vmatpush1.msra.mxu0 %v48
    %6741 = vmatprep.subr.mxu0 0.0
    %6742 = vmatpush1.msra.mxu0 %v49
    %6743 = vmatprep.subr.mxu0 0.0
    %6744 = vmatpush1.msra.mxu0 %v50
    %6745 = vmatprep.subr.mxu0 0.0
    %6746 = vmatpush1.msra.mxu0 %v51
    %6747 = vmatprep.subr.mxu0 0.0
    %6748 = vmatpush1.msra.mxu0 0.0
    %6749 = vmatprep.subr.mxu0 0.0
    %6750 = vmatpush1.msra.mxu0 0.0
    %6751 = vmatprep.subr.mxu0 0.0
    %6752 = vmatpush1.msra.mxu0 0.0
    %6753 = vmatprep.subr.mxu0 0.0
    %6754 = vmatpush1.msra.mxu0 0.0
    %6755 = vmatprep.subr.mxu0 0.0
    %6756 = vmatpush1.msra.mxu0 0.0
    %6757 = vmatprep.subr.mxu0 0.0
    %6758 = vmatpush1.msra.mxu0 0.0
    %6759 = vmatprep.subr.mxu0 0.0
    %6760 = vmatpush1.msra.mxu0 0.0
    %6761 = vmatprep.subr.mxu0 0.0
    %6762 = vmatpush1.msra.mxu0 0.0
    %6763 = vmatprep.subr.mxu0 0.0
    %6764 = vmatpush1.msra.mxu0 0.0
    %6765 = vmatprep.subr.mxu0 0.0
    %6766 = vmatpush1.msra.mxu0 0.0
    %6767 = vmatprep.subr.mxu0 0.0
    %6768 = vmatpush1.msra.mxu0 0.0
    %6769 = vmatprep.subr.mxu0 0.0
    %6770 = vmatpush1.msra.mxu0 0.0
    %6771 = vmatprep.subr.mxu0 0.0
    %6772 = vmatpush1.msra.mxu0 0.0
    %6773 = vmatprep.subr.mxu0 0.0
    %6774 = vmatpush1.msra.mxu0 0.0
    %6775 = vmatprep.subr.mxu0 0.0
    %6776 = vmatpush1.msra.mxu0 0.0
    %6777 = vmatprep.subr.mxu0 0.0
    %6778 = vmatpush1.msra.mxu0 0.0
    %6779 = vmatprep.subr.mxu0 0.0
    %6780 = vmatpush1.msra.mxu0 0.0
    %6781 = vmatprep.subr.mxu0 0.0
    %6782 = vmatpush1.msra.mxu0 0.0
    %6783 = vmatprep.subr.mxu0 0.0
    %6784 = vmatpush1.msra.mxu0 0.0
    %6785 = vmatprep.subr.mxu0 0.0
    %6786 = vmatpush1.msra.mxu0 0.0
    %6787 = vmatprep.subr.mxu0 0.0
    %6788 = vmatpush1.msra.mxu0 0.0
    %6789 = vmatprep.subr.mxu0 0.0
    %6790 = vmatpush1.msra.mxu0 0.0
    %6791 = vmatprep.subr.mxu0 0.0
    %6792 = vmatpush1.msra.mxu0 0.0
    %6793 = vmatprep.subr.mxu0 0.0
    %6794 = vmatpush1.msra.mxu0 0.0
    %6795 = vmatprep.subr.mxu0 0.0
    %6796 = vmatpush1.msra.mxu0 0.0
    %6797 = vmatprep.subr.mxu0 0.0
    %6798 = vmatpush1.msra.mxu0 0.0
    %6799 = vmatprep.subr.mxu0 0.0
    %6800 = vmatpush1.msra.mxu0 0.0
    %6801 = vmatprep.subr.mxu0 0.0
    %6802 = vmatpush1.msra.mxu0 0.0
    %6803 = vmatprep.mubr.f32.mxu0 0.0
    %6804 = vmatmul.mubr.f32.gmra.mrb[0].mxu0 %v6735
    %v6805 = vpop.f32.mrb[0].mxu0
    %v6806 = vadd.f32 0.0, %v6805
    %v6807 = vpop.f32.mrb[0].mxu0
    %6808 = vmatprep.mubr.f32.mxu0 0.0
    %6809 = vmatmul.mubr.f32.gmra.mrb[0].mxu0 %v6737
    %v6810 = vpop.f32.mrb[0].mxu0
    %v6811 = vadd.f32 0.0, %v6810
    %v6812 = vpop.f32.mrb[0].mxu0
    %6813 = vdwg.mxu0
    %v6814 = vadd.f32 %v6727, %v6806
    %v6815 = vadd.f32 %v6728, %v6811
    %v6816 = vmul.f32 %v6814, %v38
    %v6817 = vmul.f32 %v6815, %v38
    %v6818 = vxor.u32 %v6816, 2147483648
    %v6819 = vxor.u32 %v6817, 2147483648
    %v6820 = vmul.f32 %v6818, 1.442695
    %v6821 = vpow.pop %v6820
    %v6822 = vmul.f32 %v6819, 1.442695
    %v6823 = vpow.pop %v6822
    %v6824 = vadd.f32 %v6821, 1.0
    %v6825 = vadd.f32 %v6823, 1.0
    %v6826 = vrcp.pop %v6824
    %v6827 = vmul.f32 1.0, %v6826
    %v6828 = vrcp.pop %v6825
    %v6829 = vmul.f32 1.0, %v6828
    %v6830 = vmul.f32 %v6827, %v38
    %v6831 = vmul.f32 %v6829, %v38
    %v6832 = vadd.f32 %v6830, %v39
    %v6833 = vadd.f32 %v6831, %v39
    %v6834 = vmul.f32 %v6832, %v6343
    %v6835 = vmul.f32 %v6833, %v6344
    %6838 = vrot.lane.b32.xlu0 %v6832, 64
    %v6839 = vpop.permute.xlu0 %6838
    %6840 = vrot.lane.b32.xlu0 %v6833, 64
    %v6841 = vpop.permute.xlu0 %6840
    %v6844 = vmul.f32 %v6832, %v6839
    %v6845 = vmul.f32 %v6833, %v6841
    %6848 = vrot.lane.b32.xlu0 %v6844, 32
    %v6849 = vpop.permute.xlu0 %6848
    %6850 = vrot.lane.b32.xlu0 %v6845, 32
    %v6851 = vpop.permute.xlu0 %6850
    %v6854 = vadd.f32 %v6834, %v6849
    %v6855 = vadd.f32 %v6835, %v6851
    %v6856 = vtanh.pop %v6854
    %v6857 = vtanh.pop %v6855
    %6860 = vrot.lane.b32.xlu0 %v6856, 64
    %v6861 = vpop.permute.xlu0 %6860
    %6862 = vrot.lane.b32.xlu0 %v6857, 64
    %v6863 = vpop.permute.xlu0 %6862
    %v6866 = vmul.f32 %v6832, %v6861
    %v6867 = vmul.f32 %v6833, %v6863
    %6868 = vmatprep.subr.mxu0 0.0
    %6869 = vmatpush1.msra.mxu0 %v53
    %6870 = vmatprep.subr.mxu0 0.0
    %6871 = vmatpush1.msra.mxu0 %v54
    %6872 = vmatprep.subr.mxu0 0.0
    %6873 = vmatpush1.msra.mxu0 %v55
    %6874 = vmatprep.subr.mxu0 0.0
    %6875 = vmatpush1.msra.mxu0 %v56
    %6876 = vmatprep.subr.mxu0 0.0
    %6877 = vmatpush1.msra.mxu0 0.0
    %6878 = vmatprep.subr.mxu0 0.0
    %6879 = vmatpush1.msra.mxu0 0.0
    %6880 = vmatprep.subr.mxu0 0.0
    %6881 = vmatpush1.msra.mxu0 0.0
    %6882 = vmatprep.subr.mxu0 0.0
    %6883 = vmatpush1.msra.mxu0 0.0
    %6884 = vmatprep.subr.mxu0 0.0
    %6885 = vmatpush1.msra.mxu0 0.0
    %6886 = vmatprep.subr.mxu0 0.0
    %6887 = vmatpush1.msra.mxu0 0.0
    %6888 = vmatprep.subr.mxu0 0.0
    %6889 = vmatpush1.msra.mxu0 0.0
    %6890 = vmatprep.subr.mxu0 0.0
    %6891 = vmatpush1.msra.mxu0 0.0
    %6892 = vmatprep.subr.mxu0 0.0
    %6893 = vmatpush1.msra.mxu0 0.0
    %6894 = vmatprep.subr.mxu0 0.0
    %6895 = vmatpush1.msra.mxu0 0.0
    %6896 = vmatprep.subr.mxu0 0.0
    %6897 = vmatpush1.msra.mxu0 0.0
    %6898 = vmatprep.subr.mxu0 0.0
    %6899 = vmatpush1.msra.mxu0 0.0
    %6900 = vmatprep.subr.mxu0 0.0
    %6901 = vmatpush1.msra.mxu0 0.0
    %6902 = vmatprep.subr.mxu0 0.0
    %6903 = vmatpush1.msra.mxu0 0.0
    %6904 = vmatprep.subr.mxu0 0.0
    %6905 = vmatpush1.msra.mxu0 0.0
    %6906 = vmatprep.subr.mxu0 0.0
    %6907 = vmatpush1.msra.mxu0 0.0
    %6908 = vmatprep.subr.mxu0 0.0
    %6909 = vmatpush1.msra.mxu0 0.0
    %6910 = vmatprep.subr.mxu0 0.0
    %6911 = vmatpush1.msra.mxu0 0.0
    %6912 = vmatprep.subr.mxu0 0.0
    %6913 = vmatpush1.msra.mxu0 0.0
    %6914 = vmatprep.subr.mxu0 0.0
    %6915 = vmatpush1.msra.mxu0 0.0
    %6916 = vmatprep.subr.mxu0 0.0
    %6917 = vmatpush1.msra.mxu0 0.0
    %6918 = vmatprep.subr.mxu0 0.0
    %6919 = vmatpush1.msra.mxu0 0.0
    %6920 = vmatprep.subr.mxu0 0.0
    %6921 = vmatpush1.msra.mxu0 0.0
    %6922 = vmatprep.subr.mxu0 0.0
    %6923 = vmatpush1.msra.mxu0 0.0
    %6924 = vmatprep.subr.mxu0 0.0
    %6925 = vmatpush1.msra.mxu0 0.0
    %6926 = vmatprep.subr.mxu0 0.0
    %6927 = vmatpush1.msra.mxu0 0.0
    %6928 = vmatprep.subr.mxu0 0.0
    %6929 = vmatpush1.msra.mxu0 0.0
    %6930 = vmatprep.subr.mxu0 0.0
    %6931 = vmatpush1.msra.mxu0 0.0
    %6932 = vmatprep.mubr.f32.mxu0 0.0
    %6933 = vmatmul.mubr.f32.gmra.mrb[0].mxu0 %v6735
    %v6934 = vpop.f32.mrb[0].mxu0
    %v6935 = vadd.f32 %v66, %v6934
    %v6936 = vpop.f32.mrb[0].mxu0
    %6937 = vmatprep.mubr.f32.mxu0 0.0
    %6938 = vmatmul.mubr.f32.gmra.mrb[0].mxu0 %v6737
    %v6939 = vpop.f32.mrb[0].mxu0
    %v6940 = vadd.f32 %v66, %v6939
    %v6941 = vpop.f32.mrb[0].mxu0
    %6942 = vdwg.mxu0
    %v6943 = vsel %vm466, %v6568, 0
    %v6945 = vsel %vm466, %v6570, 0
    %6947 = vmatprep.subr.mxu0 0.0
    %6948 = vmatpush1.msra.mxu0 %v57
    %6949 = vmatprep.subr.mxu0 0.0
    %6950 = vmatpush1.msra.mxu0 %v58
    %6951 = vmatprep.subr.mxu0 0.0
    %6952 = vmatpush1.msra.mxu0 %v59
    %6953 = vmatprep.subr.mxu0 0.0
    %6954 = vmatpush1.msra.mxu0 %v60
    %6955 = vmatprep.subr.mxu0 0.0
    %6956 = vmatpush1.msra.mxu0 0.0
    %6957 = vmatprep.subr.mxu0 0.0
    %6958 = vmatpush1.msra.mxu0 0.0
    %6959 = vmatprep.subr.mxu0 0.0
    %6960 = vmatpush1.msra.mxu0 0.0
    %6961 = vmatprep.subr.mxu0 0.0
    %6962 = vmatpush1.msra.mxu0 0.0
    %6963 = vmatprep.subr.mxu0 0.0
    %6964 = vmatpush1.msra.mxu0 0.0
    %6965 = vmatprep.subr.mxu0 0.0
    %6966 = vmatpush1.msra.mxu0 0.0
    %6967 = vmatprep.subr.mxu0 0.0
    %6968 = vmatpush1.msra.mxu0 0.0
    %6969 = vmatprep.subr.mxu0 0.0
    %6970 = vmatpush1.msra.mxu0 0.0
    %6971 = vmatprep.subr.mxu0 0.0
    %6972 = vmatpush1.msra.mxu0 0.0
    %6973 = vmatprep.subr.mxu0 0.0
    %6974 = vmatpush1.msra.mxu0 0.0
    %6975 = vmatprep.subr.mxu0 0.0
    %6976 = vmatpush1.msra.mxu0 0.0
    %6977 = vmatprep.subr.mxu0 0.0
    %6978 = vmatpush1.msra.mxu0 0.0
    %6979 = vmatprep.subr.mxu0 0.0
    %6980 = vmatpush1.msra.mxu0 0.0
    %6981 = vmatprep.subr.mxu0 0.0
    %6982 = vmatpush1.msra.mxu0 0.0
    %6983 = vmatprep.subr.mxu0 0.0
    %6984 = vmatpush1.msra.mxu0 0.0
    %6985 = vmatprep.subr.mxu0 0.0
    %6986 = vmatpush1.msra.mxu0 0.0
    %6987 = vmatprep.subr.mxu0 0.0
    %6988 = vmatpush1.msra.mxu0 0.0
    %6989 = vmatprep.subr.mxu0 0.0
    %6990 = vmatpush1.msra.mxu0 0.0
    %6991 = vmatprep.subr.mxu0 0.0
    %6992 = vmatpush1.msra.mxu0 0.0
    %6993 = vmatprep.subr.mxu0 0.0
    %6994 = vmatpush1.msra.mxu0 0.0
    %6995 = vmatprep.subr.mxu0 0.0
    %6996 = vmatpush1.msra.mxu0 0.0
    %6997 = vmatprep.subr.mxu0 0.0
    %6998 = vmatpush1.msra.mxu0 0.0
    %6999 = vmatprep.subr.mxu0 0.0
    %7000 = vmatpush1.msra.mxu0 0.0
    %7001 = vmatprep.subr.mxu0 0.0
    %7002 = vmatpush1.msra.mxu0 0.0
    %7003 = vmatprep.subr.mxu0 0.0
    %7004 = vmatpush1.msra.mxu0 0.0
    %7005 = vmatprep.subr.mxu0 0.0
    %7006 = vmatpush1.msra.mxu0 0.0
    %7007 = vmatprep.subr.mxu0 0.0
    %7008 = vmatpush1.msra.mxu0 0.0
    %7009 = vmatprep.subr.mxu0 0.0
    %7010 = vmatpush1.msra.mxu0 0.0
    %7011 = vmatprep.mubr.f32.mxu0 0.0
    %7012 = vmatmul.mubr.f32.gmra.mrb[0].mxu0 %v6943
    %v7013 = vpop.f32.mrb[0].mxu0
    %v7014 = vadd.f32 0.0, %v7013
    %v7015 = vpop.f32.mrb[0].mxu0
    %7016 = vmatprep.mubr.f32.mxu0 0.0
    %7017 = vmatmul.mubr.f32.gmra.mrb[0].mxu0 %v6945
    %v7018 = vpop.f32.mrb[0].mxu0
    %v7019 = vadd.f32 0.0, %v7018
    %v7020 = vpop.f32.mrb[0].mxu0
    %7021 = vdwg.mxu0
    %v7022 = vadd.f32 %v6935, %v7014
    %v7023 = vadd.f32 %v6940, %v7019
    %v7024 = vmul.f32 %v7022, %v38
    %v7025 = vmul.f32 %v7023, %v38
    %v7026 = vxor.u32 %v7024, 2147483648
    %v7027 = vxor.u32 %v7025, 2147483648
    %v7028 = vmul.f32 %v7026, 1.442695
    %v7029 = vpow.pop %v7028
    %v7030 = vmul.f32 %v7027, 1.442695
    %v7031 = vpow.pop %v7030
    %v7032 = vadd.f32 %v7029, 1.0
    %v7033 = vadd.f32 %v7031, 1.0
    %v7034 = vrcp.pop %v7032
    %v7035 = vmul.f32 1.0, %v7034
    %v7036 = vrcp.pop %v7033
    %v7037 = vmul.f32 1.0, %v7036
    %v7038 = vmul.f32 %v7035, %v38
    %v7039 = vmul.f32 %v7037, %v38
    %v7040 = vadd.f32 %v7038, %v39
    %v7041 = vadd.f32 %v7039, %v39
    %v7042 = vmul.f32 %v7040, %v6551
    %v7043 = vmul.f32 %v7041, %v6552
    %7046 = vrot.lane.b32.xlu0 %v7040, 64
    %v7047 = vpop.permute.xlu0 %7046
    %7048 = vrot.lane.b32.xlu0 %v7041, 64
    %v7049 = vpop.permute.xlu0 %7048
    %v7052 = vmul.f32 %v7040, %v7047
    %v7053 = vmul.f32 %v7041, %v7049
    %7056 = vrot.lane.b32.xlu0 %v7052, 32
    %v7057 = vpop.permute.xlu0 %7056
    %7058 = vrot.lane.b32.xlu0 %v7053, 32
    %v7059 = vpop.permute.xlu0 %7058
    %v7062 = vadd.f32 %v7042, %v7057
    %v7063 = vadd.f32 %v7043, %v7059
    %v7064 = vtanh.pop %v7062
    %v7065 = vtanh.pop %v7063
    %7068 = vrot.lane.b32.xlu0 %v7064, 64
    %v7069 = vpop.permute.xlu0 %7068
    %7070 = vrot.lane.b32.xlu0 %v7065, 64
    %v7071 = vpop.permute.xlu0 %7070
    %v7074 = vmul.f32 %v7040, %v7069
    %v7075 = vmul.f32 %v7041, %v7071
    %7078 = vrot.lane.b32.xlu0 %v7074, 32
    %v7079 = vpop.permute.xlu0 %7078
    %7080 = vrot.lane.b32.xlu0 %v7075, 32
    %v7081 = vpop.permute.xlu0 %7080
    %7084 = vmatprep.subr.mxu0 0.0
    %7085 = vmatpush1.msra.mxu0 %v7079
    %7086 = vmatprep.subr.mxu0 0.0
    %7087 = vmatpush1.msra.mxu0 %v7081
    %7088 = vmatprep.subr.mxu0 0.0
    %7089 = vmatpush1.msra.mxu0 0.0
    %7090 = vmatprep.subr.mxu0 0.0
    %7091 = vmatpush1.msra.mxu0 0.0
    %7092 = vmatprep.subr.mxu0 0.0
    %7093 = vmatpush1.msra.mxu0 0.0
    %7094 = vmatprep.subr.mxu0 0.0
    %7095 = vmatpush1.msra.mxu0 0.0
    %7096 = vmatprep.subr.mxu0 0.0
    %7097 = vmatpush1.msra.mxu0 0.0
    %7098 = vmatprep.subr.mxu0 0.0
    %7099 = vmatpush1.msra.mxu0 0.0
    %7100 = vmatprep.subr.mxu0 0.0
    %7101 = vmatpush1.msra.mxu0 0.0
    %7102 = vmatprep.subr.mxu0 0.0
    %7103 = vmatpush1.msra.mxu0 0.0
    %7104 = vmatprep.subr.mxu0 0.0
    %7105 = vmatpush1.msra.mxu0 0.0
    %7106 = vmatprep.subr.mxu0 0.0
    %7107 = vmatpush1.msra.mxu0 0.0
    %7108 = vmatprep.subr.mxu0 0.0
    %7109 = vmatpush1.msra.mxu0 0.0
    %7110 = vmatprep.subr.mxu0 0.0
    %7111 = vmatpush1.msra.mxu0 0.0
    %7112 = vmatprep.subr.mxu0 0.0
    %7113 = vmatpush1.msra.mxu0 0.0
    %7114 = vmatprep.subr.mxu0 0.0
    %7115 = vmatpush1.msra.mxu0 0.0
    %7116 = vmatprep.subr.mxu0 0.0
    %7117 = vmatpush1.msra.mxu0 0.0
    %7118 = vmatprep.subr.mxu0 0.0
    %7119 = vmatpush1.msra.mxu0 0.0
    %7120 = vmatprep.subr.mxu0 0.0
    %7121 = vmatpush1.msra.mxu0 0.0
    %7122 = vmatprep.subr.mxu0 0.0
    %7123 = vmatpush1.msra.mxu0 0.0
    %7124 = vmatprep.subr.mxu0 0.0
    %7125 = vmatpush1.msra.mxu0 0.0
    %7126 = vmatprep.subr.mxu0 0.0
    %7127 = vmatpush1.msra.mxu0 0.0
    %7128 = vmatprep.subr.mxu0 0.0
    %7129 = vmatpush1.msra.mxu0 0.0
    %7130 = vmatprep.subr.mxu0 0.0
    %7131 = vmatpush1.msra.mxu0 0.0
    %7132 = vmatprep.subr.mxu0 0.0
    %7133 = vmatpush1.msra.mxu0 0.0
    %7134 = vmatprep.subr.mxu0 0.0
    %7135 = vmatpush1.msra.mxu0 0.0
    %7136 = vmatprep.subr.mxu0 0.0
    %7137 = vmatpush1.msra.mxu0 0.0
    %7138 = vmatprep.subr.mxu0 0.0
    %7139 = vmatpush1.msra.mxu0 0.0
    %7140 = vmatprep.subr.mxu0 0.0
    %7141 = vmatpush1.msra.mxu0 0.0
    %7142 = vmatprep.subr.mxu0 0.0
    %7143 = vmatpush1.msra.mxu0 0.0
    %7144 = vmatprep.subr.mxu0 0.0
    %7145 = vmatpush1.msra.mxu0 0.0
    %7146 = vmatprep.subr.mxu0 0.0
    %7147 = vmatpush1.msra.mxu0 0.0
    %7148 = vmatprep.mubr.f32.mxu0 0.0
    %7149 = vmatmul.mubr.f32.gmra.mrb[0].mxu0 %v954
    %v7150 = vpop.f32.mrb[0].mxu0
    %v7151 = vadd.f32 0.0, %v7150
    %v7152 = vpop.f32.mrb[0].mxu0
    %7153 = vdwg.mxu0
    %v7154 = vld [vmem:[%s7 + $0x300] sm:$0xff]
    %v7155 = vld [vmem:[%s7 + $0x308] sm:$0xff]
    %v7156 = vld [vmem:[%s7 + $0x310] sm:$0xff]
    %v7157 = vld [vmem:[%s7 + $0x318] sm:$0xff]
    %v7158 = vld [vmem:[%s7 + $0x320] sm:$0xff]
    %v7159 = vld [vmem:[%s7 + $0x328] sm:$0xff]
    %v7160 = vld [vmem:[%s7 + $0x330] sm:$0xff]
    %v7161 = vld [vmem:[%s7 + $0x338] sm:$0xff]
    %v7163 = vsel %vm466, %v7151, 0
    %7165 = vmatprep.subr.mxu0 %v7155
    %7166 = vmatpush1.msra.mxu0 %v7154
    %7167 = vmatprep.subr.mxu0 %v7157
    %7168 = vmatpush1.msra.mxu0 %v7156
    %7169 = vmatprep.subr.mxu0 %v7159
    %7170 = vmatpush1.msra.mxu0 %v7158
    %7171 = vmatprep.subr.mxu0 %v7161
    %7172 = vmatpush1.msra.mxu0 %v7160
    %7173 = vmatprep.subr.mxu0 0.0
    %7174 = vmatpush1.msra.mxu0 0.0
    %7175 = vmatprep.subr.mxu0 0.0
    %7176 = vmatpush1.msra.mxu0 0.0
    %7177 = vmatprep.subr.mxu0 0.0
    %7178 = vmatpush1.msra.mxu0 0.0
    %7179 = vmatprep.subr.mxu0 0.0
    %7180 = vmatpush1.msra.mxu0 0.0
    %7181 = vmatprep.subr.mxu0 0.0
    %7182 = vmatpush1.msra.mxu0 0.0
    %7183 = vmatprep.subr.mxu0 0.0
    %7184 = vmatpush1.msra.mxu0 0.0
    %7185 = vmatprep.subr.mxu0 0.0
    %7186 = vmatpush1.msra.mxu0 0.0
    %7187 = vmatprep.subr.mxu0 0.0
    %7188 = vmatpush1.msra.mxu0 0.0
    %7189 = vmatprep.subr.mxu0 0.0
    %7190 = vmatpush1.msra.mxu0 0.0
    %7191 = vmatprep.subr.mxu0 0.0
    %7192 = vmatpush1.msra.mxu0 0.0
    %7193 = vmatprep.subr.mxu0 0.0
    %7194 = vmatpush1.msra.mxu0 0.0
    %7195 = vmatprep.subr.mxu0 0.0
    %7196 = vmatpush1.msra.mxu0 0.0
    %7197 = vmatprep.subr.mxu0 0.0
    %7198 = vmatpush1.msra.mxu0 0.0
    %7199 = vmatprep.subr.mxu0 0.0
    %7200 = vmatpush1.msra.mxu0 0.0
    %7201 = vmatprep.subr.mxu0 0.0
    %7202 = vmatpush1.msra.mxu0 0.0
    %7203 = vmatprep.subr.mxu0 0.0
    %7204 = vmatpush1.msra.mxu0 0.0
    %7205 = vmatprep.subr.mxu0 0.0
    %7206 = vmatpush1.msra.mxu0 0.0
    %7207 = vmatprep.subr.mxu0 0.0
    %7208 = vmatpush1.msra.mxu0 0.0
    %7209 = vmatprep.subr.mxu0 0.0
    %7210 = vmatpush1.msra.mxu0 0.0
    %7211 = vmatprep.subr.mxu0 0.0
    %7212 = vmatpush1.msra.mxu0 0.0
    %7213 = vmatprep.subr.mxu0 0.0
    %7214 = vmatpush1.msra.mxu0 0.0
    %7215 = vmatprep.subr.mxu0 0.0
    %7216 = vmatpush1.msra.mxu0 0.0
    %7217 = vmatprep.subr.mxu0 0.0
    %7218 = vmatpush1.msra.mxu0 0.0
    %7219 = vmatprep.subr.mxu0 0.0
    %7220 = vmatpush1.msra.mxu0 0.0
    %7221 = vmatprep.subr.mxu0 0.0
    %7222 = vmatpush1.msra.mxu0 0.0
    %7223 = vmatprep.subr.mxu0 0.0
    %7224 = vmatpush1.msra.mxu0 0.0
    %7225 = vmatprep.subr.mxu0 0.0
    %7226 = vmatpush1.msra.mxu0 0.0
    %7227 = vmatprep.subr.mxu0 0.0
    %7228 = vmatpush1.msra.mxu0 0.0
    %7229 = vmatprep.mubr.f32.mxu0 0.0
    %7230 = vmatmul.mubr.f32.gmra.mrb[0].mxu0 %v7163
    %v7231 = vpop.f32.mrb[0].mxu0
    %v7232 = vadd.f32 0.0, %v7231
    %v7233 = vpop.f32.mrb[0].mxu0
    %v7234 = vadd.f32 0.0, %v7233
    %7235 = vdwg.mxu0
    %v7236 = vadd.f32 %v6725, %v7232
    %v7237 = vadd.f32 %v6726, %v7234
    %v7238 = vld [vmem:[#allocation2 + $0xe0] sm:$0xff]
    %v7239 = vld [vmem:[#allocation2 + $0xe8] sm:$0xff]
    %7242 = vrot.lane.b32.xlu0 %v6866, 32
    %v7243 = vpop.permute.xlu0 %7242
    %7244 = vrot.lane.b32.xlu0 %v6867, 32
    %v7245 = vpop.permute.xlu0 %7244
    %v7246 = vsel %vm466, %v7243, 0
    %v7248 = vsel %vm466, %v7245, 0
    %7250 = vmatprep.subr.mxu0 0.0
    %7251 = vmatpush1.msra.mxu0 %v48
    %7252 = vmatprep.subr.mxu0 0.0
    %7253 = vmatpush1.msra.mxu0 %v49
    %7254 = vmatprep.subr.mxu0 0.0
    %7255 = vmatpush1.msra.mxu0 %v50
    %7256 = vmatprep.subr.mxu0 0.0
    %7257 = vmatpush1.msra.mxu0 %v51
    %7258 = vmatprep.subr.mxu0 0.0
    %7259 = vmatpush1.msra.mxu0 0.0
    %7260 = vmatprep.subr.mxu0 0.0
    %7261 = vmatpush1.msra.mxu0 0.0
    %7262 = vmatprep.subr.mxu0 0.0
    %7263 = vmatpush1.msra.mxu0 0.0
    %7264 = vmatprep.subr.mxu0 0.0
    %7265 = vmatpush1.msra.mxu0 0.0
    %7266 = vmatprep.subr.mxu0 0.0
    %7267 = vmatpush1.msra.mxu0 0.0
    %7268 = vmatprep.subr.mxu0 0.0
    %7269 = vmatpush1.msra.mxu0 0.0
    %7270 = vmatprep.subr.mxu0 0.0
    %7271 = vmatpush1.msra.mxu0 0.0
    %7272 = vmatprep.subr.mxu0 0.0
    %7273 = vmatpush1.msra.mxu0 0.0
    %7274 = vmatprep.subr.mxu0 0.0
    %7275 = vmatpush1.msra.mxu0 0.0
    %7276 = vmatprep.subr.mxu0 0.0
    %7277 = vmatpush1.msra.mxu0 0.0
    %7278 = vmatprep.subr.mxu0 0.0
    %7279 = vmatpush1.msra.mxu0 0.0
    %7280 = vmatprep.subr.mxu0 0.0
    %7281 = vmatpush1.msra.mxu0 0.0
    %7282 = vmatprep.subr.mxu0 0.0
    %7283 = vmatpush1.msra.mxu0 0.0
    %7284 = vmatprep.subr.mxu0 0.0
    %7285 = vmatpush1.msra.mxu0 0.0
    %7286 = vmatprep.subr.mxu0 0.0
    %7287 = vmatpush1.msra.mxu0 0.0
    %7288 = vmatprep.subr.mxu0 0.0
    %7289 = vmatpush1.msra.mxu0 0.0
    %7290 = vmatprep.subr.mxu0 0.0
    %7291 = vmatpush1.msra.mxu0 0.0
    %7292 = vmatprep.subr.mxu0 0.0
    %7293 = vmatpush1.msra.mxu0 0.0
    %7294 = vmatprep.subr.mxu0 0.0
    %7295 = vmatpush1.msra.mxu0 0.0
    %7296 = vmatprep.subr.mxu0 0.0
    %7297 = vmatpush1.msra.mxu0 0.0
    %7298 = vmatprep.subr.mxu0 0.0
    %7299 = vmatpush1.msra.mxu0 0.0
    %7300 = vmatprep.subr.mxu0 0.0
    %7301 = vmatpush1.msra.mxu0 0.0
    %7302 = vmatprep.subr.mxu0 0.0
    %7303 = vmatpush1.msra.mxu0 0.0
    %7304 = vmatprep.subr.mxu0 0.0
    %7305 = vmatpush1.msra.mxu0 0.0
    %7306 = vmatprep.subr.mxu0 0.0
    %7307 = vmatpush1.msra.mxu0 0.0
    %7308 = vmatprep.subr.mxu0 0.0
    %7309 = vmatpush1.msra.mxu0 0.0
    %7310 = vmatprep.subr.mxu0 0.0
    %7311 = vmatpush1.msra.mxu0 0.0
    %7312 = vmatprep.subr.mxu0 0.0
    %7313 = vmatpush1.msra.mxu0 0.0
    %7314 = vmatprep.mubr.f32.mxu0 0.0
    %7315 = vmatmul.mubr.f32.gmra.mrb[0].mxu0 %v7246
    %v7316 = vpop.f32.mrb[0].mxu0
    %v7317 = vadd.f32 0.0, %v7316
    %v7318 = vpop.f32.mrb[0].mxu0
    %7319 = vmatprep.mubr.f32.mxu0 0.0
    %7320 = vmatmul.mubr.f32.gmra.mrb[0].mxu0 %v7248
    %v7321 = vpop.f32.mrb[0].mxu0
    %v7322 = vadd.f32 0.0, %v7321
    %v7323 = vpop.f32.mrb[0].mxu0
    %7324 = vdwg.mxu0
    %v7325 = vadd.f32 %v7238, %v7317
    %v7326 = vadd.f32 %v7239, %v7322
    %v7327 = vmul.f32 %v7325, %v38
    %v7328 = vmul.f32 %v7326, %v38
    %v7329 = vxor.u32 %v7327, 2147483648
    %v7330 = vxor.u32 %v7328, 2147483648
    %v7331 = vmul.f32 %v7329, 1.442695
    %v7332 = vpow.pop %v7331
    %v7333 = vmul.f32 %v7330, 1.442695
    %v7334 = vpow.pop %v7333
    %v7335 = vadd.f32 %v7332, 1.0
    %v7336 = vadd.f32 %v7334, 1.0
    %v7337 = vrcp.pop %v7335
    %v7338 = vmul.f32 1.0, %v7337
    %v7339 = vrcp.pop %v7336
    %v7340 = vmul.f32 1.0, %v7339
    %v7341 = vmul.f32 %v7338, %v38
    %v7342 = vmul.f32 %v7340, %v38
    %v7343 = vadd.f32 %v7341, %v39
    %v7344 = vadd.f32 %v7342, %v39
    %v7345 = vmul.f32 %v7343, %v6854
    %v7346 = vmul.f32 %v7344, %v6855
    %7349 = vrot.lane.b32.xlu0 %v7343, 64
    %v7350 = vpop.permute.xlu0 %7349
    %7351 = vrot.lane.b32.xlu0 %v7344, 64
    %v7352 = vpop.permute.xlu0 %7351
    %v7355 = vmul.f32 %v7343, %v7350
    %v7356 = vmul.f32 %v7344, %v7352
    %7359 = vrot.lane.b32.xlu0 %v7355, 32
    %v7360 = vpop.permute.xlu0 %7359
    %7361 = vrot.lane.b32.xlu0 %v7356, 32
    %v7362 = vpop.permute.xlu0 %7361
    %v7365 = vadd.f32 %v7345, %v7360
    %v7366 = vadd.f32 %v7346, %v7362
    %v7367 = vtanh.pop %v7365
    %v7368 = vtanh.pop %v7366
    %7371 = vrot.lane.b32.xlu0 %v7367, 64
    %v7372 = vpop.permute.xlu0 %7371
    %7373 = vrot.lane.b32.xlu0 %v7368, 64
    %v7374 = vpop.permute.xlu0 %7373
    %v7377 = vmul.f32 %v7343, %v7372
    %v7378 = vmul.f32 %v7344, %v7374
    %7379 = vmatprep.subr.mxu0 0.0
    %7380 = vmatpush1.msra.mxu0 %v53
    %7381 = vmatprep.subr.mxu0 0.0
    %7382 = vmatpush1.msra.mxu0 %v54
    %7383 = vmatprep.subr.mxu0 0.0
    %7384 = vmatpush1.msra.mxu0 %v55
    %7385 = vmatprep.subr.mxu0 0.0
    %7386 = vmatpush1.msra.mxu0 %v56
    %7387 = vmatprep.subr.mxu0 0.0
    %7388 = vmatpush1.msra.mxu0 0.0
    %7389 = vmatprep.subr.mxu0 0.0
    %7390 = vmatpush1.msra.mxu0 0.0
    %7391 = vmatprep.subr.mxu0 0.0
    %7392 = vmatpush1.msra.mxu0 0.0
    %7393 = vmatprep.subr.mxu0 0.0
    %7394 = vmatpush1.msra.mxu0 0.0
    %7395 = vmatprep.subr.mxu0 0.0
    %7396 = vmatpush1.msra.mxu0 0.0
    %7397 = vmatprep.subr.mxu0 0.0
    %7398 = vmatpush1.msra.mxu0 0.0
    %7399 = vmatprep.subr.mxu0 0.0
    %7400 = vmatpush1.msra.mxu0 0.0
    %7401 = vmatprep.subr.mxu0 0.0
    %7402 = vmatpush1.msra.mxu0 0.0
    %7403 = vmatprep.subr.mxu0 0.0
    %7404 = vmatpush1.msra.mxu0 0.0
    %7405 = vmatprep.subr.mxu0 0.0
    %7406 = vmatpush1.msra.mxu0 0.0
    %7407 = vmatprep.subr.mxu0 0.0
    %7408 = vmatpush1.msra.mxu0 0.0
    %7409 = vmatprep.subr.mxu0 0.0
    %7410 = vmatpush1.msra.mxu0 0.0
    %7411 = vmatprep.subr.mxu0 0.0
    %7412 = vmatpush1.msra.mxu0 0.0
    %7413 = vmatprep.subr.mxu0 0.0
    %7414 = vmatpush1.msra.mxu0 0.0
    %7415 = vmatprep.subr.mxu0 0.0
    %7416 = vmatpush1.msra.mxu0 0.0
    %7417 = vmatprep.subr.mxu0 0.0
    %7418 = vmatpush1.msra.mxu0 0.0
    %7419 = vmatprep.subr.mxu0 0.0
    %7420 = vmatpush1.msra.mxu0 0.0
    %7421 = vmatprep.subr.mxu0 0.0
    %7422 = vmatpush1.msra.mxu0 0.0
    %7423 = vmatprep.subr.mxu0 0.0
    %7424 = vmatpush1.msra.mxu0 0.0
    %7425 = vmatprep.subr.mxu0 0.0
    %7426 = vmatpush1.msra.mxu0 0.0
    %7427 = vmatprep.subr.mxu0 0.0
    %7428 = vmatpush1.msra.mxu0 0.0
    %7429 = vmatprep.subr.mxu0 0.0
    %7430 = vmatpush1.msra.mxu0 0.0
    %7431 = vmatprep.subr.mxu0 0.0
    %7432 = vmatpush1.msra.mxu0 0.0
    %7433 = vmatprep.subr.mxu0 0.0
    %7434 = vmatpush1.msra.mxu0 0.0
    %7435 = vmatprep.subr.mxu0 0.0
    %7436 = vmatpush1.msra.mxu0 0.0
    %7437 = vmatprep.subr.mxu0 0.0
    %7438 = vmatpush1.msra.mxu0 0.0
    %7439 = vmatprep.subr.mxu0 0.0
    %7440 = vmatpush1.msra.mxu0 0.0
    %7441 = vmatprep.subr.mxu0 0.0
    %7442 = vmatpush1.msra.mxu0 0.0
    %7443 = vmatprep.mubr.f32.mxu0 0.0
    %7444 = vmatmul.mubr.f32.gmra.mrb[0].mxu0 %v7246
    %v7445 = vpop.f32.mrb[0].mxu0
    %v7446 = vadd.f32 %v66, %v7445
    %v7447 = vpop.f32.mrb[0].mxu0
    %7448 = vmatprep.mubr.f32.mxu0 0.0
    %7449 = vmatmul.mubr.f32.gmra.mrb[0].mxu0 %v7248
    %v7450 = vpop.f32.mrb[0].mxu0
    %v7451 = vadd.f32 %v66, %v7450
    %v7452 = vpop.f32.mrb[0].mxu0
    %7453 = vdwg.mxu0
    %v7454 = vsel %vm466, %v7079, 0
    %v7456 = vsel %vm466, %v7081, 0
    %7458 = vmatprep.subr.mxu0 0.0
    %7459 = vmatpush1.msra.mxu0 %v57
    %7460 = vmatprep.subr.mxu0 0.0
    %7461 = vmatpush1.msra.mxu0 %v58
    %7462 = vmatprep.subr.mxu0 0.0
    %7463 = vmatpush1.msra.mxu0 %v59
    %7464 = vmatprep.subr.mxu0 0.0
    %7465 = vmatpush1.msra.mxu0 %v60
    %7466 = vmatprep.subr.mxu0 0.0
    %7467 = vmatpush1.msra.mxu0 0.0
    %7468 = vmatprep.subr.mxu0 0.0
    %7469 = vmatpush1.msra.mxu0 0.0
    %7470 = vmatprep.subr.mxu0 0.0
    %7471 = vmatpush1.msra.mxu0 0.0
    %7472 = vmatprep.subr.mxu0 0.0
    %7473 = vmatpush1.msra.mxu0 0.0
    %7474 = vmatprep.subr.mxu0 0.0
    %7475 = vmatpush1.msra.mxu0 0.0
    %7476 = vmatprep.subr.mxu0 0.0
    %7477 = vmatpush1.msra.mxu0 0.0
    %7478 = vmatprep.subr.mxu0 0.0
    %7479 = vmatpush1.msra.mxu0 0.0
    %7480 = vmatprep.subr.mxu0 0.0
    %7481 = vmatpush1.msra.mxu0 0.0
    %7482 = vmatprep.subr.mxu0 0.0
    %7483 = vmatpush1.msra.mxu0 0.0
    %7484 = vmatprep.subr.mxu0 0.0
    %7485 = vmatpush1.msra.mxu0 0.0
    %7486 = vmatprep.subr.mxu0 0.0
    %7487 = vmatpush1.msra.mxu0 0.0
    %7488 = vmatprep.subr.mxu0 0.0
    %7489 = vmatpush1.msra.mxu0 0.0
    %7490 = vmatprep.subr.mxu0 0.0
    %7491 = vmatpush1.msra.mxu0 0.0
    %7492 = vmatprep.subr.mxu0 0.0
    %7493 = vmatpush1.msra.mxu0 0.0
    %7494 = vmatprep.subr.mxu0 0.0
    %7495 = vmatpush1.msra.mxu0 0.0
    %7496 = vmatprep.subr.mxu0 0.0
    %7497 = vmatpush1.msra.mxu0 0.0
    %7498 = vmatprep.subr.mxu0 0.0
    %7499 = vmatpush1.msra.mxu0 0.0
    %7500 = vmatprep.subr.mxu0 0.0
    %7501 = vmatpush1.msra.mxu0 0.0
    %7502 = vmatprep.subr.mxu0 0.0
    %7503 = vmatpush1.msra.mxu0 0.0
    %7504 = vmatprep.subr.mxu0 0.0
    %7505 = vmatpush1.msra.mxu0 0.0
    %7506 = vmatprep.subr.mxu0 0.0
    %7507 = vmatpush1.msra.mxu0 0.0
    %7508 = vmatprep.subr.mxu0 0.0
    %7509 = vmatpush1.msra.mxu0 0.0
    %7510 = vmatprep.subr.mxu0 0.0
    %7511 = vmatpush1.msra.mxu0 0.0
    %7512 = vmatprep.subr.mxu0 0.0
    %7513 = vmatpush1.msra.mxu0 0.0
    %7514 = vmatprep.subr.mxu0 0.0
    %7515 = vmatpush1.msra.mxu0 0.0
    %7516 = vmatprep.subr.mxu0 0.0
    %7517 = vmatpush1.msra.mxu0 0.0
    %7518 = vmatprep.subr.mxu0 0.0
    %7519 = vmatpush1.msra.mxu0 0.0
    %7520 = vmatprep.subr.mxu0 0.0
    %7521 = vmatpush1.msra.mxu0 0.0
    %7522 = vmatprep.mubr.f32.mxu0 0.0
    %7523 = vmatmul.mubr.f32.gmra.mrb[0].mxu0 %v7454
    %v7524 = vpop.f32.mrb[0].mxu0
    %v7525 = vadd.f32 0.0, %v7524
    %v7526 = vpop.f32.mrb[0].mxu0
    %7527 = vmatprep.mubr.f32.mxu0 0.0
    %7528 = vmatmul.mubr.f32.gmra.mrb[0].mxu0 %v7456
    %v7529 = vpop.f32.mrb[0].mxu0
    %v7530 = vadd.f32 0.0, %v7529
    %v7531 = vpop.f32.mrb[0].mxu0
    %7532 = vdwg.mxu0
    %v7533 = vadd.f32 %v7446, %v7525
    %v7534 = vadd.f32 %v7451, %v7530
    %v7535 = vmul.f32 %v7533, %v38
    %v7536 = vmul.f32 %v7534, %v38
    %v7537 = vxor.u32 %v7535, 2147483648
    %v7538 = vxor.u32 %v7536, 2147483648
    %v7539 = vmul.f32 %v7537, 1.442695
    %v7540 = vpow.pop %v7539
    %v7541 = vmul.f32 %v7538, 1.442695
    %v7542 = vpow.pop %v7541
    %v7543 = vadd.f32 %v7540, 1.0
    %v7544 = vadd.f32 %v7542, 1.0
    %v7545 = vrcp.pop %v7543
    %v7546 = vmul.f32 1.0, %v7545
    %v7547 = vrcp.pop %v7544
    %v7548 = vmul.f32 1.0, %v7547
    %v7549 = vmul.f32 %v7546, %v38
    %v7550 = vmul.f32 %v7548, %v38
    %v7551 = vadd.f32 %v7549, %v39
    %v7552 = vadd.f32 %v7550, %v39
    %v7553 = vmul.f32 %v7551, %v7062
    %v7554 = vmul.f32 %v7552, %v7063
    %7557 = vrot.lane.b32.xlu0 %v7551, 64
    %v7558 = vpop.permute.xlu0 %7557
    %7559 = vrot.lane.b32.xlu0 %v7552, 64
    %v7560 = vpop.permute.xlu0 %7559
    %v7563 = vmul.f32 %v7551, %v7558
    %v7564 = vmul.f32 %v7552, %v7560
    %7567 = vrot.lane.b32.xlu0 %v7563, 32
    %v7568 = vpop.permute.xlu0 %7567
    %7569 = vrot.lane.b32.xlu0 %v7564, 32
    %v7570 = vpop.permute.xlu0 %7569
    %v7573 = vadd.f32 %v7553, %v7568
    %v7574 = vadd.f32 %v7554, %v7570
    %v7575 = vtanh.pop %v7573
    %v7576 = vtanh.pop %v7574
    %7579 = vrot.lane.b32.xlu0 %v7575, 64
    %v7580 = vpop.permute.xlu0 %7579
    %7581 = vrot.lane.b32.xlu0 %v7576, 64
    %v7582 = vpop.permute.xlu0 %7581
    %v7585 = vmul.f32 %v7551, %v7580
    %v7586 = vmul.f32 %v7552, %v7582
    %7589 = vrot.lane.b32.xlu0 %v7585, 32
    %v7590 = vpop.permute.xlu0 %7589
    %7591 = vrot.lane.b32.xlu0 %v7586, 32
    %v7592 = vpop.permute.xlu0 %7591
    %7595 = vmatprep.subr.mxu0 0.0
    %7596 = vmatpush1.msra.mxu0 %v7590
    %7597 = vmatprep.subr.mxu0 0.0
    %7598 = vmatpush1.msra.mxu0 %v7592
    %7599 = vmatprep.subr.mxu0 0.0
    %7600 = vmatpush1.msra.mxu0 0.0
    %7601 = vmatprep.subr.mxu0 0.0
    %7602 = vmatpush1.msra.mxu0 0.0
    %7603 = vmatprep.subr.mxu0 0.0
    %7604 = vmatpush1.msra.mxu0 0.0
    %7605 = vmatprep.subr.mxu0 0.0
    %7606 = vmatpush1.msra.mxu0 0.0
    %7607 = vmatprep.subr.mxu0 0.0
    %7608 = vmatpush1.msra.mxu0 0.0
    %7609 = vmatprep.subr.mxu0 0.0
    %7610 = vmatpush1.msra.mxu0 0.0
    %7611 = vmatprep.subr.mxu0 0.0
    %7612 = vmatpush1.msra.mxu0 0.0
    %7613 = vmatprep.subr.mxu0 0.0
    %7614 = vmatpush1.msra.mxu0 0.0
    %7615 = vmatprep.subr.mxu0 0.0
    %7616 = vmatpush1.msra.mxu0 0.0
    %7617 = vmatprep.subr.mxu0 0.0
    %7618 = vmatpush1.msra.mxu0 0.0
    %7619 = vmatprep.subr.mxu0 0.0
    %7620 = vmatpush1.msra.mxu0 0.0
    %7621 = vmatprep.subr.mxu0 0.0
    %7622 = vmatpush1.msra.mxu0 0.0
    %7623 = vmatprep.subr.mxu0 0.0
    %7624 = vmatpush1.msra.mxu0 0.0
    %7625 = vmatprep.subr.mxu0 0.0
    %7626 = vmatpush1.msra.mxu0 0.0
    %7627 = vmatprep.subr.mxu0 0.0
    %7628 = vmatpush1.msra.mxu0 0.0
    %7629 = vmatprep.subr.mxu0 0.0
    %7630 = vmatpush1.msra.mxu0 0.0
    %7631 = vmatprep.subr.mxu0 0.0
    %7632 = vmatpush1.msra.mxu0 0.0
    %7633 = vmatprep.subr.mxu0 0.0
    %7634 = vmatpush1.msra.mxu0 0.0
    %7635 = vmatprep.subr.mxu0 0.0
    %7636 = vmatpush1.msra.mxu0 0.0
    %7637 = vmatprep.subr.mxu0 0.0
    %7638 = vmatpush1.msra.mxu0 0.0
    %7639 = vmatprep.subr.mxu0 0.0
    %7640 = vmatpush1.msra.mxu0 0.0
    %7641 = vmatprep.subr.mxu0 0.0
    %7642 = vmatpush1.msra.mxu0 0.0
    %7643 = vmatprep.subr.mxu0 0.0
    %7644 = vmatpush1.msra.mxu0 0.0
    %7645 = vmatprep.subr.mxu0 0.0
    %7646 = vmatpush1.msra.mxu0 0.0
    %7647 = vmatprep.subr.mxu0 0.0
    %7648 = vmatpush1.msra.mxu0 0.0
    %7649 = vmatprep.subr.mxu0 0.0
    %7650 = vmatpush1.msra.mxu0 0.0
    %7651 = vmatprep.subr.mxu0 0.0
    %7652 = vmatpush1.msra.mxu0 0.0
    %7653 = vmatprep.subr.mxu0 0.0
    %7654 = vmatpush1.msra.mxu0 0.0
    %7655 = vmatprep.subr.mxu0 0.0
    %7656 = vmatpush1.msra.mxu0 0.0
    %7657 = vmatprep.subr.mxu0 0.0
    %7658 = vmatpush1.msra.mxu0 0.0
    %7659 = vmatprep.mubr.f32.mxu0 0.0
    %7660 = vmatmul.mubr.f32.gmra.mrb[0].mxu0 %v954
    %v7661 = vpop.f32.mrb[0].mxu0
    %v7662 = vadd.f32 0.0, %v7661
    %v7663 = vpop.f32.mrb[0].mxu0
    %7664 = vdwg.mxu0
    %v7665 = vld [vmem:[%s7 + $0x340] sm:$0xff]
    %v7666 = vld [vmem:[%s7 + $0x348] sm:$0xff]
    %v7667 = vld [vmem:[%s7 + $0x350] sm:$0xff]
    %v7668 = vld [vmem:[%s7 + $0x358] sm:$0xff]
    %v7669 = vld [vmem:[%s7 + $0x360] sm:$0xff]
    %v7670 = vld [vmem:[%s7 + $0x368] sm:$0xff]
    %v7671 = vld [vmem:[%s7 + $0x370] sm:$0xff]
    %v7672 = vld [vmem:[%s7 + $0x378] sm:$0xff]
    %v7674 = vsel %vm466, %v7662, 0
    %7676 = vmatprep.subr.mxu0 %v7666
    %7677 = vmatpush1.msra.mxu0 %v7665
    %7678 = vmatprep.subr.mxu0 %v7668
    %7679 = vmatpush1.msra.mxu0 %v7667
    %7680 = vmatprep.subr.mxu0 %v7670
    %7681 = vmatpush1.msra.mxu0 %v7669
    %7682 = vmatprep.subr.mxu0 %v7672
    %7683 = vmatpush1.msra.mxu0 %v7671
    %7684 = vmatprep.subr.mxu0 0.0
    %7685 = vmatpush1.msra.mxu0 0.0
    %7686 = vmatprep.subr.mxu0 0.0
    %7687 = vmatpush1.msra.mxu0 0.0
    %7688 = vmatprep.subr.mxu0 0.0
    %7689 = vmatpush1.msra.mxu0 0.0
    %7690 = vmatprep.subr.mxu0 0.0
    %7691 = vmatpush1.msra.mxu0 0.0
    %7692 = vmatprep.subr.mxu0 0.0
    %7693 = vmatpush1.msra.mxu0 0.0
    %7694 = vmatprep.subr.mxu0 0.0
    %7695 = vmatpush1.msra.mxu0 0.0
    %7696 = vmatprep.subr.mxu0 0.0
    %7697 = vmatpush1.msra.mxu0 0.0
    %7698 = vmatprep.subr.mxu0 0.0
    %7699 = vmatpush1.msra.mxu0 0.0
    %7700 = vmatprep.subr.mxu0 0.0
    %7701 = vmatpush1.msra.mxu0 0.0
    %7702 = vmatprep.subr.mxu0 0.0
    %7703 = vmatpush1.msra.mxu0 0.0
    %7704 = vmatprep.subr.mxu0 0.0
    %7705 = vmatpush1.msra.mxu0 0.0
    %7706 = vmatprep.subr.mxu0 0.0
    %7707 = vmatpush1.msra.mxu0 0.0
    %7708 = vmatprep.subr.mxu0 0.0
    %7709 = vmatpush1.msra.mxu0 0.0
    %7710 = vmatprep.subr.mxu0 0.0
    %7711 = vmatpush1.msra.mxu0 0.0
    %7712 = vmatprep.subr.mxu0 0.0
    %7713 = vmatpush1.msra.mxu0 0.0
    %7714 = vmatprep.subr.mxu0 0.0
    %7715 = vmatpush1.msra.mxu0 0.0
    %7716 = vmatprep.subr.mxu0 0.0
    %7717 = vmatpush1.msra.mxu0 0.0
    %7718 = vmatprep.subr.mxu0 0.0
    %7719 = vmatpush1.msra.mxu0 0.0
    %7720 = vmatprep.subr.mxu0 0.0
    %7721 = vmatpush1.msra.mxu0 0.0
    %7722 = vmatprep.subr.mxu0 0.0
    %7723 = vmatpush1.msra.mxu0 0.0
    %7724 = vmatprep.subr.mxu0 0.0
    %7725 = vmatpush1.msra.mxu0 0.0
    %7726 = vmatprep.subr.mxu0 0.0
    %7727 = vmatpush1.msra.mxu0 0.0
    %7728 = vmatprep.subr.mxu0 0.0
    %7729 = vmatpush1.msra.mxu0 0.0
    %7730 = vmatprep.subr.mxu0 0.0
    %7731 = vmatpush1.msra.mxu0 0.0
    %7732 = vmatprep.subr.mxu0 0.0
    %7733 = vmatpush1.msra.mxu0 0.0
    %7734 = vmatprep.subr.mxu0 0.0
    %7735 = vmatpush1.msra.mxu0 0.0
    %7736 = vmatprep.subr.mxu0 0.0
    %7737 = vmatpush1.msra.mxu0 0.0
    %7738 = vmatprep.subr.mxu0 0.0
    %7739 = vmatpush1.msra.mxu0 0.0
    %7740 = vmatprep.mubr.f32.mxu0 0.0
    %7741 = vmatmul.mubr.f32.gmra.mrb[0].mxu0 %v7674
    %v7742 = vpop.f32.mrb[0].mxu0
    %v7743 = vadd.f32 0.0, %v7742
    %v7744 = vpop.f32.mrb[0].mxu0
    %v7745 = vadd.f32 0.0, %v7744
    %7746 = vdwg.mxu0
    %v7747 = vadd.f32 %v7236, %v7743
    %v7748 = vadd.f32 %v7237, %v7745
    %v7749 = vld [vmem:[#allocation2 + $0xf0] sm:$0xff]
    %v7750 = vld [vmem:[#allocation2 + $0xf8] sm:$0xff]
    %7753 = vrot.lane.b32.xlu0 %v7377, 32
    %v7754 = vpop.permute.xlu0 %7753
    %7755 = vrot.lane.b32.xlu0 %v7378, 32
    %v7756 = vpop.permute.xlu0 %7755
    %v7757 = vsel %vm466, %v7754, 0
    %v7759 = vsel %vm466, %v7756, 0
    %7761 = vmatprep.subr.mxu0 0.0
    %7762 = vmatpush1.msra.mxu0 %v48
    %7763 = vmatprep.subr.mxu0 0.0
    %7764 = vmatpush1.msra.mxu0 %v49
    %7765 = vmatprep.subr.mxu0 0.0
    %7766 = vmatpush1.msra.mxu0 %v50
    %7767 = vmatprep.subr.mxu0 0.0
    %7768 = vmatpush1.msra.mxu0 %v51
    %7769 = vmatprep.subr.mxu0 0.0
    %7770 = vmatpush1.msra.mxu0 0.0
    %7771 = vmatprep.subr.mxu0 0.0
    %7772 = vmatpush1.msra.mxu0 0.0
    %7773 = vmatprep.subr.mxu0 0.0
    %7774 = vmatpush1.msra.mxu0 0.0
    %7775 = vmatprep.subr.mxu0 0.0
    %7776 = vmatpush1.msra.mxu0 0.0
    %7777 = vmatprep.subr.mxu0 0.0
    %7778 = vmatpush1.msra.mxu0 0.0
    %7779 = vmatprep.subr.mxu0 0.0
    %7780 = vmatpush1.msra.mxu0 0.0
    %7781 = vmatprep.subr.mxu0 0.0
    %7782 = vmatpush1.msra.mxu0 0.0
    %7783 = vmatprep.subr.mxu0 0.0
    %7784 = vmatpush1.msra.mxu0 0.0
    %7785 = vmatprep.subr.mxu0 0.0
    %7786 = vmatpush1.msra.mxu0 0.0
    %7787 = vmatprep.subr.mxu0 0.0
    %7788 = vmatpush1.msra.mxu0 0.0
    %7789 = vmatprep.subr.mxu0 0.0
    %7790 = vmatpush1.msra.mxu0 0.0
    %7791 = vmatprep.subr.mxu0 0.0
    %7792 = vmatpush1.msra.mxu0 0.0
    %7793 = vmatprep.subr.mxu0 0.0
    %7794 = vmatpush1.msra.mxu0 0.0
    %7795 = vmatprep.subr.mxu0 0.0
    %7796 = vmatpush1.msra.mxu0 0.0
    %7797 = vmatprep.subr.mxu0 0.0
    %7798 = vmatpush1.msra.mxu0 0.0
    %7799 = vmatprep.subr.mxu0 0.0
    %7800 = vmatpush1.msra.mxu0 0.0
    %7801 = vmatprep.subr.mxu0 0.0
    %7802 = vmatpush1.msra.mxu0 0.0
    %7803 = vmatprep.subr.mxu0 0.0
    %7804 = vmatpush1.msra.mxu0 0.0
    %7805 = vmatprep.subr.mxu0 0.0
    %7806 = vmatpush1.msra.mxu0 0.0
    %7807 = vmatprep.subr.mxu0 0.0
    %7808 = vmatpush1.msra.mxu0 0.0
    %7809 = vmatprep.subr.mxu0 0.0
    %7810 = vmatpush1.msra.mxu0 0.0
    %7811 = vmatprep.subr.mxu0 0.0
    %7812 = vmatpush1.msra.mxu0 0.0
    %7813 = vmatprep.subr.mxu0 0.0
    %7814 = vmatpush1.msra.mxu0 0.0
    %7815 = vmatprep.subr.mxu0 0.0
    %7816 = vmatpush1.msra.mxu0 0.0
    %7817 = vmatprep.subr.mxu0 0.0
    %7818 = vmatpush1.msra.mxu0 0.0
    %7819 = vmatprep.subr.mxu0 0.0
    %7820 = vmatpush1.msra.mxu0 0.0
    %7821 = vmatprep.subr.mxu0 0.0
    %7822 = vmatpush1.msra.mxu0 0.0
    %7823 = vmatprep.subr.mxu0 0.0
    %7824 = vmatpush1.msra.mxu0 0.0
    %7825 = vmatprep.mubr.f32.mxu0 0.0
    %7826 = vmatmul.mubr.f32.gmra.mrb[0].mxu0 %v7757
    %v7827 = vpop.f32.mrb[0].mxu0
    %v7828 = vadd.f32 0.0, %v7827
    %v7829 = vpop.f32.mrb[0].mxu0
    %7830 = vmatprep.mubr.f32.mxu0 0.0
    %7831 = vmatmul.mubr.f32.gmra.mrb[0].mxu0 %v7759
    %v7832 = vpop.f32.mrb[0].mxu0
    %v7833 = vadd.f32 0.0, %v7832
    %v7834 = vpop.f32.mrb[0].mxu0
    %7835 = vdwg.mxu0
    %v7836 = vadd.f32 %v7749, %v7828
    %v7837 = vadd.f32 %v7750, %v7833
    %v7838 = vmul.f32 %v7836, %v38
    %v7839 = vmul.f32 %v7837, %v38
    %v7840 = vxor.u32 %v7838, 2147483648
    %v7841 = vxor.u32 %v7839, 2147483648
    %v7842 = vmul.f32 %v7840, 1.442695
    %v7843 = vpow.pop %v7842
    %v7844 = vmul.f32 %v7841, 1.442695
    %v7845 = vpow.pop %v7844
    %v7846 = vadd.f32 %v7843, 1.0
    %v7847 = vadd.f32 %v7845, 1.0
    %v7848 = vrcp.pop %v7846
    %v7849 = vmul.f32 1.0, %v7848
    %v7850 = vrcp.pop %v7847
    %v7851 = vmul.f32 1.0, %v7850
    %v7852 = vmul.f32 %v7849, %v38
    %v7853 = vmul.f32 %v7851, %v38
    %v7854 = vadd.f32 %v7852, %v39
    %v7855 = vadd.f32 %v7853, %v39
    %v7856 = vmul.f32 %v7854, %v7365
    %v7857 = vmul.f32 %v7855, %v7366
    %7860 = vrot.lane.b32.xlu0 %v7854, 64
    %v7861 = vpop.permute.xlu0 %7860
    %7862 = vrot.lane.b32.xlu0 %v7855, 64
    %v7863 = vpop.permute.xlu0 %7862
    %v7866 = vmul.f32 %v7854, %v7861
    %v7867 = vmul.f32 %v7855, %v7863
    %7870 = vrot.lane.b32.xlu0 %v7866, 32
    %v7871 = vpop.permute.xlu0 %7870
    %7872 = vrot.lane.b32.xlu0 %v7867, 32
    %v7873 = vpop.permute.xlu0 %7872
    %v7876 = vadd.f32 %v7856, %v7871
    %v7877 = vadd.f32 %v7857, %v7873
    %v7878 = vtanh.pop %v7876
    %v7879 = vtanh.pop %v7877
    %7882 = vrot.lane.b32.xlu0 %v7878, 64
    %v7883 = vpop.permute.xlu0 %7882
    %7884 = vrot.lane.b32.xlu0 %v7879, 64
    %v7885 = vpop.permute.xlu0 %7884
    %v7888 = vmul.f32 %v7854, %v7883
    %v7889 = vmul.f32 %v7855, %v7885
    %7890 = vmatprep.subr.mxu0 0.0
    %7891 = vmatpush1.msra.mxu0 %v53
    %7892 = vmatprep.subr.mxu0 0.0
    %7893 = vmatpush1.msra.mxu0 %v54
    %7894 = vmatprep.subr.mxu0 0.0
    %7895 = vmatpush1.msra.mxu0 %v55
    %7896 = vmatprep.subr.mxu0 0.0
    %7897 = vmatpush1.msra.mxu0 %v56
    %7898 = vmatprep.subr.mxu0 0.0
    %7899 = vmatpush1.msra.mxu0 0.0
    %7900 = vmatprep.subr.mxu0 0.0
    %7901 = vmatpush1.msra.mxu0 0.0
    %7902 = vmatprep.subr.mxu0 0.0
    %7903 = vmatpush1.msra.mxu0 0.0
    %7904 = vmatprep.subr.mxu0 0.0
    %7905 = vmatpush1.msra.mxu0 0.0
    %7906 = vmatprep.subr.mxu0 0.0
    %7907 = vmatpush1.msra.mxu0 0.0
    %7908 = vmatprep.subr.mxu0 0.0
    %7909 = vmatpush1.msra.mxu0 0.0
    %7910 = vmatprep.subr.mxu0 0.0
    %7911 = vmatpush1.msra.mxu0 0.0
    %7912 = vmatprep.subr.mxu0 0.0
    %7913 = vmatpush1.msra.mxu0 0.0
    %7914 = vmatprep.subr.mxu0 0.0
    %7915 = vmatpush1.msra.mxu0 0.0
    %7916 = vmatprep.subr.mxu0 0.0
    %7917 = vmatpush1.msra.mxu0 0.0
    %7918 = vmatprep.subr.mxu0 0.0
    %7919 = vmatpush1.msra.mxu0 0.0
    %7920 = vmatprep.subr.mxu0 0.0
    %7921 = vmatpush1.msra.mxu0 0.0
    %7922 = vmatprep.subr.mxu0 0.0
    %7923 = vmatpush1.msra.mxu0 0.0
    %7924 = vmatprep.subr.mxu0 0.0
    %7925 = vmatpush1.msra.mxu0 0.0
    %7926 = vmatprep.subr.mxu0 0.0
    %7927 = vmatpush1.msra.mxu0 0.0
    %7928 = vmatprep.subr.mxu0 0.0
    %7929 = vmatpush1.msra.mxu0 0.0
    %7930 = vmatprep.subr.mxu0 0.0
    %7931 = vmatpush1.msra.mxu0 0.0
    %7932 = vmatprep.subr.mxu0 0.0
    %7933 = vmatpush1.msra.mxu0 0.0
    %7934 = vmatprep.subr.mxu0 0.0
    %7935 = vmatpush1.msra.mxu0 0.0
    %7936 = vmatprep.subr.mxu0 0.0
    %7937 = vmatpush1.msra.mxu0 0.0
    %7938 = vmatprep.subr.mxu0 0.0
    %7939 = vmatpush1.msra.mxu0 0.0
    %7940 = vmatprep.subr.mxu0 0.0
    %7941 = vmatpush1.msra.mxu0 0.0
    %7942 = vmatprep.subr.mxu0 0.0
    %7943 = vmatpush1.msra.mxu0 0.0
    %7944 = vmatprep.subr.mxu0 0.0
    %7945 = vmatpush1.msra.mxu0 0.0
    %7946 = vmatprep.subr.mxu0 0.0
    %7947 = vmatpush1.msra.mxu0 0.0
    %7948 = vmatprep.subr.mxu0 0.0
    %7949 = vmatpush1.msra.mxu0 0.0
    %7950 = vmatprep.subr.mxu0 0.0
    %7951 = vmatpush1.msra.mxu0 0.0
    %7952 = vmatprep.subr.mxu0 0.0
    %7953 = vmatpush1.msra.mxu0 0.0
    %7954 = vmatprep.mubr.f32.mxu0 0.0
    %7955 = vmatmul.mubr.f32.gmra.mrb[0].mxu0 %v7757
    %v7956 = vpop.f32.mrb[0].mxu0
    %v7957 = vadd.f32 %v66, %v7956
    %v7958 = vpop.f32.mrb[0].mxu0
    %7959 = vmatprep.mubr.f32.mxu0 0.0
    %7960 = vmatmul.mubr.f32.gmra.mrb[0].mxu0 %v7759
    %v7961 = vpop.f32.mrb[0].mxu0
    %v7962 = vadd.f32 %v66, %v7961
    %v7963 = vpop.f32.mrb[0].mxu0
    %7964 = vdwg.mxu0
    %v7965 = vsel %vm466, %v7590, 0
    %v7967 = vsel %vm466, %v7592, 0
    %7969 = vmatprep.subr.mxu0 0.0
    %7970 = vmatpush1.msra.mxu0 %v57
    %7971 = vmatprep.subr.mxu0 0.0
    %7972 = vmatpush1.msra.mxu0 %v58
    %7973 = vmatprep.subr.mxu0 0.0
    %7974 = vmatpush1.msra.mxu0 %v59
    %7975 = vmatprep.subr.mxu0 0.0
    %7976 = vmatpush1.msra.mxu0 %v60
    %7977 = vmatprep.subr.mxu0 0.0
    %7978 = vmatpush1.msra.mxu0 0.0
    %7979 = vmatprep.subr.mxu0 0.0
    %7980 = vmatpush1.msra.mxu0 0.0
    %7981 = vmatprep.subr.mxu0 0.0
    %7982 = vmatpush1.msra.mxu0 0.0
    %7983 = vmatprep.subr.mxu0 0.0
    %7984 = vmatpush1.msra.mxu0 0.0
    %7985 = vmatprep.subr.mxu0 0.0
    %7986 = vmatpush1.msra.mxu0 0.0
    %7987 = vmatprep.subr.mxu0 0.0
    %7988 = vmatpush1.msra.mxu0 0.0
    %7989 = vmatprep.subr.mxu0 0.0
    %7990 = vmatpush1.msra.mxu0 0.0
    %7991 = vmatprep.subr.mxu0 0.0
    %7992 = vmatpush1.msra.mxu0 0.0
    %7993 = vmatprep.subr.mxu0 0.0
    %7994 = vmatpush1.msra.mxu0 0.0
    %7995 = vmatprep.subr.mxu0 0.0
    %7996 = vmatpush1.msra.mxu0 0.0
    %7997 = vmatprep.subr.mxu0 0.0
    %7998 = vmatpush1.msra.mxu0 0.0
    %7999 = vmatprep.subr.mxu0 0.0
    %8000 = vmatpush1.msra.mxu0 0.0
    %8001 = vmatprep.subr.mxu0 0.0
    %8002 = vmatpush1.msra.mxu0 0.0
    %8003 = vmatprep.subr.mxu0 0.0
    %8004 = vmatpush1.msra.mxu0 0.0
    %8005 = vmatprep.subr.mxu0 0.0
    %8006 = vmatpush1.msra.mxu0 0.0
    %8007 = vmatprep.subr.mxu0 0.0
    %8008 = vmatpush1.msra.mxu0 0.0
    %8009 = vmatprep.subr.mxu0 0.0
    %8010 = vmatpush1.msra.mxu0 0.0
    %8011 = vmatprep.subr.mxu0 0.0
    %8012 = vmatpush1.msra.mxu0 0.0
    %8013 = vmatprep.subr.mxu0 0.0
    %8014 = vmatpush1.msra.mxu0 0.0
    %8015 = vmatprep.subr.mxu0 0.0
    %8016 = vmatpush1.msra.mxu0 0.0
    %8017 = vmatprep.subr.mxu0 0.0
    %8018 = vmatpush1.msra.mxu0 0.0
    %8019 = vmatprep.subr.mxu0 0.0
    %8020 = vmatpush1.msra.mxu0 0.0
    %8021 = vmatprep.subr.mxu0 0.0
    %8022 = vmatpush1.msra.mxu0 0.0
    %8023 = vmatprep.subr.mxu0 0.0
    %8024 = vmatpush1.msra.mxu0 0.0
    %8025 = vmatprep.subr.mxu0 0.0
    %8026 = vmatpush1.msra.mxu0 0.0
    %8027 = vmatprep.subr.mxu0 0.0
    %8028 = vmatpush1.msra.mxu0 0.0
    %8029 = vmatprep.subr.mxu0 0.0
    %8030 = vmatpush1.msra.mxu0 0.0
    %8031 = vmatprep.subr.mxu0 0.0
    %8032 = vmatpush1.msra.mxu0 0.0
    %8033 = vmatprep.mubr.f32.mxu0 0.0
    %8034 = vmatmul.mubr.f32.gmra.mrb[0].mxu0 %v7965
    %v8035 = vpop.f32.mrb[0].mxu0
    %v8036 = vadd.f32 0.0, %v8035
    %v8037 = vpop.f32.mrb[0].mxu0
    %8038 = vmatprep.mubr.f32.mxu0 0.0
    %8039 = vmatmul.mubr.f32.gmra.mrb[0].mxu0 %v7967
    %v8040 = vpop.f32.mrb[0].mxu0
    %v8041 = vadd.f32 0.0, %v8040
    %v8042 = vpop.f32.mrb[0].mxu0
    %8043 = vdwg.mxu0
    %v8044 = vadd.f32 %v7957, %v8036
    %v8045 = vadd.f32 %v7962, %v8041
    %v8046 = vmul.f32 %v8044, %v38
    %v8047 = vmul.f32 %v8045, %v38
    %v8048 = vxor.u32 %v8046, 2147483648
    %v8049 = vxor.u32 %v8047, 2147483648
    %v8050 = vmul.f32 %v8048, 1.442695
    %v8051 = vpow.pop %v8050
    %v8052 = vmul.f32 %v8049, 1.442695
    %v8053 = vpow.pop %v8052
    %v8054 = vadd.f32 %v8051, 1.0
    %v8055 = vadd.f32 %v8053, 1.0
    %v8056 = vrcp.pop %v8054
    %v8057 = vmul.f32 1.0, %v8056
    %v8058 = vrcp.pop %v8055
    %v8059 = vmul.f32 1.0, %v8058
    %v8060 = vmul.f32 %v8057, %v38
    %v8061 = vmul.f32 %v8059, %v38
    %v8062 = vadd.f32 %v8060, %v39
    %v8063 = vadd.f32 %v8061, %v39
    %v8064 = vmul.f32 %v8062, %v7573
    %v8065 = vmul.f32 %v8063, %v7574
    %8068 = vrot.lane.b32.xlu0 %v8062, 64
    %v8069 = vpop.permute.xlu0 %8068
    %8070 = vrot.lane.b32.xlu0 %v8063, 64
    %v8071 = vpop.permute.xlu0 %8070
    %v8074 = vmul.f32 %v8062, %v8069
    %v8075 = vmul.f32 %v8063, %v8071
    %8078 = vrot.lane.b32.xlu0 %v8074, 32
    %v8079 = vpop.permute.xlu0 %8078
    %8080 = vrot.lane.b32.xlu0 %v8075, 32
    %v8081 = vpop.permute.xlu0 %8080
    %v8084 = vadd.f32 %v8064, %v8079
    %v8085 = vadd.f32 %v8065, %v8081
    %v8086 = vtanh.pop %v8084
    %v8087 = vtanh.pop %v8085
    %8090 = vrot.lane.b32.xlu0 %v8086, 64
    %v8091 = vpop.permute.xlu0 %8090
    %8092 = vrot.lane.b32.xlu0 %v8087, 64
    %v8093 = vpop.permute.xlu0 %8092
    %v8096 = vmul.f32 %v8062, %v8091
    %v8097 = vmul.f32 %v8063, %v8093
    %8100 = vrot.lane.b32.xlu0 %v8096, 32
    %v8101 = vpop.permute.xlu0 %8100
    %8102 = vrot.lane.b32.xlu0 %v8097, 32
    %v8103 = vpop.permute.xlu0 %8102
    %8106 = vmatprep.subr.mxu0 0.0
    %8107 = vmatpush1.msra.mxu0 %v8101
    %8108 = vmatprep.subr.mxu0 0.0
    %8109 = vmatpush1.msra.mxu0 %v8103
    %8110 = vmatprep.subr.mxu0 0.0
    %8111 = vmatpush1.msra.mxu0 0.0
    %8112 = vmatprep.subr.mxu0 0.0
    %8113 = vmatpush1.msra.mxu0 0.0
    %8114 = vmatprep.subr.mxu0 0.0
    %8115 = vmatpush1.msra.mxu0 0.0
    %8116 = vmatprep.subr.mxu0 0.0
    %8117 = vmatpush1.msra.mxu0 0.0
    %8118 = vmatprep.subr.mxu0 0.0
    %8119 = vmatpush1.msra.mxu0 0.0
    %8120 = vmatprep.subr.mxu0 0.0
    %8121 = vmatpush1.msra.mxu0 0.0
    %8122 = vmatprep.subr.mxu0 0.0
    %8123 = vmatpush1.msra.mxu0 0.0
    %8124 = vmatprep.subr.mxu0 0.0
    %8125 = vmatpush1.msra.mxu0 0.0
    %8126 = vmatprep.subr.mxu0 0.0
    %8127 = vmatpush1.msra.mxu0 0.0
    %8128 = vmatprep.subr.mxu0 0.0
    %8129 = vmatpush1.msra.mxu0 0.0
    %8130 = vmatprep.subr.mxu0 0.0
    %8131 = vmatpush1.msra.mxu0 0.0
    %8132 = vmatprep.subr.mxu0 0.0
    %8133 = vmatpush1.msra.mxu0 0.0
    %8134 = vmatprep.subr.mxu0 0.0
    %8135 = vmatpush1.msra.mxu0 0.0
    %8136 = vmatprep.subr.mxu0 0.0
    %8137 = vmatpush1.msra.mxu0 0.0
    %8138 = vmatprep.subr.mxu0 0.0
    %8139 = vmatpush1.msra.mxu0 0.0
    %8140 = vmatprep.subr.mxu0 0.0
    %8141 = vmatpush1.msra.mxu0 0.0
    %8142 = vmatprep.subr.mxu0 0.0
    %8143 = vmatpush1.msra.mxu0 0.0
    %8144 = vmatprep.subr.mxu0 0.0
    %8145 = vmatpush1.msra.mxu0 0.0
    %8146 = vmatprep.subr.mxu0 0.0
    %8147 = vmatpush1.msra.mxu0 0.0
    %8148 = vmatprep.subr.mxu0 0.0
    %8149 = vmatpush1.msra.mxu0 0.0
    %8150 = vmatprep.subr.mxu0 0.0
    %8151 = vmatpush1.msra.mxu0 0.0
    %8152 = vmatprep.subr.mxu0 0.0
    %8153 = vmatpush1.msra.mxu0 0.0
    %8154 = vmatprep.subr.mxu0 0.0
    %8155 = vmatpush1.msra.mxu0 0.0
    %8156 = vmatprep.subr.mxu0 0.0
    %8157 = vmatpush1.msra.mxu0 0.0
    %8158 = vmatprep.subr.mxu0 0.0
    %8159 = vmatpush1.msra.mxu0 0.0
    %8160 = vmatprep.subr.mxu0 0.0
    %8161 = vmatpush1.msra.mxu0 0.0
    %8162 = vmatprep.subr.mxu0 0.0
    %8163 = vmatpush1.msra.mxu0 0.0
    %8164 = vmatprep.subr.mxu0 0.0
    %8165 = vmatpush1.msra.mxu0 0.0
    %8166 = vmatprep.subr.mxu0 0.0
    %8167 = vmatpush1.msra.mxu0 0.0
    %8168 = vmatprep.subr.mxu0 0.0
    %8169 = vmatpush1.msra.mxu0 0.0
    %8170 = vmatprep.mubr.f32.mxu0 0.0
    %8171 = vmatmul.mubr.f32.gmra.mrb[0].mxu0 %v954
    %v8172 = vpop.f32.mrb[0].mxu0
    %v8173 = vadd.f32 0.0, %v8172
    %v8174 = vpop.f32.mrb[0].mxu0
    %8175 = vdwg.mxu0
    %v8176 = vld [vmem:[%s7 + $0x380] sm:$0xff]
    %v8177 = vld [vmem:[%s7 + $0x388] sm:$0xff]
    %v8178 = vld [vmem:[%s7 + $0x390] sm:$0xff]
    %v8179 = vld [vmem:[%s7 + $0x398] sm:$0xff]
    %v8180 = vld [vmem:[%s7 + $0x3a0] sm:$0xff]
    %v8181 = vld [vmem:[%s7 + $0x3a8] sm:$0xff]
    %v8182 = vld [vmem:[%s7 + $0x3b0] sm:$0xff]
    %v8183 = vld [vmem:[%s7 + $0x3b8] sm:$0xff]
    %v8185 = vsel %vm466, %v8173, 0
    %8187 = vmatprep.subr.mxu0 %v8177
    %8188 = vmatpush1.msra.mxu0 %v8176
    %8189 = vmatprep.subr.mxu0 %v8179
    %8190 = vmatpush1.msra.mxu0 %v8178
    %8191 = vmatprep.subr.mxu0 %v8181
    %8192 = vmatpush1.msra.mxu0 %v8180
    %8193 = vmatprep.subr.mxu0 %v8183
    %8194 = vmatpush1.msra.mxu0 %v8182
    %8195 = vmatprep.subr.mxu0 0.0
    %8196 = vmatpush1.msra.mxu0 0.0
    %8197 = vmatprep.subr.mxu0 0.0
    %8198 = vmatpush1.msra.mxu0 0.0
    %8199 = vmatprep.subr.mxu0 0.0
    %8200 = vmatpush1.msra.mxu0 0.0
    %8201 = vmatprep.subr.mxu0 0.0
    %8202 = vmatpush1.msra.mxu0 0.0
    %8203 = vmatprep.subr.mxu0 0.0
    %8204 = vmatpush1.msra.mxu0 0.0
    %8205 = vmatprep.subr.mxu0 0.0
    %8206 = vmatpush1.msra.mxu0 0.0
    %8207 = vmatprep.subr.mxu0 0.0
    %8208 = vmatpush1.msra.mxu0 0.0
    %8209 = vmatprep.subr.mxu0 0.0
    %8210 = vmatpush1.msra.mxu0 0.0
    %8211 = vmatprep.subr.mxu0 0.0
    %8212 = vmatpush1.msra.mxu0 0.0
    %8213 = vmatprep.subr.mxu0 0.0
    %8214 = vmatpush1.msra.mxu0 0.0
    %8215 = vmatprep.subr.mxu0 0.0
    %8216 = vmatpush1.msra.mxu0 0.0
    %8217 = vmatprep.subr.mxu0 0.0
    %8218 = vmatpush1.msra.mxu0 0.0
    %8219 = vmatprep.subr.mxu0 0.0
    %8220 = vmatpush1.msra.mxu0 0.0
    %8221 = vmatprep.subr.mxu0 0.0
    %8222 = vmatpush1.msra.mxu0 0.0
    %8223 = vmatprep.subr.mxu0 0.0
    %8224 = vmatpush1.msra.mxu0 0.0
    %8225 = vmatprep.subr.mxu0 0.0
    %8226 = vmatpush1.msra.mxu0 0.0
    %8227 = vmatprep.subr.mxu0 0.0
    %8228 = vmatpush1.msra.mxu0 0.0
    %8229 = vmatprep.subr.mxu0 0.0
    %8230 = vmatpush1.msra.mxu0 0.0
    %8231 = vmatprep.subr.mxu0 0.0
    %8232 = vmatpush1.msra.mxu0 0.0
    %8233 = vmatprep.subr.mxu0 0.0
    %8234 = vmatpush1.msra.mxu0 0.0
    %8235 = vmatprep.subr.mxu0 0.0
    %8236 = vmatpush1.msra.mxu0 0.0
    %8237 = vmatprep.subr.mxu0 0.0
    %8238 = vmatpush1.msra.mxu0 0.0
    %8239 = vmatprep.subr.mxu0 0.0
    %8240 = vmatpush1.msra.mxu0 0.0
    %8241 = vmatprep.subr.mxu0 0.0
    %8242 = vmatpush1.msra.mxu0 0.0
    %8243 = vmatprep.subr.mxu0 0.0
    %8244 = vmatpush1.msra.mxu0 0.0
    %8245 = vmatprep.subr.mxu0 0.0
    %8246 = vmatpush1.msra.mxu0 0.0
    %8247 = vmatprep.subr.mxu0 0.0
    %8248 = vmatpush1.msra.mxu0 0.0
    %8249 = vmatprep.subr.mxu0 0.0
    %8250 = vmatpush1.msra.mxu0 0.0
    %8251 = vmatprep.mubr.f32.mxu0 0.0
    %8252 = vmatmul.mubr.f32.gmra.mrb[0].mxu0 %v8185
    %v8253 = vpop.f32.mrb[0].mxu0
    %v8254 = vadd.f32 0.0, %v8253
    %v8255 = vpop.f32.mrb[0].mxu0
    %v8256 = vadd.f32 0.0, %v8255
    %8257 = vdwg.mxu0
    %v8258 = vadd.f32 %v7747, %v8254
    %v8259 = vadd.f32 %v7748, %v8256
    %8262 = vrot.lane.b32.xlu0 %v7888, 32
    %v8263 = vpop.permute.xlu0 %8262
    %8264 = vrot.lane.b32.xlu0 %v7889, 32
    %v8265 = vpop.permute.xlu0 %8264
    %v8266 = vsel %vm466, %v8263, 0
    %v8268 = vsel %vm466, %v8265, 0
    %8270 = vmatprep.subr.mxu0 0.0
    %8271 = vmatpush1.msra.mxu0 %v53
    %8272 = vmatprep.subr.mxu0 0.0
    %8273 = vmatpush1.msra.mxu0 %v54
    %8274 = vmatprep.subr.mxu0 0.0
    %8275 = vmatpush1.msra.mxu0 %v55
    %8276 = vmatprep.subr.mxu0 0.0
    %8277 = vmatpush1.msra.mxu0 %v56
    %8278 = vmatprep.subr.mxu0 0.0
    %8279 = vmatpush1.msra.mxu0 0.0
    %8280 = vmatprep.subr.mxu0 0.0
    %8281 = vmatpush1.msra.mxu0 0.0
    %8282 = vmatprep.subr.mxu0 0.0
    %8283 = vmatpush1.msra.mxu0 0.0
    %8284 = vmatprep.subr.mxu0 0.0
    %8285 = vmatpush1.msra.mxu0 0.0
    %8286 = vmatprep.subr.mxu0 0.0
    %8287 = vmatpush1.msra.mxu0 0.0
    %8288 = vmatprep.subr.mxu0 0.0
    %8289 = vmatpush1.msra.mxu0 0.0
    %8290 = vmatprep.subr.mxu0 0.0
    %8291 = vmatpush1.msra.mxu0 0.0
    %8292 = vmatprep.subr.mxu0 0.0
    %8293 = vmatpush1.msra.mxu0 0.0
    %8294 = vmatprep.subr.mxu0 0.0
    %8295 = vmatpush1.msra.mxu0 0.0
    %8296 = vmatprep.subr.mxu0 0.0
    %8297 = vmatpush1.msra.mxu0 0.0
    %8298 = vmatprep.subr.mxu0 0.0
    %8299 = vmatpush1.msra.mxu0 0.0
    %8300 = vmatprep.subr.mxu0 0.0
    %8301 = vmatpush1.msra.mxu0 0.0
    %8302 = vmatprep.subr.mxu0 0.0
    %8303 = vmatpush1.msra.mxu0 0.0
    %8304 = vmatprep.subr.mxu0 0.0
    %8305 = vmatpush1.msra.mxu0 0.0
    %8306 = vmatprep.subr.mxu0 0.0
    %8307 = vmatpush1.msra.mxu0 0.0
    %8308 = vmatprep.subr.mxu0 0.0
    %8309 = vmatpush1.msra.mxu0 0.0
    %8310 = vmatprep.subr.mxu0 0.0
    %8311 = vmatpush1.msra.mxu0 0.0
    %8312 = vmatprep.subr.mxu0 0.0
    %8313 = vmatpush1.msra.mxu0 0.0
    %8314 = vmatprep.subr.mxu0 0.0
    %8315 = vmatpush1.msra.mxu0 0.0
    %8316 = vmatprep.subr.mxu0 0.0
    %8317 = vmatpush1.msra.mxu0 0.0
    %8318 = vmatprep.subr.mxu0 0.0
    %8319 = vmatpush1.msra.mxu0 0.0
    %8320 = vmatprep.subr.mxu0 0.0
    %8321 = vmatpush1.msra.mxu0 0.0
    %8322 = vmatprep.subr.mxu0 0.0
    %8323 = vmatpush1.msra.mxu0 0.0
    %8324 = vmatprep.subr.mxu0 0.0
    %8325 = vmatpush1.msra.mxu0 0.0
    %8326 = vmatprep.subr.mxu0 0.0
    %8327 = vmatpush1.msra.mxu0 0.0
    %8328 = vmatprep.subr.mxu0 0.0
    %8329 = vmatpush1.msra.mxu0 0.0
    %8330 = vmatprep.subr.mxu0 0.0
    %8331 = vmatpush1.msra.mxu0 0.0
    %8332 = vmatprep.subr.mxu0 0.0
    %8333 = vmatpush1.msra.mxu0 0.0
    %8334 = vmatprep.mubr.f32.mxu0 0.0
    %8335 = vmatmul.mubr.f32.gmra.mrb[0].mxu0 %v8266
    %v8336 = vpop.f32.mrb[0].mxu0
    %v8337 = vadd.f32 %v66, %v8336
    %v8338 = vpop.f32.mrb[0].mxu0
    %8339 = vmatprep.mubr.f32.mxu0 0.0
    %8340 = vmatmul.mubr.f32.gmra.mrb[0].mxu0 %v8268
    %v8341 = vpop.f32.mrb[0].mxu0
    %v8342 = vadd.f32 %v66, %v8341
    %v8343 = vpop.f32.mrb[0].mxu0
    %8344 = vdwg.mxu0
    %v8345 = vsel %vm466, %v8101, 0
    %v8347 = vsel %vm466, %v8103, 0
    %8349 = vmatprep.subr.mxu0 0.0
    %8350 = vmatpush1.msra.mxu0 %v57
    %8351 = vmatprep.subr.mxu0 0.0
    %8352 = vmatpush1.msra.mxu0 %v58
    %8353 = vmatprep.subr.mxu0 0.0
    %8354 = vmatpush1.msra.mxu0 %v59
    %8355 = vmatprep.subr.mxu0 0.0
    %8356 = vmatpush1.msra.mxu0 %v60
    %8357 = vmatprep.subr.mxu0 0.0
    %8358 = vmatpush1.msra.mxu0 0.0
    %8359 = vmatprep.subr.mxu0 0.0
    %8360 = vmatpush1.msra.mxu0 0.0
    %8361 = vmatprep.subr.mxu0 0.0
    %8362 = vmatpush1.msra.mxu0 0.0
    %8363 = vmatprep.subr.mxu0 0.0
    %8364 = vmatpush1.msra.mxu0 0.0
    %8365 = vmatprep.subr.mxu0 0.0
    %8366 = vmatpush1.msra.mxu0 0.0
    %8367 = vmatprep.subr.mxu0 0.0
    %8368 = vmatpush1.msra.mxu0 0.0
    %8369 = vmatprep.subr.mxu0 0.0
    %8370 = vmatpush1.msra.mxu0 0.0
    %8371 = vmatprep.subr.mxu0 0.0
    %8372 = vmatpush1.msra.mxu0 0.0
    %8373 = vmatprep.subr.mxu0 0.0
    %8374 = vmatpush1.msra.mxu0 0.0
    %8375 = vmatprep.subr.mxu0 0.0
    %8376 = vmatpush1.msra.mxu0 0.0
    %8377 = vmatprep.subr.mxu0 0.0
    %8378 = vmatpush1.msra.mxu0 0.0
    %8379 = vmatprep.subr.mxu0 0.0
    %8380 = vmatpush1.msra.mxu0 0.0
    %8381 = vmatprep.subr.mxu0 0.0
    %8382 = vmatpush1.msra.mxu0 0.0
    %8383 = vmatprep.subr.mxu0 0.0
    %8384 = vmatpush1.msra.mxu0 0.0
    %8385 = vmatprep.subr.mxu0 0.0
    %8386 = vmatpush1.msra.mxu0 0.0
    %8387 = vmatprep.subr.mxu0 0.0
    %8388 = vmatpush1.msra.mxu0 0.0
    %8389 = vmatprep.subr.mxu0 0.0
    %8390 = vmatpush1.msra.mxu0 0.0
    %8391 = vmatprep.subr.mxu0 0.0
    %8392 = vmatpush1.msra.mxu0 0.0
    %8393 = vmatprep.subr.mxu0 0.0
    %8394 = vmatpush1.msra.mxu0 0.0
    %8395 = vmatprep.subr.mxu0 0.0
    %8396 = vmatpush1.msra.mxu0 0.0
    %8397 = vmatprep.subr.mxu0 0.0
    %8398 = vmatpush1.msra.mxu0 0.0
    %8399 = vmatprep.subr.mxu0 0.0
    %8400 = vmatpush1.msra.mxu0 0.0
    %8401 = vmatprep.subr.mxu0 0.0
    %8402 = vmatpush1.msra.mxu0 0.0
    %8403 = vmatprep.subr.mxu0 0.0
    %8404 = vmatpush1.msra.mxu0 0.0
    %8405 = vmatprep.subr.mxu0 0.0
    %8406 = vmatpush1.msra.mxu0 0.0
    %8407 = vmatprep.subr.mxu0 0.0
    %8408 = vmatpush1.msra.mxu0 0.0
    %8409 = vmatprep.subr.mxu0 0.0
    %8410 = vmatpush1.msra.mxu0 0.0
    %8411 = vmatprep.subr.mxu0 0.0
    %8412 = vmatpush1.msra.mxu0 0.0
    %8413 = vmatprep.mubr.f32.mxu0 0.0
    %8414 = vmatmul.mubr.f32.gmra.mrb[0].mxu0 %v8345
    %v8415 = vpop.f32.mrb[0].mxu0
    %v8416 = vadd.f32 0.0, %v8415
    %v8417 = vpop.f32.mrb[0].mxu0
    %8418 = vmatprep.mubr.f32.mxu0 0.0
    %8419 = vmatmul.mubr.f32.gmra.mrb[0].mxu0 %v8347
    %v8420 = vpop.f32.mrb[0].mxu0
    %v8421 = vadd.f32 0.0, %v8420
    %v8422 = vpop.f32.mrb[0].mxu0
    %8423 = vdwg.mxu0
    %v8424 = vadd.f32 %v8337, %v8416
    %v8425 = vadd.f32 %v8342, %v8421
    %v8426 = vmul.f32 %v8424, %v38
    %v8427 = vmul.f32 %v8425, %v38
    %v8428 = vxor.u32 %v8426, 2147483648
    %v8429 = vxor.u32 %v8427, 2147483648
    %v8430 = vmul.f32 %v8428, 1.442695
    %v8431 = vpow.pop %v8430
    %v8432 = vmul.f32 %v8429, 1.442695
    %v8433 = vpow.pop %v8432
    %v8434 = vadd.f32 %v8431, 1.0
    %v8435 = vadd.f32 %v8433, 1.0
    %v8436 = vrcp.pop %v8434
    %v8437 = vmul.f32 1.0, %v8436
    %v8438 = vrcp.pop %v8435
    %v8439 = vmul.f32 1.0, %v8438
    %v8440 = vmul.f32 %v8437, %v38
    %v8441 = vmul.f32 %v8439, %v38
    %v8442 = vadd.f32 %v8440, %v39
    %v8443 = vadd.f32 %v8441, %v39
    %v8444 = vmul.f32 %v8442, %v8084
    %v8445 = vmul.f32 %v8443, %v8085
    %8448 = vrot.lane.b32.xlu0 %v8442, 64
    %v8449 = vpop.permute.xlu0 %8448
    %8450 = vrot.lane.b32.xlu0 %v8443, 64
    %v8451 = vpop.permute.xlu0 %8450
    %v8454 = vmul.f32 %v8442, %v8449
    %v8455 = vmul.f32 %v8443, %v8451
    %8458 = vrot.lane.b32.xlu0 %v8454, 32
    %v8459 = vpop.permute.xlu0 %8458
    %8460 = vrot.lane.b32.xlu0 %v8455, 32
    %v8461 = vpop.permute.xlu0 %8460
    %v8464 = vadd.f32 %v8444, %v8459
    %v8465 = vadd.f32 %v8445, %v8461
    %v8466 = vtanh.pop %v8464
    %v8467 = vtanh.pop %v8465
    %8470 = vrot.lane.b32.xlu0 %v8466, 64
    %v8471 = vpop.permute.xlu0 %8470
    %8472 = vrot.lane.b32.xlu0 %v8467, 64
    %v8473 = vpop.permute.xlu0 %8472
    %v8476 = vmul.f32 %v8442, %v8471
    %v8477 = vmul.f32 %v8443, %v8473
    %8480 = vrot.lane.b32.xlu0 %v8476, 32
    %v8481 = vpop.permute.xlu0 %8480
    %8482 = vrot.lane.b32.xlu0 %v8477, 32
    %v8483 = vpop.permute.xlu0 %8482
    %8486 = vmatprep.subr.mxu0 0.0
    %8487 = vmatpush1.msra.mxu0 %v8481
    %8488 = vmatprep.subr.mxu0 0.0
    %8489 = vmatpush1.msra.mxu0 %v8483
    %8490 = vmatprep.subr.mxu0 0.0
    %8491 = vmatpush1.msra.mxu0 0.0
    %8492 = vmatprep.subr.mxu0 0.0
    %8493 = vmatpush1.msra.mxu0 0.0
    %8494 = vmatprep.subr.mxu0 0.0
    %8495 = vmatpush1.msra.mxu0 0.0
    %8496 = vmatprep.subr.mxu0 0.0
    %8497 = vmatpush1.msra.mxu0 0.0
    %8498 = vmatprep.subr.mxu0 0.0
    %8499 = vmatpush1.msra.mxu0 0.0
    %8500 = vmatprep.subr.mxu0 0.0
    %8501 = vmatpush1.msra.mxu0 0.0
    %8502 = vmatprep.subr.mxu0 0.0
    %8503 = vmatpush1.msra.mxu0 0.0
    %8504 = vmatprep.subr.mxu0 0.0
    %8505 = vmatpush1.msra.mxu0 0.0
    %8506 = vmatprep.subr.mxu0 0.0
    %8507 = vmatpush1.msra.mxu0 0.0
    %8508 = vmatprep.subr.mxu0 0.0
    %8509 = vmatpush1.msra.mxu0 0.0
    %8510 = vmatprep.subr.mxu0 0.0
    %8511 = vmatpush1.msra.mxu0 0.0
    %8512 = vmatprep.subr.mxu0 0.0
    %8513 = vmatpush1.msra.mxu0 0.0
    %8514 = vmatprep.subr.mxu0 0.0
    %8515 = vmatpush1.msra.mxu0 0.0
    %8516 = vmatprep.subr.mxu0 0.0
    %8517 = vmatpush1.msra.mxu0 0.0
    %8518 = vmatprep.subr.mxu0 0.0
    %8519 = vmatpush1.msra.mxu0 0.0
    %8520 = vmatprep.subr.mxu0 0.0
    %8521 = vmatpush1.msra.mxu0 0.0
    %8522 = vmatprep.subr.mxu0 0.0
    %8523 = vmatpush1.msra.mxu0 0.0
    %8524 = vmatprep.subr.mxu0 0.0
    %8525 = vmatpush1.msra.mxu0 0.0
    %8526 = vmatprep.subr.mxu0 0.0
    %8527 = vmatpush1.msra.mxu0 0.0
    %8528 = vmatprep.subr.mxu0 0.0
    %8529 = vmatpush1.msra.mxu0 0.0
    %8530 = vmatprep.subr.mxu0 0.0
    %8531 = vmatpush1.msra.mxu0 0.0
    %8532 = vmatprep.subr.mxu0 0.0
    %8533 = vmatpush1.msra.mxu0 0.0
    %8534 = vmatprep.subr.mxu0 0.0
    %8535 = vmatpush1.msra.mxu0 0.0
    %8536 = vmatprep.subr.mxu0 0.0
    %8537 = vmatpush1.msra.mxu0 0.0
    %8538 = vmatprep.subr.mxu0 0.0
    %8539 = vmatpush1.msra.mxu0 0.0
    %8540 = vmatprep.subr.mxu0 0.0
    %8541 = vmatpush1.msra.mxu0 0.0
    %8542 = vmatprep.subr.mxu0 0.0
    %8543 = vmatpush1.msra.mxu0 0.0
    %8544 = vmatprep.subr.mxu0 0.0
    %8545 = vmatpush1.msra.mxu0 0.0
    %8546 = vmatprep.subr.mxu0 0.0
    %8547 = vmatpush1.msra.mxu0 0.0
    %8548 = vmatprep.subr.mxu0 0.0
    %8549 = vmatpush1.msra.mxu0 0.0
    %8550 = vmatprep.mubr.f32.mxu0 0.0
    %8551 = vmatmul.mubr.f32.gmra.mrb[0].mxu0 %v954
    %v8552 = vpop.f32.mrb[0].mxu0
    %v8553 = vadd.f32 0.0, %v8552
    %v8554 = vpop.f32.mrb[0].mxu0
    %8555 = vdwg.mxu0
    %v8556 = vld [vmem:[%s7 + $0x3c0] sm:$0xff]
    %v8557 = vld [vmem:[%s7 + $0x3c8] sm:$0xff]
    %v8558 = vld [vmem:[%s7 + $0x3d0] sm:$0xff]
    %v8559 = vld [vmem:[%s7 + $0x3d8] sm:$0xff]
    %v8560 = vld [vmem:[%s7 + $0x3e0] sm:$0xff]
    %v8561 = vld [vmem:[%s7 + $0x3e8] sm:$0xff]
    %v8562 = vld [vmem:[%s7 + $0x3f0] sm:$0xff]
    %v8563 = vld [vmem:[%s7 + $0x3f8] sm:$0xff]
    %v8565 = vsel %vm466, %v8553, 0
    %8567 = vmatprep.subr.mxu0 %v8557
    %8568 = vmatpush1.msra.mxu0 %v8556
    %8569 = vmatprep.subr.mxu0 %v8559
    %8570 = vmatpush1.msra.mxu0 %v8558
    %8571 = vmatprep.subr.mxu0 %v8561
    %8572 = vmatpush1.msra.mxu0 %v8560
    %8573 = vmatprep.subr.mxu0 %v8563
    %8574 = vmatpush1.msra.mxu0 %v8562
    %8575 = vmatprep.subr.mxu0 0.0
    %8576 = vmatpush1.msra.mxu0 0.0
    %8577 = vmatprep.subr.mxu0 0.0
    %8578 = vmatpush1.msra.mxu0 0.0
    %8579 = vmatprep.subr.mxu0 0.0
    %8580 = vmatpush1.msra.mxu0 0.0
    %8581 = vmatprep.subr.mxu0 0.0
    %8582 = vmatpush1.msra.mxu0 0.0
    %8583 = vmatprep.subr.mxu0 0.0
    %8584 = vmatpush1.msra.mxu0 0.0
    %8585 = vmatprep.subr.mxu0 0.0
    %8586 = vmatpush1.msra.mxu0 0.0
    %8587 = vmatprep.subr.mxu0 0.0
    %8588 = vmatpush1.msra.mxu0 0.0
    %8589 = vmatprep.subr.mxu0 0.0
    %8590 = vmatpush1.msra.mxu0 0.0
    %8591 = vmatprep.subr.mxu0 0.0
    %8592 = vmatpush1.msra.mxu0 0.0
    %8593 = vmatprep.subr.mxu0 0.0
    %8594 = vmatpush1.msra.mxu0 0.0
    %8595 = vmatprep.subr.mxu0 0.0
    %8596 = vmatpush1.msra.mxu0 0.0
    %8597 = vmatprep.subr.mxu0 0.0
    %8598 = vmatpush1.msra.mxu0 0.0
    %8599 = vmatprep.subr.mxu0 0.0
    %8600 = vmatpush1.msra.mxu0 0.0
    %8601 = vmatprep.subr.mxu0 0.0
    %8602 = vmatpush1.msra.mxu0 0.0
    %8603 = vmatprep.subr.mxu0 0.0
    %8604 = vmatpush1.msra.mxu0 0.0
    %8605 = vmatprep.subr.mxu0 0.0
    %8606 = vmatpush1.msra.mxu0 0.0
    %8607 = vmatprep.subr.mxu0 0.0
    %8608 = vmatpush1.msra.mxu0 0.0
    %8609 = vmatprep.subr.mxu0 0.0
    %8610 = vmatpush1.msra.mxu0 0.0
    %8611 = vmatprep.subr.mxu0 0.0
    %8612 = vmatpush1.msra.mxu0 0.0
    %8613 = vmatprep.subr.mxu0 0.0
    %8614 = vmatpush1.msra.mxu0 0.0
    %8615 = vmatprep.subr.mxu0 0.0
    %8616 = vmatpush1.msra.mxu0 0.0
    %8617 = vmatprep.subr.mxu0 0.0
    %8618 = vmatpush1.msra.mxu0 0.0
    %8619 = vmatprep.subr.mxu0 0.0
    %8620 = vmatpush1.msra.mxu0 0.0
    %8621 = vmatprep.subr.mxu0 0.0
    %8622 = vmatpush1.msra.mxu0 0.0
    %8623 = vmatprep.subr.mxu0 0.0
    %8624 = vmatpush1.msra.mxu0 0.0
    %8625 = vmatprep.subr.mxu0 0.0
    %8626 = vmatpush1.msra.mxu0 0.0
    %8627 = vmatprep.subr.mxu0 0.0
    %8628 = vmatpush1.msra.mxu0 0.0
    %8629 = vmatprep.subr.mxu0 0.0
    %8630 = vmatpush1.msra.mxu0 0.0
    %8631 = vmatprep.mubr.f32.mxu0 0.0
    %8632 = vmatmul.mubr.f32.gmra.mrb[0].mxu0 %v8565
    %v8633 = vpop.f32.mrb[0].mxu0
    %v8634 = vadd.f32 0.0, %v8633
    %v8635 = vpop.f32.mrb[0].mxu0
    %v8636 = vadd.f32 0.0, %v8635
    %8637 = vdwg.mxu0
    %v8638 = vadd.f32 %v8258, %v8634
    %v8639 = vadd.f32 %v8259, %v8636
    %v8640 = vld [vmem:[%s8] sm:$0x3]
    %v8642 = vlaneseq
    %v8643 = vshrl.u32 %v8642, 7
    %v8644 = vsub.s32 0, %v8643
    %v8645 = vrot.slane %v8640, %v8644
    %v8646 = vlaneseq
    %v8647 = vshrl.u32 %v8646, 7
    %v8648 = vsub.s32 1, %v8647
    %v8649 = vrot.slane %v8640, %v8648
    %v8652 = vadd.f32 %v8638, %v8645
    %v8653 = vadd.f32 %v8639, %v8649
    %v8656 = vcombine.low %v8652, %v8653
    %v8658 = vunpack.c.l.s4 1983009808
    %v8659 = vunpack.c.0.s8 %v8658
    %v8660 = vlaneseq
    %v8661 = vshrl.u32 %v8660, 7
    %v8662 = vsub.s32 %v8659, %v8661
    %v8663 = vrot.slane %v8656, %v8662
    %8665 = vst [vmem:[#allocation3] sm:$0xf] %v8663
    // Predicated region
    $region38: #{lstm_model_forward.1} parent=1 // pred_check
      _
    $region39: #{lstm_model_forward.1} parent=1 // pred_check_branch
      %8667 = sbr.rel (0) target = $region41
    $region40: #{lstm_model_forward.1} parent=1 // pred_region
      %s8669 = ssub.s32 64, 64
      %8670 = vsyncadd [#allocation4], %s8669
      %s8672 = sshll.u32 [#allocation3], 4
      %s8673 = int_to_ptr.vmem [resolvable:$true] %s8672
      %8675 = dma.vmem_to_hbm [thread:$0]  %s8673, 64, %s9, [#allocation4]
    $region41: #{lstm_model_forward.1} parent=1 // pred_fallthru
      _
    // Predicated region
    $region42: #{lstm_model_forward.1} parent=1 // pred_check
      _
    $region43: #{lstm_model_forward.1} parent=1 // pred_check_branch
      %8677 = sbr.rel (0) target = $region45
    $region44: #{lstm_model_forward.1} parent=1 // pred_region
      %8678 = dma.done [#allocation4], 64
    $region45: #{lstm_model_forward.1} parent=1 // pred_fallthru
      _
    %8679 = vsyncpa [#allocation4], 1

</llo_original>
